<compile_context>
chip_gen: v6e
topology: v6e:2x2x1
jax: 0.10.0
libtpu: 0.0.40
codegen_flags: <defaults>
</compile_context>

<pallas_src>
from functools import partial

import jax
import jax.numpy as jnp
from jax.experimental import pallas as pl
from jax.experimental.pallas import tpu as pltpu

# ------------------------- configuration (small) ----------------------------
PATCH_EMBED_DIM  = 128   # torch default 1024
HIDDEN_SIZE      = 256   # torch default 4096
NUM_LATENTS      = 16    # torch default 256
DEPTH            = 6     # same as module
HEADS            = 4     # torch default 16
DIM_HEAD         = 32    # torch default 96
NUM_MEDIA_EMBEDS = 1     # same as module
FF_MULT          = 4
LN_EPS           = 1e-5

INNER  = HEADS * DIM_HEAD
FF_DIM = FF_MULT * PATCH_EMBED_DIM
SCALE  = DIM_HEAD ** -0.5

BATCH     = 2
N_PATCHES = 32

# MXU operand dtype. Kept f32 so the small-shape validation matches the f32
# reference to < 2e-2.  At production sizes set to jnp.bfloat16 (see TODOs).
MXU_DTYPE = jnp.float32


# ------------------------------ in-kernel math -------------------------------
def _erf_inkernel(x):
    # Abramowitz & Stegun 7.1.26 polynomial erf, |abs err| <= 1.5e-7 (f32-exact).
    # TODO(synk): switch to jax.lax.erf once the Mosaic lowering is guaranteed.
    a1, a2, a3, a4, a5 = 0.254829592, -0.284496736, 1.421413741, -1.453152027, 1.061405429
    p = 0.3275911
    ax = jnp.abs(x)
    t = 1.0 / (1.0 + p * ax)
    poly = ((((a5 * t + a4) * t + a3) * t + a2) * t + a1) * t
    y = 1.0 - poly * jnp.exp(-ax * ax)
    return jnp.where(x >= 0, y, -y)


def _gelu_exact(x):
    # matches torch nn.GELU() (approximate='none'): x * 0.5 * (1 + erf(x / sqrt(2)))
    return 0.5 * x * (1.0 + _erf_inkernel(x * 0.7071067811865475))


def _ln(x, w, b):
    # x: (rows, D) f32; w, b: (1, D) broadcast.  Biased variance (matches torch).
    mu = jnp.mean(x, axis=-1, keepdims=True)
    xc = x - mu
    var = jnp.mean(xc * xc, axis=-1, keepdims=True)
    return xc * jax.lax.rsqrt(var + LN_EPS) * w + b


def _mm(a, b):
    """a @ b on the MXU, f32 accumulation."""
    return jnp.dot(a.astype(MXU_DTYPE), b.astype(MXU_DTYPE),
                   preferred_element_type=jnp.float32)


def _mm_nt(a, b):
    """a @ b.T on the MXU, f32 accumulation (contraction on last dims)."""
    return jax.lax.dot_general(a.astype(MXU_DTYPE), b.astype(MXU_DTYPE),
                               (((1,), (1,)), ((), ())),
                               preferred_element_type=jnp.float32)


# ------------------------------ fused kernel ---------------------------------
def _perceiver_fused_kernel(
        # ---- inputs ----
        img_ref,                   # (BT*N, D)       ln_vision input, all batches
        lnv_w_ref, lnv_b_ref,      # (1, D)          ln_vision
        pos_ref,                   # (1, D)          media_pos_emb[0, 0]
        lat0_ref,                  # (BT*L, D)       initial latents (pre-tiled over batch)
        nm_w_ref, nm_b_ref,        # (1, 1, D)       norm_media   (layer l)
        nl_w_ref, nl_b_ref,        # (1, 1, D)       norm_latents (layer l)
        q_w_ref,                   # (1, D, INNER)   to_q  (pre-scaled by dim_head**-0.5)
        kv_w_ref,                  # (1, D, 2*INNER) to_kv
        out_w_ref,                 # (1, INNER, D)   to_out
        ffln_w_ref, ffln_b_ref,    # (1, 1, D)
        ff1_w_ref,                 # (1, D, FF_DIM)
        ff2_w_ref,                 # (1, FF_DIM, D)
        fln_w_ref, fln_b_ref,      # (1, D)          resampler final norm
        proj_w_ref,                # (D, HIDDEN)
        proj_b_ref,                # (1, HIDDEN)
        # ---- output ----
        o_ref,                     # (BT*L, HIDDEN)
        # ---- scratch (persists across the depth axis) ----
        x_sc,                      # (BT*N, D) f32   ln_vision(x) + pos_emb
        lat_sc,                    # (BT*L, D) f32   running latents
        *, bt, n, l):
    layer = pl.program_id(0)

    # -- first layer: build media tokens (ln_vision + pos) & init latents --
    @pl.when(layer == 0)
    def _init():
        x_sc[...] = _ln(img_ref[...].astype(jnp.float32),
                        lnv_w_ref[...], lnv_b_ref[...]) + pos_ref[...]
        lat_sc[...] = lat0_ref[...].astype(jnp.float32)

    # ---------------- PerceiverAttention (batched projections) ----------------
    xn = _ln(x_sc[...], nm_w_ref[0], nm_b_ref[0])              # (BT*N, D)
    lt = _ln(lat_sc[...], nl_w_ref[0], nl_b_ref[0])            # (BT*L, D)

    q = _mm(lt, q_w_ref[0])                                    # (BT*L, INNER), scale folded in
    kv_m = _mm(xn, kv_w_ref[0])                                # (BT*N, 2*INNER)
    kv_l = _mm(lt, kv_w_ref[0])                                # (BT*L, 2*INNER)
    k_m, v_m = kv_m[:, :INNER], kv_m[:, INNER:]                # 128-aligned splits
    k_l, v_l = kv_l[:, :INNER], kv_l[:, INNER:]

    # Attention softmax stays per (batch, head); per-head outputs are packed
    # back to (BT*L, INNER) so the output projection is a single K=INNER matmul.
    o_batches = []
    for b in range(bt):
        rm = slice(b * n, (b + 1) * n)
        rl = slice(b * l, (b + 1) * l)
        qb, kmb, klb = q[rl], k_m[rm], k_l[rl]
        vmb, vlb = v_m[rm], v_l[rl]
        per_head = []
        for h in range(HEADS):
            c = slice(h * DIM_HEAD, (h + 1) * DIM_HEAD)
            sim_m = _mm_nt(qb[:, c], kmb[:, c])                # (L, N)
            sim_l = _mm_nt(qb[:, c], klb[:, c])                # (L, L)
            m = jnp.maximum(jnp.max(sim_m, axis=-1, keepdims=True),
                            jnp.max(sim_l, axis=-1, keepdims=True))
            em = jnp.exp(sim_m - m)                            # joint softmax over media+latents
            el = jnp.exp(sim_l - m)
            denom = (jnp.sum(em, axis=-1, keepdims=True)
                     + jnp.sum(el, axis=-1, keepdims=True))
            oh = _mm(em, vmb[:, c]) + _mm(el, vlb[:, c])       # (L, dh)
            per_head.append(oh * pl.reciprocal(denom, approx=True))
        o_batches.append(jnp.concatenate(per_head, axis=-1))   # (L, INNER)
    o_all = jnp.concatenate(o_batches, axis=0)                 # (BT*L, INNER)

    lat = lat_sc[...] + _mm(o_all, out_w_ref[0])               # residual (fused)

    # ---------------- FeedForward (batched) ----------------
    z = _ln(lat, ffln_w_ref[0], ffln_b_ref[0])
    h1 = _gelu_exact(_mm(z, ff1_w_ref[0]))                     # (BT*L, FF_DIM)
    lat = lat + _mm(h1, ff2_w_ref[0])                          # residual (fused)
    lat_sc[...] = lat

    # -- last layer: resampler final LN + llm_proj, lane-dense (BT*L, HIDDEN) store --
    @pl.when(layer == DEPTH - 1)
    def _final():
        zf = _ln(lat, fln_w_ref[...], fln_b_ref[...])
        o_ref[...] = (_mm(zf, proj_w_ref[...]) + proj_b_ref[...]).astype(o_ref.dtype)


# ------------------------------- forward ------------------------------------
def perceiver_forward(params, image_features):
    B, N, D = image_features.shape
    T = 1                                   # x = x[:, None] -> num_media always 1 here
    BT = B * T
    L = params["latents"].shape[0]

    layers = params["layers"]
    stack = lambda name: jnp.stack([lp[name] for lp in layers])
    # LN params stacked as (DEPTH, 1, D) so each block equals the full (1, D) trailing dims.
    stack_ln = lambda name: jnp.stack([lp[name].reshape(1, D) for lp in layers])

    nm_w, nm_b = stack_ln("norm_media_w"), stack_ln("norm_media_b")
    nl_w, nl_b = stack_ln("norm_latents_w"), stack_ln("norm_latents_b")
    ffl_w, ffl_b = stack_ln("ff_ln_w"), stack_ln("ff_ln_b")
    q_w = stack("to_q_w") * SCALE           # fold the query scale into the weight (host-side)
    kv_w, out_w = stack("to_kv_w"), stack("to_out_w")
    ff1_w, ff2_w = stack("ff_w1"), stack("ff_w2")

    img = image_features.reshape(BT * N, D)                    # all batches, row-major
    lat0 = jnp.tile(params["latents"], (BT, 1))                # (BT*L, D)
    pos = params["media_pos_emb"][0].reshape(1, D)             # T == 1, num_media_embeds == 1

    cmap2 = lambda layer: (0, 0)            # constant (full-array) 2-D blocks
    lmap3 = lambda layer: (layer, 0, 0)     # per-layer stacked weights

    in_specs = [
        pl.BlockSpec((BT * N, D), cmap2),                   # img (ln_vision input)
        pl.BlockSpec((1, D), cmap2),                        # ln_vision w
        pl.BlockSpec((1, D), cmap2),                        # ln_vision b
        pl.BlockSpec((1, D), cmap2),                        # media pos emb
        pl.BlockSpec((BT * L, D), cmap2),                   # latents (init, tiled)
        pl.BlockSpec((1, 1, D), lmap3),                     # norm_media w
        pl.BlockSpec((1, 1, D), lmap3),                     # norm_media b
        pl.BlockSpec((1, 1, D), lmap3),                     # norm_latents w
        pl.BlockSpec((1, 1, D), lmap3),                     # norm_latents b
        pl.BlockSpec((1, D, INNER), lmap3),                 # to_q (pre-scaled)
        pl.BlockSpec((1, D, 2 * INNER), lmap3),             # to_kv
        pl.BlockSpec((1, INNER, D), lmap3),                 # to_out
        pl.BlockSpec((1, 1, D), lmap3),                     # ff ln w
        pl.BlockSpec((1, 1, D), lmap3),                     # ff ln b
        pl.BlockSpec((1, D, FF_DIM), lmap3),                # ff w1
        pl.BlockSpec((1, FF_DIM, D), lmap3),                # ff w2
        pl.BlockSpec((1, D), cmap2),                        # final ln w
        pl.BlockSpec((1, D), cmap2),                        # final ln b
        pl.BlockSpec((D, HIDDEN_SIZE), cmap2),              # llm_proj w
        pl.BlockSpec((1, HIDDEN_SIZE), cmap2),              # llm_proj b
    ]

    out = pl.pallas_call(
        partial(_perceiver_fused_kernel, bt=BT, n=N, l=L),
        out_shape=jax.ShapeDtypeStruct((BT * L, HIDDEN_SIZE), image_features.dtype),
        grid=(DEPTH,),
        in_specs=in_specs,
        out_specs=pl.BlockSpec((BT * L, HIDDEN_SIZE), cmap2),
        scratch_shapes=[pltpu.VMEM((BT * N, D), jnp.float32),
                        pltpu.VMEM((BT * L, D), jnp.float32)],
        compiler_params=pltpu.CompilerParams(
            dimension_semantics=("arbitrary",),     # depth carries state in scratch
            vmem_limit_bytes=48 << 20),              # explicit; <= ~56 MiB so valid on v7x
    )(img,
      params["ln_vision_w"].reshape(1, D), params["ln_vision_b"].reshape(1, D),
      pos, lat0,
      nm_w, nm_b, nl_w, nl_b,
      q_w, kv_w, out_w,
      ffl_w, ffl_b, ff1_w, ff2_w,
      params["final_ln_w"].reshape(1, D), params["final_ln_b"].reshape(1, D),
      params["llm_proj_w"], params["llm_proj_b"].reshape(1, HIDDEN_SIZE))

    return out.reshape(B, T, L, HIDDEN_SIZE)


# --------------------------- pure-JAX reference -----------------------------
def _ln_ref(x, w, b):
    mu = jnp.mean(x, axis=-1, keepdims=True)
    var = jnp.mean((x - mu) ** 2, axis=-1, keepdims=True)
    return (x - mu) * jax.lax.rsqrt(var + LN_EPS) * w + b


def perceiver_forward_ref(params, image_features):
    P = jax.lax.Precision.HIGHEST
    B, N, D = image_features.shape
    x = _ln_ref(image_features, params["ln_vision_w"], params["ln_vision_b"])
    x = x[:, None]
    T = x.shape[1]
    x = x + params["media_pos_emb"][:T]
    L = params["latents"].shape[0]
    latents = jnp.broadcast_to(params["latents"][None, None], (B, T, L, D))
    scale = DIM_HEAD ** -0.5

    def heads(z):
        b, t, n, _ = z.shape
        return jnp.transpose(z.reshape(b, t, n, HEADS, DIM_HEAD), (0, 3, 1, 2, 4))

    for lp in params["layers"]:
        xn = _ln_ref(x, lp["norm_media_w"], lp["norm_media_b"])
        lt = _ln_ref(latents, lp["norm_latents_w"], lp["norm_latents_b"])
        q = jnp.einsum("btnd,de->btne", lt, lp["to_q_w"], precision=P)
        kv_in = jnp.concatenate([xn, lt], axis=2)
        kv = jnp.einsum("btnd,de->btne", kv_in, lp["to_kv_w"], precision=P)
        k, v = jnp.split(kv, 2, axis=-1)
        qh, kh, vh = heads(q) * scale, heads(k), heads(v)
        sim = jnp.einsum("bhtid,bhtjd->bhtij", qh, kh, precision=P)
        sim = sim - jnp.max(sim, axis=-1, keepdims=True)
        attn = jax.nn.softmax(sim, axis=-1)
        o = jnp.einsum("bhtij,bhtjd->bhtid", attn, vh, precision=P)
        o = jnp.transpose(o, (0, 2, 3, 1, 4)).reshape(B, T, L, HEADS * DIM_HEAD)
        latents = jnp.einsum("btne,ed->btnd", o, lp["to_out_w"], precision=P) + latents
        z = _ln_ref(latents, lp["ff_ln_w"], lp["ff_ln_b"])
        z = jnp.einsum("btnd,df->btnf", z, lp["ff_w1"], precision=P)
        z = jax.nn.gelu(z, approximate=False)
        z = jnp.einsum("btnf,fd->btnd", z, lp["ff_w2"], precision=P)
        latents = z + latents
    latents = _ln_ref(latents, params["final_ln_w"], params["final_ln_b"])
    return (jnp.einsum("btnd,dh->btnh", latents, params["llm_proj_w"], precision=P)
            + params["llm_proj_b"])


# ----------------------------- parameter init -------------------------------
def init_params(key):
    inner = HEADS * DIM_HEAD
    keys = iter(jax.random.split(key, 64))
    f32 = jnp.float32

    def w_init(shape, scale=0.02):
        return (scale * jax.random.normal(next(keys), shape)).astype(f32)

    def ln_init(dim):
        kw, kb = jax.random.split(next(keys))
        return ((1.0 + 0.05 * jax.random.normal(kw, (dim,))).astype(f32),
                (0.05 * jax.random.normal(kb, (dim,))).astype(f32))

    p = {}
    p["ln_vision_w"], p["ln_vision_b"] = ln_init(PATCH_EMBED_DIM)
    p["latents"] = w_init((NUM_LATENTS, PATCH_EMBED_DIM), scale=1.0)
    p["media_pos_emb"] = w_init((NUM_MEDIA_EMBEDS, 1, PATCH_EMBED_DIM), scale=1.0)
    p["layers"] = []
    for _ in range(DEPTH):
        lp = {}
        lp["norm_media_w"], lp["norm_media_b"] = ln_init(PATCH_EMBED_DIM)
        lp["norm_latents_w"], lp["norm_latents_b"] = ln_init(PATCH_EMBED_DIM)
        lp["to_q_w"] = w_init((PATCH_EMBED_DIM, inner))
        lp["to_kv_w"] = w_init((PATCH_EMBED_DIM, 2 * inner))
        lp["to_out_w"] = w_init((inner, PATCH_EMBED_DIM))
        lp["ff_ln_w"], lp["ff_ln_b"] = ln_init(PATCH_EMBED_DIM)
        lp["ff_w1"] = w_init((PATCH_EMBED_DIM, FF_MULT * PATCH_EMBED_DIM))
        lp["ff_w2"] = w_init((FF_MULT * PATCH_EMBED_DIM, PATCH_EMBED_DIM))
        p["layers"].append(lp)
    p["final_ln_w"], p["final_ln_b"] = ln_init(PATCH_EMBED_DIM)
    p["llm_proj_w"] = w_init((PATCH_EMBED_DIM, HIDDEN_SIZE))
    p["llm_proj_b"] = w_init((HIDDEN_SIZE,))
    return p


# --------------------------------- main --------------------------------------
if __name__ == "__main__":
    root = jax.random.PRNGKey(0)
    k_params, k_x = jax.random.split(root)
    params = init_params(k_params)
    image_features = jax.random.normal(
        k_x, (BATCH, N_PATCHES, PATCH_EMBED_DIM), dtype=jnp.float32)

    out = jax.jit(perceiver_forward)(params, image_features)
    out = jax.block_until_ready(out)
    assert out.shape == (BATCH, 1, NUM_LATENTS, HIDDEN_SIZE), out.shape
    assert jnp.all(jnp.isfinite(out))

    ref = perceiver_forward_ref(params, image_features)
    max_err = float(jnp.max(jnp.abs(out - ref)))
    assert max_err < 2e-2, f"mismatch vs reference: max abs err = {max_err}"

    print("KERNEL_OK")
</pallas_src>

<mosaic_0001>
module attributes {stable_mosaic.version = 11 : i64} {
  func.func @_perceiver_fused_kernel(%arg0: i32, %arg1: memref<64x128xf32, #tpu.memory_space<vmem>>, %arg2: memref<1x128xf32, #tpu.memory_space<vmem>>, %arg3: memref<1x128xf32, #tpu.memory_space<vmem>>, %arg4: memref<1x128xf32, #tpu.memory_space<vmem>>, %arg5: memref<32x128xf32, #tpu.memory_space<vmem>>, %arg6: memref<1x1x128xf32, #tpu.memory_space<vmem>>, %arg7: memref<1x1x128xf32, #tpu.memory_space<vmem>>, %arg8: memref<1x1x128xf32, #tpu.memory_space<vmem>>, %arg9: memref<1x1x128xf32, #tpu.memory_space<vmem>>, %arg10: memref<1x128x128xf32, #tpu.memory_space<vmem>>, %arg11: memref<1x128x256xf32, #tpu.memory_space<vmem>>, %arg12: memref<1x128x128xf32, #tpu.memory_space<vmem>>, %arg13: memref<1x1x128xf32, #tpu.memory_space<vmem>>, %arg14: memref<1x1x128xf32, #tpu.memory_space<vmem>>, %arg15: memref<1x128x512xf32, #tpu.memory_space<vmem>>, %arg16: memref<1x512x128xf32, #tpu.memory_space<vmem>>, %arg17: memref<1x128xf32, #tpu.memory_space<vmem>>, %arg18: memref<1x128xf32, #tpu.memory_space<vmem>>, %arg19: memref<128x256xf32, #tpu.memory_space<vmem>>, %arg20: memref<1x256xf32, #tpu.memory_space<vmem>>, %arg21: memref<32x256xf32, #tpu.memory_space<vmem>>, %arg22: memref<64x128xf32, #tpu.memory_space<vmem>>, %arg23: memref<32x128xf32, #tpu.memory_space<vmem>>) attributes {dimension_semantics = [#tpu.dimension_semantics<arbitrary>], iteration_bounds = array<i64: 6>, scalar_prefetch = 0 : i64, scratch_operands = 2 : i64, tpu.core_type = #tpu.core_type<tc>, window_params = [{pipeline_mode = #tpu.pipeline_mode<synchronous>, transform_indices = @transform_0, window_bounds = array<i64: 64, 128>}, {pipeline_mode = #tpu.pipeline_mode<synchronous>, transform_indices = @transform_1, window_bounds = array<i64: 1, 128>}, {pipeline_mode = #tpu.pipeline_mode<synchronous>, transform_indices = @transform_2, window_bounds = array<i64: 1, 128>}, {pipeline_mode = #tpu.pipeline_mode<synchronous>, transform_indices = @transform_3, window_bounds = array<i64: 1, 128>}, {pipeline_mode = #tpu.pipeline_mode<synchronous>, transform_indices = @transform_4, window_bounds = array<i64: 32, 128>}, {transform_indices = @transform_5, window_bounds = array<i64: 1, 1, 128>}, {transform_indices = @transform_6, window_bounds = array<i64: 1, 1, 128>}, {transform_indices = @transform_7, window_bounds = array<i64: 1, 1, 128>}, {transform_indices = @transform_8, window_bounds = array<i64: 1, 1, 128>}, {transform_indices = @transform_9, window_bounds = array<i64: 1, 128, 128>}, {transform_indices = @transform_10, window_bounds = array<i64: 1, 128, 256>}, {transform_indices = @transform_11, window_bounds = array<i64: 1, 128, 128>}, {transform_indices = @transform_12, window_bounds = array<i64: 1, 1, 128>}, {transform_indices = @transform_13, window_bounds = array<i64: 1, 1, 128>}, {transform_indices = @transform_14, window_bounds = array<i64: 1, 128, 512>}, {transform_indices = @transform_15, window_bounds = array<i64: 1, 512, 128>}, {pipeline_mode = #tpu.pipeline_mode<synchronous>, transform_indices = @transform_16, window_bounds = array<i64: 1, 128>}, {pipeline_mode = #tpu.pipeline_mode<synchronous>, transform_indices = @transform_17, window_bounds = array<i64: 1, 128>}, {pipeline_mode = #tpu.pipeline_mode<synchronous>, transform_indices = @transform_18, window_bounds = array<i64: 128, 256>}, {pipeline_mode = #tpu.pipeline_mode<synchronous>, transform_indices = @transform_19, window_bounds = array<i64: 1, 256>}, {pipeline_mode = #tpu.pipeline_mode<synchronous>, transform_indices = @transform_20, window_bounds = array<i64: 32, 256>}]} {
    %c0_i32 = arith.constant 0 : i32
    %0 = arith.cmpi eq, %arg0, %c0_i32 : i32
    %1 = arith.extui %0 : i1 to i32
    %c0_i32_0 = arith.constant 0 : i32
    %2 = arith.cmpi ne, %1, %c0_i32_0 : i32
    scf.if %2 {
      %c0_144 = arith.constant 0 : index
      %c0_145 = arith.constant 0 : index
      %399 = vector.load %arg1[%c0_144, %c0_145] : memref<64x128xf32, #tpu.memory_space<vmem>>, vector<64x128xf32>
      %c0_146 = arith.constant 0 : index
      %c0_147 = arith.constant 0 : index
      %400 = vector.load %arg2[%c0_146, %c0_147] : memref<1x128xf32, #tpu.memory_space<vmem>>, vector<1x128xf32>
      %c0_148 = arith.constant 0 : index
      %c0_149 = arith.constant 0 : index
      %401 = vector.load %arg3[%c0_148, %c0_149] : memref<1x128xf32, #tpu.memory_space<vmem>>, vector<1x128xf32>
      %cst_150 = arith.constant dense<0.000000e+00> : vector<64xf32>
      %402 = vector.multi_reduction <add>, %399, %cst_150 [1] : vector<64x128xf32> to vector<64xf32>
      %403 = vector.shape_cast %402 : vector<64xf32> to vector<64x1xf32>
      %cst_151 = arith.constant 1.280000e+02 : f32
      %404 = vector.broadcast %cst_151 : f32 to vector<64x1xf32>
      %405 = arith.divf %403, %404 : vector<64x1xf32>
      %406 = vector.broadcast %405 : vector<64x1xf32> to vector<64x128xf32>
      %407 = arith.subf %399, %406 : vector<64x128xf32>
      %408 = arith.mulf %407, %407 : vector<64x128xf32>
      %cst_152 = arith.constant dense<0.000000e+00> : vector<64xf32>
      %409 = vector.multi_reduction <add>, %408, %cst_152 [1] : vector<64x128xf32> to vector<64xf32>
      %410 = vector.shape_cast %409 : vector<64xf32> to vector<64x1xf32>
      %cst_153 = arith.constant 1.280000e+02 : f32
      %411 = vector.broadcast %cst_153 : f32 to vector<64x1xf32>
      %412 = arith.divf %410, %411 : vector<64x1xf32>
      %cst_154 = arith.constant 9.99999974E-6 : f32
      %413 = vector.broadcast %cst_154 : f32 to vector<64x1xf32>
      %414 = arith.addf %412, %413 : vector<64x1xf32>
      %415 = math.rsqrt %414 : vector<64x1xf32>
      %416 = vector.broadcast %415 : vector<64x1xf32> to vector<64x128xf32>
      %417 = arith.mulf %407, %416 : vector<64x128xf32>
      %418 = vector.broadcast %400 : vector<1x128xf32> to vector<64x128xf32>
      %419 = arith.mulf %417, %418 : vector<64x128xf32>
      %420 = vector.broadcast %401 : vector<1x128xf32> to vector<64x128xf32>
      %421 = arith.addf %419, %420 : vector<64x128xf32>
      %c0_155 = arith.constant 0 : index
      %c0_156 = arith.constant 0 : index
      %422 = vector.load %arg4[%c0_155, %c0_156] : memref<1x128xf32, #tpu.memory_space<vmem>>, vector<1x128xf32>
      %423 = vector.broadcast %422 : vector<1x128xf32> to vector<64x128xf32>
      %424 = arith.addf %421, %423 : vector<64x128xf32>
      %c0_157 = arith.constant 0 : index
      %c0_158 = arith.constant 0 : index
      %425 = vector.load %arg22[%c0_157, %c0_158] : memref<64x128xf32, #tpu.memory_space<vmem>>, vector<64x128xf32>
      tpu.vector_store %arg22[%c0_157, %c0_158], %424 {strides = array<i32>} : memref<64x128xf32, #tpu.memory_space<vmem>>, vector<64x128xf32>,
      %c0_159 = arith.constant 0 : index
      %c0_160 = arith.constant 0 : index
      %426 = vector.load %arg5[%c0_159, %c0_160] : memref<32x128xf32, #tpu.memory_space<vmem>>, vector<32x128xf32>
      %c0_161 = arith.constant 0 : index
      %c0_162 = arith.constant 0 : index
      %427 = vector.load %arg23[%c0_161, %c0_162] : memref<32x128xf32, #tpu.memory_space<vmem>>, vector<32x128xf32>
      tpu.vector_store %arg23[%c0_161, %c0_162], %426 {strides = array<i32>} : memref<32x128xf32, #tpu.memory_space<vmem>>, vector<32x128xf32>,
    } else {
    }
    %c0 = arith.constant 0 : index
    %c0_1 = arith.constant 0 : index
    %3 = vector.load %arg22[%c0, %c0_1] : memref<64x128xf32, #tpu.memory_space<vmem>>, vector<64x128xf32>
    %c0_2 = arith.constant 0 : index
    %c0_3 = arith.constant 0 : index
    %c0_4 = arith.constant 0 : index
    %4 = vector.load %arg6[%c0_2, %c0_3, %c0_4] : memref<1x1x128xf32, #tpu.memory_space<vmem>>, vector<1x1x128xf32>
    %5 = vector.shape_cast %4 : vector<1x1x128xf32> to vector<1x128xf32>
    %c0_5 = arith.constant 0 : index
    %c0_6 = arith.constant 0 : index
    %c0_7 = arith.constant 0 : index
    %6 = vector.load %arg7[%c0_5, %c0_6, %c0_7] : memref<1x1x128xf32, #tpu.memory_space<vmem>>, vector<1x1x128xf32>
    %7 = vector.shape_cast %6 : vector<1x1x128xf32> to vector<1x128xf32>
    %cst = arith.constant dense<0.000000e+00> : vector<64xf32>
    %8 = vector.multi_reduction <add>, %3, %cst [1] : vector<64x128xf32> to vector<64xf32>
    %9 = vector.shape_cast %8 : vector<64xf32> to vector<64x1xf32>
    %cst_8 = arith.constant 1.280000e+02 : f32
    %10 = vector.broadcast %cst_8 : f32 to vector<64x1xf32>
    %11 = arith.divf %9, %10 : vector<64x1xf32>
    %12 = vector.broadcast %11 : vector<64x1xf32> to vector<64x128xf32>
    %13 = arith.subf %3, %12 : vector<64x128xf32>
    %14 = arith.mulf %13, %13 : vector<64x128xf32>
    %cst_9 = arith.constant dense<0.000000e+00> : vector<64xf32>
    %15 = vector.multi_reduction <add>, %14, %cst_9 [1] : vector<64x128xf32> to vector<64xf32>
    %16 = vector.shape_cast %15 : vector<64xf32> to vector<64x1xf32>
    %cst_10 = arith.constant 1.280000e+02 : f32
    %17 = vector.broadcast %cst_10 : f32 to vector<64x1xf32>
    %18 = arith.divf %16, %17 : vector<64x1xf32>
    %cst_11 = arith.constant 9.99999974E-6 : f32
    %19 = vector.broadcast %cst_11 : f32 to vector<64x1xf32>
    %20 = arith.addf %18, %19 : vector<64x1xf32>
    %21 = math.rsqrt %20 : vector<64x1xf32>
    %22 = vector.broadcast %21 : vector<64x1xf32> to vector<64x128xf32>
    %23 = arith.mulf %13, %22 : vector<64x128xf32>
    %24 = vector.broadcast %5 : vector<1x128xf32> to vector<64x128xf32>
    %25 = arith.mulf %23, %24 : vector<64x128xf32>
    %26 = vector.broadcast %7 : vector<1x128xf32> to vector<64x128xf32>
    %27 = arith.addf %25, %26 : vector<64x128xf32>
    %c0_12 = arith.constant 0 : index
    %c0_13 = arith.constant 0 : index
    %28 = vector.load %arg23[%c0_12, %c0_13] : memref<32x128xf32, #tpu.memory_space<vmem>>, vector<32x128xf32>
    %c0_14 = arith.constant 0 : index
    %c0_15 = arith.constant 0 : index
    %c0_16 = arith.constant 0 : index
    %29 = vector.load %arg8[%c0_14, %c0_15, %c0_16] : memref<1x1x128xf32, #tpu.memory_space<vmem>>, vector<1x1x128xf32>
    %30 = vector.shape_cast %29 : vector<1x1x128xf32> to vector<1x128xf32>
    %c0_17 = arith.constant 0 : index
    %c0_18 = arith.constant 0 : index
    %c0_19 = arith.constant 0 : index
    %31 = vector.load %arg9[%c0_17, %c0_18, %c0_19] : memref<1x1x128xf32, #tpu.memory_space<vmem>>, vector<1x1x128xf32>
    %32 = vector.shape_cast %31 : vector<1x1x128xf32> to vector<1x128xf32>
    %cst_20 = arith.constant dense<0.000000e+00> : vector<32xf32>
    %33 = vector.multi_reduction <add>, %28, %cst_20 [1] : vector<32x128xf32> to vector<32xf32>
    %34 = vector.shape_cast %33 : vector<32xf32> to vector<32x1xf32>
    %cst_21 = arith.constant 1.280000e+02 : f32
    %35 = vector.broadcast %cst_21 : f32 to vector<32x1xf32>
    %36 = arith.divf %34, %35 : vector<32x1xf32>
    %37 = vector.broadcast %36 : vector<32x1xf32> to vector<32x128xf32>
    %38 = arith.subf %28, %37 : vector<32x128xf32>
    %39 = arith.mulf %38, %38 : vector<32x128xf32>
    %cst_22 = arith.constant dense<0.000000e+00> : vector<32xf32>
    %40 = vector.multi_reduction <add>, %39, %cst_22 [1] : vector<32x128xf32> to vector<32xf32>
    %41 = vector.shape_cast %40 : vector<32xf32> to vector<32x1xf32>
    %cst_23 = arith.constant 1.280000e+02 : f32
    %42 = vector.broadcast %cst_23 : f32 to vector<32x1xf32>
    %43 = arith.divf %41, %42 : vector<32x1xf32>
    %cst_24 = arith.constant 9.99999974E-6 : f32
    %44 = vector.broadcast %cst_24 : f32 to vector<32x1xf32>
    %45 = arith.addf %43, %44 : vector<32x1xf32>
    %46 = math.rsqrt %45 : vector<32x1xf32>
    %47 = vector.broadcast %46 : vector<32x1xf32> to vector<32x128xf32>
    %48 = arith.mulf %38, %47 : vector<32x128xf32>
    %49 = vector.broadcast %30 : vector<1x128xf32> to vector<32x128xf32>
    %50 = arith.mulf %48, %49 : vector<32x128xf32>
    %51 = vector.broadcast %32 : vector<1x128xf32> to vector<32x128xf32>
    %52 = arith.addf %50, %51 : vector<32x128xf32>
    %c0_25 = arith.constant 0 : index
    %c0_26 = arith.constant 0 : index
    %c0_27 = arith.constant 0 : index
    %53 = vector.load %arg10[%c0_25, %c0_26, %c0_27] : memref<1x128x128xf32, #tpu.memory_space<vmem>>, vector<1x128x128xf32>
    %54 = vector.shape_cast %53 : vector<1x128x128xf32> to vector<128x128xf32>
    %cst_28 = arith.constant dense<0.000000e+00> : vector<32x128xf32>
    %55 = tpu.matmul %52, %54, %cst_28 {dimension_numbers = #tpu.dot_dimension_numbers<[1], [0], [0], [1], [0, 0, 1, 1], [], []>} : vector<32x128xf32>, vector<128x128xf32>, vector<32x128xf32> -> vector<32x128xf32>
    %c0_29 = arith.constant 0 : index
    %c0_30 = arith.constant 0 : index
    %c0_31 = arith.constant 0 : index
    %56 = vector.load %arg11[%c0_29, %c0_30, %c0_31] : memref<1x128x256xf32, #tpu.memory_space<vmem>>, vector<1x128x256xf32>
    %57 = vector.shape_cast %56 : vector<1x128x256xf32> to vector<128x256xf32>
    %cst_32 = arith.constant dense<0.000000e+00> : vector<64x256xf32>
    %58 = tpu.matmul %27, %57, %cst_32 {dimension_numbers = #tpu.dot_dimension_numbers<[1], [0], [0], [1], [0, 0, 1, 1], [], []>} : vector<64x128xf32>, vector<128x256xf32>, vector<64x256xf32> -> vector<64x256xf32>
    %c0_33 = arith.constant 0 : index
    %c0_34 = arith.constant 0 : index
    %c0_35 = arith.constant 0 : index
    %59 = vector.load %arg11[%c0_33, %c0_34, %c0_35] : memref<1x128x256xf32, #tpu.memory_space<vmem>>, vector<1x128x256xf32>
    %60 = vector.shape_cast %59 : vector<1x128x256xf32> to vector<128x256xf32>
    %cst_36 = arith.constant dense<0.000000e+00> : vector<32x256xf32>
    %61 = tpu.matmul %52, %60, %cst_36 {dimension_numbers = #tpu.dot_dimension_numbers<[1], [0], [0], [1], [0, 0, 1, 1], [], []>} : vector<32x128xf32>, vector<128x256xf32>, vector<32x256xf32> -> vector<32x256xf32>
    %62 = vector.extract_strided_slice %58 {offsets = [0, 0], sizes = [64, 128], strides = [1, 1]} : vector<64x256xf32> to vector<64x128xf32>
    %63 = vector.extract_strided_slice %58 {offsets = [0, 128], sizes = [64, 128], strides = [1, 1]} : vector<64x256xf32> to vector<64x128xf32>
    %64 = vector.extract_strided_slice %61 {offsets = [0, 0], sizes = [32, 128], strides = [1, 1]} : vector<32x256xf32> to vector<32x128xf32>
    %65 = vector.extract_strided_slice %61 {offsets = [0, 128], sizes = [32, 128], strides = [1, 1]} : vector<32x256xf32> to vector<32x128xf32>
    %66 = vector.extract_strided_slice %55 {offsets = [0, 0], sizes = [16, 128], strides = [1, 1]} : vector<32x128xf32> to vector<16x128xf32>
    %67 = vector.extract_strided_slice %62 {offsets = [0, 0], sizes = [32, 128], strides = [1, 1]} : vector<64x128xf32> to vector<32x128xf32>
    %68 = vector.extract_strided_slice %64 {offsets = [0, 0], sizes = [16, 128], strides = [1, 1]} : vector<32x128xf32> to vector<16x128xf32>
    %69 = vector.extract_strided_slice %63 {offsets = [0, 0], sizes = [32, 128], strides = [1, 1]} : vector<64x128xf32> to vector<32x128xf32>
    %70 = vector.extract_strided_slice %65 {offsets = [0, 0], sizes = [16, 128], strides = [1, 1]} : vector<32x128xf32> to vector<16x128xf32>
    %71 = vector.extract_strided_slice %66 {offsets = [0, 0], sizes = [16, 32], strides = [1, 1]} : vector<16x128xf32> to vector<16x32xf32>
    %72 = vector.extract_strided_slice %67 {offsets = [0, 0], sizes = [32, 32], strides = [1, 1]} : vector<32x128xf32> to vector<32x32xf32>
    %cst_37 = arith.constant dense<0.000000e+00> : vector<16x32xf32>
    %73 = tpu.matmul %71, %72, %cst_37 {dimension_numbers = #tpu.dot_dimension_numbers<[1], [1], [0], [0], [0, 0, 1, 0], [], []>} : vector<16x32xf32>, vector<32x32xf32>, vector<16x32xf32> -> vector<16x32xf32>
    %74 = vector.extract_strided_slice %66 {offsets = [0, 0], sizes = [16, 32], strides = [1, 1]} : vector<16x128xf32> to vector<16x32xf32>
    %75 = vector.extract_strided_slice %68 {offsets = [0, 0], sizes = [16, 32], strides = [1, 1]} : vector<16x128xf32> to vector<16x32xf32>
    %cst_38 = arith.constant dense<0.000000e+00> : vector<16x16xf32>
    %76 = tpu.matmul %74, %75, %cst_38 {dimension_numbers = #tpu.dot_dimension_numbers<[1], [1], [0], [0], [0, 0, 1, 0], [], []>} : vector<16x32xf32>, vector<16x32xf32>, vector<16x16xf32> -> vector<16x16xf32>
    %cst_39 = arith.constant dense<0xFF800000> : vector<16xf32>
    %77 = vector.multi_reduction <maximumf>, %73, %cst_39 [1] : vector<16x32xf32> to vector<16xf32>
    %78 = vector.shape_cast %77 : vector<16xf32> to vector<16x1xf32>
    %cst_40 = arith.constant dense<0xFF800000> : vector<16xf32>
    %79 = vector.multi_reduction <maximumf>, %76, %cst_40 [1] : vector<16x16xf32> to vector<16xf32>
    %80 = vector.shape_cast %79 : vector<16xf32> to vector<16x1xf32>
    %81 = arith.maximumf %78, %80 : vector<16x1xf32>
    %82 = vector.broadcast %81 : vector<16x1xf32> to vector<16x32xf32>
    %83 = arith.subf %73, %82 : vector<16x32xf32>
    %84 = math.exp %83 : vector<16x32xf32>
    %85 = vector.broadcast %81 : vector<16x1xf32> to vector<16x16xf32>
    %86 = arith.subf %76, %85 : vector<16x16xf32>
    %87 = math.exp %86 : vector<16x16xf32>
    %cst_41 = arith.constant dense<0.000000e+00> : vector<16xf32>
    %88 = vector.multi_reduction <add>, %84, %cst_41 [1] : vector<16x32xf32> to vector<16xf32>
    %89 = vector.shape_cast %88 : vector<16xf32> to vector<16x1xf32>
    %cst_42 = arith.constant dense<0.000000e+00> : vector<16xf32>
    %90 = vector.multi_reduction <add>, %87, %cst_42 [1] : vector<16x16xf32> to vector<16xf32>
    %91 = vector.shape_cast %90 : vector<16xf32> to vector<16x1xf32>
    %92 = arith.addf %89, %91 : vector<16x1xf32>
    %93 = vector.extract_strided_slice %69 {offsets = [0, 0], sizes = [32, 32], strides = [1, 1]} : vector<32x128xf32> to vector<32x32xf32>
    %cst_43 = arith.constant dense<0.000000e+00> : vector<16x32xf32>
    %94 = tpu.matmul %84, %93, %cst_43 {dimension_numbers = #tpu.dot_dimension_numbers<[1], [0], [0], [1], [0, 0, 1, 1], [], []>} : vector<16x32xf32>, vector<32x32xf32>, vector<16x32xf32> -> vector<16x32xf32>
    %95 = vector.extract_strided_slice %70 {offsets = [0, 0], sizes = [16, 32], strides = [1, 1]} : vector<16x128xf32> to vector<16x32xf32>
    %cst_44 = arith.constant dense<0.000000e+00> : vector<16x32xf32>
    %96 = tpu.matmul %87, %95, %cst_44 {dimension_numbers = #tpu.dot_dimension_numbers<[1], [0], [0], [1], [0, 0, 1, 1], [], []>} : vector<16x16xf32>, vector<16x32xf32>, vector<16x32xf32> -> vector<16x32xf32>
    %97 = arith.addf %94, %96 : vector<16x32xf32>
    %98 = tpu.reciprocal %92 {approx = true} : vector<16x1xf32> -> vector<16x1xf32>
    %99 = vector.broadcast %98 : vector<16x1xf32> to vector<16x32xf32>
    %100 = arith.mulf %97, %99 : vector<16x32xf32>
    %101 = vector.extract_strided_slice %66 {offsets = [0, 32], sizes = [16, 32], strides = [1, 1]} : vector<16x128xf32> to vector<16x32xf32>
    %102 = vector.extract_strided_slice %67 {offsets = [0, 32], sizes = [32, 32], strides = [1, 1]} : vector<32x128xf32> to vector<32x32xf32>
    %cst_45 = arith.constant dense<0.000000e+00> : vector<16x32xf32>
    %103 = tpu.matmul %101, %102, %cst_45 {dimension_numbers = #tpu.dot_dimension_numbers<[1], [1], [0], [0], [0, 0, 1, 0], [], []>} : vector<16x32xf32>, vector<32x32xf32>, vector<16x32xf32> -> vector<16x32xf32>
    %104 = vector.extract_strided_slice %66 {offsets = [0, 32], sizes = [16, 32], strides = [1, 1]} : vector<16x128xf32> to vector<16x32xf32>
    %105 = vector.extract_strided_slice %68 {offsets = [0, 32], sizes = [16, 32], strides = [1, 1]} : vector<16x128xf32> to vector<16x32xf32>
    %cst_46 = arith.constant dense<0.000000e+00> : vector<16x16xf32>
    %106 = tpu.matmul %104, %105, %cst_46 {dimension_numbers = #tpu.dot_dimension_numbers<[1], [1], [0], [0], [0, 0, 1, 0], [], []>} : vector<16x32xf32>, vector<16x32xf32>, vector<16x16xf32> -> vector<16x16xf32>
    %cst_47 = arith.constant dense<0xFF800000> : vector<16xf32>
    %107 = vector.multi_reduction <maximumf>, %103, %cst_47 [1] : vector<16x32xf32> to vector<16xf32>
    %108 = vector.shape_cast %107 : vector<16xf32> to vector<16x1xf32>
    %cst_48 = arith.constant dense<0xFF800000> : vector<16xf32>
    %109 = vector.multi_reduction <maximumf>, %106, %cst_48 [1] : vector<16x16xf32> to vector<16xf32>
    %110 = vector.shape_cast %109 : vector<16xf32> to vector<16x1xf32>
    %111 = arith.maximumf %108, %110 : vector<16x1xf32>
    %112 = vector.broadcast %111 : vector<16x1xf32> to vector<16x32xf32>
    %113 = arith.subf %103, %112 : vector<16x32xf32>
    %114 = math.exp %113 : vector<16x32xf32>
    %115 = vector.broadcast %111 : vector<16x1xf32> to vector<16x16xf32>
    %116 = arith.subf %106, %115 : vector<16x16xf32>
    %117 = math.exp %116 : vector<16x16xf32>
    %cst_49 = arith.constant dense<0.000000e+00> : vector<16xf32>
    %118 = vector.multi_reduction <add>, %114, %cst_49 [1] : vector<16x32xf32> to vector<16xf32>
    %119 = vector.shape_cast %118 : vector<16xf32> to vector<16x1xf32>
    %cst_50 = arith.constant dense<0.000000e+00> : vector<16xf32>
    %120 = vector.multi_reduction <add>, %117, %cst_50 [1] : vector<16x16xf32> to vector<16xf32>
    %121 = vector.shape_cast %120 : vector<16xf32> to vector<16x1xf32>
    %122 = arith.addf %119, %121 : vector<16x1xf32>
    %123 = vector.extract_strided_slice %69 {offsets = [0, 32], sizes = [32, 32], strides = [1, 1]} : vector<32x128xf32> to vector<32x32xf32>
    %cst_51 = arith.constant dense<0.000000e+00> : vector<16x32xf32>
    %124 = tpu.matmul %114, %123, %cst_51 {dimension_numbers = #tpu.dot_dimension_numbers<[1], [0], [0], [1], [0, 0, 1, 1], [], []>} : vector<16x32xf32>, vector<32x32xf32>, vector<16x32xf32> -> vector<16x32xf32>
    %125 = vector.extract_strided_slice %70 {offsets = [0, 32], sizes = [16, 32], strides = [1, 1]} : vector<16x128xf32> to vector<16x32xf32>
    %cst_52 = arith.constant dense<0.000000e+00> : vector<16x32xf32>
    %126 = tpu.matmul %117, %125, %cst_52 {dimension_numbers = #tpu.dot_dimension_numbers<[1], [0], [0], [1], [0, 0, 1, 1], [], []>} : vector<16x16xf32>, vector<16x32xf32>, vector<16x32xf32> -> vector<16x32xf32>
    %127 = arith.addf %124, %126 : vector<16x32xf32>
    %128 = tpu.reciprocal %122 {approx = true} : vector<16x1xf32> -> vector<16x1xf32>
    %129 = vector.broadcast %128 : vector<16x1xf32> to vector<16x32xf32>
    %130 = arith.mulf %127, %129 : vector<16x32xf32>
    %131 = vector.extract_strided_slice %66 {offsets = [0, 64], sizes = [16, 32], strides = [1, 1]} : vector<16x128xf32> to vector<16x32xf32>
    %132 = vector.extract_strided_slice %67 {offsets = [0, 64], sizes = [32, 32], strides = [1, 1]} : vector<32x128xf32> to vector<32x32xf32>
    %cst_53 = arith.constant dense<0.000000e+00> : vector<16x32xf32>
    %133 = tpu.matmul %131, %132, %cst_53 {dimension_numbers = #tpu.dot_dimension_numbers<[1], [1], [0], [0], [0, 0, 1, 0], [], []>} : vector<16x32xf32>, vector<32x32xf32>, vector<16x32xf32> -> vector<16x32xf32>
    %134 = vector.extract_strided_slice %66 {offsets = [0, 64], sizes = [16, 32], strides = [1, 1]} : vector<16x128xf32> to vector<16x32xf32>
    %135 = vector.extract_strided_slice %68 {offsets = [0, 64], sizes = [16, 32], strides = [1, 1]} : vector<16x128xf32> to vector<16x32xf32>
    %cst_54 = arith.constant dense<0.000000e+00> : vector<16x16xf32>
    %136 = tpu.matmul %134, %135, %cst_54 {dimension_numbers = #tpu.dot_dimension_numbers<[1], [1], [0], [0], [0, 0, 1, 0], [], []>} : vector<16x32xf32>, vector<16x32xf32>, vector<16x16xf32> -> vector<16x16xf32>
    %cst_55 = arith.constant dense<0xFF800000> : vector<16xf32>
    %137 = vector.multi_reduction <maximumf>, %133, %cst_55 [1] : vector<16x32xf32> to vector<16xf32>
    %138 = vector.shape_cast %137 : vector<16xf32> to vector<16x1xf32>
    %cst_56 = arith.constant dense<0xFF800000> : vector<16xf32>
    %139 = vector.multi_reduction <maximumf>, %136, %cst_56 [1] : vector<16x16xf32> to vector<16xf32>
    %140 = vector.shape_cast %139 : vector<16xf32> to vector<16x1xf32>
    %141 = arith.maximumf %138, %140 : vector<16x1xf32>
    %142 = vector.broadcast %141 : vector<16x1xf32> to vector<16x32xf32>
    %143 = arith.subf %133, %142 : vector<16x32xf32>
    %144 = math.exp %143 : vector<16x32xf32>
    %145 = vector.broadcast %141 : vector<16x1xf32> to vector<16x16xf32>
    %146 = arith.subf %136, %145 : vector<16x16xf32>
    %147 = math.exp %146 : vector<16x16xf32>
    %cst_57 = arith.constant dense<0.000000e+00> : vector<16xf32>
    %148 = vector.multi_reduction <add>, %144, %cst_57 [1] : vector<16x32xf32> to vector<16xf32>
    %149 = vector.shape_cast %148 : vector<16xf32> to vector<16x1xf32>
    %cst_58 = arith.constant dense<0.000000e+00> : vector<16xf32>
    %150 = vector.multi_reduction <add>, %147, %cst_58 [1] : vector<16x16xf32> to vector<16xf32>
    %151 = vector.shape_cast %150 : vector<16xf32> to vector<16x1xf32>
    %152 = arith.addf %149, %151 : vector<16x1xf32>
    %153 = vector.extract_strided_slice %69 {offsets = [0, 64], sizes = [32, 32], strides = [1, 1]} : vector<32x128xf32> to vector<32x32xf32>
    %cst_59 = arith.constant dense<0.000000e+00> : vector<16x32xf32>
    %154 = tpu.matmul %144, %153, %cst_59 {dimension_numbers = #tpu.dot_dimension_numbers<[1], [0], [0], [1], [0, 0, 1, 1], [], []>} : vector<16x32xf32>, vector<32x32xf32>, vector<16x32xf32> -> vector<16x32xf32>
    %155 = vector.extract_strided_slice %70 {offsets = [0, 64], sizes = [16, 32], strides = [1, 1]} : vector<16x128xf32> to vector<16x32xf32>
    %cst_60 = arith.constant dense<0.000000e+00> : vector<16x32xf32>
    %156 = tpu.matmul %147, %155, %cst_60 {dimension_numbers = #tpu.dot_dimension_numbers<[1], [0], [0], [1], [0, 0, 1, 1], [], []>} : vector<16x16xf32>, vector<16x32xf32>, vector<16x32xf32> -> vector<16x32xf32>
    %157 = arith.addf %154, %156 : vector<16x32xf32>
    %158 = tpu.reciprocal %152 {approx = true} : vector<16x1xf32> -> vector<16x1xf32>
    %159 = vector.broadcast %158 : vector<16x1xf32> to vector<16x32xf32>
    %160 = arith.mulf %157, %159 : vector<16x32xf32>
    %161 = vector.extract_strided_slice %66 {offsets = [0, 96], sizes = [16, 32], strides = [1, 1]} : vector<16x128xf32> to vector<16x32xf32>
    %162 = vector.extract_strided_slice %67 {offsets = [0, 96], sizes = [32, 32], strides = [1, 1]} : vector<32x128xf32> to vector<32x32xf32>
    %cst_61 = arith.constant dense<0.000000e+00> : vector<16x32xf32>
    %163 = tpu.matmul %161, %162, %cst_61 {dimension_numbers = #tpu.dot_dimension_numbers<[1], [1], [0], [0], [0, 0, 1, 0], [], []>} : vector<16x32xf32>, vector<32x32xf32>, vector<16x32xf32> -> vector<16x32xf32>
    %164 = vector.extract_strided_slice %66 {offsets = [0, 96], sizes = [16, 32], strides = [1, 1]} : vector<16x128xf32> to vector<16x32xf32>
    %165 = vector.extract_strided_slice %68 {offsets = [0, 96], sizes = [16, 32], strides = [1, 1]} : vector<16x128xf32> to vector<16x32xf32>
    %cst_62 = arith.constant dense<0.000000e+00> : vector<16x16xf32>
    %166 = tpu.matmul %164, %165, %cst_62 {dimension_numbers = #tpu.dot_dimension_numbers<[1], [1], [0], [0], [0, 0, 1, 0], [], []>} : vector<16x32xf32>, vector<16x32xf32>, vector<16x16xf32> -> vector<16x16xf32>
    %cst_63 = arith.constant dense<0xFF800000> : vector<16xf32>
    %167 = vector.multi_reduction <maximumf>, %163, %cst_63 [1] : vector<16x32xf32> to vector<16xf32>
    %168 = vector.shape_cast %167 : vector<16xf32> to vector<16x1xf32>
    %cst_64 = arith.constant dense<0xFF800000> : vector<16xf32>
    %169 = vector.multi_reduction <maximumf>, %166, %cst_64 [1] : vector<16x16xf32> to vector<16xf32>
    %170 = vector.shape_cast %169 : vector<16xf32> to vector<16x1xf32>
    %171 = arith.maximumf %168, %170 : vector<16x1xf32>
    %172 = vector.broadcast %171 : vector<16x1xf32> to vector<16x32xf32>
    %173 = arith.subf %163, %172 : vector<16x32xf32>
    %174 = math.exp %173 : vector<16x32xf32>
    %175 = vector.broadcast %171 : vector<16x1xf32> to vector<16x16xf32>
    %176 = arith.subf %166, %175 : vector<16x16xf32>
    %177 = math.exp %176 : vector<16x16xf32>
    %cst_65 = arith.constant dense<0.000000e+00> : vector<16xf32>
    %178 = vector.multi_reduction <add>, %174, %cst_65 [1] : vector<16x32xf32> to vector<16xf32>
    %179 = vector.shape_cast %178 : vector<16xf32> to vector<16x1xf32>
    %cst_66 = arith.constant dense<0.000000e+00> : vector<16xf32>
    %180 = vector.multi_reduction <add>, %177, %cst_66 [1] : vector<16x16xf32> to vector<16xf32>
    %181 = vector.shape_cast %180 : vector<16xf32> to vector<16x1xf32>
    %182 = arith.addf %179, %181 : vector<16x1xf32>
    %183 = vector.extract_strided_slice %69 {offsets = [0, 96], sizes = [32, 32], strides = [1, 1]} : vector<32x128xf32> to vector<32x32xf32>
    %cst_67 = arith.constant dense<0.000000e+00> : vector<16x32xf32>
    %184 = tpu.matmul %174, %183, %cst_67 {dimension_numbers = #tpu.dot_dimension_numbers<[1], [0], [0], [1], [0, 0, 1, 1], [], []>} : vector<16x32xf32>, vector<32x32xf32>, vector<16x32xf32> -> vector<16x32xf32>
    %185 = vector.extract_strided_slice %70 {offsets = [0, 96], sizes = [16, 32], strides = [1, 1]} : vector<16x128xf32> to vector<16x32xf32>
    %cst_68 = arith.constant dense<0.000000e+00> : vector<16x32xf32>
    %186 = tpu.matmul %177, %185, %cst_68 {dimension_numbers = #tpu.dot_dimension_numbers<[1], [0], [0], [1], [0, 0, 1, 1], [], []>} : vector<16x16xf32>, vector<16x32xf32>, vector<16x32xf32> -> vector<16x32xf32>
    %187 = arith.addf %184, %186 : vector<16x32xf32>
    %188 = tpu.reciprocal %182 {approx = true} : vector<16x1xf32> -> vector<16x1xf32>
    %189 = vector.broadcast %188 : vector<16x1xf32> to vector<16x32xf32>
    %190 = arith.mulf %187, %189 : vector<16x32xf32>
    %191 = tpu.concatenate %100, %130, %160, %190 in 1 : vector<16x32xf32>, vector<16x32xf32>, vector<16x32xf32>, vector<16x32xf32> -> vector<16x128xf32>
    %192 = vector.extract_strided_slice %55 {offsets = [16, 0], sizes = [16, 128], strides = [1, 1]} : vector<32x128xf32> to vector<16x128xf32>
    %193 = vector.extract_strided_slice %62 {offsets = [32, 0], sizes = [32, 128], strides = [1, 1]} : vector<64x128xf32> to vector<32x128xf32>
    %194 = vector.extract_strided_slice %64 {offsets = [16, 0], sizes = [16, 128], strides = [1, 1]} : vector<32x128xf32> to vector<16x128xf32>
    %195 = vector.extract_strided_slice %63 {offsets = [32, 0], sizes = [32, 128], strides = [1, 1]} : vector<64x128xf32> to vector<32x128xf32>
    %196 = vector.extract_strided_slice %65 {offsets = [16, 0], sizes = [16, 128], strides = [1, 1]} : vector<32x128xf32> to vector<16x128xf32>
    %197 = vector.extract_strided_slice %192 {offsets = [0, 0], sizes = [16, 32], strides = [1, 1]} : vector<16x128xf32> to vector<16x32xf32>
    %198 = vector.extract_strided_slice %193 {offsets = [0, 0], sizes = [32, 32], strides = [1, 1]} : vector<32x128xf32> to vector<32x32xf32>
    %cst_69 = arith.constant dense<0.000000e+00> : vector<16x32xf32>
    %199 = tpu.matmul %197, %198, %cst_69 {dimension_numbers = #tpu.dot_dimension_numbers<[1], [1], [0], [0], [0, 0, 1, 0], [], []>} : vector<16x32xf32>, vector<32x32xf32>, vector<16x32xf32> -> vector<16x32xf32>
    %200 = vector.extract_strided_slice %192 {offsets = [0, 0], sizes = [16, 32], strides = [1, 1]} : vector<16x128xf32> to vector<16x32xf32>
    %201 = vector.extract_strided_slice %194 {offsets = [0, 0], sizes = [16, 32], strides = [1, 1]} : vector<16x128xf32> to vector<16x32xf32>
    %cst_70 = arith.constant dense<0.000000e+00> : vector<16x16xf32>
    %202 = tpu.matmul %200, %201, %cst_70 {dimension_numbers = #tpu.dot_dimension_numbers<[1], [1], [0], [0], [0, 0, 1, 0], [], []>} : vector<16x32xf32>, vector<16x32xf32>, vector<16x16xf32> -> vector<16x16xf32>
    %cst_71 = arith.constant dense<0xFF800000> : vector<16xf32>
    %203 = vector.multi_reduction <maximumf>, %199, %cst_71 [1] : vector<16x32xf32> to vector<16xf32>
    %204 = vector.shape_cast %203 : vector<16xf32> to vector<16x1xf32>
    %cst_72 = arith.constant dense<0xFF800000> : vector<16xf32>
    %205 = vector.multi_reduction <maximumf>, %202, %cst_72 [1] : vector<16x16xf32> to vector<16xf32>
    %206 = vector.shape_cast %205 : vector<16xf32> to vector<16x1xf32>
    %207 = arith.maximumf %204, %206 : vector<16x1xf32>
    %208 = vector.broadcast %207 : vector<16x1xf32> to vector<16x32xf32>
    %209 = arith.subf %199, %208 : vector<16x32xf32>
    %210 = math.exp %209 : vector<16x32xf32>
    %211 = vector.broadcast %207 : vector<16x1xf32> to vector<16x16xf32>
    %212 = arith.subf %202, %211 : vector<16x16xf32>
    %213 = math.exp %212 : vector<16x16xf32>
    %cst_73 = arith.constant dense<0.000000e+00> : vector<16xf32>
    %214 = vector.multi_reduction <add>, %210, %cst_73 [1] : vector<16x32xf32> to vector<16xf32>
    %215 = vector.shape_cast %214 : vector<16xf32> to vector<16x1xf32>
    %cst_74 = arith.constant dense<0.000000e+00> : vector<16xf32>
    %216 = vector.multi_reduction <add>, %213, %cst_74 [1] : vector<16x16xf32> to vector<16xf32>
    %217 = vector.shape_cast %216 : vector<16xf32> to vector<16x1xf32>
    %218 = arith.addf %215, %217 : vector<16x1xf32>
    %219 = vector.extract_strided_slice %195 {offsets = [0, 0], sizes = [32, 32], strides = [1, 1]} : vector<32x128xf32> to vector<32x32xf32>
    %cst_75 = arith.constant dense<0.000000e+00> : vector<16x32xf32>
    %220 = tpu.matmul %210, %219, %cst_75 {dimension_numbers = #tpu.dot_dimension_numbers<[1], [0], [0], [1], [0, 0, 1, 1], [], []>} : vector<16x32xf32>, vector<32x32xf32>, vector<16x32xf32> -> vector<16x32xf32>
    %221 = vector.extract_strided_slice %196 {offsets = [0, 0], sizes = [16, 32], strides = [1, 1]} : vector<16x128xf32> to vector<16x32xf32>
    %cst_76 = arith.constant dense<0.000000e+00> : vector<16x32xf32>
    %222 = tpu.matmul %213, %221, %cst_76 {dimension_numbers = #tpu.dot_dimension_numbers<[1], [0], [0], [1], [0, 0, 1, 1], [], []>} : vector<16x16xf32>, vector<16x32xf32>, vector<16x32xf32> -> vector<16x32xf32>
    %223 = arith.addf %220, %222 : vector<16x32xf32>
    %224 = tpu.reciprocal %218 {approx = true} : vector<16x1xf32> -> vector<16x1xf32>
    %225 = vector.broadcast %224 : vector<16x1xf32> to vector<16x32xf32>
    %226 = arith.mulf %223, %225 : vector<16x32xf32>
    %227 = vector.extract_strided_slice %192 {offsets = [0, 32], sizes = [16, 32], strides = [1, 1]} : vector<16x128xf32> to vector<16x32xf32>
    %228 = vector.extract_strided_slice %193 {offsets = [0, 32], sizes = [32, 32], strides = [1, 1]} : vector<32x128xf32> to vector<32x32xf32>
    %cst_77 = arith.constant dense<0.000000e+00> : vector<16x32xf32>
    %229 = tpu.matmul %227, %228, %cst_77 {dimension_numbers = #tpu.dot_dimension_numbers<[1], [1], [0], [0], [0, 0, 1, 0], [], []>} : vector<16x32xf32>, vector<32x32xf32>, vector<16x32xf32> -> vector<16x32xf32>
    %230 = vector.extract_strided_slice %192 {offsets = [0, 32], sizes = [16, 32], strides = [1, 1]} : vector<16x128xf32> to vector<16x32xf32>
    %231 = vector.extract_strided_slice %194 {offsets = [0, 32], sizes = [16, 32], strides = [1, 1]} : vector<16x128xf32> to vector<16x32xf32>
    %cst_78 = arith.constant dense<0.000000e+00> : vector<16x16xf32>
    %232 = tpu.matmul %230, %231, %cst_78 {dimension_numbers = #tpu.dot_dimension_numbers<[1], [1], [0], [0], [0, 0, 1, 0], [], []>} : vector<16x32xf32>, vector<16x32xf32>, vector<16x16xf32> -> vector<16x16xf32>
    %cst_79 = arith.constant dense<0xFF800000> : vector<16xf32>
    %233 = vector.multi_reduction <maximumf>, %229, %cst_79 [1] : vector<16x32xf32> to vector<16xf32>
    %234 = vector.shape_cast %233 : vector<16xf32> to vector<16x1xf32>
    %cst_80 = arith.constant dense<0xFF800000> : vector<16xf32>
    %235 = vector.multi_reduction <maximumf>, %232, %cst_80 [1] : vector<16x16xf32> to vector<16xf32>
    %236 = vector.shape_cast %235 : vector<16xf32> to vector<16x1xf32>
    %237 = arith.maximumf %234, %236 : vector<16x1xf32>
    %238 = vector.broadcast %237 : vector<16x1xf32> to vector<16x32xf32>
    %239 = arith.subf %229, %238 : vector<16x32xf32>
    %240 = math.exp %239 : vector<16x32xf32>
    %241 = vector.broadcast %237 : vector<16x1xf32> to vector<16x16xf32>
    %242 = arith.subf %232, %241 : vector<16x16xf32>
    %243 = math.exp %242 : vector<16x16xf32>
    %cst_81 = arith.constant dense<0.000000e+00> : vector<16xf32>
    %244 = vector.multi_reduction <add>, %240, %cst_81 [1] : vector<16x32xf32> to vector<16xf32>
    %245 = vector.shape_cast %244 : vector<16xf32> to vector<16x1xf32>
    %cst_82 = arith.constant dense<0.000000e+00> : vector<16xf32>
    %246 = vector.multi_reduction <add>, %243, %cst_82 [1] : vector<16x16xf32> to vector<16xf32>
    %247 = vector.shape_cast %246 : vector<16xf32> to vector<16x1xf32>
    %248 = arith.addf %245, %247 : vector<16x1xf32>
    %249 = vector.extract_strided_slice %195 {offsets = [0, 32], sizes = [32, 32], strides = [1, 1]} : vector<32x128xf32> to vector<32x32xf32>
    %cst_83 = arith.constant dense<0.000000e+00> : vector<16x32xf32>
    %250 = tpu.matmul %240, %249, %cst_83 {dimension_numbers = #tpu.dot_dimension_numbers<[1], [0], [0], [1], [0, 0, 1, 1], [], []>} : vector<16x32xf32>, vector<32x32xf32>, vector<16x32xf32> -> vector<16x32xf32>
    %251 = vector.extract_strided_slice %196 {offsets = [0, 32], sizes = [16, 32], strides = [1, 1]} : vector<16x128xf32> to vector<16x32xf32>
    %cst_84 = arith.constant dense<0.000000e+00> : vector<16x32xf32>
    %252 = tpu.matmul %243, %251, %cst_84 {dimension_numbers = #tpu.dot_dimension_numbers<[1], [0], [0], [1], [0, 0, 1, 1], [], []>} : vector<16x16xf32>, vector<16x32xf32>, vector<16x32xf32> -> vector<16x32xf32>
    %253 = arith.addf %250, %252 : vector<16x32xf32>
    %254 = tpu.reciprocal %248 {approx = true} : vector<16x1xf32> -> vector<16x1xf32>
    %255 = vector.broadcast %254 : vector<16x1xf32> to vector<16x32xf32>
    %256 = arith.mulf %253, %255 : vector<16x32xf32>
    %257 = vector.extract_strided_slice %192 {offsets = [0, 64], sizes = [16, 32], strides = [1, 1]} : vector<16x128xf32> to vector<16x32xf32>
    %258 = vector.extract_strided_slice %193 {offsets = [0, 64], sizes = [32, 32], strides = [1, 1]} : vector<32x128xf32> to vector<32x32xf32>
    %cst_85 = arith.constant dense<0.000000e+00> : vector<16x32xf32>
    %259 = tpu.matmul %257, %258, %cst_85 {dimension_numbers = #tpu.dot_dimension_numbers<[1], [1], [0], [0], [0, 0, 1, 0], [], []>} : vector<16x32xf32>, vector<32x32xf32>, vector<16x32xf32> -> vector<16x32xf32>
    %260 = vector.extract_strided_slice %192 {offsets = [0, 64], sizes = [16, 32], strides = [1, 1]} : vector<16x128xf32> to vector<16x32xf32>
    %261 = vector.extract_strided_slice %194 {offsets = [0, 64], sizes = [16, 32], strides = [1, 1]} : vector<16x128xf32> to vector<16x32xf32>
    %cst_86 = arith.constant dense<0.000000e+00> : vector<16x16xf32>
    %262 = tpu.matmul %260, %261, %cst_86 {dimension_numbers = #tpu.dot_dimension_numbers<[1], [1], [0], [0], [0, 0, 1, 0], [], []>} : vector<16x32xf32>, vector<16x32xf32>, vector<16x16xf32> -> vector<16x16xf32>
    %cst_87 = arith.constant dense<0xFF800000> : vector<16xf32>
    %263 = vector.multi_reduction <maximumf>, %259, %cst_87 [1] : vector<16x32xf32> to vector<16xf32>
    %264 = vector.shape_cast %263 : vector<16xf32> to vector<16x1xf32>
    %cst_88 = arith.constant dense<0xFF800000> : vector<16xf32>
    %265 = vector.multi_reduction <maximumf>, %262, %cst_88 [1] : vector<16x16xf32> to vector<16xf32>
    %266 = vector.shape_cast %265 : vector<16xf32> to vector<16x1xf32>
    %267 = arith.maximumf %264, %266 : vector<16x1xf32>
    %268 = vector.broadcast %267 : vector<16x1xf32> to vector<16x32xf32>
    %269 = arith.subf %259, %268 : vector<16x32xf32>
    %270 = math.exp %269 : vector<16x32xf32>
    %271 = vector.broadcast %267 : vector<16x1xf32> to vector<16x16xf32>
    %272 = arith.subf %262, %271 : vector<16x16xf32>
    %273 = math.exp %272 : vector<16x16xf32>
    %cst_89 = arith.constant dense<0.000000e+00> : vector<16xf32>
    %274 = vector.multi_reduction <add>, %270, %cst_89 [1] : vector<16x32xf32> to vector<16xf32>
    %275 = vector.shape_cast %274 : vector<16xf32> to vector<16x1xf32>
    %cst_90 = arith.constant dense<0.000000e+00> : vector<16xf32>
    %276 = vector.multi_reduction <add>, %273, %cst_90 [1] : vector<16x16xf32> to vector<16xf32>
    %277 = vector.shape_cast %276 : vector<16xf32> to vector<16x1xf32>
    %278 = arith.addf %275, %277 : vector<16x1xf32>
    %279 = vector.extract_strided_slice %195 {offsets = [0, 64], sizes = [32, 32], strides = [1, 1]} : vector<32x128xf32> to vector<32x32xf32>
    %cst_91 = arith.constant dense<0.000000e+00> : vector<16x32xf32>
    %280 = tpu.matmul %270, %279, %cst_91 {dimension_numbers = #tpu.dot_dimension_numbers<[1], [0], [0], [1], [0, 0, 1, 1], [], []>} : vector<16x32xf32>, vector<32x32xf32>, vector<16x32xf32> -> vector<16x32xf32>
    %281 = vector.extract_strided_slice %196 {offsets = [0, 64], sizes = [16, 32], strides = [1, 1]} : vector<16x128xf32> to vector<16x32xf32>
    %cst_92 = arith.constant dense<0.000000e+00> : vector<16x32xf32>
    %282 = tpu.matmul %273, %281, %cst_92 {dimension_numbers = #tpu.dot_dimension_numbers<[1], [0], [0], [1], [0, 0, 1, 1], [], []>} : vector<16x16xf32>, vector<16x32xf32>, vector<16x32xf32> -> vector<16x32xf32>
    %283 = arith.addf %280, %282 : vector<16x32xf32>
    %284 = tpu.reciprocal %278 {approx = true} : vector<16x1xf32> -> vector<16x1xf32>
    %285 = vector.broadcast %284 : vector<16x1xf32> to vector<16x32xf32>
    %286 = arith.mulf %283, %285 : vector<16x32xf32>
    %287 = vector.extract_strided_slice %192 {offsets = [0, 96], sizes = [16, 32], strides = [1, 1]} : vector<16x128xf32> to vector<16x32xf32>
    %288 = vector.extract_strided_slice %193 {offsets = [0, 96], sizes = [32, 32], strides = [1, 1]} : vector<32x128xf32> to vector<32x32xf32>
    %cst_93 = arith.constant dense<0.000000e+00> : vector<16x32xf32>
    %289 = tpu.matmul %287, %288, %cst_93 {dimension_numbers = #tpu.dot_dimension_numbers<[1], [1], [0], [0], [0, 0, 1, 0], [], []>} : vector<16x32xf32>, vector<32x32xf32>, vector<16x32xf32> -> vector<16x32xf32>
    %290 = vector.extract_strided_slice %192 {offsets = [0, 96], sizes = [16, 32], strides = [1, 1]} : vector<16x128xf32> to vector<16x32xf32>
    %291 = vector.extract_strided_slice %194 {offsets = [0, 96], sizes = [16, 32], strides = [1, 1]} : vector<16x128xf32> to vector<16x32xf32>
    %cst_94 = arith.constant dense<0.000000e+00> : vector<16x16xf32>
    %292 = tpu.matmul %290, %291, %cst_94 {dimension_numbers = #tpu.dot_dimension_numbers<[1], [1], [0], [0], [0, 0, 1, 0], [], []>} : vector<16x32xf32>, vector<16x32xf32>, vector<16x16xf32> -> vector<16x16xf32>
    %cst_95 = arith.constant dense<0xFF800000> : vector<16xf32>
    %293 = vector.multi_reduction <maximumf>, %289, %cst_95 [1] : vector<16x32xf32> to vector<16xf32>
    %294 = vector.shape_cast %293 : vector<16xf32> to vector<16x1xf32>
    %cst_96 = arith.constant dense<0xFF800000> : vector<16xf32>
    %295 = vector.multi_reduction <maximumf>, %292, %cst_96 [1] : vector<16x16xf32> to vector<16xf32>
    %296 = vector.shape_cast %295 : vector<16xf32> to vector<16x1xf32>
    %297 = arith.maximumf %294, %296 : vector<16x1xf32>
    %298 = vector.broadcast %297 : vector<16x1xf32> to vector<16x32xf32>
    %299 = arith.subf %289, %298 : vector<16x32xf32>
    %300 = math.exp %299 : vector<16x32xf32>
    %301 = vector.broadcast %297 : vector<16x1xf32> to vector<16x16xf32>
    %302 = arith.subf %292, %301 : vector<16x16xf32>
    %303 = math.exp %302 : vector<16x16xf32>
    %cst_97 = arith.constant dense<0.000000e+00> : vector<16xf32>
    %304 = vector.multi_reduction <add>, %300, %cst_97 [1] : vector<16x32xf32> to vector<16xf32>
    %305 = vector.shape_cast %304 : vector<16xf32> to vector<16x1xf32>
    %cst_98 = arith.constant dense<0.000000e+00> : vector<16xf32>
    %306 = vector.multi_reduction <add>, %303, %cst_98 [1] : vector<16x16xf32> to vector<16xf32>
    %307 = vector.shape_cast %306 : vector<16xf32> to vector<16x1xf32>
    %308 = arith.addf %305, %307 : vector<16x1xf32>
    %309 = vector.extract_strided_slice %195 {offsets = [0, 96], sizes = [32, 32], strides = [1, 1]} : vector<32x128xf32> to vector<32x32xf32>
    %cst_99 = arith.constant dense<0.000000e+00> : vector<16x32xf32>
    %310 = tpu.matmul %300, %309, %cst_99 {dimension_numbers = #tpu.dot_dimension_numbers<[1], [0], [0], [1], [0, 0, 1, 1], [], []>} : vector<16x32xf32>, vector<32x32xf32>, vector<16x32xf32> -> vector<16x32xf32>
    %311 = vector.extract_strided_slice %196 {offsets = [0, 96], sizes = [16, 32], strides = [1, 1]} : vector<16x128xf32> to vector<16x32xf32>
    %cst_100 = arith.constant dense<0.000000e+00> : vector<16x32xf32>
    %312 = tpu.matmul %303, %311, %cst_100 {dimension_numbers = #tpu.dot_dimension_numbers<[1], [0], [0], [1], [0, 0, 1, 1], [], []>} : vector<16x16xf32>, vector<16x32xf32>, vector<16x32xf32> -> vector<16x32xf32>
    %313 = arith.addf %310, %312 : vector<16x32xf32>
    %314 = tpu.reciprocal %308 {approx = true} : vector<16x1xf32> -> vector<16x1xf32>
    %315 = vector.broadcast %314 : vector<16x1xf32> to vector<16x32xf32>
    %316 = arith.mulf %313, %315 : vector<16x32xf32>
    %317 = tpu.concatenate %226, %256, %286, %316 in 1 : vector<16x32xf32>, vector<16x32xf32>, vector<16x32xf32>, vector<16x32xf32> -> vector<16x128xf32>
    %318 = tpu.concatenate %191, %317 in 0 : vector<16x128xf32>, vector<16x128xf32> -> vector<32x128xf32>
    %c0_101 = arith.constant 0 : index
    %c0_102 = arith.constant 0 : index
    %319 = vector.load %arg23[%c0_101, %c0_102] : memref<32x128xf32, #tpu.memory_space<vmem>>, vector<32x128xf32>
    %c0_103 = arith.constant 0 : index
    %c0_104 = arith.constant 0 : index
    %c0_105 = arith.constant 0 : index
    %320 = vector.load %arg12[%c0_103, %c0_104, %c0_105] : memref<1x128x128xf32, #tpu.memory_space<vmem>>, vector<1x128x128xf32>
    %321 = vector.shape_cast %320 : vector<1x128x128xf32> to vector<128x128xf32>
    %cst_106 = arith.constant dense<0.000000e+00> : vector<32x128xf32>
    %322 = tpu.matmul %318, %321, %cst_106 {dimension_numbers = #tpu.dot_dimension_numbers<[1], [0], [0], [1], [0, 0, 1, 1], [], []>} : vector<32x128xf32>, vector<128x128xf32>, vector<32x128xf32> -> vector<32x128xf32>
    %323 = arith.addf %319, %322 : vector<32x128xf32>
    %c0_107 = arith.constant 0 : index
    %c0_108 = arith.constant 0 : index
    %c0_109 = arith.constant 0 : index
    %324 = vector.load %arg13[%c0_107, %c0_108, %c0_109] : memref<1x1x128xf32, #tpu.memory_space<vmem>>, vector<1x1x128xf32>
    %325 = vector.shape_cast %324 : vector<1x1x128xf32> to vector<1x128xf32>
    %c0_110 = arith.constant 0 : index
    %c0_111 = arith.constant 0 : index
    %c0_112 = arith.constant 0 : index
    %326 = vector.load %arg14[%c0_110, %c0_111, %c0_112] : memref<1x1x128xf32, #tpu.memory_space<vmem>>, vector<1x1x128xf32>
    %327 = vector.shape_cast %326 : vector<1x1x128xf32> to vector<1x128xf32>
    %cst_113 = arith.constant dense<0.000000e+00> : vector<32xf32>
    %328 = vector.multi_reduction <add>, %323, %cst_113 [1] : vector<32x128xf32> to vector<32xf32>
    %329 = vector.shape_cast %328 : vector<32xf32> to vector<32x1xf32>
    %cst_114 = arith.constant 1.280000e+02 : f32
    %330 = vector.broadcast %cst_114 : f32 to vector<32x1xf32>
    %331 = arith.divf %329, %330 : vector<32x1xf32>
    %332 = vector.broadcast %331 : vector<32x1xf32> to vector<32x128xf32>
    %333 = arith.subf %323, %332 : vector<32x128xf32>
    %334 = arith.mulf %333, %333 : vector<32x128xf32>
    %cst_115 = arith.constant dense<0.000000e+00> : vector<32xf32>
    %335 = vector.multi_reduction <add>, %334, %cst_115 [1] : vector<32x128xf32> to vector<32xf32>
    %336 = vector.shape_cast %335 : vector<32xf32> to vector<32x1xf32>
    %cst_116 = arith.constant 1.280000e+02 : f32
    %337 = vector.broadcast %cst_116 : f32 to vector<32x1xf32>
    %338 = arith.divf %336, %337 : vector<32x1xf32>
    %cst_117 = arith.constant 9.99999974E-6 : f32
    %339 = vector.broadcast %cst_117 : f32 to vector<32x1xf32>
    %340 = arith.addf %338, %339 : vector<32x1xf32>
    %341 = math.rsqrt %340 : vector<32x1xf32>
    %342 = vector.broadcast %341 : vector<32x1xf32> to vector<32x128xf32>
    %343 = arith.mulf %333, %342 : vector<32x128xf32>
    %344 = vector.broadcast %325 : vector<1x128xf32> to vector<32x128xf32>
    %345 = arith.mulf %343, %344 : vector<32x128xf32>
    %346 = vector.broadcast %327 : vector<1x128xf32> to vector<32x128xf32>
    %347 = arith.addf %345, %346 : vector<32x128xf32>
    %c0_118 = arith.constant 0 : index
    %c0_119 = arith.constant 0 : index
    %c0_120 = arith.constant 0 : index
    %348 = vector.load %arg15[%c0_118, %c0_119, %c0_120] : memref<1x128x512xf32, #tpu.memory_space<vmem>>, vector<1x128x512xf32>
    %349 = vector.shape_cast %348 : vector<1x128x512xf32> to vector<128x512xf32>
    %cst_121 = arith.constant dense<0.000000e+00> : vector<32x512xf32>
    %350 = tpu.matmul %347, %349, %cst_121 {dimension_numbers = #tpu.dot_dimension_numbers<[1], [0], [0], [1], [0, 0, 1, 1], [], []>} : vector<32x128xf32>, vector<128x512xf32>, vector<32x512xf32> -> vector<32x512xf32>
    %cst_122 = arith.constant 5.000000e-01 : f32
    %351 = vector.broadcast %cst_122 : f32 to vector<32x512xf32>
    %352 = arith.mulf %351, %350 : vector<32x512xf32>
    %cst_123 = arith.constant 0.707106769 : f32
    %353 = vector.broadcast %cst_123 : f32 to vector<32x512xf32>
    %354 = arith.mulf %350, %353 : vector<32x512xf32>
    %355 = math.absf %354 : vector<32x512xf32>
    %cst_124 = arith.constant 0.327591091 : f32
    %356 = vector.broadcast %cst_124 : f32 to vector<32x512xf32>
    %357 = arith.mulf %356, %355 : vector<32x512xf32>
    %cst_125 = arith.constant 1.000000e+00 : f32
    %358 = vector.broadcast %cst_125 : f32 to vector<32x512xf32>
    %359 = arith.addf %358, %357 : vector<32x512xf32>
    %cst_126 = arith.constant 1.000000e+00 : f32
    %360 = vector.broadcast %cst_126 : f32 to vector<32x512xf32>
    %361 = arith.divf %360, %359 : vector<32x512xf32>
    %cst_127 = arith.constant 1.06140542 : f32
    %362 = vector.broadcast %cst_127 : f32 to vector<32x512xf32>
    %363 = arith.mulf %362, %361 : vector<32x512xf32>
    %cst_128 = arith.constant -1.45315206 : f32
    %364 = vector.broadcast %cst_128 : f32 to vector<32x512xf32>
    %365 = arith.addf %363, %364 : vector<32x512xf32>
    %366 = arith.mulf %365, %361 : vector<32x512xf32>
    %cst_129 = arith.constant 1.42141378 : f32
    %367 = vector.broadcast %cst_129 : f32 to vector<32x512xf32>
    %368 = arith.addf %366, %367 : vector<32x512xf32>
    %369 = arith.mulf %368, %361 : vector<32x512xf32>
    %cst_130 = arith.constant -0.284496725 : f32
    %370 = vector.broadcast %cst_130 : f32 to vector<32x512xf32>
    %371 = arith.addf %369, %370 : vector<32x512xf32>
    %372 = arith.mulf %371, %361 : vector<32x512xf32>
    %cst_131 = arith.constant 0.254829586 : f32
    %373 = vector.broadcast %cst_131 : f32 to vector<32x512xf32>
    %374 = arith.addf %372, %373 : vector<32x512xf32>
    %375 = arith.mulf %374, %361 : vector<32x512xf32>
    %cst_132 = arith.constant 0.000000e+00 : f32
    %376 = vector.broadcast %cst_132 : f32 to vector<32x512xf32>
    %377 = arith.subf %376, %355 : vector<32x512xf32>
    %378 = arith.mulf %377, %355 : vector<32x512xf32>
    %379 = math.exp %378 : vector<32x512xf32>
    %380 = arith.mulf %375, %379 : vector<32x512xf32>
    %cst_133 = arith.constant 1.000000e+00 : f32
    %381 = vector.broadcast %cst_133 : f32 to vector<32x512xf32>
    %382 = arith.subf %381, %380 : vector<32x512xf32>
    %cst_134 = arith.constant 0.000000e+00 : f32
    %383 = vector.broadcast %cst_134 : f32 to vector<32x512xf32>
    %384 = arith.cmpf oge, %354, %383 : vector<32x512xf32>
    %cst_135 = arith.constant 0.000000e+00 : f32
    %385 = vector.broadcast %cst_135 : f32 to vector<32x512xf32>
    %386 = arith.subf %385, %382 : vector<32x512xf32>
    %387 = arith.select %384, %382, %386 : vector<32x512xi1>, vector<32x512xf32>
    %cst_136 = arith.constant 1.000000e+00 : f32
    %388 = vector.broadcast %cst_136 : f32 to vector<32x512xf32>
    %389 = arith.addf %388, %387 : vector<32x512xf32>
    %390 = arith.mulf %352, %389 : vector<32x512xf32>
    %c0_137 = arith.constant 0 : index
    %c0_138 = arith.constant 0 : index
    %c0_139 = arith.constant 0 : index
    %391 = vector.load %arg16[%c0_137, %c0_138, %c0_139] : memref<1x512x128xf32, #tpu.memory_space<vmem>>, vector<1x512x128xf32>
    %392 = vector.shape_cast %391 : vector<1x512x128xf32> to vector<512x128xf32>
    %cst_140 = arith.constant dense<0.000000e+00> : vector<32x128xf32>
    %393 = tpu.matmul %390, %392, %cst_140 {dimension_numbers = #tpu.dot_dimension_numbers<[1], [0], [0], [1], [0, 0, 1, 1], [], []>} : vector<32x512xf32>, vector<512x128xf32>, vector<32x128xf32> -> vector<32x128xf32>
    %394 = arith.addf %323, %393 : vector<32x128xf32>
    %c0_141 = arith.constant 0 : index
    %c0_142 = arith.constant 0 : index
    %395 = vector.load %arg23[%c0_141, %c0_142] : memref<32x128xf32, #tpu.memory_space<vmem>>, vector<32x128xf32>
    tpu.vector_store %arg23[%c0_141, %c0_142], %394 {strides = array<i32>} : memref<32x128xf32, #tpu.memory_space<vmem>>, vector<32x128xf32>,
    %c5_i32 = arith.constant 5 : i32
    %396 = arith.cmpi eq, %arg0, %c5_i32 : i32
    %397 = arith.extui %396 : i1 to i32
    %c0_i32_143 = arith.constant 0 : i32
    %398 = arith.cmpi ne, %397, %c0_i32_143 : i32
    scf.if %398 {
      %c0_144 = arith.constant 0 : index
      %c0_145 = arith.constant 0 : index
      %399 = vector.load %arg17[%c0_144, %c0_145] : memref<1x128xf32, #tpu.memory_space<vmem>>, vector<1x128xf32>
      %c0_146 = arith.constant 0 : index
      %c0_147 = arith.constant 0 : index
      %400 = vector.load %arg18[%c0_146, %c0_147] : memref<1x128xf32, #tpu.memory_space<vmem>>, vector<1x128xf32>
      %cst_148 = arith.constant dense<0.000000e+00> : vector<32xf32>
      %401 = vector.multi_reduction <add>, %394, %cst_148 [1] : vector<32x128xf32> to vector<32xf32>
      %402 = vector.shape_cast %401 : vector<32xf32> to vector<32x1xf32>
      %cst_149 = arith.constant 1.280000e+02 : f32
      %403 = vector.broadcast %cst_149 : f32 to vector<32x1xf32>
      %404 = arith.divf %402, %403 : vector<32x1xf32>
      %405 = vector.broadcast %404 : vector<32x1xf32> to vector<32x128xf32>
      %406 = arith.subf %394, %405 : vector<32x128xf32>
      %407 = arith.mulf %406, %406 : vector<32x128xf32>
      %cst_150 = arith.constant dense<0.000000e+00> : vector<32xf32>
      %408 = vector.multi_reduction <add>, %407, %cst_150 [1] : vector<32x128xf32> to vector<32xf32>
      %409 = vector.shape_cast %408 : vector<32xf32> to vector<32x1xf32>
      %cst_151 = arith.constant 1.280000e+02 : f32
      %410 = vector.broadcast %cst_151 : f32 to vector<32x1xf32>
      %411 = arith.divf %409, %410 : vector<32x1xf32>
      %cst_152 = arith.constant 9.99999974E-6 : f32
      %412 = vector.broadcast %cst_152 : f32 to vector<32x1xf32>
      %413 = arith.addf %411, %412 : vector<32x1xf32>
      %414 = math.rsqrt %413 : vector<32x1xf32>
      %415 = vector.broadcast %414 : vector<32x1xf32> to vector<32x128xf32>
      %416 = arith.mulf %406, %415 : vector<32x128xf32>
      %417 = vector.broadcast %399 : vector<1x128xf32> to vector<32x128xf32>
      %418 = arith.mulf %416, %417 : vector<32x128xf32>
      %419 = vector.broadcast %400 : vector<1x128xf32> to vector<32x128xf32>
      %420 = arith.addf %418, %419 : vector<32x128xf32>
      %c0_153 = arith.constant 0 : index
      %c0_154 = arith.constant 0 : index
      %421 = vector.load %arg19[%c0_153, %c0_154] : memref<128x256xf32, #tpu.memory_space<vmem>>, vector<128x256xf32>
      %cst_155 = arith.constant dense<0.000000e+00> : vector<32x256xf32>
      %422 = tpu.matmul %420, %421, %cst_155 {dimension_numbers = #tpu.dot_dimension_numbers<[1], [0], [0], [1], [0, 0, 1, 1], [], []>} : vector<32x128xf32>, vector<128x256xf32>, vector<32x256xf32> -> vector<32x256xf32>
      %c0_156 = arith.constant 0 : index
      %c0_157 = arith.constant 0 : index
      %423 = vector.load %arg20[%c0_156, %c0_157] : memref<1x256xf32, #tpu.memory_space<vmem>>, vector<1x256xf32>
      %424 = vector.broadcast %423 : vector<1x256xf32> to vector<32x256xf32>
      %425 = arith.addf %422, %424 : vector<32x256xf32>
      %c0_158 = arith.constant 0 : index
      %c0_159 = arith.constant 0 : index
      %426 = vector.load %arg21[%c0_158, %c0_159] : memref<32x256xf32, #tpu.memory_space<vmem>>, vector<32x256xf32>
      tpu.vector_store %arg21[%c0_158, %c0_159], %425 {strides = array<i32>} : memref<32x256xf32, #tpu.memory_space<vmem>>, vector<32x256xf32>,
    } else {
    }
    return
  }
  func.func @transform_0(%arg0: i32) -> (i32, i32) {
    %c0_i32 = arith.constant 0 : i32
    %c0_i32_0 = arith.constant 0 : i32
    %c0_i32_1 = arith.constant 0 : i32
    return %c0_i32, %c0_i32_0 : i32, i32
  }
  func.func @transform_1(%arg0: i32) -> (i32, i32) {
    %c0_i32 = arith.constant 0 : i32
    %c0_i32_0 = arith.constant 0 : i32
    %c0_i32_1 = arith.constant 0 : i32
    return %c0_i32, %c0_i32_0 : i32, i32
  }
  func.func @transform_2(%arg0: i32) -> (i32, i32) {
    %c0_i32 = arith.constant 0 : i32
    %c0_i32_0 = arith.constant 0 : i32
    %c0_i32_1 = arith.constant 0 : i32
    return %c0_i32, %c0_i32_0 : i32, i32
  }
  func.func @transform_3(%arg0: i32) -> (i32, i32) {
    %c0_i32 = arith.constant 0 : i32
    %c0_i32_0 = arith.constant 0 : i32
    %c0_i32_1 = arith.constant 0 : i32
    return %c0_i32, %c0_i32_0 : i32, i32
  }
  func.func @transform_4(%arg0: i32) -> (i32, i32) {
    %c0_i32 = arith.constant 0 : i32
    %c0_i32_0 = arith.constant 0 : i32
    %c0_i32_1 = arith.constant 0 : i32
    return %c0_i32, %c0_i32_0 : i32, i32
  }
  func.func @transform_5(%arg0: i32) -> (i32, i32, i32) {
    %c0_i32 = arith.constant 0 : i32
    %c0_i32_0 = arith.constant 0 : i32
    %c0_i32_1 = arith.constant 0 : i32
    return %arg0, %c0_i32, %c0_i32_0 : i32, i32, i32
  }
  func.func @transform_6(%arg0: i32) -> (i32, i32, i32) {
    %c0_i32 = arith.constant 0 : i32
    %c0_i32_0 = arith.constant 0 : i32
    %c0_i32_1 = arith.constant 0 : i32
    return %arg0, %c0_i32, %c0_i32_0 : i32, i32, i32
  }
  func.func @transform_7(%arg0: i32) -> (i32, i32, i32) {
    %c0_i32 = arith.constant 0 : i32
    %c0_i32_0 = arith.constant 0 : i32
    %c0_i32_1 = arith.constant 0 : i32
    return %arg0, %c0_i32, %c0_i32_0 : i32, i32, i32
  }
  func.func @transform_8(%arg0: i32) -> (i32, i32, i32) {
    %c0_i32 = arith.constant 0 : i32
    %c0_i32_0 = arith.constant 0 : i32
    %c0_i32_1 = arith.constant 0 : i32
    return %arg0, %c0_i32, %c0_i32_0 : i32, i32, i32
  }
  func.func @transform_9(%arg0: i32) -> (i32, i32, i32) {
    %c0_i32 = arith.constant 0 : i32
    %c0_i32_0 = arith.constant 0 : i32
    %c0_i32_1 = arith.constant 0 : i32
    return %arg0, %c0_i32, %c0_i32_0 : i32, i32, i32
  }
  func.func @transform_10(%arg0: i32) -> (i32, i32, i32) {
    %c0_i32 = arith.constant 0 : i32
    %c0_i32_0 = arith.constant 0 : i32
    %c0_i32_1 = arith.constant 0 : i32
    return %arg0, %c0_i32, %c0_i32_0 : i32, i32, i32
  }
  func.func @transform_11(%arg0: i32) -> (i32, i32, i32) {
    %c0_i32 = arith.constant 0 : i32
    %c0_i32_0 = arith.constant 0 : i32
    %c0_i32_1 = arith.constant 0 : i32
    return %arg0, %c0_i32, %c0_i32_0 : i32, i32, i32
  }
  func.func @transform_12(%arg0: i32) -> (i32, i32, i32) {
    %c0_i32 = arith.constant 0 : i32
    %c0_i32_0 = arith.constant 0 : i32
    %c0_i32_1 = arith.constant 0 : i32
    return %arg0, %c0_i32, %c0_i32_0 : i32, i32, i32
  }
  func.func @transform_13(%arg0: i32) -> (i32, i32, i32) {
    %c0_i32 = arith.constant 0 : i32
    %c0_i32_0 = arith.constant 0 : i32
    %c0_i32_1 = arith.constant 0 : i32
    return %arg0, %c0_i32, %c0_i32_0 : i32, i32, i32
  }
  func.func @transform_14(%arg0: i32) -> (i32, i32, i32) {
    %c0_i32 = arith.constant 0 : i32
    %c0_i32_0 = arith.constant 0 : i32
    %c0_i32_1 = arith.constant 0 : i32
    return %arg0, %c0_i32, %c0_i32_0 : i32, i32, i32
  }
  func.func @transform_15(%arg0: i32) -> (i32, i32, i32) {
    %c0_i32 = arith.constant 0 : i32
    %c0_i32_0 = arith.constant 0 : i32
    %c0_i32_1 = arith.constant 0 : i32
    return %arg0, %c0_i32, %c0_i32_0 : i32, i32, i32
  }
  func.func @transform_16(%arg0: i32) -> (i32, i32) {
    %c0_i32 = arith.constant 0 : i32
    %c0_i32_0 = arith.constant 0 : i32
    %c0_i32_1 = arith.constant 0 : i32
    return %c0_i32, %c0_i32_0 : i32, i32
  }
  func.func @transform_17(%arg0: i32) -> (i32, i32) {
    %c0_i32 = arith.constant 0 : i32
    %c0_i32_0 = arith.constant 0 : i32
    %c0_i32_1 = arith.constant 0 : i32
    return %c0_i32, %c0_i32_0 : i32, i32
  }
  func.func @transform_18(%arg0: i32) -> (i32, i32) {
    %c0_i32 = arith.constant 0 : i32
    %c0_i32_0 = arith.constant 0 : i32
    %c0_i32_1 = arith.constant 0 : i32
    return %c0_i32, %c0_i32_0 : i32, i32
  }
  func.func @transform_19(%arg0: i32) -> (i32, i32) {
    %c0_i32 = arith.constant 0 : i32
    %c0_i32_0 = arith.constant 0 : i32
    %c0_i32_1 = arith.constant 0 : i32
    return %c0_i32, %c0_i32_0 : i32, i32
  }
  func.func @transform_20(%arg0: i32) -> (i32, i32) {
    %c0_i32 = arith.constant 0 : i32
    %c0_i32_0 = arith.constant 0 : i32
    %c0_i32_1 = arith.constant 0 : i32
    return %c0_i32, %c0_i32_0 : i32, i32
  }
}

</mosaic_0001>

<llo_original>
// kernel: perceiver_forward.1
$region0: #{perceiver_forward.1}
  #allocation0 [shape = 'u32[]', space=smem, size = 0x4, offset = 0x4, fixed_abs, tag = 'smem constant byte address 0x4 - core index']
  #allocation1 [shape = 'u32[144,128]{1,0:T(1,128)}', space=vmem, size = 0x12000, scoped, tag = 'internal scratch']
  #allocation2 [shape = 'f32[64,128]{1,0:T(8,128)}', space=vmem, size = 0x8000, scoped, tag = 'scratch operand']
  #allocation3 [shape = 'f32[32,128]{1,0:T(8,128)}', space=vmem, size = 0x4000, scoped, tag = 'scratch operand']
  %s0 = inlined_call_operand.vmem [shape: f32[64,128], index: 0, kind: input, shape index: {}]
  %s1 = inlined_call_operand.vmem [shape: f32[1,128], index: 1, kind: input, shape index: {}]
  %s2 = inlined_call_operand.vmem [shape: f32[1,128], index: 2, kind: input, shape index: {}]
  %s3 = inlined_call_operand.vmem [shape: f32[1,128], index: 3, kind: input, shape index: {}]
  %s4 = inlined_call_operand.vmem [shape: f32[32,128], index: 4, kind: input, shape index: {}]
  %s5 = inlined_call_operand.vmem [shape: f32[6,1,128], index: 5, kind: input, shape index: {}]
  %s6 = inlined_call_operand.vmem [shape: f32[6,1,128], index: 6, kind: input, shape index: {}]
  %s7 = inlined_call_operand.vmem [shape: f32[6,1,128], index: 7, kind: input, shape index: {}]
  %s8 = inlined_call_operand.vmem [shape: f32[6,1,128], index: 8, kind: input, shape index: {}]
  %s9 = inlined_call_operand.vmem [shape: f32[6,128,128], index: 9, kind: input, shape index: {}]
  %s10 = inlined_call_operand.vmem [shape: f32[6,128,256], index: 10, kind: input, shape index: {}]
  %s11 = inlined_call_operand.vmem [shape: f32[6,128,128], index: 11, kind: input, shape index: {}]
  %s12 = inlined_call_operand.vmem [shape: f32[6,1,128], index: 12, kind: input, shape index: {}]
  %s13 = inlined_call_operand.vmem [shape: f32[6,1,128], index: 13, kind: input, shape index: {}]
  %s14 = inlined_call_operand.vmem [shape: f32[6,128,512], index: 14, kind: input, shape index: {}]
  %s15 = inlined_call_operand.vmem [shape: f32[6,512,128], index: 15, kind: input, shape index: {}]
  %s16 = inlined_call_operand.vmem [shape: f32[1,128], index: 16, kind: input, shape index: {}]
  %s17 = inlined_call_operand.vmem [shape: f32[1,128], index: 17, kind: input, shape index: {}]
  %s18 = inlined_call_operand.vmem [shape: f32[128,256], index: 18, kind: input, shape index: {}]
  %s19 = inlined_call_operand.vmem [shape: f32[1,256], index: 19, kind: input, shape index: {}]
  %s20 = inlined_call_operand.hbm [shape: f32[32,256], index: 20, kind: output, shape index: {}]
  %s21 = sld [smem:[#allocation0]]
  $region121: #{perceiver_forward.1} parent=0
    _
  %s23 = ssub.s32 1, %s21
  %s24 = scalar_select 0, %s23, %s21
  $region1: #{perceiver_forward.1} parent=0
    #allocation4 [shape = 'u8[32768]{0}', space=vmem, size = 0x8000, scoped, tag = 'output window, operand 0, single buffered']
    #allocation5 [shape = 's32[2]{0}', space=sflag, size = 0x8, scoped, tag = 'scoped memory for perceiver_forward.1']
    %25 = vsyncpa [#allocation5], 0
    loop: start=0, step=1, limit=8
    $region2: #{perceiver_forward.1} parent=1 // loop_pre_header
      _
    $region3: #{perceiver_forward.1} parent=1 // loop_header
      %s27 = sphi 0, %s31
      %p28 = scmp.ge.s32.totalorder %s27, 8
      %s35 = sphi 0, %s35
      %s37 = sphi 0, %s35
      %s38 = sphi 0, %s37
      %s52 = sphi 0, %s38
      %s56 = sphi 0, %s56
      %s58 = sphi 0, %s56
      %s59 = sphi 0, %s58
      %s73 = sphi 0, %s59
      %s77 = sphi 0, %s77
      %s79 = sphi 0, %s77
      %s80 = sphi 0, %s79
      %s94 = sphi 0, %s80
      %s98 = sphi 0, %s98
      %s100 = sphi 0, %s98
      %s101 = sphi 0, %s100
      %s115 = sphi 0, %s101
      %s119 = sphi 0, %s119
      %s121 = sphi 0, %s119
      %s122 = sphi 0, %s121
      %s136 = sphi 0, %s122
      %s142 = sphi 0, %s144
      %s145 = sphi 0, %s142
      %s146 = sphi 0, %s145
      %s162 = sphi 0, %s146
      %s168 = sphi 0, %s170
      %s171 = sphi 0, %s168
      %s172 = sphi 0, %s171
      %s188 = sphi 0, %s172
      %s194 = sphi 0, %s196
      %s197 = sphi 0, %s194
      %s198 = sphi 0, %s197
      %s214 = sphi 0, %s198
      %s220 = sphi 0, %s222
      %s223 = sphi 0, %s220
      %s224 = sphi 0, %s223
      %s240 = sphi 0, %s224
      %s246 = sphi 0, %s248
      %s249 = sphi 0, %s246
      %s250 = sphi 0, %s249
      %s266 = sphi 0, %s250
      %s272 = sphi 0, %s274
      %s275 = sphi 0, %s272
      %s276 = sphi 0, %s275
      %s292 = sphi 0, %s276
      %s298 = sphi 0, %s300
      %s301 = sphi 0, %s298
      %s302 = sphi 0, %s301
      %s318 = sphi 0, %s302
      %s324 = sphi 0, %s326
      %s327 = sphi 0, %s324
      %s328 = sphi 0, %s327
      %s344 = sphi 0, %s328
      %s350 = sphi 0, %s352
      %s353 = sphi 0, %s350
      %s354 = sphi 0, %s353
      %s370 = sphi 0, %s354
      %s376 = sphi 0, %s378
      %s379 = sphi 0, %s376
      %s380 = sphi 0, %s379
      %s396 = sphi 0, %s380
      %s402 = sphi 0, %s404
      %s405 = sphi 0, %s402
      %s406 = sphi 0, %s405
      %s422 = sphi 0, %s406
      %s426 = sphi 0, %s426
      %s428 = sphi 0, %s426
      %s429 = sphi 0, %s428
      %s443 = sphi 0, %s429
      %s447 = sphi 0, %s447
      %s449 = sphi 0, %s447
      %s450 = sphi 0, %s449
      %s464 = sphi 0, %s450
      %s468 = sphi 0, %s468
      %s470 = sphi 0, %s468
      %s471 = sphi 0, %s470
      %s485 = sphi 0, %s471
      %s489 = sphi 0, %s489
      %s491 = sphi 0, %s489
      %s492 = sphi 0, %s491
      %s506 = sphi 0, %s492
      %s510 = sphi 0, %s510
      %s512 = sphi 0, %s510
      %s513 = sphi 0, %s512
      %s527 = sphi 0, %s513
    $region4: #{perceiver_forward.1} parent=1 // loop_header_branch
      %30 = sbr.rel (%p28) target = $region8
    $region5: #{perceiver_forward.1} parent=1 // loop_body
      %s32 = ssub.s32 %s27, 1
      %s33 = ssub.s32 %s27, 2
      %s34 = sadd.s32 %s27, 1
      %s36 = sadd.s32 %s35, 1
      %p39 = scmp.eq.s32.totalorder %s27, 5
      %p40 = scmp.ne.s32.totalorder %s35, %s37
      %p41 = scmp.eq.s32.totalorder %s27, 0
      %p42 = por %p40, %p41
      %p43 = scmp.ne.s32.totalorder %s35, %s37
      %p44 = scmp.eq.s32.totalorder %s32, 5
      %p45 = por %p43, %p44
      %p46 = scmp.ne.s32.totalorder %s37, %s38
      %p47 = scmp.eq.s32.totalorder %s32, 0
      %p48 = por %p46, %p47
      %p49 = scmp.ne.s32.totalorder %s37, %s38
      %p50 = scmp.eq.s32.totalorder %s33, 5
      %p51 = por %p49, %p50
      %p53 = scmp.ne.s32.totalorder %s38, %s52
      %p54 = scmp.eq.s32.totalorder %s33, 0
      %p55 = por %p53, %p54
      %s57 = sadd.s32 %s56, 1
      %p60 = scmp.eq.s32.totalorder %s27, 5
      %p61 = scmp.ne.s32.totalorder %s56, %s58
      %p62 = scmp.eq.s32.totalorder %s27, 0
      %p63 = por %p61, %p62
      %p64 = scmp.ne.s32.totalorder %s56, %s58
      %p65 = scmp.eq.s32.totalorder %s32, 5
      %p66 = por %p64, %p65
      %p67 = scmp.ne.s32.totalorder %s58, %s59
      %p68 = scmp.eq.s32.totalorder %s32, 0
      %p69 = por %p67, %p68
      %p70 = scmp.ne.s32.totalorder %s58, %s59
      %p71 = scmp.eq.s32.totalorder %s33, 5
      %p72 = por %p70, %p71
      %p74 = scmp.ne.s32.totalorder %s59, %s73
      %p75 = scmp.eq.s32.totalorder %s33, 0
      %p76 = por %p74, %p75
      %s78 = sadd.s32 %s77, 1
      %p81 = scmp.eq.s32.totalorder %s27, 5
      %p82 = scmp.ne.s32.totalorder %s77, %s79
      %p83 = scmp.eq.s32.totalorder %s27, 0
      %p84 = por %p82, %p83
      %p85 = scmp.ne.s32.totalorder %s77, %s79
      %p86 = scmp.eq.s32.totalorder %s32, 5
      %p87 = por %p85, %p86
      %p88 = scmp.ne.s32.totalorder %s79, %s80
      %p89 = scmp.eq.s32.totalorder %s32, 0
      %p90 = por %p88, %p89
      %p91 = scmp.ne.s32.totalorder %s79, %s80
      %p92 = scmp.eq.s32.totalorder %s33, 5
      %p93 = por %p91, %p92
      %p95 = scmp.ne.s32.totalorder %s80, %s94
      %p96 = scmp.eq.s32.totalorder %s33, 0
      %p97 = por %p95, %p96
      %s99 = sadd.s32 %s98, 1
      %p102 = scmp.eq.s32.totalorder %s27, 5
      %p103 = scmp.ne.s32.totalorder %s98, %s100
      %p104 = scmp.eq.s32.totalorder %s27, 0
      %p105 = por %p103, %p104
      %p106 = scmp.ne.s32.totalorder %s98, %s100
      %p107 = scmp.eq.s32.totalorder %s32, 5
      %p108 = por %p106, %p107
      %p109 = scmp.ne.s32.totalorder %s100, %s101
      %p110 = scmp.eq.s32.totalorder %s32, 0
      %p111 = por %p109, %p110
      %p112 = scmp.ne.s32.totalorder %s100, %s101
      %p113 = scmp.eq.s32.totalorder %s33, 5
      %p114 = por %p112, %p113
      %p116 = scmp.ne.s32.totalorder %s101, %s115
      %p117 = scmp.eq.s32.totalorder %s33, 0
      %p118 = por %p116, %p117
      %s120 = sadd.s32 %s119, 1
      %p123 = scmp.eq.s32.totalorder %s27, 5
      %p124 = scmp.ne.s32.totalorder %s119, %s121
      %p125 = scmp.eq.s32.totalorder %s27, 0
      %p126 = por %p124, %p125
      %p127 = scmp.ne.s32.totalorder %s119, %s121
      %p128 = scmp.eq.s32.totalorder %s32, 5
      %p129 = por %p127, %p128
      %p130 = scmp.ne.s32.totalorder %s121, %s122
      %p131 = scmp.eq.s32.totalorder %s32, 0
      %p132 = por %p130, %p131
      %p133 = scmp.ne.s32.totalorder %s121, %s122
      %p134 = scmp.eq.s32.totalorder %s33, 5
      %p135 = por %p133, %p134
      %p137 = scmp.ne.s32.totalorder %s122, %s136
      %p138 = scmp.eq.s32.totalorder %s33, 0
      %p139 = por %p137, %p138
      %s140 = ssub.s32 %s27, %s34
      %p141 = scmp.eq.s32.totalorder %s140, 0
      %s143 = sadd.s32 %s142, 1
      %s144 = scalar_select %p141, %s142, %s143
      %p147 = pneg %p141
      %p148 = scmp.eq.s32.totalorder %s27, 5
      %p149 = por %p147, %p148
      %p150 = scmp.ne.s32.totalorder %s142, %s145
      %p151 = scmp.eq.s32.totalorder %s27, 0
      %p152 = por %p150, %p151
      %p153 = scmp.ne.s32.totalorder %s142, %s145
      %p154 = scmp.eq.s32.totalorder %s32, 5
      %p155 = por %p153, %p154
      %p156 = scmp.ne.s32.totalorder %s145, %s146
      %p157 = scmp.eq.s32.totalorder %s32, 0
      %p158 = por %p156, %p157
      %p159 = scmp.ne.s32.totalorder %s145, %s146
      %p160 = scmp.eq.s32.totalorder %s33, 5
      %p161 = por %p159, %p160
      %p163 = scmp.ne.s32.totalorder %s146, %s162
      %p164 = scmp.eq.s32.totalorder %s33, 0
      %p165 = por %p163, %p164
      %s166 = ssub.s32 %s27, %s34
      %p167 = scmp.eq.s32.totalorder %s166, 0
      %s169 = sadd.s32 %s168, 1
      %s170 = scalar_select %p167, %s168, %s169
      %p173 = pneg %p167
      %p174 = scmp.eq.s32.totalorder %s27, 5
      %p175 = por %p173, %p174
      %p176 = scmp.ne.s32.totalorder %s168, %s171
      %p177 = scmp.eq.s32.totalorder %s27, 0
      %p178 = por %p176, %p177
      %p179 = scmp.ne.s32.totalorder %s168, %s171
      %p180 = scmp.eq.s32.totalorder %s32, 5
      %p181 = por %p179, %p180
      %p182 = scmp.ne.s32.totalorder %s171, %s172
      %p183 = scmp.eq.s32.totalorder %s32, 0
      %p184 = por %p182, %p183
      %p185 = scmp.ne.s32.totalorder %s171, %s172
      %p186 = scmp.eq.s32.totalorder %s33, 5
      %p187 = por %p185, %p186
      %p189 = scmp.ne.s32.totalorder %s172, %s188
      %p190 = scmp.eq.s32.totalorder %s33, 0
      %p191 = por %p189, %p190
      %s192 = ssub.s32 %s27, %s34
      %p193 = scmp.eq.s32.totalorder %s192, 0
      %s195 = sadd.s32 %s194, 1
      %s196 = scalar_select %p193, %s194, %s195
      %p199 = pneg %p193
      %p200 = scmp.eq.s32.totalorder %s27, 5
      %p201 = por %p199, %p200
      %p202 = scmp.ne.s32.totalorder %s194, %s197
      %p203 = scmp.eq.s32.totalorder %s27, 0
      %p204 = por %p202, %p203
      %p205 = scmp.ne.s32.totalorder %s194, %s197
      %p206 = scmp.eq.s32.totalorder %s32, 5
      %p207 = por %p205, %p206
      %p208 = scmp.ne.s32.totalorder %s197, %s198
      %p209 = scmp.eq.s32.totalorder %s32, 0
      %p210 = por %p208, %p209
      %p211 = scmp.ne.s32.totalorder %s197, %s198
      %p212 = scmp.eq.s32.totalorder %s33, 5
      %p213 = por %p211, %p212
      %p215 = scmp.ne.s32.totalorder %s198, %s214
      %p216 = scmp.eq.s32.totalorder %s33, 0
      %p217 = por %p215, %p216
      %s218 = ssub.s32 %s27, %s34
      %p219 = scmp.eq.s32.totalorder %s218, 0
      %s221 = sadd.s32 %s220, 1
      %s222 = scalar_select %p219, %s220, %s221
      %p225 = pneg %p219
      %p226 = scmp.eq.s32.totalorder %s27, 5
      %p227 = por %p225, %p226
      %p228 = scmp.ne.s32.totalorder %s220, %s223
      %p229 = scmp.eq.s32.totalorder %s27, 0
      %p230 = por %p228, %p229
      %p231 = scmp.ne.s32.totalorder %s220, %s223
      %p232 = scmp.eq.s32.totalorder %s32, 5
      %p233 = por %p231, %p232
      %p234 = scmp.ne.s32.totalorder %s223, %s224
      %p235 = scmp.eq.s32.totalorder %s32, 0
      %p236 = por %p234, %p235
      %p237 = scmp.ne.s32.totalorder %s223, %s224
      %p238 = scmp.eq.s32.totalorder %s33, 5
      %p239 = por %p237, %p238
      %p241 = scmp.ne.s32.totalorder %s224, %s240
      %p242 = scmp.eq.s32.totalorder %s33, 0
      %p243 = por %p241, %p242
      %s244 = ssub.s32 %s27, %s34
      %p245 = scmp.eq.s32.totalorder %s244, 0
      %s247 = sadd.s32 %s246, 1
      %s248 = scalar_select %p245, %s246, %s247
      %p251 = pneg %p245
      %p252 = scmp.eq.s32.totalorder %s27, 5
      %p253 = por %p251, %p252
      %p254 = scmp.ne.s32.totalorder %s246, %s249
      %p255 = scmp.eq.s32.totalorder %s27, 0
      %p256 = por %p254, %p255
      %p257 = scmp.ne.s32.totalorder %s246, %s249
      %p258 = scmp.eq.s32.totalorder %s32, 5
      %p259 = por %p257, %p258
      %p260 = scmp.ne.s32.totalorder %s249, %s250
      %p261 = scmp.eq.s32.totalorder %s32, 0
      %p262 = por %p260, %p261
      %p263 = scmp.ne.s32.totalorder %s249, %s250
      %p264 = scmp.eq.s32.totalorder %s33, 5
      %p265 = por %p263, %p264
      %p267 = scmp.ne.s32.totalorder %s250, %s266
      %p268 = scmp.eq.s32.totalorder %s33, 0
      %p269 = por %p267, %p268
      %s270 = ssub.s32 %s27, %s34
      %p271 = scmp.eq.s32.totalorder %s270, 0
      %s273 = sadd.s32 %s272, 1
      %s274 = scalar_select %p271, %s272, %s273
      %p277 = pneg %p271
      %p278 = scmp.eq.s32.totalorder %s27, 5
      %p279 = por %p277, %p278
      %p280 = scmp.ne.s32.totalorder %s272, %s275
      %p281 = scmp.eq.s32.totalorder %s27, 0
      %p282 = por %p280, %p281
      %p283 = scmp.ne.s32.totalorder %s272, %s275
      %p284 = scmp.eq.s32.totalorder %s32, 5
      %p285 = por %p283, %p284
      %p286 = scmp.ne.s32.totalorder %s275, %s276
      %p287 = scmp.eq.s32.totalorder %s32, 0
      %p288 = por %p286, %p287
      %p289 = scmp.ne.s32.totalorder %s275, %s276
      %p290 = scmp.eq.s32.totalorder %s33, 5
      %p291 = por %p289, %p290
      %p293 = scmp.ne.s32.totalorder %s276, %s292
      %p294 = scmp.eq.s32.totalorder %s33, 0
      %p295 = por %p293, %p294
      %s296 = ssub.s32 %s27, %s34
      %p297 = scmp.eq.s32.totalorder %s296, 0
      %s299 = sadd.s32 %s298, 1
      %s300 = scalar_select %p297, %s298, %s299
      %p303 = pneg %p297
      %p304 = scmp.eq.s32.totalorder %s27, 5
      %p305 = por %p303, %p304
      %p306 = scmp.ne.s32.totalorder %s298, %s301
      %p307 = scmp.eq.s32.totalorder %s27, 0
      %p308 = por %p306, %p307
      %p309 = scmp.ne.s32.totalorder %s298, %s301
      %p310 = scmp.eq.s32.totalorder %s32, 5
      %p311 = por %p309, %p310
      %p312 = scmp.ne.s32.totalorder %s301, %s302
      %p313 = scmp.eq.s32.totalorder %s32, 0
      %p314 = por %p312, %p313
      %p315 = scmp.ne.s32.totalorder %s301, %s302
      %p316 = scmp.eq.s32.totalorder %s33, 5
      %p317 = por %p315, %p316
      %p319 = scmp.ne.s32.totalorder %s302, %s318
      %p320 = scmp.eq.s32.totalorder %s33, 0
      %p321 = por %p319, %p320
      %s322 = ssub.s32 %s27, %s34
      %p323 = scmp.eq.s32.totalorder %s322, 0
      %s325 = sadd.s32 %s324, 1
      %s326 = scalar_select %p323, %s324, %s325
      %p329 = pneg %p323
      %p330 = scmp.eq.s32.totalorder %s27, 5
      %p331 = por %p329, %p330
      %p332 = scmp.ne.s32.totalorder %s324, %s327
      %p333 = scmp.eq.s32.totalorder %s27, 0
      %p334 = por %p332, %p333
      %p335 = scmp.ne.s32.totalorder %s324, %s327
      %p336 = scmp.eq.s32.totalorder %s32, 5
      %p337 = por %p335, %p336
      %p338 = scmp.ne.s32.totalorder %s327, %s328
      %p339 = scmp.eq.s32.totalorder %s32, 0
      %p340 = por %p338, %p339
      %p341 = scmp.ne.s32.totalorder %s327, %s328
      %p342 = scmp.eq.s32.totalorder %s33, 5
      %p343 = por %p341, %p342
      %p345 = scmp.ne.s32.totalorder %s328, %s344
      %p346 = scmp.eq.s32.totalorder %s33, 0
      %p347 = por %p345, %p346
      %s348 = ssub.s32 %s27, %s34
      %p349 = scmp.eq.s32.totalorder %s348, 0
      %s351 = sadd.s32 %s350, 1
      %s352 = scalar_select %p349, %s350, %s351
      %p355 = pneg %p349
      %p356 = scmp.eq.s32.totalorder %s27, 5
      %p357 = por %p355, %p356
      %p358 = scmp.ne.s32.totalorder %s350, %s353
      %p359 = scmp.eq.s32.totalorder %s27, 0
      %p360 = por %p358, %p359
      %p361 = scmp.ne.s32.totalorder %s350, %s353
      %p362 = scmp.eq.s32.totalorder %s32, 5
      %p363 = por %p361, %p362
      %p364 = scmp.ne.s32.totalorder %s353, %s354
      %p365 = scmp.eq.s32.totalorder %s32, 0
      %p366 = por %p364, %p365
      %p367 = scmp.ne.s32.totalorder %s353, %s354
      %p368 = scmp.eq.s32.totalorder %s33, 5
      %p369 = por %p367, %p368
      %p371 = scmp.ne.s32.totalorder %s354, %s370
      %p372 = scmp.eq.s32.totalorder %s33, 0
      %p373 = por %p371, %p372
      %s374 = ssub.s32 %s27, %s34
      %p375 = scmp.eq.s32.totalorder %s374, 0
      %s377 = sadd.s32 %s376, 1
      %s378 = scalar_select %p375, %s376, %s377
      %p381 = pneg %p375
      %p382 = scmp.eq.s32.totalorder %s27, 5
      %p383 = por %p381, %p382
      %p384 = scmp.ne.s32.totalorder %s376, %s379
      %p385 = scmp.eq.s32.totalorder %s27, 0
      %p386 = por %p384, %p385
      %p387 = scmp.ne.s32.totalorder %s376, %s379
      %p388 = scmp.eq.s32.totalorder %s32, 5
      %p389 = por %p387, %p388
      %p390 = scmp.ne.s32.totalorder %s379, %s380
      %p391 = scmp.eq.s32.totalorder %s32, 0
      %p392 = por %p390, %p391
      %p393 = scmp.ne.s32.totalorder %s379, %s380
      %p394 = scmp.eq.s32.totalorder %s33, 5
      %p395 = por %p393, %p394
      %p397 = scmp.ne.s32.totalorder %s380, %s396
      %p398 = scmp.eq.s32.totalorder %s33, 0
      %p399 = por %p397, %p398
      %s400 = ssub.s32 %s27, %s34
      %p401 = scmp.eq.s32.totalorder %s400, 0
      %s403 = sadd.s32 %s402, 1
      %s404 = scalar_select %p401, %s402, %s403
      %p407 = pneg %p401
      %p408 = scmp.eq.s32.totalorder %s27, 5
      %p409 = por %p407, %p408
      %p410 = scmp.ne.s32.totalorder %s402, %s405
      %p411 = scmp.eq.s32.totalorder %s27, 0
      %p412 = por %p410, %p411
      %p413 = scmp.ne.s32.totalorder %s402, %s405
      %p414 = scmp.eq.s32.totalorder %s32, 5
      %p415 = por %p413, %p414
      %p416 = scmp.ne.s32.totalorder %s405, %s406
      %p417 = scmp.eq.s32.totalorder %s32, 0
      %p418 = por %p416, %p417
      %p419 = scmp.ne.s32.totalorder %s405, %s406
      %p420 = scmp.eq.s32.totalorder %s33, 5
      %p421 = por %p419, %p420
      %p423 = scmp.ne.s32.totalorder %s406, %s422
      %p424 = scmp.eq.s32.totalorder %s33, 0
      %p425 = por %p423, %p424
      %s427 = sadd.s32 %s426, 1
      %p430 = scmp.eq.s32.totalorder %s27, 5
      %p431 = scmp.ne.s32.totalorder %s426, %s428
      %p432 = scmp.eq.s32.totalorder %s27, 0
      %p433 = por %p431, %p432
      %p434 = scmp.ne.s32.totalorder %s426, %s428
      %p435 = scmp.eq.s32.totalorder %s32, 5
      %p436 = por %p434, %p435
      %p437 = scmp.ne.s32.totalorder %s428, %s429
      %p438 = scmp.eq.s32.totalorder %s32, 0
      %p439 = por %p437, %p438
      %p440 = scmp.ne.s32.totalorder %s428, %s429
      %p441 = scmp.eq.s32.totalorder %s33, 5
      %p442 = por %p440, %p441
      %p444 = scmp.ne.s32.totalorder %s429, %s443
      %p445 = scmp.eq.s32.totalorder %s33, 0
      %p446 = por %p444, %p445
      %s448 = sadd.s32 %s447, 1
      %p451 = scmp.eq.s32.totalorder %s27, 5
      %p452 = scmp.ne.s32.totalorder %s447, %s449
      %p453 = scmp.eq.s32.totalorder %s27, 0
      %p454 = por %p452, %p453
      %p455 = scmp.ne.s32.totalorder %s447, %s449
      %p456 = scmp.eq.s32.totalorder %s32, 5
      %p457 = por %p455, %p456
      %p458 = scmp.ne.s32.totalorder %s449, %s450
      %p459 = scmp.eq.s32.totalorder %s32, 0
      %p460 = por %p458, %p459
      %p461 = scmp.ne.s32.totalorder %s449, %s450
      %p462 = scmp.eq.s32.totalorder %s33, 5
      %p463 = por %p461, %p462
      %p465 = scmp.ne.s32.totalorder %s450, %s464
      %p466 = scmp.eq.s32.totalorder %s33, 0
      %p467 = por %p465, %p466
      %s469 = sadd.s32 %s468, 1
      %p472 = scmp.eq.s32.totalorder %s27, 5
      %p473 = scmp.ne.s32.totalorder %s468, %s470
      %p474 = scmp.eq.s32.totalorder %s27, 0
      %p475 = por %p473, %p474
      %p476 = scmp.ne.s32.totalorder %s468, %s470
      %p477 = scmp.eq.s32.totalorder %s32, 5
      %p478 = por %p476, %p477
      %p479 = scmp.ne.s32.totalorder %s470, %s471
      %p480 = scmp.eq.s32.totalorder %s32, 0
      %p481 = por %p479, %p480
      %p482 = scmp.ne.s32.totalorder %s470, %s471
      %p483 = scmp.eq.s32.totalorder %s33, 5
      %p484 = por %p482, %p483
      %p486 = scmp.ne.s32.totalorder %s471, %s485
      %p487 = scmp.eq.s32.totalorder %s33, 0
      %p488 = por %p486, %p487
      %s490 = sadd.s32 %s489, 1
      %p493 = scmp.eq.s32.totalorder %s27, 5
      %p494 = scmp.ne.s32.totalorder %s489, %s491
      %p495 = scmp.eq.s32.totalorder %s27, 0
      %p496 = por %p494, %p495
      %p497 = scmp.ne.s32.totalorder %s489, %s491
      %p498 = scmp.eq.s32.totalorder %s32, 5
      %p499 = por %p497, %p498
      %p500 = scmp.ne.s32.totalorder %s491, %s492
      %p501 = scmp.eq.s32.totalorder %s32, 0
      %p502 = por %p500, %p501
      %p503 = scmp.ne.s32.totalorder %s491, %s492
      %p504 = scmp.eq.s32.totalorder %s33, 5
      %p505 = por %p503, %p504
      %p507 = scmp.ne.s32.totalorder %s492, %s506
      %p508 = scmp.eq.s32.totalorder %s33, 0
      %p509 = por %p507, %p508
      %s511 = sadd.s32 %s510, 1
      %p514 = scmp.eq.s32.totalorder %s27, 5
      %p515 = scmp.ne.s32.totalorder %s510, %s512
      %p516 = scmp.eq.s32.totalorder %s27, 0
      %p517 = por %p515, %p516
      %p518 = scmp.ne.s32.totalorder %s510, %s512
      %p519 = scmp.eq.s32.totalorder %s32, 5
      %p520 = por %p518, %p519
      %p521 = scmp.ne.s32.totalorder %s512, %s513
      %p522 = scmp.eq.s32.totalorder %s32, 0
      %p523 = por %p521, %p522
      %p524 = scmp.ne.s32.totalorder %s512, %s513
      %p525 = scmp.eq.s32.totalorder %s33, 5
      %p526 = por %p524, %p525
      %p528 = scmp.ne.s32.totalorder %s513, %s527
      %p529 = scmp.eq.s32.totalorder %s33, 0
      %p530 = por %p528, %p529
      %p531 = scmp.le.s32.totalorder 1, %s27
      %p532 = scmp.lt.s32.totalorder %s27, 7
      %p533 = pnand %p531, %p532
      %p534 = pneg %p533
      // Predicated region
      $region9: #{perceiver_forward.1} parent=5 // pred_check
        _
      $region10: #{perceiver_forward.1} parent=5 // pred_check_branch
        %536 = sbr.rel (%p533) target = $region12
      $region11: #{perceiver_forward.1} parent=5 // pred_region
        %s537 = ssub.s32 %s27, 1
        // Predicated region
        $region13: #{perceiver_forward.1} parent=11 // pred_check
          %p538 = pneg %p48
        $region14: #{perceiver_forward.1} parent=11 // pred_check_branch
          %540 = sbr.rel (%p538) target = $region16
        $region15: #{perceiver_forward.1} parent=11 // pred_region
          _
        $region16: #{perceiver_forward.1} parent=11 // pred_fallthru
          _
        // Predicated region
        $region17: #{perceiver_forward.1} parent=11 // pred_check
          %p541 = pneg %p69
        $region18: #{perceiver_forward.1} parent=11 // pred_check_branch
          %543 = sbr.rel (%p541) target = $region20
        $region19: #{perceiver_forward.1} parent=11 // pred_region
          _
        $region20: #{perceiver_forward.1} parent=11 // pred_fallthru
          _
        // Predicated region
        $region21: #{perceiver_forward.1} parent=11 // pred_check
          %p544 = pneg %p90
        $region22: #{perceiver_forward.1} parent=11 // pred_check_branch
          %546 = sbr.rel (%p544) target = $region24
        $region23: #{perceiver_forward.1} parent=11 // pred_region
          _
        $region24: #{perceiver_forward.1} parent=11 // pred_fallthru
          _
        // Predicated region
        $region25: #{perceiver_forward.1} parent=11 // pred_check
          %p547 = pneg %p111
        $region26: #{perceiver_forward.1} parent=11 // pred_check_branch
          %549 = sbr.rel (%p547) target = $region28
        $region27: #{perceiver_forward.1} parent=11 // pred_region
          _
        $region28: #{perceiver_forward.1} parent=11 // pred_fallthru
          _
        // Predicated region
        $region29: #{perceiver_forward.1} parent=11 // pred_check
          %p550 = pneg %p132
        $region30: #{perceiver_forward.1} parent=11 // pred_check_branch
          %552 = sbr.rel (%p550) target = $region32
        $region31: #{perceiver_forward.1} parent=11 // pred_region
          _
        $region32: #{perceiver_forward.1} parent=11 // pred_fallthru
          _
        // Predicated region
        $region33: #{perceiver_forward.1} parent=11 // pred_check
          %p553 = pneg %p439
        $region34: #{perceiver_forward.1} parent=11 // pred_check_branch
          %555 = sbr.rel (%p553) target = $region36
        $region35: #{perceiver_forward.1} parent=11 // pred_region
          _
        $region36: #{perceiver_forward.1} parent=11 // pred_fallthru
          _
        // Predicated region
        $region37: #{perceiver_forward.1} parent=11 // pred_check
          %p556 = pneg %p460
        $region38: #{perceiver_forward.1} parent=11 // pred_check_branch
          %558 = sbr.rel (%p556) target = $region40
        $region39: #{perceiver_forward.1} parent=11 // pred_region
          _
        $region40: #{perceiver_forward.1} parent=11 // pred_fallthru
          _
        // Predicated region
        $region41: #{perceiver_forward.1} parent=11 // pred_check
          %p559 = pneg %p481
        $region42: #{perceiver_forward.1} parent=11 // pred_check_branch
          %561 = sbr.rel (%p559) target = $region44
        $region43: #{perceiver_forward.1} parent=11 // pred_region
          _
        $region44: #{perceiver_forward.1} parent=11 // pred_fallthru
          _
        // Predicated region
        $region45: #{perceiver_forward.1} parent=11 // pred_check
          %p562 = pneg %p502
        $region46: #{perceiver_forward.1} parent=11 // pred_check_branch
          %564 = sbr.rel (%p562) target = $region48
        $region47: #{perceiver_forward.1} parent=11 // pred_region
          _
        $region48: #{perceiver_forward.1} parent=11 // pred_fallthru
          _
      $region12: #{perceiver_forward.1} parent=5 // pred_fallthru
        _
      %p565 = scmp.lt.s32.totalorder %s27, 6
      // Predicated region
      $region49: #{perceiver_forward.1} parent=5 // pred_check
        %p566 = pneg %p565
      $region50: #{perceiver_forward.1} parent=5 // pred_check_branch
        %568 = sbr.rel (%p566) target = $region52
      $region51: #{perceiver_forward.1} parent=5 // pred_region
        // Predicated region
        $region53: #{perceiver_forward.1} parent=51 // pred_check
          %p569 = pneg %p152
        $region54: #{perceiver_forward.1} parent=51 // pred_check_branch
          %571 = sbr.rel (%p569) target = $region56
        $region55: #{perceiver_forward.1} parent=51 // pred_region
          %p572 = scmp.lt.s32.totalorder %s27, 5
          %s573 = scalar_select %p572, %s27, 5
          %s574 = scalar_lea.vmem %s5, %s573
        $region56: #{perceiver_forward.1} parent=51 // pred_fallthru
          _
        // Predicated region
        $region57: #{perceiver_forward.1} parent=51 // pred_check
          %p575 = pneg %p178
        $region58: #{perceiver_forward.1} parent=51 // pred_check_branch
          %577 = sbr.rel (%p575) target = $region60
        $region59: #{perceiver_forward.1} parent=51 // pred_region
          %p578 = scmp.lt.s32.totalorder %s27, 5
          %s579 = scalar_select %p578, %s27, 5
          %s580 = scalar_lea.vmem %s6, %s579
        $region60: #{perceiver_forward.1} parent=51 // pred_fallthru
          _
        // Predicated region
        $region61: #{perceiver_forward.1} parent=51 // pred_check
          %p581 = pneg %p204
        $region62: #{perceiver_forward.1} parent=51 // pred_check_branch
          %583 = sbr.rel (%p581) target = $region64
        $region63: #{perceiver_forward.1} parent=51 // pred_region
          %p584 = scmp.lt.s32.totalorder %s27, 5
          %s585 = scalar_select %p584, %s27, 5
          %s586 = scalar_lea.vmem %s7, %s585
        $region64: #{perceiver_forward.1} parent=51 // pred_fallthru
          _
        // Predicated region
        $region65: #{perceiver_forward.1} parent=51 // pred_check
          %p587 = pneg %p230
        $region66: #{perceiver_forward.1} parent=51 // pred_check_branch
          %589 = sbr.rel (%p587) target = $region68
        $region67: #{perceiver_forward.1} parent=51 // pred_region
          %p590 = scmp.lt.s32.totalorder %s27, 5
          %s591 = scalar_select %p590, %s27, 5
          %s592 = scalar_lea.vmem %s8, %s591
        $region68: #{perceiver_forward.1} parent=51 // pred_fallthru
          _
        // Predicated region
        $region69: #{perceiver_forward.1} parent=51 // pred_check
          %p593 = pneg %p256
        $region70: #{perceiver_forward.1} parent=51 // pred_check_branch
          %595 = sbr.rel (%p593) target = $region72
        $region71: #{perceiver_forward.1} parent=51 // pred_region
          %p596 = scmp.lt.s32.totalorder %s27, 5
          %s597 = scalar_select %p596, %s27, 5
          %s598 = smul.addr %s597, 16
          %s599 = smul.addr %s598, 8
          %s600 = scalar_lea.vmem %s9, %s599
        $region72: #{perceiver_forward.1} parent=51 // pred_fallthru
          _
        // Predicated region
        $region73: #{perceiver_forward.1} parent=51 // pred_check
          %p601 = pneg %p282
        $region74: #{perceiver_forward.1} parent=51 // pred_check_branch
          %603 = sbr.rel (%p601) target = $region76
        $region75: #{perceiver_forward.1} parent=51 // pred_region
          %p604 = scmp.lt.s32.totalorder %s27, 5
          %s605 = scalar_select %p604, %s27, 5
          %s606 = smul.addr %s605, 32
          %s607 = smul.addr %s606, 8
          %s608 = scalar_lea.vmem %s10, %s607
        $region76: #{perceiver_forward.1} parent=51 // pred_fallthru
          _
        // Predicated region
        $region77: #{perceiver_forward.1} parent=51 // pred_check
          %p609 = pneg %p308
        $region78: #{perceiver_forward.1} parent=51 // pred_check_branch
          %611 = sbr.rel (%p609) target = $region80
        $region79: #{perceiver_forward.1} parent=51 // pred_region
          %p612 = scmp.lt.s32.totalorder %s27, 5
          %s613 = scalar_select %p612, %s27, 5
          %s614 = smul.addr %s613, 16
          %s615 = smul.addr %s614, 8
          %s616 = scalar_lea.vmem %s11, %s615
        $region80: #{perceiver_forward.1} parent=51 // pred_fallthru
          _
        // Predicated region
        $region81: #{perceiver_forward.1} parent=51 // pred_check
          %p617 = pneg %p334
        $region82: #{perceiver_forward.1} parent=51 // pred_check_branch
          %619 = sbr.rel (%p617) target = $region84
        $region83: #{perceiver_forward.1} parent=51 // pred_region
          %p620 = scmp.lt.s32.totalorder %s27, 5
          %s621 = scalar_select %p620, %s27, 5
          %s622 = scalar_lea.vmem %s12, %s621
        $region84: #{perceiver_forward.1} parent=51 // pred_fallthru
          _
        // Predicated region
        $region85: #{perceiver_forward.1} parent=51 // pred_check
          %p623 = pneg %p360
        $region86: #{perceiver_forward.1} parent=51 // pred_check_branch
          %625 = sbr.rel (%p623) target = $region88
        $region87: #{perceiver_forward.1} parent=51 // pred_region
          %p626 = scmp.lt.s32.totalorder %s27, 5
          %s627 = scalar_select %p626, %s27, 5
          %s628 = scalar_lea.vmem %s13, %s627
        $region88: #{perceiver_forward.1} parent=51 // pred_fallthru
          _
        // Predicated region
        $region89: #{perceiver_forward.1} parent=51 // pred_check
          %p629 = pneg %p386
        $region90: #{perceiver_forward.1} parent=51 // pred_check_branch
          %631 = sbr.rel (%p629) target = $region92
        $region91: #{perceiver_forward.1} parent=51 // pred_region
          %p632 = scmp.lt.s32.totalorder %s27, 5
          %s633 = scalar_select %p632, %s27, 5
          %s634 = smul.addr %s633, 64
          %s635 = smul.addr %s634, 8
          %s636 = scalar_lea.vmem %s14, %s635
        $region92: #{perceiver_forward.1} parent=51 // pred_fallthru
          _
        // Predicated region
        $region93: #{perceiver_forward.1} parent=51 // pred_check
          %p637 = pneg %p412
        $region94: #{perceiver_forward.1} parent=51 // pred_check_branch
          %639 = sbr.rel (%p637) target = $region96
        $region95: #{perceiver_forward.1} parent=51 // pred_region
          %p640 = scmp.lt.s32.totalorder %s27, 5
          %s641 = scalar_select %p640, %s27, 5
          %s642 = smul.addr %s641, 64
          %s643 = smul.addr %s642, 8
          %s644 = scalar_lea.vmem %s15, %s643
        $region96: #{perceiver_forward.1} parent=51 // pred_fallthru
          _
      $region52: #{perceiver_forward.1} parent=5 // pred_fallthru
        _
      %p645 = scmp.le.s32.totalorder 1, %s27
      %p646 = scmp.lt.s32.totalorder %s27, 7
      %p647 = pnand %p645, %p646
      %p648 = pneg %p647
      // Predicated region
      $region97: #{perceiver_forward.1} parent=5 // pred_check
        _
      $region98: #{perceiver_forward.1} parent=5 // pred_check_branch
        %650 = sbr.rel (%p647) target = $region100
      $region99: #{perceiver_forward.1} parent=5 // pred_region
        %s651 = ssub.s32 %s27, 1
        %p652 = pneg %p48
        %p653 = pneg %p45
        %p654 = pneg %p69
        %p655 = pneg %p66
        %p656 = pneg %p90
        %p657 = pneg %p87
        %p658 = pneg %p111
        %p659 = pneg %p108
        %p660 = pneg %p132
        %p661 = pneg %p129
        %p662 = scmp.lt.s32.totalorder %s32, 5
        %s663 = scalar_select %p662, %s32, 5
        %s664 = scalar_lea.vmem %s5, %s663
        %p665 = pneg %p158
        %p666 = pneg %p155
        %p667 = scmp.lt.s32.totalorder %s32, 5
        %s668 = scalar_select %p667, %s32, 5
        %s669 = scalar_lea.vmem %s6, %s668
        %p670 = pneg %p184
        %p671 = pneg %p181
        %p672 = scmp.lt.s32.totalorder %s32, 5
        %s673 = scalar_select %p672, %s32, 5
        %s674 = scalar_lea.vmem %s7, %s673
        %p675 = pneg %p210
        %p676 = pneg %p207
        %p677 = scmp.lt.s32.totalorder %s32, 5
        %s678 = scalar_select %p677, %s32, 5
        %s679 = scalar_lea.vmem %s8, %s678
        %p680 = pneg %p236
        %p681 = pneg %p233
        %p682 = scmp.lt.s32.totalorder %s32, 5
        %s683 = scalar_select %p682, %s32, 5
        %s684 = smul.addr %s683, 16
        %s685 = smul.addr %s684, 8
        %s686 = scalar_lea.vmem %s9, %s685
        %p687 = pneg %p262
        %p688 = pneg %p259
        %p689 = scmp.lt.s32.totalorder %s32, 5
        %s690 = scalar_select %p689, %s32, 5
        %s691 = smul.addr %s690, 32
        %s692 = smul.addr %s691, 8
        %s693 = scalar_lea.vmem %s10, %s692
        %p694 = pneg %p288
        %p695 = pneg %p285
        %p696 = scmp.lt.s32.totalorder %s32, 5
        %s697 = scalar_select %p696, %s32, 5
        %s698 = smul.addr %s697, 16
        %s699 = smul.addr %s698, 8
        %s700 = scalar_lea.vmem %s11, %s699
        %p701 = pneg %p314
        %p702 = pneg %p311
        %p703 = scmp.lt.s32.totalorder %s32, 5
        %s704 = scalar_select %p703, %s32, 5
        %s705 = scalar_lea.vmem %s12, %s704
        %p706 = pneg %p340
        %p707 = pneg %p337
        %p708 = scmp.lt.s32.totalorder %s32, 5
        %s709 = scalar_select %p708, %s32, 5
        %s710 = scalar_lea.vmem %s13, %s709
        %p711 = pneg %p366
        %p712 = pneg %p363
        %p713 = scmp.lt.s32.totalorder %s32, 5
        %s714 = scalar_select %p713, %s32, 5
        %s715 = smul.addr %s714, 64
        %s716 = smul.addr %s715, 8
        %s717 = scalar_lea.vmem %s14, %s716
        %p718 = pneg %p392
        %p719 = pneg %p389
        %p720 = scmp.lt.s32.totalorder %s32, 5
        %s721 = scalar_select %p720, %s32, 5
        %s722 = smul.addr %s721, 64
        %s723 = smul.addr %s722, 8
        %s724 = scalar_lea.vmem %s15, %s723
        %p725 = pneg %p418
        %p726 = pneg %p415
        %p727 = pneg %p439
        %p728 = pneg %p436
        %p729 = pneg %p460
        %p730 = pneg %p457
        %p731 = pneg %p481
        %p732 = pneg %p478
        %p733 = pneg %p502
        %p734 = pneg %p499
        %p735 = pneg %p523
        %p736 = pneg %p520
        %p737 = scmp.lt.s32.totalorder %s32, 5
        %s738 = scalar_select %p737, %s32, 5
        %s739 = scalar_lea.vmem %s5, %s738
        %p740 = scmp.lt.s32.totalorder %s32, 5
        %s741 = scalar_select %p740, %s32, 5
        %s742 = scalar_lea.vmem %s6, %s741
        %p743 = scmp.lt.s32.totalorder %s32, 5
        %s744 = scalar_select %p743, %s32, 5
        %s745 = scalar_lea.vmem %s7, %s744
        %p746 = scmp.lt.s32.totalorder %s32, 5
        %s747 = scalar_select %p746, %s32, 5
        %s748 = scalar_lea.vmem %s8, %s747
        %p749 = scmp.lt.s32.totalorder %s32, 5
        %s750 = scalar_select %p749, %s32, 5
        %s751 = smul.addr %s750, 16
        %s752 = smul.addr %s751, 8
        %s753 = scalar_lea.vmem %s9, %s752
        %p754 = scmp.lt.s32.totalorder %s32, 5
        %s755 = scalar_select %p754, %s32, 5
        %s756 = smul.addr %s755, 32
        %s757 = smul.addr %s756, 8
        %s758 = scalar_lea.vmem %s10, %s757
        %p759 = scmp.lt.s32.totalorder %s32, 5
        %s760 = scalar_select %p759, %s32, 5
        %s761 = smul.addr %s760, 16
        %s762 = smul.addr %s761, 8
        %s763 = scalar_lea.vmem %s11, %s762
        %p764 = scmp.lt.s32.totalorder %s32, 5
        %s765 = scalar_select %p764, %s32, 5
        %s766 = scalar_lea.vmem %s12, %s765
        %p767 = scmp.lt.s32.totalorder %s32, 5
        %s768 = scalar_select %p767, %s32, 5
        %s769 = scalar_lea.vmem %s13, %s768
        %p770 = scmp.lt.s32.totalorder %s32, 5
        %s771 = scalar_select %p770, %s32, 5
        %s772 = smul.addr %s771, 64
        %s773 = smul.addr %s772, 8
        %s774 = scalar_lea.vmem %s14, %s773
        %p775 = scmp.lt.s32.totalorder %s32, 5
        %s776 = scalar_select %p775, %s32, 5
        %s777 = smul.addr %s776, 64
        %s778 = smul.addr %s777, 8
        %s779 = scalar_lea.vmem %s15, %s778
        %p780 = scmp.eq.s32.totalorder %s32, 0
        // Predicated region
        $region101: #{perceiver_forward.1} parent=99 // pred_check
          %p781 = pneg %p780
        $region102: #{perceiver_forward.1} parent=99 // pred_check_branch
          %783 = sbr.rel (%p781) target = $region104
        $region103: #{perceiver_forward.1} parent=99 // pred_region
          %v784 = vld [vmem:[%s0] sm:$0xff]
          %v785 = vld [vmem:[%s0 + $0x8] sm:$0xff]
          %v786 = vld [vmem:[%s0 + $0x10] sm:$0xff]
          %v787 = vld [vmem:[%s0 + $0x18] sm:$0xff]
          %v788 = vld [vmem:[%s0 + $0x20] sm:$0xff]
          %v789 = vld [vmem:[%s0 + $0x28] sm:$0xff]
          %v790 = vld [vmem:[%s0 + $0x30] sm:$0xff]
          %v791 = vld [vmem:[%s0 + $0x38] sm:$0xff]
          %v792 = vld [vmem:[%s1] sm:$0x1]
          %v793 = vld [vmem:[%s2] sm:$0x1]
          %794 = vadd.xlane.f32.xlu0 %v784
          %v795 = vpop.xlane.xlu0 %794
          %796 = vadd.xlane.f32.xlu0 %v785
          %v797 = vpop.xlane.xlu0 %796
          %798 = vadd.xlane.f32.xlu0 %v786
          %v799 = vpop.xlane.xlu0 %798
          %800 = vadd.xlane.f32.xlu0 %v787
          %v801 = vpop.xlane.xlu0 %800
          %802 = vadd.xlane.f32.xlu0 %v788
          %v803 = vpop.xlane.xlu0 %802
          %804 = vadd.xlane.f32.xlu0 %v789
          %v805 = vpop.xlane.xlu0 %804
          %806 = vadd.xlane.f32.xlu0 %v790
          %v807 = vpop.xlane.xlu0 %806
          %808 = vadd.xlane.f32.xlu0 %v791
          %v809 = vpop.xlane.xlu0 %808
          %v810 = vrcp.pop 128.0
          %v811 = vmul.f32 %v795, %v810
          %v812 = vmul.f32 %v797, %v810
          %v813 = vmul.f32 %v799, %v810
          %v814 = vmul.f32 %v801, %v810
          %v815 = vmul.f32 %v803, %v810
          %v816 = vmul.f32 %v805, %v810
          %v817 = vmul.f32 %v807, %v810
          %v818 = vmul.f32 %v809, %v810
          %v819 = vsub.f32 %v784, %v811
          %v820 = vsub.f32 %v785, %v812
          %v821 = vsub.f32 %v786, %v813
          %v822 = vsub.f32 %v787, %v814
          %v823 = vsub.f32 %v788, %v815
          %v824 = vsub.f32 %v789, %v816
          %v825 = vsub.f32 %v790, %v817
          %v826 = vsub.f32 %v791, %v818
          %v827 = vmul.f32 %v819, %v819
          %v828 = vmul.f32 %v820, %v820
          %v829 = vmul.f32 %v821, %v821
          %v830 = vmul.f32 %v822, %v822
          %v831 = vmul.f32 %v823, %v823
          %v832 = vmul.f32 %v824, %v824
          %v833 = vmul.f32 %v825, %v825
          %v834 = vmul.f32 %v826, %v826
          %835 = vadd.xlane.f32.xlu0 %v827
          %v836 = vpop.xlane.xlu0 %835
          %837 = vadd.xlane.f32.xlu0 %v828
          %v838 = vpop.xlane.xlu0 %837
          %839 = vadd.xlane.f32.xlu0 %v829
          %v840 = vpop.xlane.xlu0 %839
          %841 = vadd.xlane.f32.xlu0 %v830
          %v842 = vpop.xlane.xlu0 %841
          %843 = vadd.xlane.f32.xlu0 %v831
          %v844 = vpop.xlane.xlu0 %843
          %845 = vadd.xlane.f32.xlu0 %v832
          %v846 = vpop.xlane.xlu0 %845
          %847 = vadd.xlane.f32.xlu0 %v833
          %v848 = vpop.xlane.xlu0 %847
          %849 = vadd.xlane.f32.xlu0 %v834
          %v850 = vpop.xlane.xlu0 %849
          %v851 = vmul.f32 %v836, %v810
          %v852 = vmul.f32 %v838, %v810
          %v853 = vmul.f32 %v840, %v810
          %v854 = vmul.f32 %v842, %v810
          %v855 = vmul.f32 %v844, %v810
          %v856 = vmul.f32 %v846, %v810
          %v857 = vmul.f32 %v848, %v810
          %v858 = vmul.f32 %v850, %v810
          %v859 = vadd.f32 %v851, 1e-05
          %v860 = vadd.f32 %v852, 1e-05
          %v861 = vadd.f32 %v853, 1e-05
          %v862 = vadd.f32 %v854, 1e-05
          %v863 = vadd.f32 %v855, 1e-05
          %v864 = vadd.f32 %v856, 1e-05
          %v865 = vadd.f32 %v857, 1e-05
          %v866 = vadd.f32 %v858, 1e-05
          %v867 = vrsqrt.pop %v859
          %v868 = vrsqrt.pop %v860
          %v869 = vrsqrt.pop %v861
          %v870 = vrsqrt.pop %v862
          %v871 = vrsqrt.pop %v863
          %v872 = vrsqrt.pop %v864
          %v873 = vrsqrt.pop %v865
          %v874 = vrsqrt.pop %v866
          %v875 = vmul.f32 %v819, %v867
          %v876 = vmul.f32 %v820, %v868
          %v877 = vmul.f32 %v821, %v869
          %v878 = vmul.f32 %v822, %v870
          %v879 = vmul.f32 %v823, %v871
          %v880 = vmul.f32 %v824, %v872
          %v881 = vmul.f32 %v825, %v873
          %v882 = vmul.f32 %v826, %v874
          %v884 = vlaneseq
          %v885 = vshrl.u32 %v884, 7
          %v886 = vsub.s32 0, %v885
          %v887 = vrot.slane %v792, %v886
          %v889 = vmul.f32 %v875, %v887
          %v890 = vmul.f32 %v876, %v887
          %v891 = vmul.f32 %v877, %v887
          %v892 = vmul.f32 %v878, %v887
          %v893 = vmul.f32 %v879, %v887
          %v894 = vmul.f32 %v880, %v887
          %v895 = vmul.f32 %v881, %v887
          %v896 = vmul.f32 %v882, %v887
          %v898 = vlaneseq
          %v899 = vshrl.u32 %v898, 7
          %v900 = vsub.s32 0, %v899
          %v901 = vrot.slane %v793, %v900
          %v903 = vadd.f32 %v889, %v901
          %v904 = vadd.f32 %v890, %v901
          %v905 = vadd.f32 %v891, %v901
          %v906 = vadd.f32 %v892, %v901
          %v907 = vadd.f32 %v893, %v901
          %v908 = vadd.f32 %v894, %v901
          %v909 = vadd.f32 %v895, %v901
          %v910 = vadd.f32 %v896, %v901
          %v911 = vld [vmem:[%s3] sm:$0x1]
          %v913 = vlaneseq
          %v914 = vshrl.u32 %v913, 7
          %v915 = vsub.s32 0, %v914
          %v916 = vrot.slane %v911, %v915
          %v918 = vadd.f32 %v903, %v916
          %v919 = vadd.f32 %v904, %v916
          %v920 = vadd.f32 %v905, %v916
          %v921 = vadd.f32 %v906, %v916
          %v922 = vadd.f32 %v907, %v916
          %v923 = vadd.f32 %v908, %v916
          %v924 = vadd.f32 %v909, %v916
          %v925 = vadd.f32 %v910, %v916
          %926 = vst [vmem:[#allocation2] sm:$0xff] %v918
          %927 = vst [vmem:[#allocation2 + $0x8] sm:$0xff] %v919
          %928 = vst [vmem:[#allocation2 + $0x10] sm:$0xff] %v920
          %929 = vst [vmem:[#allocation2 + $0x18] sm:$0xff] %v921
          %930 = vst [vmem:[#allocation2 + $0x20] sm:$0xff] %v922
          %931 = vst [vmem:[#allocation2 + $0x28] sm:$0xff] %v923
          %932 = vst [vmem:[#allocation2 + $0x30] sm:$0xff] %v924
          %933 = vst [vmem:[#allocation2 + $0x38] sm:$0xff] %v925
          %v934 = vld [vmem:[%s4] sm:$0xff]
          %v935 = vld [vmem:[%s4 + $0x8] sm:$0xff]
          %v936 = vld [vmem:[%s4 + $0x10] sm:$0xff]
          %v937 = vld [vmem:[%s4 + $0x18] sm:$0xff]
          %938 = vst [vmem:[#allocation3] sm:$0xff] %v934
          %939 = vst [vmem:[#allocation3 + $0x8] sm:$0xff] %v935
          %940 = vst [vmem:[#allocation3 + $0x10] sm:$0xff] %v936
          %941 = vst [vmem:[#allocation3 + $0x18] sm:$0xff] %v937
        $region104: #{perceiver_forward.1} parent=99 // pred_fallthru
          _
        %v942 = vld [vmem:[#allocation2] sm:$0xff]
        %v943 = vld [vmem:[#allocation2 + $0x8] sm:$0xff]
        %v944 = vld [vmem:[#allocation2 + $0x10] sm:$0xff]
        %v945 = vld [vmem:[#allocation2 + $0x18] sm:$0xff]
        %v946 = vld [vmem:[#allocation2 + $0x20] sm:$0xff]
        %v947 = vld [vmem:[#allocation2 + $0x28] sm:$0xff]
        %v948 = vld [vmem:[#allocation2 + $0x30] sm:$0xff]
        %v949 = vld [vmem:[#allocation2 + $0x38] sm:$0xff]
        %v950 = vld [vmem:[%s739] sm:$0x1]
        %v951 = vld [vmem:[%s742] sm:$0x1]
        %952 = vadd.xlane.f32.xlu0 %v942
        %v953 = vpop.xlane.xlu0 %952
        %954 = vadd.xlane.f32.xlu0 %v943
        %v955 = vpop.xlane.xlu0 %954
        %956 = vadd.xlane.f32.xlu0 %v944
        %v957 = vpop.xlane.xlu0 %956
        %958 = vadd.xlane.f32.xlu0 %v945
        %v959 = vpop.xlane.xlu0 %958
        %960 = vadd.xlane.f32.xlu0 %v946
        %v961 = vpop.xlane.xlu0 %960
        %962 = vadd.xlane.f32.xlu0 %v947
        %v963 = vpop.xlane.xlu0 %962
        %964 = vadd.xlane.f32.xlu0 %v948
        %v965 = vpop.xlane.xlu0 %964
        %966 = vadd.xlane.f32.xlu0 %v949
        %v967 = vpop.xlane.xlu0 %966
        %v968 = vrcp.pop 128.0
        %v969 = vmul.f32 %v953, %v968
        %v970 = vmul.f32 %v955, %v968
        %v971 = vmul.f32 %v957, %v968
        %v972 = vmul.f32 %v959, %v968
        %v973 = vmul.f32 %v961, %v968
        %v974 = vmul.f32 %v963, %v968
        %v975 = vmul.f32 %v965, %v968
        %v976 = vmul.f32 %v967, %v968
        %v977 = vsub.f32 %v942, %v969
        %v978 = vsub.f32 %v943, %v970
        %v979 = vsub.f32 %v944, %v971
        %v980 = vsub.f32 %v945, %v972
        %v981 = vsub.f32 %v946, %v973
        %v982 = vsub.f32 %v947, %v974
        %v983 = vsub.f32 %v948, %v975
        %v984 = vsub.f32 %v949, %v976
        %v985 = vmul.f32 %v977, %v977
        %v986 = vmul.f32 %v978, %v978
        %v987 = vmul.f32 %v979, %v979
        %v988 = vmul.f32 %v980, %v980
        %v989 = vmul.f32 %v981, %v981
        %v990 = vmul.f32 %v982, %v982
        %v991 = vmul.f32 %v983, %v983
        %v992 = vmul.f32 %v984, %v984
        %993 = vadd.xlane.f32.xlu0 %v985
        %v994 = vpop.xlane.xlu0 %993
        %995 = vadd.xlane.f32.xlu0 %v986
        %v996 = vpop.xlane.xlu0 %995
        %997 = vadd.xlane.f32.xlu0 %v987
        %v998 = vpop.xlane.xlu0 %997
        %999 = vadd.xlane.f32.xlu0 %v988
        %v1000 = vpop.xlane.xlu0 %999
        %1001 = vadd.xlane.f32.xlu0 %v989
        %v1002 = vpop.xlane.xlu0 %1001
        %1003 = vadd.xlane.f32.xlu0 %v990
        %v1004 = vpop.xlane.xlu0 %1003
        %1005 = vadd.xlane.f32.xlu0 %v991
        %v1006 = vpop.xlane.xlu0 %1005
        %1007 = vadd.xlane.f32.xlu0 %v992
        %v1008 = vpop.xlane.xlu0 %1007
        %v1009 = vmul.f32 %v994, %v968
        %v1010 = vmul.f32 %v996, %v968
        %v1011 = vmul.f32 %v998, %v968
        %v1012 = vmul.f32 %v1000, %v968
        %v1013 = vmul.f32 %v1002, %v968
        %v1014 = vmul.f32 %v1004, %v968
        %v1015 = vmul.f32 %v1006, %v968
        %v1016 = vmul.f32 %v1008, %v968
        %v1017 = vadd.f32 %v1009, 1e-05
        %v1018 = vadd.f32 %v1010, 1e-05
        %v1019 = vadd.f32 %v1011, 1e-05
        %v1020 = vadd.f32 %v1012, 1e-05
        %v1021 = vadd.f32 %v1013, 1e-05
        %v1022 = vadd.f32 %v1014, 1e-05
        %v1023 = vadd.f32 %v1015, 1e-05
        %v1024 = vadd.f32 %v1016, 1e-05
        %v1025 = vrsqrt.pop %v1017
        %v1026 = vrsqrt.pop %v1018
        %v1027 = vrsqrt.pop %v1019
        %v1028 = vrsqrt.pop %v1020
        %v1029 = vrsqrt.pop %v1021
        %v1030 = vrsqrt.pop %v1022
        %v1031 = vrsqrt.pop %v1023
        %v1032 = vrsqrt.pop %v1024
        %v1033 = vmul.f32 %v977, %v1025
        %v1034 = vmul.f32 %v978, %v1026
        %v1035 = vmul.f32 %v979, %v1027
        %v1036 = vmul.f32 %v980, %v1028
        %v1037 = vmul.f32 %v981, %v1029
        %v1038 = vmul.f32 %v982, %v1030
        %v1039 = vmul.f32 %v983, %v1031
        %v1040 = vmul.f32 %v984, %v1032
        %v1042 = vlaneseq
        %v1043 = vshrl.u32 %v1042, 7
        %v1044 = vsub.s32 0, %v1043
        %v1045 = vrot.slane %v950, %v1044
        %v1047 = vmul.f32 %v1033, %v1045
        %v1048 = vmul.f32 %v1034, %v1045
        %v1049 = vmul.f32 %v1035, %v1045
        %v1050 = vmul.f32 %v1036, %v1045
        %v1051 = vmul.f32 %v1037, %v1045
        %v1052 = vmul.f32 %v1038, %v1045
        %v1053 = vmul.f32 %v1039, %v1045
        %v1054 = vmul.f32 %v1040, %v1045
        %v1056 = vlaneseq
        %v1057 = vshrl.u32 %v1056, 7
        %v1058 = vsub.s32 0, %v1057
        %v1059 = vrot.slane %v951, %v1058
        %v1061 = vadd.f32 %v1047, %v1059
        %v1062 = vadd.f32 %v1048, %v1059
        %v1063 = vadd.f32 %v1049, %v1059
        %v1064 = vadd.f32 %v1050, %v1059
        %v1065 = vadd.f32 %v1051, %v1059
        %v1066 = vadd.f32 %v1052, %v1059
        %v1067 = vadd.f32 %v1053, %v1059
        %v1068 = vadd.f32 %v1054, %v1059
        %v1069 = vld [vmem:[#allocation3] sm:$0xff]
        %v1070 = vld [vmem:[#allocation3 + $0x8] sm:$0xff]
        %v1071 = vld [vmem:[#allocation3 + $0x10] sm:$0xff]
        %v1072 = vld [vmem:[#allocation3 + $0x18] sm:$0xff]
        %v1073 = vld [vmem:[%s745] sm:$0x1]
        %v1074 = vld [vmem:[%s748] sm:$0x1]
        %1075 = vadd.xlane.f32.xlu0 %v1069
        %v1076 = vpop.xlane.xlu0 %1075
        %1077 = vadd.xlane.f32.xlu0 %v1070
        %v1078 = vpop.xlane.xlu0 %1077
        %1079 = vadd.xlane.f32.xlu0 %v1071
        %v1080 = vpop.xlane.xlu0 %1079
        %1081 = vadd.xlane.f32.xlu0 %v1072
        %v1082 = vpop.xlane.xlu0 %1081
        %v1083 = vmul.f32 %v1076, %v968
        %v1084 = vmul.f32 %v1078, %v968
        %v1085 = vmul.f32 %v1080, %v968
        %v1086 = vmul.f32 %v1082, %v968
        %v1087 = vsub.f32 %v1069, %v1083
        %v1088 = vsub.f32 %v1070, %v1084
        %v1089 = vsub.f32 %v1071, %v1085
        %v1090 = vsub.f32 %v1072, %v1086
        %v1091 = vmul.f32 %v1087, %v1087
        %v1092 = vmul.f32 %v1088, %v1088
        %v1093 = vmul.f32 %v1089, %v1089
        %v1094 = vmul.f32 %v1090, %v1090
        %1095 = vadd.xlane.f32.xlu0 %v1091
        %v1096 = vpop.xlane.xlu0 %1095
        %1097 = vadd.xlane.f32.xlu0 %v1092
        %v1098 = vpop.xlane.xlu0 %1097
        %1099 = vadd.xlane.f32.xlu0 %v1093
        %v1100 = vpop.xlane.xlu0 %1099
        %1101 = vadd.xlane.f32.xlu0 %v1094
        %v1102 = vpop.xlane.xlu0 %1101
        %v1103 = vmul.f32 %v1096, %v968
        %v1104 = vmul.f32 %v1098, %v968
        %v1105 = vmul.f32 %v1100, %v968
        %v1106 = vmul.f32 %v1102, %v968
        %v1107 = vadd.f32 %v1103, 1e-05
        %v1108 = vadd.f32 %v1104, 1e-05
        %v1109 = vadd.f32 %v1105, 1e-05
        %v1110 = vadd.f32 %v1106, 1e-05
        %v1111 = vrsqrt.pop %v1107
        %v1112 = vrsqrt.pop %v1108
        %v1113 = vrsqrt.pop %v1109
        %v1114 = vrsqrt.pop %v1110
        %v1115 = vmul.f32 %v1087, %v1111
        %v1116 = vmul.f32 %v1088, %v1112
        %v1117 = vmul.f32 %v1089, %v1113
        %v1118 = vmul.f32 %v1090, %v1114
        %v1120 = vlaneseq
        %v1121 = vshrl.u32 %v1120, 7
        %v1122 = vsub.s32 0, %v1121
        %v1123 = vrot.slane %v1073, %v1122
        %v1125 = vmul.f32 %v1115, %v1123
        %v1126 = vmul.f32 %v1116, %v1123
        %v1127 = vmul.f32 %v1117, %v1123
        %v1128 = vmul.f32 %v1118, %v1123
        %v1130 = vlaneseq
        %v1131 = vshrl.u32 %v1130, 7
        %v1132 = vsub.s32 0, %v1131
        %v1133 = vrot.slane %v1074, %v1132
        %v1135 = vadd.f32 %v1125, %v1133
        %v1136 = vadd.f32 %v1126, %v1133
        %v1137 = vadd.f32 %v1127, %v1133
        %v1138 = vadd.f32 %v1128, %v1133
        %v1139 = vld [vmem:[%s753] sm:$0xff]
        %v1140 = vld [vmem:[%s753 + $0x8] sm:$0xff]
        %v1141 = vld [vmem:[%s753 + $0x10] sm:$0xff]
        %v1142 = vld [vmem:[%s753 + $0x18] sm:$0xff]
        %v1143 = vld [vmem:[%s753 + $0x20] sm:$0xff]
        %v1144 = vld [vmem:[%s753 + $0x28] sm:$0xff]
        %v1145 = vld [vmem:[%s753 + $0x30] sm:$0xff]
        %v1146 = vld [vmem:[%s753 + $0x38] sm:$0xff]
        %v1147 = vld [vmem:[%s753 + $0x40] sm:$0xff]
        %v1148 = vld [vmem:[%s753 + $0x48] sm:$0xff]
        %v1149 = vld [vmem:[%s753 + $0x50] sm:$0xff]
        %v1150 = vld [vmem:[%s753 + $0x58] sm:$0xff]
        %v1151 = vld [vmem:[%s753 + $0x60] sm:$0xff]
        %v1152 = vld [vmem:[%s753 + $0x68] sm:$0xff]
        %v1153 = vld [vmem:[%s753 + $0x70] sm:$0xff]
        %v1154 = vld [vmem:[%s753 + $0x78] sm:$0xff]
        %1155 = vmatprep.subr.mxu0 0.0
        %1156 = vmatpush1.msra.mxu0 %v1154
        %1157 = vmatprep.subr.mxu0 0.0
        %1158 = vmatpush1.msra.mxu0 %v1153
        %1159 = vmatprep.subr.mxu0 0.0
        %1160 = vmatpush1.msra.mxu0 %v1152
        %1161 = vmatprep.subr.mxu0 0.0
        %1162 = vmatpush1.msra.mxu0 %v1151
        %1163 = vmatprep.subr.mxu0 0.0
        %1164 = vmatpush1.msra.mxu0 %v1150
        %1165 = vmatprep.subr.mxu0 0.0
        %1166 = vmatpush1.msra.mxu0 %v1149
        %1167 = vmatprep.subr.mxu0 0.0
        %1168 = vmatpush1.msra.mxu0 %v1148
        %1169 = vmatprep.subr.mxu0 0.0
        %1170 = vmatpush1.msra.mxu0 %v1147
        %1171 = vmatprep.subr.mxu0 0.0
        %1172 = vmatpush1.msra.mxu0 %v1146
        %1173 = vmatprep.subr.mxu0 0.0
        %1174 = vmatpush1.msra.mxu0 %v1145
        %1175 = vmatprep.subr.mxu0 0.0
        %1176 = vmatpush1.msra.mxu0 %v1144
        %1177 = vmatprep.subr.mxu0 0.0
        %1178 = vmatpush1.msra.mxu0 %v1143
        %1179 = vmatprep.subr.mxu0 0.0
        %1180 = vmatpush1.msra.mxu0 %v1142
        %1181 = vmatprep.subr.mxu0 0.0
        %1182 = vmatpush1.msra.mxu0 %v1141
        %1183 = vmatprep.subr.mxu0 0.0
        %1184 = vmatpush1.msra.mxu0 %v1140
        %1185 = vmatprep.subr.mxu0 0.0
        %1186 = vmatpush1.msra.mxu0 %v1139
        %1187 = vmatprep.subr.mxu0 0.0
        %1188 = vmatpush2.msra.mxu0 0.0
        %1189 = vmatprep.subr.mxu0 0.0
        %1190 = vmatpush2.msra.mxu0 0.0
        %1191 = vmatprep.subr.mxu0 0.0
        %1192 = vmatpush2.msra.mxu0 0.0
        %1193 = vmatprep.subr.mxu0 0.0
        %1194 = vmatpush2.msra.mxu0 0.0
        %1195 = vmatprep.subr.mxu0 0.0
        %1196 = vmatpush2.msra.mxu0 0.0
        %1197 = vmatprep.subr.mxu0 0.0
        %1198 = vmatpush2.msra.mxu0 0.0
        %1199 = vmatprep.subr.mxu0 0.0
        %1200 = vmatpush2.msra.mxu0 0.0
        %1201 = vmatprep.subr.mxu0 0.0
        %1202 = vmatpush2.msra.mxu0 0.0
        %1203 = vmatprep.subr.mxu0 0.0
        %1204 = vmatpush2.msra.mxu0 0.0
        %1205 = vmatprep.subr.mxu0 0.0
        %1206 = vmatpush2.msra.mxu0 0.0
        %1207 = vmatprep.subr.mxu0 0.0
        %1208 = vmatpush2.msra.mxu0 0.0
        %1209 = vmatprep.subr.mxu0 0.0
        %1210 = vmatpush2.msra.mxu0 0.0
        %1211 = vmatprep.subr.mxu0 0.0
        %1212 = vmatpush2.msra.mxu0 0.0
        %1213 = vmatprep.subr.mxu0 0.0
        %1214 = vmatpush2.msra.mxu0 0.0
        %1215 = vmatprep.subr.mxu0 0.0
        %1216 = vmatpush2.msra.mxu0 0.0
        %1217 = vmatprep.subr.mxu0 0.0
        %1218 = vmatpush2.msra.mxu0 0.0
        %1219 = vmatprep.mubr.f32.mxu0 0.0
        %1220 = vmatmul.mubr.f32.gmra.mxu0 %v1135
        %v1221 = vpop.f32.mrf.mxu0
        %v1222 = vadd.f32 0.0, %v1221
        %v1223 = vpop.f32.mrf.mxu0
        %1224 = vmatprep.mubr.f32.mxu0 0.0
        %1225 = vmatmul.mubr.f32.gmra.mxu0 %v1136
        %v1226 = vpop.f32.mrf.mxu0
        %v1227 = vadd.f32 0.0, %v1226
        %v1228 = vpop.f32.mrf.mxu0
        %1229 = vmatprep.mubr.f32.mxu0 0.0
        %1230 = vmatmul.mubr.f32.gmra.mxu0 %v1137
        %v1231 = vpop.f32.mrf.mxu0
        %v1232 = vadd.f32 0.0, %v1231
        %v1233 = vpop.f32.mrf.mxu0
        %1234 = vmatprep.mubr.f32.mxu0 0.0
        %1235 = vmatmul.mubr.f32.gmra.mxu0 %v1138
        %v1236 = vpop.f32.mrf.mxu0
        %v1237 = vadd.f32 0.0, %v1236
        %v1238 = vpop.f32.mrf.mxu0
        %1239 = vdwg.mxu0
        %v1240 = vld [vmem:[%s758] sm:$0xff]
        %v1241 = vld [vmem:[%s758 + $0x8] sm:$0xff]
        %v1242 = vld [vmem:[%s758 + $0x10] sm:$0xff]
        %v1243 = vld [vmem:[%s758 + $0x18] sm:$0xff]
        %v1244 = vld [vmem:[%s758 + $0x20] sm:$0xff]
        %v1245 = vld [vmem:[%s758 + $0x28] sm:$0xff]
        %v1246 = vld [vmem:[%s758 + $0x30] sm:$0xff]
        %v1247 = vld [vmem:[%s758 + $0x38] sm:$0xff]
        %v1248 = vld [vmem:[%s758 + $0x40] sm:$0xff]
        %v1249 = vld [vmem:[%s758 + $0x48] sm:$0xff]
        %v1250 = vld [vmem:[%s758 + $0x50] sm:$0xff]
        %v1251 = vld [vmem:[%s758 + $0x58] sm:$0xff]
        %v1252 = vld [vmem:[%s758 + $0x60] sm:$0xff]
        %v1253 = vld [vmem:[%s758 + $0x68] sm:$0xff]
        %v1254 = vld [vmem:[%s758 + $0x70] sm:$0xff]
        %v1255 = vld [vmem:[%s758 + $0x78] sm:$0xff]
        %v1256 = vld [vmem:[%s758 + $0x80] sm:$0xff]
        %v1257 = vld [vmem:[%s758 + $0x88] sm:$0xff]
        %v1258 = vld [vmem:[%s758 + $0x90] sm:$0xff]
        %v1259 = vld [vmem:[%s758 + $0x98] sm:$0xff]
        %v1260 = vld [vmem:[%s758 + $0xa0] sm:$0xff]
        %v1261 = vld [vmem:[%s758 + $0xa8] sm:$0xff]
        %v1262 = vld [vmem:[%s758 + $0xb0] sm:$0xff]
        %v1263 = vld [vmem:[%s758 + $0xb8] sm:$0xff]
        %v1264 = vld [vmem:[%s758 + $0xc0] sm:$0xff]
        %v1265 = vld [vmem:[%s758 + $0xc8] sm:$0xff]
        %v1266 = vld [vmem:[%s758 + $0xd0] sm:$0xff]
        %v1267 = vld [vmem:[%s758 + $0xd8] sm:$0xff]
        %v1268 = vld [vmem:[%s758 + $0xe0] sm:$0xff]
        %v1269 = vld [vmem:[%s758 + $0xe8] sm:$0xff]
        %v1270 = vld [vmem:[%s758 + $0xf0] sm:$0xff]
        %v1271 = vld [vmem:[%s758 + $0xf8] sm:$0xff]
        %1272 = vmatprep.subr.mxu0 %v1271
        %1273 = vmatpush1.msra.mxu0 %v1270
        %1274 = vmatprep.subr.mxu0 %v1269
        %1275 = vmatpush1.msra.mxu0 %v1268
        %1276 = vmatprep.subr.mxu0 %v1267
        %1277 = vmatpush1.msra.mxu0 %v1266
        %1278 = vmatprep.subr.mxu0 %v1265
        %1279 = vmatpush1.msra.mxu0 %v1264
        %1280 = vmatprep.subr.mxu0 %v1263
        %1281 = vmatpush1.msra.mxu0 %v1262
        %1282 = vmatprep.subr.mxu0 %v1261
        %1283 = vmatpush1.msra.mxu0 %v1260
        %1284 = vmatprep.subr.mxu0 %v1259
        %1285 = vmatpush1.msra.mxu0 %v1258
        %1286 = vmatprep.subr.mxu0 %v1257
        %1287 = vmatpush1.msra.mxu0 %v1256
        %1288 = vmatprep.subr.mxu0 %v1255
        %1289 = vmatpush1.msra.mxu0 %v1254
        %1290 = vmatprep.subr.mxu0 %v1253
        %1291 = vmatpush1.msra.mxu0 %v1252
        %1292 = vmatprep.subr.mxu0 %v1251
        %1293 = vmatpush1.msra.mxu0 %v1250
        %1294 = vmatprep.subr.mxu0 %v1249
        %1295 = vmatpush1.msra.mxu0 %v1248
        %1296 = vmatprep.subr.mxu0 %v1247
        %1297 = vmatpush1.msra.mxu0 %v1246
        %1298 = vmatprep.subr.mxu0 %v1245
        %1299 = vmatpush1.msra.mxu0 %v1244
        %1300 = vmatprep.subr.mxu0 %v1243
        %1301 = vmatpush1.msra.mxu0 %v1242
        %1302 = vmatprep.subr.mxu0 %v1241
        %1303 = vmatpush1.msra.mxu0 %v1240
        %1304 = vmatprep.subr.mxu0 0.0
        %1305 = vmatpush2.msra.mxu0 0.0
        %1306 = vmatprep.subr.mxu0 0.0
        %1307 = vmatpush2.msra.mxu0 0.0
        %1308 = vmatprep.subr.mxu0 0.0
        %1309 = vmatpush2.msra.mxu0 0.0
        %1310 = vmatprep.subr.mxu0 0.0
        %1311 = vmatpush2.msra.mxu0 0.0
        %1312 = vmatprep.subr.mxu0 0.0
        %1313 = vmatpush2.msra.mxu0 0.0
        %1314 = vmatprep.subr.mxu0 0.0
        %1315 = vmatpush2.msra.mxu0 0.0
        %1316 = vmatprep.subr.mxu0 0.0
        %1317 = vmatpush2.msra.mxu0 0.0
        %1318 = vmatprep.subr.mxu0 0.0
        %1319 = vmatpush2.msra.mxu0 0.0
        %1320 = vmatprep.subr.mxu0 0.0
        %1321 = vmatpush2.msra.mxu0 0.0
        %1322 = vmatprep.subr.mxu0 0.0
        %1323 = vmatpush2.msra.mxu0 0.0
        %1324 = vmatprep.subr.mxu0 0.0
        %1325 = vmatpush2.msra.mxu0 0.0
        %1326 = vmatprep.subr.mxu0 0.0
        %1327 = vmatpush2.msra.mxu0 0.0
        %1328 = vmatprep.subr.mxu0 0.0
        %1329 = vmatpush2.msra.mxu0 0.0
        %1330 = vmatprep.subr.mxu0 0.0
        %1331 = vmatpush2.msra.mxu0 0.0
        %1332 = vmatprep.subr.mxu0 0.0
        %1333 = vmatpush2.msra.mxu0 0.0
        %1334 = vmatprep.subr.mxu0 0.0
        %1335 = vmatpush2.msra.mxu0 0.0
        %1336 = vmatprep.mubr.f32.mxu0 0.0
        %1337 = vmatmul.mubr.f32.gmra.mxu0 %v1061
        %v1338 = vpop.f32.mrf.mxu0
        %v1339 = vadd.f32 0.0, %v1338
        %v1340 = vpop.f32.mrf.mxu0
        %v1341 = vadd.f32 0.0, %v1340
        %1342 = vmatprep.mubr.f32.mxu0 0.0
        %1343 = vmatmul.mubr.f32.gmra.mxu0 %v1062
        %v1344 = vpop.f32.mrf.mxu0
        %v1345 = vadd.f32 0.0, %v1344
        %v1346 = vpop.f32.mrf.mxu0
        %v1347 = vadd.f32 0.0, %v1346
        %1348 = vmatprep.mubr.f32.mxu0 0.0
        %1349 = vmatmul.mubr.f32.gmra.mxu0 %v1063
        %v1350 = vpop.f32.mrf.mxu0
        %v1351 = vadd.f32 0.0, %v1350
        %v1352 = vpop.f32.mrf.mxu0
        %v1353 = vadd.f32 0.0, %v1352
        %1354 = vmatprep.mubr.f32.mxu0 0.0
        %1355 = vmatmul.mubr.f32.gmra.mxu0 %v1064
        %v1356 = vpop.f32.mrf.mxu0
        %v1357 = vadd.f32 0.0, %v1356
        %v1358 = vpop.f32.mrf.mxu0
        %v1359 = vadd.f32 0.0, %v1358
        %1360 = vmatprep.mubr.f32.mxu0 0.0
        %1361 = vmatmul.mubr.f32.gmra.mxu0 %v1065
        %v1362 = vpop.f32.mrf.mxu0
        %v1363 = vadd.f32 0.0, %v1362
        %v1364 = vpop.f32.mrf.mxu0
        %v1365 = vadd.f32 0.0, %v1364
        %1366 = vmatprep.mubr.f32.mxu0 0.0
        %1367 = vmatmul.mubr.f32.gmra.mxu0 %v1066
        %v1368 = vpop.f32.mrf.mxu0
        %v1369 = vadd.f32 0.0, %v1368
        %v1370 = vpop.f32.mrf.mxu0
        %v1371 = vadd.f32 0.0, %v1370
        %1372 = vmatprep.mubr.f32.mxu0 0.0
        %1373 = vmatmul.mubr.f32.gmra.mxu0 %v1067
        %v1374 = vpop.f32.mrf.mxu0
        %v1375 = vadd.f32 0.0, %v1374
        %v1376 = vpop.f32.mrf.mxu0
        %v1377 = vadd.f32 0.0, %v1376
        %1378 = vmatprep.mubr.f32.mxu0 0.0
        %1379 = vmatmul.mubr.f32.gmra.mxu0 %v1068
        %v1380 = vpop.f32.mrf.mxu0
        %v1381 = vadd.f32 0.0, %v1380
        %v1382 = vpop.f32.mrf.mxu0
        %v1383 = vadd.f32 0.0, %v1382
        %1384 = vdwg.mxu0
        %1385 = vmatprep.subr.mxu0 %v1271
        %1386 = vmatpush1.msra.mxu0 %v1270
        %1387 = vmatprep.subr.mxu0 %v1269
        %1388 = vmatpush1.msra.mxu0 %v1268
        %1389 = vmatprep.subr.mxu0 %v1267
        %1390 = vmatpush1.msra.mxu0 %v1266
        %1391 = vmatprep.subr.mxu0 %v1265
        %1392 = vmatpush1.msra.mxu0 %v1264
        %1393 = vmatprep.subr.mxu0 %v1263
        %1394 = vmatpush1.msra.mxu0 %v1262
        %1395 = vmatprep.subr.mxu0 %v1261
        %1396 = vmatpush1.msra.mxu0 %v1260
        %1397 = vmatprep.subr.mxu0 %v1259
        %1398 = vmatpush1.msra.mxu0 %v1258
        %1399 = vmatprep.subr.mxu0 %v1257
        %1400 = vmatpush1.msra.mxu0 %v1256
        %1401 = vmatprep.subr.mxu0 %v1255
        %1402 = vmatpush1.msra.mxu0 %v1254
        %1403 = vmatprep.subr.mxu0 %v1253
        %1404 = vmatpush1.msra.mxu0 %v1252
        %1405 = vmatprep.subr.mxu0 %v1251
        %1406 = vmatpush1.msra.mxu0 %v1250
        %1407 = vmatprep.subr.mxu0 %v1249
        %1408 = vmatpush1.msra.mxu0 %v1248
        %1409 = vmatprep.subr.mxu0 %v1247
        %1410 = vmatpush1.msra.mxu0 %v1246
        %1411 = vmatprep.subr.mxu0 %v1245
        %1412 = vmatpush1.msra.mxu0 %v1244
        %1413 = vmatprep.subr.mxu0 %v1243
        %1414 = vmatpush1.msra.mxu0 %v1242
        %1415 = vmatprep.subr.mxu0 %v1241
        %1416 = vmatpush1.msra.mxu0 %v1240
        %1417 = vmatprep.subr.mxu0 0.0
        %1418 = vmatpush2.msra.mxu0 0.0
        %1419 = vmatprep.subr.mxu0 0.0
        %1420 = vmatpush2.msra.mxu0 0.0
        %1421 = vmatprep.subr.mxu0 0.0
        %1422 = vmatpush2.msra.mxu0 0.0
        %1423 = vmatprep.subr.mxu0 0.0
        %1424 = vmatpush2.msra.mxu0 0.0
        %1425 = vmatprep.subr.mxu0 0.0
        %1426 = vmatpush2.msra.mxu0 0.0
        %1427 = vmatprep.subr.mxu0 0.0
        %1428 = vmatpush2.msra.mxu0 0.0
        %1429 = vmatprep.subr.mxu0 0.0
        %1430 = vmatpush2.msra.mxu0 0.0
        %1431 = vmatprep.subr.mxu0 0.0
        %1432 = vmatpush2.msra.mxu0 0.0
        %1433 = vmatprep.subr.mxu0 0.0
        %1434 = vmatpush2.msra.mxu0 0.0
        %1435 = vmatprep.subr.mxu0 0.0
        %1436 = vmatpush2.msra.mxu0 0.0
        %1437 = vmatprep.subr.mxu0 0.0
        %1438 = vmatpush2.msra.mxu0 0.0
        %1439 = vmatprep.subr.mxu0 0.0
        %1440 = vmatpush2.msra.mxu0 0.0
        %1441 = vmatprep.subr.mxu0 0.0
        %1442 = vmatpush2.msra.mxu0 0.0
        %1443 = vmatprep.subr.mxu0 0.0
        %1444 = vmatpush2.msra.mxu0 0.0
        %1445 = vmatprep.subr.mxu0 0.0
        %1446 = vmatpush2.msra.mxu0 0.0
        %1447 = vmatprep.subr.mxu0 0.0
        %1448 = vmatpush2.msra.mxu0 0.0
        %1449 = vmatprep.mubr.f32.mxu0 0.0
        %1450 = vmatmul.mubr.f32.gmra.mxu0 %v1135
        %v1451 = vpop.f32.mrf.mxu0
        %v1452 = vadd.f32 0.0, %v1451
        %v1453 = vpop.f32.mrf.mxu0
        %v1454 = vadd.f32 0.0, %v1453
        %1455 = vmatprep.mubr.f32.mxu0 0.0
        %1456 = vmatmul.mubr.f32.gmra.mxu0 %v1136
        %v1457 = vpop.f32.mrf.mxu0
        %v1458 = vadd.f32 0.0, %v1457
        %v1459 = vpop.f32.mrf.mxu0
        %v1460 = vadd.f32 0.0, %v1459
        %1461 = vmatprep.mubr.f32.mxu0 0.0
        %1462 = vmatmul.mubr.f32.gmra.mxu0 %v1137
        %v1463 = vpop.f32.mrf.mxu0
        %v1464 = vadd.f32 0.0, %v1463
        %v1465 = vpop.f32.mrf.mxu0
        %v1466 = vadd.f32 0.0, %v1465
        %1467 = vmatprep.mubr.f32.mxu0 0.0
        %1468 = vmatmul.mubr.f32.gmra.mxu0 %v1138
        %v1469 = vpop.f32.mrf.mxu0
        %v1470 = vadd.f32 0.0, %v1469
        %v1471 = vpop.f32.mrf.mxu0
        %v1472 = vadd.f32 0.0, %v1471
        %1473 = vdwg.mxu0
        %vm1474 = vcmask 261120
        %v1476 = vsel %vm1474, %v1222, 0
        %v1479 = vsel %vm1474, %v1227, 0
        %v1482 = vsel %vm1474, %v1339, 0
        %v1485 = vsel %vm1474, %v1345, 0
        %v1488 = vsel %vm1474, %v1351, 0
        %v1491 = vsel %vm1474, %v1357, 0
        %1493 = vmatprep.subr.mxu0 0.0
        %1494 = vmatpush1.xpose.msra.mxu0 0.0
        %1495 = vmatprep.subr.mxu0 0.0
        %1496 = vmatpush1.xpose.msra.mxu0 0.0
        %1497 = vmatprep.subr.mxu0 0.0
        %1498 = vmatpush1.xpose.msra.mxu0 0.0
        %1499 = vmatprep.subr.mxu0 0.0
        %1500 = vmatpush1.xpose.msra.mxu0 0.0
        %1501 = vmatprep.subr.mxu0 0.0
        %1502 = vmatpush1.xpose.msra.mxu0 0.0
        %1503 = vmatprep.subr.mxu0 0.0
        %1504 = vmatpush1.xpose.msra.mxu0 0.0
        %1505 = vmatprep.subr.mxu0 0.0
        %1506 = vmatpush1.xpose.msra.mxu0 0.0
        %1507 = vmatprep.subr.mxu0 0.0
        %1508 = vmatpush1.xpose.msra.mxu0 0.0
        %1509 = vmatprep.subr.mxu0 0.0
        %1510 = vmatpush1.xpose.msra.mxu0 0.0
        %1511 = vmatprep.subr.mxu0 0.0
        %1512 = vmatpush1.xpose.msra.mxu0 0.0
        %1513 = vmatprep.subr.mxu0 0.0
        %1514 = vmatpush1.xpose.msra.mxu0 0.0
        %1515 = vmatprep.subr.mxu0 0.0
        %1516 = vmatpush1.xpose.msra.mxu0 0.0
        %1517 = vmatprep.subr.mxu0 0.0
        %1518 = vmatpush1.xpose.msra.mxu0 %v1491
        %1519 = vmatprep.subr.mxu0 0.0
        %1520 = vmatpush1.xpose.msra.mxu0 %v1488
        %1521 = vmatprep.subr.mxu0 0.0
        %1522 = vmatpush1.xpose.msra.mxu0 %v1485
        %1523 = vmatprep.subr.mxu0 0.0
        %1524 = vmatpush1.xpose.msra.mxu0 %v1482
        %1525 = vmatprep.subr.mxu0 0.0
        %1526 = vmatpush2.xpose.msra.mxu0 0.0
        %1527 = vmatprep.subr.mxu0 0.0
        %1528 = vmatpush2.xpose.msra.mxu0 0.0
        %1529 = vmatprep.subr.mxu0 0.0
        %1530 = vmatpush2.xpose.msra.mxu0 0.0
        %1531 = vmatprep.subr.mxu0 0.0
        %1532 = vmatpush2.xpose.msra.mxu0 0.0
        %1533 = vmatprep.subr.mxu0 0.0
        %1534 = vmatpush2.xpose.msra.mxu0 0.0
        %1535 = vmatprep.subr.mxu0 0.0
        %1536 = vmatpush2.xpose.msra.mxu0 0.0
        %1537 = vmatprep.subr.mxu0 0.0
        %1538 = vmatpush2.xpose.msra.mxu0 0.0
        %1539 = vmatprep.subr.mxu0 0.0
        %1540 = vmatpush2.xpose.msra.mxu0 0.0
        %1541 = vmatprep.subr.mxu0 0.0
        %1542 = vmatpush2.xpose.msra.mxu0 0.0
        %1543 = vmatprep.subr.mxu0 0.0
        %1544 = vmatpush2.xpose.msra.mxu0 0.0
        %1545 = vmatprep.subr.mxu0 0.0
        %1546 = vmatpush2.xpose.msra.mxu0 0.0
        %1547 = vmatprep.subr.mxu0 0.0
        %1548 = vmatpush2.xpose.msra.mxu0 0.0
        %1549 = vmatprep.subr.mxu0 0.0
        %1550 = vmatpush2.xpose.msra.mxu0 0.0
        %1551 = vmatprep.subr.mxu0 0.0
        %1552 = vmatpush2.xpose.msra.mxu0 0.0
        %1553 = vmatprep.subr.mxu0 0.0
        %1554 = vmatpush2.xpose.msra.mxu0 0.0
        %1555 = vmatprep.subr.mxu0 0.0
        %1556 = vmatpush2.xpose.msra.mxu0 0.0
        %1557 = vmatprep.mubr.f32.mxu0 0.0
        %1558 = vmatmul.mubr.f32.gmra.mxu0 %v1476
        %v1559 = vpop.f32.mrf.mxu0
        %v1560 = vadd.f32 0.0, %v1559
        %v1561 = vpop.f32.mrf.mxu0
        %1562 = vmatprep.mubr.f32.mxu0 0.0
        %1563 = vmatmul.mubr.f32.gmra.mxu0 %v1479
        %v1564 = vpop.f32.mrf.mxu0
        %v1565 = vadd.f32 0.0, %v1564
        %v1566 = vpop.f32.mrf.mxu0
        %1567 = vdwg.mxu0
        %v1569 = vsel %vm1474, %v1452, 0
        %v1572 = vsel %vm1474, %v1458, 0
        %1574 = vmatprep.subr.mxu0 0.0
        %1575 = vmatpush1.xpose.msra.mxu0 0.0
        %1576 = vmatprep.subr.mxu0 0.0
        %1577 = vmatpush1.xpose.msra.mxu0 0.0
        %1578 = vmatprep.subr.mxu0 0.0
        %1579 = vmatpush1.xpose.msra.mxu0 0.0
        %1580 = vmatprep.subr.mxu0 0.0
        %1581 = vmatpush1.xpose.msra.mxu0 0.0
        %1582 = vmatprep.subr.mxu0 0.0
        %1583 = vmatpush1.xpose.msra.mxu0 0.0
        %1584 = vmatprep.subr.mxu0 0.0
        %1585 = vmatpush1.xpose.msra.mxu0 0.0
        %1586 = vmatprep.subr.mxu0 0.0
        %1587 = vmatpush1.xpose.msra.mxu0 0.0
        %1588 = vmatprep.subr.mxu0 0.0
        %1589 = vmatpush1.xpose.msra.mxu0 0.0
        %1590 = vmatprep.subr.mxu0 0.0
        %1591 = vmatpush1.xpose.msra.mxu0 0.0
        %1592 = vmatprep.subr.mxu0 0.0
        %1593 = vmatpush1.xpose.msra.mxu0 0.0
        %1594 = vmatprep.subr.mxu0 0.0
        %1595 = vmatpush1.xpose.msra.mxu0 0.0
        %1596 = vmatprep.subr.mxu0 0.0
        %1597 = vmatpush1.xpose.msra.mxu0 0.0
        %1598 = vmatprep.subr.mxu0 0.0
        %1599 = vmatpush1.xpose.msra.mxu0 0.0
        %1600 = vmatprep.subr.mxu0 0.0
        %1601 = vmatpush1.xpose.msra.mxu0 0.0
        %1602 = vmatprep.subr.mxu0 0.0
        %1603 = vmatpush1.xpose.msra.mxu0 %v1572
        %1604 = vmatprep.subr.mxu0 0.0
        %1605 = vmatpush1.xpose.msra.mxu0 %v1569
        %1606 = vmatprep.subr.mxu0 0.0
        %1607 = vmatpush2.xpose.msra.mxu0 0.0
        %1608 = vmatprep.subr.mxu0 0.0
        %1609 = vmatpush2.xpose.msra.mxu0 0.0
        %1610 = vmatprep.subr.mxu0 0.0
        %1611 = vmatpush2.xpose.msra.mxu0 0.0
        %1612 = vmatprep.subr.mxu0 0.0
        %1613 = vmatpush2.xpose.msra.mxu0 0.0
        %1614 = vmatprep.subr.mxu0 0.0
        %1615 = vmatpush2.xpose.msra.mxu0 0.0
        %1616 = vmatprep.subr.mxu0 0.0
        %1617 = vmatpush2.xpose.msra.mxu0 0.0
        %1618 = vmatprep.subr.mxu0 0.0
        %1619 = vmatpush2.xpose.msra.mxu0 0.0
        %1620 = vmatprep.subr.mxu0 0.0
        %1621 = vmatpush2.xpose.msra.mxu0 0.0
        %1622 = vmatprep.subr.mxu0 0.0
        %1623 = vmatpush2.xpose.msra.mxu0 0.0
        %1624 = vmatprep.subr.mxu0 0.0
        %1625 = vmatpush2.xpose.msra.mxu0 0.0
        %1626 = vmatprep.subr.mxu0 0.0
        %1627 = vmatpush2.xpose.msra.mxu0 0.0
        %1628 = vmatprep.subr.mxu0 0.0
        %1629 = vmatpush2.xpose.msra.mxu0 0.0
        %1630 = vmatprep.subr.mxu0 0.0
        %1631 = vmatpush2.xpose.msra.mxu0 0.0
        %1632 = vmatprep.subr.mxu0 0.0
        %1633 = vmatpush2.xpose.msra.mxu0 0.0
        %1634 = vmatprep.subr.mxu0 0.0
        %1635 = vmatpush2.xpose.msra.mxu0 0.0
        %1636 = vmatprep.subr.mxu0 0.0
        %1637 = vmatpush2.xpose.msra.mxu0 0.0
        %1638 = vmatprep.mubr.f32.mxu0 0.0
        %1639 = vmatmul.mubr.f32.gmra.mxu0 %v1476
        %v1640 = vpop.f32.mrf.mxu0
        %v1641 = vadd.f32 0.0, %v1640
        %v1642 = vpop.f32.mrf.mxu0
        %1643 = vmatprep.mubr.f32.mxu0 0.0
        %1644 = vmatmul.mubr.f32.gmra.mxu0 %v1479
        %v1645 = vpop.f32.mrf.mxu0
        %v1646 = vadd.f32 0.0, %v1645
        %v1647 = vpop.f32.mrf.mxu0
        %1648 = vdwg.mxu0
        %v1649 = vsel %vm1474, %v1560, -inf
        %1650 = vmax.xlane.f32.xlu0 %v1649
        %v1651 = vpop.xlane.xlu0 %1650
        %v1652 = vsel %vm1474, %v1565, -inf
        %1653 = vmax.xlane.f32.xlu0 %v1652
        %v1654 = vpop.xlane.xlu0 %1653
        %vm1655 = vcmask 130048
        %v1656 = vsel %vm1655, %v1641, -inf
        %1657 = vmax.xlane.f32.xlu0 %v1656
        %v1658 = vpop.xlane.xlu0 %1657
        %v1659 = vsel %vm1655, %v1646, -inf
        %1660 = vmax.xlane.f32.xlu0 %v1659
        %v1661 = vpop.xlane.xlu0 %1660
        %v1662 = vmax.f32 %v1651, %v1658
        %v1663 = vmax.f32 %v1654, %v1661
        %v1664 = vsub.f32 %v1560, %v1662
        %v1665 = vsub.f32 %v1565, %v1663
        %v1666 = vmul.f32 %v1664, 1.442695
        %v1667 = vpow.pop %v1666
        %v1668 = vmul.f32 %v1665, 1.442695
        %v1669 = vpow.pop %v1668
        %v1670 = vsub.f32 %v1641, %v1662
        %v1671 = vsub.f32 %v1646, %v1663
        %v1672 = vmul.f32 %v1670, 1.442695
        %v1673 = vpow.pop %v1672
        %v1674 = vmul.f32 %v1671, 1.442695
        %v1675 = vpow.pop %v1674
        %v1676 = vsel %vm1474, %v1667, 0.0
        %1677 = vadd.xlane.f32.xlu0 %v1676
        %v1678 = vpop.xlane.xlu0 %1677
        %v1679 = vsel %vm1474, %v1669, 0.0
        %1680 = vadd.xlane.f32.xlu0 %v1679
        %v1681 = vpop.xlane.xlu0 %1680
        %v1682 = vsel %vm1655, %v1673, 0.0
        %1683 = vadd.xlane.f32.xlu0 %v1682
        %v1684 = vpop.xlane.xlu0 %1683
        %v1685 = vsel %vm1655, %v1675, 0.0
        %1686 = vadd.xlane.f32.xlu0 %v1685
        %v1687 = vpop.xlane.xlu0 %1686
        %v1688 = vadd.f32 %v1678, %v1684
        %v1689 = vadd.f32 %v1681, %v1687
        %v1691 = vsel %vm1655, %v1673, 0
        %v1694 = vsel %vm1655, %v1675, 0
        %1696 = vmatprep.subr.mxu0 0.0
        %1697 = vmatpush1.msra.mxu0 0.0
        %1698 = vmatprep.subr.mxu0 0.0
        %1699 = vmatpush1.msra.mxu0 0.0
        %1700 = vmatprep.subr.mxu0 0.0
        %1701 = vmatpush1.msra.mxu0 0.0
        %1702 = vmatprep.subr.mxu0 0.0
        %1703 = vmatpush1.msra.mxu0 0.0
        %1704 = vmatprep.subr.mxu0 0.0
        %1705 = vmatpush1.msra.mxu0 0.0
        %1706 = vmatprep.subr.mxu0 0.0
        %1707 = vmatpush1.msra.mxu0 0.0
        %1708 = vmatprep.subr.mxu0 0.0
        %1709 = vmatpush1.msra.mxu0 0.0
        %1710 = vmatprep.subr.mxu0 0.0
        %1711 = vmatpush1.msra.mxu0 0.0
        %1712 = vmatprep.subr.mxu0 0.0
        %1713 = vmatpush1.msra.mxu0 0.0
        %1714 = vmatprep.subr.mxu0 0.0
        %1715 = vmatpush1.msra.mxu0 0.0
        %1716 = vmatprep.subr.mxu0 0.0
        %1717 = vmatpush1.msra.mxu0 0.0
        %1718 = vmatprep.subr.mxu0 0.0
        %1719 = vmatpush1.msra.mxu0 0.0
        %1720 = vmatprep.subr.mxu0 0.0
        %1721 = vmatpush1.msra.mxu0 0.0
        %1722 = vmatprep.subr.mxu0 0.0
        %1723 = vmatpush1.msra.mxu0 0.0
        %1724 = vmatprep.subr.mxu0 0.0
        %1725 = vmatpush1.msra.mxu0 %v1460
        %1726 = vmatprep.subr.mxu0 0.0
        %1727 = vmatpush1.msra.mxu0 %v1454
        %1728 = vmatprep.subr.mxu0 0.0
        %1729 = vmatpush2.msra.mxu0 0.0
        %1730 = vmatprep.subr.mxu0 0.0
        %1731 = vmatpush2.msra.mxu0 0.0
        %1732 = vmatprep.subr.mxu0 0.0
        %1733 = vmatpush2.msra.mxu0 0.0
        %1734 = vmatprep.subr.mxu0 0.0
        %1735 = vmatpush2.msra.mxu0 0.0
        %1736 = vmatprep.subr.mxu0 0.0
        %1737 = vmatpush2.msra.mxu0 0.0
        %1738 = vmatprep.subr.mxu0 0.0
        %1739 = vmatpush2.msra.mxu0 0.0
        %1740 = vmatprep.subr.mxu0 0.0
        %1741 = vmatpush2.msra.mxu0 0.0
        %1742 = vmatprep.subr.mxu0 0.0
        %1743 = vmatpush2.msra.mxu0 0.0
        %1744 = vmatprep.subr.mxu0 0.0
        %1745 = vmatpush2.msra.mxu0 0.0
        %1746 = vmatprep.subr.mxu0 0.0
        %1747 = vmatpush2.msra.mxu0 0.0
        %1748 = vmatprep.subr.mxu0 0.0
        %1749 = vmatpush2.msra.mxu0 0.0
        %1750 = vmatprep.subr.mxu0 0.0
        %1751 = vmatpush2.msra.mxu0 0.0
        %1752 = vmatprep.subr.mxu0 0.0
        %1753 = vmatpush2.msra.mxu0 0.0
        %1754 = vmatprep.subr.mxu0 0.0
        %1755 = vmatpush2.msra.mxu0 0.0
        %1756 = vmatprep.subr.mxu0 0.0
        %1757 = vmatpush2.msra.mxu0 0.0
        %1758 = vmatprep.subr.mxu0 0.0
        %1759 = vmatpush2.msra.mxu0 0.0
        %1760 = vmatprep.mubr.f32.mxu0 0.0
        %1761 = vmatmul.mubr.f32.gmra.mxu0 %v1691
        %v1762 = vpop.f32.mrf.mxu0
        %v1763 = vadd.f32 0.0, %v1762
        %v1764 = vpop.f32.mrf.mxu0
        %1765 = vmatprep.mubr.f32.mxu0 0.0
        %1766 = vmatmul.mubr.f32.gmra.mxu0 %v1694
        %v1767 = vpop.f32.mrf.mxu0
        %v1768 = vadd.f32 0.0, %v1767
        %v1769 = vpop.f32.mrf.mxu0
        %1770 = vdwg.mxu0
        %v1772 = vsel %vm1474, %v1667, 0
        %v1775 = vsel %vm1474, %v1669, 0
        %1777 = vmatprep.subr.mxu0 0.0
        %1778 = vmatpush1.msra.mxu0 0.0
        %1779 = vmatprep.subr.mxu0 0.0
        %1780 = vmatpush1.msra.mxu0 0.0
        %1781 = vmatprep.subr.mxu0 0.0
        %1782 = vmatpush1.msra.mxu0 0.0
        %1783 = vmatprep.subr.mxu0 0.0
        %1784 = vmatpush1.msra.mxu0 0.0
        %1785 = vmatprep.subr.mxu0 0.0
        %1786 = vmatpush1.msra.mxu0 0.0
        %1787 = vmatprep.subr.mxu0 0.0
        %1788 = vmatpush1.msra.mxu0 0.0
        %1789 = vmatprep.subr.mxu0 0.0
        %1790 = vmatpush1.msra.mxu0 0.0
        %1791 = vmatprep.subr.mxu0 0.0
        %1792 = vmatpush1.msra.mxu0 0.0
        %1793 = vmatprep.subr.mxu0 0.0
        %1794 = vmatpush1.msra.mxu0 0.0
        %1795 = vmatprep.subr.mxu0 0.0
        %1796 = vmatpush1.msra.mxu0 0.0
        %1797 = vmatprep.subr.mxu0 0.0
        %1798 = vmatpush1.msra.mxu0 0.0
        %1799 = vmatprep.subr.mxu0 0.0
        %1800 = vmatpush1.msra.mxu0 0.0
        %1801 = vmatprep.subr.mxu0 0.0
        %1802 = vmatpush1.msra.mxu0 %v1359
        %1803 = vmatprep.subr.mxu0 0.0
        %1804 = vmatpush1.msra.mxu0 %v1353
        %1805 = vmatprep.subr.mxu0 0.0
        %1806 = vmatpush1.msra.mxu0 %v1347
        %1807 = vmatprep.subr.mxu0 0.0
        %1808 = vmatpush1.msra.mxu0 %v1341
        %1809 = vmatprep.subr.mxu0 0.0
        %1810 = vmatpush2.msra.mxu0 0.0
        %1811 = vmatprep.subr.mxu0 0.0
        %1812 = vmatpush2.msra.mxu0 0.0
        %1813 = vmatprep.subr.mxu0 0.0
        %1814 = vmatpush2.msra.mxu0 0.0
        %1815 = vmatprep.subr.mxu0 0.0
        %1816 = vmatpush2.msra.mxu0 0.0
        %1817 = vmatprep.subr.mxu0 0.0
        %1818 = vmatpush2.msra.mxu0 0.0
        %1819 = vmatprep.subr.mxu0 0.0
        %1820 = vmatpush2.msra.mxu0 0.0
        %1821 = vmatprep.subr.mxu0 0.0
        %1822 = vmatpush2.msra.mxu0 0.0
        %1823 = vmatprep.subr.mxu0 0.0
        %1824 = vmatpush2.msra.mxu0 0.0
        %1825 = vmatprep.subr.mxu0 0.0
        %1826 = vmatpush2.msra.mxu0 0.0
        %1827 = vmatprep.subr.mxu0 0.0
        %1828 = vmatpush2.msra.mxu0 0.0
        %1829 = vmatprep.subr.mxu0 0.0
        %1830 = vmatpush2.msra.mxu0 0.0
        %1831 = vmatprep.subr.mxu0 0.0
        %1832 = vmatpush2.msra.mxu0 0.0
        %1833 = vmatprep.subr.mxu0 0.0
        %1834 = vmatpush2.msra.mxu0 0.0
        %1835 = vmatprep.subr.mxu0 0.0
        %1836 = vmatpush2.msra.mxu0 0.0
        %1837 = vmatprep.subr.mxu0 0.0
        %1838 = vmatpush2.msra.mxu0 0.0
        %1839 = vmatprep.subr.mxu0 0.0
        %1840 = vmatpush2.msra.mxu0 0.0
        %1841 = vmatprep.mubr.f32.mxu0 0.0
        %1842 = vmatmul.mubr.f32.gmra.mxu0 %v1772
        %v1843 = vpop.f32.mrf.mxu0
        %v1844 = vadd.f32 %v1763, %v1843
        %v1845 = vpop.f32.mrf.mxu0
        %1846 = vmatprep.mubr.f32.mxu0 0.0
        %1847 = vmatmul.mubr.f32.gmra.mxu0 %v1775
        %v1848 = vpop.f32.mrf.mxu0
        %v1849 = vadd.f32 %v1768, %v1848
        %v1850 = vpop.f32.mrf.mxu0
        %1851 = vdwg.mxu0
        %v1852 = vrcp.pop %v1688
        %v1853 = vrcp.pop %v1689
        %v1854 = vmul.f32 %v1844, %v1852
        %v1855 = vmul.f32 %v1849, %v1853
        %1856 = vrot.lane.b32.xlu0 %v1222, 96
        %v1857 = vpop.permute.xlu0 %1856
        %1858 = vrot.lane.b32.xlu0 %v1227, 96
        %v1859 = vpop.permute.xlu0 %1858
        %1860 = vrot.lane.b32.xlu0 %v1339, 96
        %v1861 = vpop.permute.xlu0 %1860
        %1862 = vrot.lane.b32.xlu0 %v1345, 96
        %v1863 = vpop.permute.xlu0 %1862
        %1864 = vrot.lane.b32.xlu0 %v1351, 96
        %v1865 = vpop.permute.xlu0 %1864
        %1866 = vrot.lane.b32.xlu0 %v1357, 96
        %v1867 = vpop.permute.xlu0 %1866
        %v1868 = vsel %vm1474, %v1857, 0
        %v1870 = vsel %vm1474, %v1859, 0
        %v1872 = vsel %vm1474, %v1861, 0
        %v1874 = vsel %vm1474, %v1863, 0
        %v1876 = vsel %vm1474, %v1865, 0
        %v1878 = vsel %vm1474, %v1867, 0
        %1880 = vmatprep.subr.mxu0 0.0
        %1881 = vmatpush1.xpose.msra.mxu0 0.0
        %1882 = vmatprep.subr.mxu0 0.0
        %1883 = vmatpush1.xpose.msra.mxu0 0.0
        %1884 = vmatprep.subr.mxu0 0.0
        %1885 = vmatpush1.xpose.msra.mxu0 0.0
        %1886 = vmatprep.subr.mxu0 0.0
        %1887 = vmatpush1.xpose.msra.mxu0 0.0
        %1888 = vmatprep.subr.mxu0 0.0
        %1889 = vmatpush1.xpose.msra.mxu0 0.0
        %1890 = vmatprep.subr.mxu0 0.0
        %1891 = vmatpush1.xpose.msra.mxu0 0.0
        %1892 = vmatprep.subr.mxu0 0.0
        %1893 = vmatpush1.xpose.msra.mxu0 0.0
        %1894 = vmatprep.subr.mxu0 0.0
        %1895 = vmatpush1.xpose.msra.mxu0 0.0
        %1896 = vmatprep.subr.mxu0 0.0
        %1897 = vmatpush1.xpose.msra.mxu0 0.0
        %1898 = vmatprep.subr.mxu0 0.0
        %1899 = vmatpush1.xpose.msra.mxu0 0.0
        %1900 = vmatprep.subr.mxu0 0.0
        %1901 = vmatpush1.xpose.msra.mxu0 0.0
        %1902 = vmatprep.subr.mxu0 0.0
        %1903 = vmatpush1.xpose.msra.mxu0 0.0
        %1904 = vmatprep.subr.mxu0 0.0
        %1905 = vmatpush1.xpose.msra.mxu0 %v1878
        %1906 = vmatprep.subr.mxu0 0.0
        %1907 = vmatpush1.xpose.msra.mxu0 %v1876
        %1908 = vmatprep.subr.mxu0 0.0
        %1909 = vmatpush1.xpose.msra.mxu0 %v1874
        %1910 = vmatprep.subr.mxu0 0.0
        %1911 = vmatpush1.xpose.msra.mxu0 %v1872
        %1912 = vmatprep.subr.mxu0 0.0
        %1913 = vmatpush2.xpose.msra.mxu0 0.0
        %1914 = vmatprep.subr.mxu0 0.0
        %1915 = vmatpush2.xpose.msra.mxu0 0.0
        %1916 = vmatprep.subr.mxu0 0.0
        %1917 = vmatpush2.xpose.msra.mxu0 0.0
        %1918 = vmatprep.subr.mxu0 0.0
        %1919 = vmatpush2.xpose.msra.mxu0 0.0
        %1920 = vmatprep.subr.mxu0 0.0
        %1921 = vmatpush2.xpose.msra.mxu0 0.0
        %1922 = vmatprep.subr.mxu0 0.0
        %1923 = vmatpush2.xpose.msra.mxu0 0.0
        %1924 = vmatprep.subr.mxu0 0.0
        %1925 = vmatpush2.xpose.msra.mxu0 0.0
        %1926 = vmatprep.subr.mxu0 0.0
        %1927 = vmatpush2.xpose.msra.mxu0 0.0
        %1928 = vmatprep.subr.mxu0 0.0
        %1929 = vmatpush2.xpose.msra.mxu0 0.0
        %1930 = vmatprep.subr.mxu0 0.0
        %1931 = vmatpush2.xpose.msra.mxu0 0.0
        %1932 = vmatprep.subr.mxu0 0.0
        %1933 = vmatpush2.xpose.msra.mxu0 0.0
        %1934 = vmatprep.subr.mxu0 0.0
        %1935 = vmatpush2.xpose.msra.mxu0 0.0
        %1936 = vmatprep.subr.mxu0 0.0
        %1937 = vmatpush2.xpose.msra.mxu0 0.0
        %1938 = vmatprep.subr.mxu0 0.0
        %1939 = vmatpush2.xpose.msra.mxu0 0.0
        %1940 = vmatprep.subr.mxu0 0.0
        %1941 = vmatpush2.xpose.msra.mxu0 0.0
        %1942 = vmatprep.subr.mxu0 0.0
        %1943 = vmatpush2.xpose.msra.mxu0 0.0
        %1944 = vmatprep.mubr.f32.mxu0 0.0
        %1945 = vmatmul.mubr.f32.gmra.mxu0 %v1868
        %v1946 = vpop.f32.mrf.mxu0
        %v1947 = vadd.f32 0.0, %v1946
        %v1948 = vpop.f32.mrf.mxu0
        %1949 = vmatprep.mubr.f32.mxu0 0.0
        %1950 = vmatmul.mubr.f32.gmra.mxu0 %v1870
        %v1951 = vpop.f32.mrf.mxu0
        %v1952 = vadd.f32 0.0, %v1951
        %v1953 = vpop.f32.mrf.mxu0
        %1954 = vdwg.mxu0
        %1955 = vrot.lane.b32.xlu0 %v1452, 96
        %v1956 = vpop.permute.xlu0 %1955
        %1957 = vrot.lane.b32.xlu0 %v1458, 96
        %v1958 = vpop.permute.xlu0 %1957
        %v1959 = vsel %vm1474, %v1956, 0
        %v1961 = vsel %vm1474, %v1958, 0
        %1963 = vmatprep.subr.mxu0 0.0
        %1964 = vmatpush1.xpose.msra.mxu0 0.0
        %1965 = vmatprep.subr.mxu0 0.0
        %1966 = vmatpush1.xpose.msra.mxu0 0.0
        %1967 = vmatprep.subr.mxu0 0.0
        %1968 = vmatpush1.xpose.msra.mxu0 0.0
        %1969 = vmatprep.subr.mxu0 0.0
        %1970 = vmatpush1.xpose.msra.mxu0 0.0
        %1971 = vmatprep.subr.mxu0 0.0
        %1972 = vmatpush1.xpose.msra.mxu0 0.0
        %1973 = vmatprep.subr.mxu0 0.0
        %1974 = vmatpush1.xpose.msra.mxu0 0.0
        %1975 = vmatprep.subr.mxu0 0.0
        %1976 = vmatpush1.xpose.msra.mxu0 0.0
        %1977 = vmatprep.subr.mxu0 0.0
        %1978 = vmatpush1.xpose.msra.mxu0 0.0
        %1979 = vmatprep.subr.mxu0 0.0
        %1980 = vmatpush1.xpose.msra.mxu0 0.0
        %1981 = vmatprep.subr.mxu0 0.0
        %1982 = vmatpush1.xpose.msra.mxu0 0.0
        %1983 = vmatprep.subr.mxu0 0.0
        %1984 = vmatpush1.xpose.msra.mxu0 0.0
        %1985 = vmatprep.subr.mxu0 0.0
        %1986 = vmatpush1.xpose.msra.mxu0 0.0
        %1987 = vmatprep.subr.mxu0 0.0
        %1988 = vmatpush1.xpose.msra.mxu0 0.0
        %1989 = vmatprep.subr.mxu0 0.0
        %1990 = vmatpush1.xpose.msra.mxu0 0.0
        %1991 = vmatprep.subr.mxu0 0.0
        %1992 = vmatpush1.xpose.msra.mxu0 %v1961
        %1993 = vmatprep.subr.mxu0 0.0
        %1994 = vmatpush1.xpose.msra.mxu0 %v1959
        %1995 = vmatprep.subr.mxu0 0.0
        %1996 = vmatpush2.xpose.msra.mxu0 0.0
        %1997 = vmatprep.subr.mxu0 0.0
        %1998 = vmatpush2.xpose.msra.mxu0 0.0
        %1999 = vmatprep.subr.mxu0 0.0
        %2000 = vmatpush2.xpose.msra.mxu0 0.0
        %2001 = vmatprep.subr.mxu0 0.0
        %2002 = vmatpush2.xpose.msra.mxu0 0.0
        %2003 = vmatprep.subr.mxu0 0.0
        %2004 = vmatpush2.xpose.msra.mxu0 0.0
        %2005 = vmatprep.subr.mxu0 0.0
        %2006 = vmatpush2.xpose.msra.mxu0 0.0
        %2007 = vmatprep.subr.mxu0 0.0
        %2008 = vmatpush2.xpose.msra.mxu0 0.0
        %2009 = vmatprep.subr.mxu0 0.0
        %2010 = vmatpush2.xpose.msra.mxu0 0.0
        %2011 = vmatprep.subr.mxu0 0.0
        %2012 = vmatpush2.xpose.msra.mxu0 0.0
        %2013 = vmatprep.subr.mxu0 0.0
        %2014 = vmatpush2.xpose.msra.mxu0 0.0
        %2015 = vmatprep.subr.mxu0 0.0
        %2016 = vmatpush2.xpose.msra.mxu0 0.0
        %2017 = vmatprep.subr.mxu0 0.0
        %2018 = vmatpush2.xpose.msra.mxu0 0.0
        %2019 = vmatprep.subr.mxu0 0.0
        %2020 = vmatpush2.xpose.msra.mxu0 0.0
        %2021 = vmatprep.subr.mxu0 0.0
        %2022 = vmatpush2.xpose.msra.mxu0 0.0
        %2023 = vmatprep.subr.mxu0 0.0
        %2024 = vmatpush2.xpose.msra.mxu0 0.0
        %2025 = vmatprep.subr.mxu0 0.0
        %2026 = vmatpush2.xpose.msra.mxu0 0.0
        %2027 = vmatprep.mubr.f32.mxu0 0.0
        %2028 = vmatmul.mubr.f32.gmra.mxu0 %v1868
        %v2029 = vpop.f32.mrf.mxu0
        %v2030 = vadd.f32 0.0, %v2029
        %v2031 = vpop.f32.mrf.mxu0
        %2032 = vmatprep.mubr.f32.mxu0 0.0
        %2033 = vmatmul.mubr.f32.gmra.mxu0 %v1870
        %v2034 = vpop.f32.mrf.mxu0
        %v2035 = vadd.f32 0.0, %v2034
        %v2036 = vpop.f32.mrf.mxu0
        %2037 = vdwg.mxu0
        %v2038 = vsel %vm1474, %v1947, -inf
        %2039 = vmax.xlane.f32.xlu0 %v2038
        %v2040 = vpop.xlane.xlu0 %2039
        %v2041 = vsel %vm1474, %v1952, -inf
        %2042 = vmax.xlane.f32.xlu0 %v2041
        %v2043 = vpop.xlane.xlu0 %2042
        %v2044 = vsel %vm1655, %v2030, -inf
        %2045 = vmax.xlane.f32.xlu0 %v2044
        %v2046 = vpop.xlane.xlu0 %2045
        %v2047 = vsel %vm1655, %v2035, -inf
        %2048 = vmax.xlane.f32.xlu0 %v2047
        %v2049 = vpop.xlane.xlu0 %2048
        %v2050 = vmax.f32 %v2040, %v2046
        %v2051 = vmax.f32 %v2043, %v2049
        %v2052 = vsub.f32 %v1947, %v2050
        %v2053 = vsub.f32 %v1952, %v2051
        %v2054 = vmul.f32 %v2052, 1.442695
        %v2055 = vpow.pop %v2054
        %v2056 = vmul.f32 %v2053, 1.442695
        %v2057 = vpow.pop %v2056
        %v2058 = vsub.f32 %v2030, %v2050
        %v2059 = vsub.f32 %v2035, %v2051
        %v2060 = vmul.f32 %v2058, 1.442695
        %v2061 = vpow.pop %v2060
        %v2062 = vmul.f32 %v2059, 1.442695
        %v2063 = vpow.pop %v2062
        %v2064 = vsel %vm1474, %v2055, 0.0
        %2065 = vadd.xlane.f32.xlu0 %v2064
        %v2066 = vpop.xlane.xlu0 %2065
        %v2067 = vsel %vm1474, %v2057, 0.0
        %2068 = vadd.xlane.f32.xlu0 %v2067
        %v2069 = vpop.xlane.xlu0 %2068
        %v2070 = vsel %vm1655, %v2061, 0.0
        %2071 = vadd.xlane.f32.xlu0 %v2070
        %v2072 = vpop.xlane.xlu0 %2071
        %v2073 = vsel %vm1655, %v2063, 0.0
        %2074 = vadd.xlane.f32.xlu0 %v2073
        %v2075 = vpop.xlane.xlu0 %2074
        %v2076 = vadd.f32 %v2066, %v2072
        %v2077 = vadd.f32 %v2069, %v2075
        %2080 = vrot.lane.b32.xlu0 %v1454, 96
        %v2081 = vpop.permute.xlu0 %2080
        %2082 = vrot.lane.b32.xlu0 %v1460, 96
        %v2083 = vpop.permute.xlu0 %2082
        %v2087 = vsel %vm1655, %v2061, 0
        %v2090 = vsel %vm1655, %v2063, 0
        %2092 = vmatprep.subr.mxu0 0.0
        %2093 = vmatpush1.msra.mxu0 0.0
        %2094 = vmatprep.subr.mxu0 0.0
        %2095 = vmatpush1.msra.mxu0 0.0
        %2096 = vmatprep.subr.mxu0 0.0
        %2097 = vmatpush1.msra.mxu0 0.0
        %2098 = vmatprep.subr.mxu0 0.0
        %2099 = vmatpush1.msra.mxu0 0.0
        %2100 = vmatprep.subr.mxu0 0.0
        %2101 = vmatpush1.msra.mxu0 0.0
        %2102 = vmatprep.subr.mxu0 0.0
        %2103 = vmatpush1.msra.mxu0 0.0
        %2104 = vmatprep.subr.mxu0 0.0
        %2105 = vmatpush1.msra.mxu0 0.0
        %2106 = vmatprep.subr.mxu0 0.0
        %2107 = vmatpush1.msra.mxu0 0.0
        %2108 = vmatprep.subr.mxu0 0.0
        %2109 = vmatpush1.msra.mxu0 0.0
        %2110 = vmatprep.subr.mxu0 0.0
        %2111 = vmatpush1.msra.mxu0 0.0
        %2112 = vmatprep.subr.mxu0 0.0
        %2113 = vmatpush1.msra.mxu0 0.0
        %2114 = vmatprep.subr.mxu0 0.0
        %2115 = vmatpush1.msra.mxu0 0.0
        %2116 = vmatprep.subr.mxu0 0.0
        %2117 = vmatpush1.msra.mxu0 0.0
        %2118 = vmatprep.subr.mxu0 0.0
        %2119 = vmatpush1.msra.mxu0 0.0
        %2120 = vmatprep.subr.mxu0 0.0
        %2121 = vmatpush1.msra.mxu0 %v2083
        %2122 = vmatprep.subr.mxu0 0.0
        %2123 = vmatpush1.msra.mxu0 %v2081
        %2124 = vmatprep.subr.mxu0 0.0
        %2125 = vmatpush2.msra.mxu0 0.0
        %2126 = vmatprep.subr.mxu0 0.0
        %2127 = vmatpush2.msra.mxu0 0.0
        %2128 = vmatprep.subr.mxu0 0.0
        %2129 = vmatpush2.msra.mxu0 0.0
        %2130 = vmatprep.subr.mxu0 0.0
        %2131 = vmatpush2.msra.mxu0 0.0
        %2132 = vmatprep.subr.mxu0 0.0
        %2133 = vmatpush2.msra.mxu0 0.0
        %2134 = vmatprep.subr.mxu0 0.0
        %2135 = vmatpush2.msra.mxu0 0.0
        %2136 = vmatprep.subr.mxu0 0.0
        %2137 = vmatpush2.msra.mxu0 0.0
        %2138 = vmatprep.subr.mxu0 0.0
        %2139 = vmatpush2.msra.mxu0 0.0
        %2140 = vmatprep.subr.mxu0 0.0
        %2141 = vmatpush2.msra.mxu0 0.0
        %2142 = vmatprep.subr.mxu0 0.0
        %2143 = vmatpush2.msra.mxu0 0.0
        %2144 = vmatprep.subr.mxu0 0.0
        %2145 = vmatpush2.msra.mxu0 0.0
        %2146 = vmatprep.subr.mxu0 0.0
        %2147 = vmatpush2.msra.mxu0 0.0
        %2148 = vmatprep.subr.mxu0 0.0
        %2149 = vmatpush2.msra.mxu0 0.0
        %2150 = vmatprep.subr.mxu0 0.0
        %2151 = vmatpush2.msra.mxu0 0.0
        %2152 = vmatprep.subr.mxu0 0.0
        %2153 = vmatpush2.msra.mxu0 0.0
        %2154 = vmatprep.subr.mxu0 0.0
        %2155 = vmatpush2.msra.mxu0 0.0
        %2156 = vmatprep.mubr.f32.mxu0 0.0
        %2157 = vmatmul.mubr.f32.gmra.mxu0 %v2087
        %v2158 = vpop.f32.mrf.mxu0
        %v2159 = vadd.f32 0.0, %v2158
        %v2160 = vpop.f32.mrf.mxu0
        %2161 = vmatprep.mubr.f32.mxu0 0.0
        %2162 = vmatmul.mubr.f32.gmra.mxu0 %v2090
        %v2163 = vpop.f32.mrf.mxu0
        %v2164 = vadd.f32 0.0, %v2163
        %v2165 = vpop.f32.mrf.mxu0
        %2166 = vdwg.mxu0
        %2171 = vrot.lane.b32.xlu0 %v1341, 96
        %v2172 = vpop.permute.xlu0 %2171
        %2173 = vrot.lane.b32.xlu0 %v1347, 96
        %v2174 = vpop.permute.xlu0 %2173
        %2175 = vrot.lane.b32.xlu0 %v1353, 96
        %v2176 = vpop.permute.xlu0 %2175
        %2177 = vrot.lane.b32.xlu0 %v1359, 96
        %v2178 = vpop.permute.xlu0 %2177
        %v2184 = vsel %vm1474, %v2055, 0
        %v2187 = vsel %vm1474, %v2057, 0
        %2189 = vmatprep.subr.mxu0 0.0
        %2190 = vmatpush1.msra.mxu0 0.0
        %2191 = vmatprep.subr.mxu0 0.0
        %2192 = vmatpush1.msra.mxu0 0.0
        %2193 = vmatprep.subr.mxu0 0.0
        %2194 = vmatpush1.msra.mxu0 0.0
        %2195 = vmatprep.subr.mxu0 0.0
        %2196 = vmatpush1.msra.mxu0 0.0
        %2197 = vmatprep.subr.mxu0 0.0
        %2198 = vmatpush1.msra.mxu0 0.0
        %2199 = vmatprep.subr.mxu0 0.0
        %2200 = vmatpush1.msra.mxu0 0.0
        %2201 = vmatprep.subr.mxu0 0.0
        %2202 = vmatpush1.msra.mxu0 0.0
        %2203 = vmatprep.subr.mxu0 0.0
        %2204 = vmatpush1.msra.mxu0 0.0
        %2205 = vmatprep.subr.mxu0 0.0
        %2206 = vmatpush1.msra.mxu0 0.0
        %2207 = vmatprep.subr.mxu0 0.0
        %2208 = vmatpush1.msra.mxu0 0.0
        %2209 = vmatprep.subr.mxu0 0.0
        %2210 = vmatpush1.msra.mxu0 0.0
        %2211 = vmatprep.subr.mxu0 0.0
        %2212 = vmatpush1.msra.mxu0 0.0
        %2213 = vmatprep.subr.mxu0 0.0
        %2214 = vmatpush1.msra.mxu0 %v2178
        %2215 = vmatprep.subr.mxu0 0.0
        %2216 = vmatpush1.msra.mxu0 %v2176
        %2217 = vmatprep.subr.mxu0 0.0
        %2218 = vmatpush1.msra.mxu0 %v2174
        %2219 = vmatprep.subr.mxu0 0.0
        %2220 = vmatpush1.msra.mxu0 %v2172
        %2221 = vmatprep.subr.mxu0 0.0
        %2222 = vmatpush2.msra.mxu0 0.0
        %2223 = vmatprep.subr.mxu0 0.0
        %2224 = vmatpush2.msra.mxu0 0.0
        %2225 = vmatprep.subr.mxu0 0.0
        %2226 = vmatpush2.msra.mxu0 0.0
        %2227 = vmatprep.subr.mxu0 0.0
        %2228 = vmatpush2.msra.mxu0 0.0
        %2229 = vmatprep.subr.mxu0 0.0
        %2230 = vmatpush2.msra.mxu0 0.0
        %2231 = vmatprep.subr.mxu0 0.0
        %2232 = vmatpush2.msra.mxu0 0.0
        %2233 = vmatprep.subr.mxu0 0.0
        %2234 = vmatpush2.msra.mxu0 0.0
        %2235 = vmatprep.subr.mxu0 0.0
        %2236 = vmatpush2.msra.mxu0 0.0
        %2237 = vmatprep.subr.mxu0 0.0
        %2238 = vmatpush2.msra.mxu0 0.0
        %2239 = vmatprep.subr.mxu0 0.0
        %2240 = vmatpush2.msra.mxu0 0.0
        %2241 = vmatprep.subr.mxu0 0.0
        %2242 = vmatpush2.msra.mxu0 0.0
        %2243 = vmatprep.subr.mxu0 0.0
        %2244 = vmatpush2.msra.mxu0 0.0
        %2245 = vmatprep.subr.mxu0 0.0
        %2246 = vmatpush2.msra.mxu0 0.0
        %2247 = vmatprep.subr.mxu0 0.0
        %2248 = vmatpush2.msra.mxu0 0.0
        %2249 = vmatprep.subr.mxu0 0.0
        %2250 = vmatpush2.msra.mxu0 0.0
        %2251 = vmatprep.subr.mxu0 0.0
        %2252 = vmatpush2.msra.mxu0 0.0
        %2253 = vmatprep.mubr.f32.mxu0 0.0
        %2254 = vmatmul.mubr.f32.gmra.mxu0 %v2184
        %v2255 = vpop.f32.mrf.mxu0
        %v2256 = vadd.f32 %v2159, %v2255
        %v2257 = vpop.f32.mrf.mxu0
        %2258 = vmatprep.mubr.f32.mxu0 0.0
        %2259 = vmatmul.mubr.f32.gmra.mxu0 %v2187
        %v2260 = vpop.f32.mrf.mxu0
        %v2261 = vadd.f32 %v2164, %v2260
        %v2262 = vpop.f32.mrf.mxu0
        %2263 = vdwg.mxu0
        %v2264 = vrcp.pop %v2076
        %v2265 = vrcp.pop %v2077
        %v2266 = vmul.f32 %v2256, %v2264
        %v2267 = vmul.f32 %v2261, %v2265
        %2268 = vrot.lane.b32.xlu0 %v1222, 64
        %v2269 = vpop.permute.xlu0 %2268
        %2270 = vrot.lane.b32.xlu0 %v1227, 64
        %v2271 = vpop.permute.xlu0 %2270
        %2272 = vrot.lane.b32.xlu0 %v1339, 64
        %v2273 = vpop.permute.xlu0 %2272
        %2274 = vrot.lane.b32.xlu0 %v1345, 64
        %v2275 = vpop.permute.xlu0 %2274
        %2276 = vrot.lane.b32.xlu0 %v1351, 64
        %v2277 = vpop.permute.xlu0 %2276
        %2278 = vrot.lane.b32.xlu0 %v1357, 64
        %v2279 = vpop.permute.xlu0 %2278
        %v2280 = vsel %vm1474, %v2269, 0
        %v2282 = vsel %vm1474, %v2271, 0
        %v2284 = vsel %vm1474, %v2273, 0
        %v2286 = vsel %vm1474, %v2275, 0
        %v2288 = vsel %vm1474, %v2277, 0
        %v2290 = vsel %vm1474, %v2279, 0
        %2292 = vmatprep.subr.mxu0 0.0
        %2293 = vmatpush1.xpose.msra.mxu0 0.0
        %2294 = vmatprep.subr.mxu0 0.0
        %2295 = vmatpush1.xpose.msra.mxu0 0.0
        %2296 = vmatprep.subr.mxu0 0.0
        %2297 = vmatpush1.xpose.msra.mxu0 0.0
        %2298 = vmatprep.subr.mxu0 0.0
        %2299 = vmatpush1.xpose.msra.mxu0 0.0
        %2300 = vmatprep.subr.mxu0 0.0
        %2301 = vmatpush1.xpose.msra.mxu0 0.0
        %2302 = vmatprep.subr.mxu0 0.0
        %2303 = vmatpush1.xpose.msra.mxu0 0.0
        %2304 = vmatprep.subr.mxu0 0.0
        %2305 = vmatpush1.xpose.msra.mxu0 0.0
        %2306 = vmatprep.subr.mxu0 0.0
        %2307 = vmatpush1.xpose.msra.mxu0 0.0
        %2308 = vmatprep.subr.mxu0 0.0
        %2309 = vmatpush1.xpose.msra.mxu0 0.0
        %2310 = vmatprep.subr.mxu0 0.0
        %2311 = vmatpush1.xpose.msra.mxu0 0.0
        %2312 = vmatprep.subr.mxu0 0.0
        %2313 = vmatpush1.xpose.msra.mxu0 0.0
        %2314 = vmatprep.subr.mxu0 0.0
        %2315 = vmatpush1.xpose.msra.mxu0 0.0
        %2316 = vmatprep.subr.mxu0 0.0
        %2317 = vmatpush1.xpose.msra.mxu0 %v2290
        %2318 = vmatprep.subr.mxu0 0.0
        %2319 = vmatpush1.xpose.msra.mxu0 %v2288
        %2320 = vmatprep.subr.mxu0 0.0
        %2321 = vmatpush1.xpose.msra.mxu0 %v2286
        %2322 = vmatprep.subr.mxu0 0.0
        %2323 = vmatpush1.xpose.msra.mxu0 %v2284
        %2324 = vmatprep.subr.mxu0 0.0
        %2325 = vmatpush2.xpose.msra.mxu0 0.0
        %2326 = vmatprep.subr.mxu0 0.0
        %2327 = vmatpush2.xpose.msra.mxu0 0.0
        %2328 = vmatprep.subr.mxu0 0.0
        %2329 = vmatpush2.xpose.msra.mxu0 0.0
        %2330 = vmatprep.subr.mxu0 0.0
        %2331 = vmatpush2.xpose.msra.mxu0 0.0
        %2332 = vmatprep.subr.mxu0 0.0
        %2333 = vmatpush2.xpose.msra.mxu0 0.0
        %2334 = vmatprep.subr.mxu0 0.0
        %2335 = vmatpush2.xpose.msra.mxu0 0.0
        %2336 = vmatprep.subr.mxu0 0.0
        %2337 = vmatpush2.xpose.msra.mxu0 0.0
        %2338 = vmatprep.subr.mxu0 0.0
        %2339 = vmatpush2.xpose.msra.mxu0 0.0
        %2340 = vmatprep.subr.mxu0 0.0
        %2341 = vmatpush2.xpose.msra.mxu0 0.0
        %2342 = vmatprep.subr.mxu0 0.0
        %2343 = vmatpush2.xpose.msra.mxu0 0.0
        %2344 = vmatprep.subr.mxu0 0.0
        %2345 = vmatpush2.xpose.msra.mxu0 0.0
        %2346 = vmatprep.subr.mxu0 0.0
        %2347 = vmatpush2.xpose.msra.mxu0 0.0
        %2348 = vmatprep.subr.mxu0 0.0
        %2349 = vmatpush2.xpose.msra.mxu0 0.0
        %2350 = vmatprep.subr.mxu0 0.0
        %2351 = vmatpush2.xpose.msra.mxu0 0.0
        %2352 = vmatprep.subr.mxu0 0.0
        %2353 = vmatpush2.xpose.msra.mxu0 0.0
        %2354 = vmatprep.subr.mxu0 0.0
        %2355 = vmatpush2.xpose.msra.mxu0 0.0
        %2356 = vmatprep.mubr.f32.mxu0 0.0
        %2357 = vmatmul.mubr.f32.gmra.mxu0 %v2280
        %v2358 = vpop.f32.mrf.mxu0
        %v2359 = vadd.f32 0.0, %v2358
        %v2360 = vpop.f32.mrf.mxu0
        %2361 = vmatprep.mubr.f32.mxu0 0.0
        %2362 = vmatmul.mubr.f32.gmra.mxu0 %v2282
        %v2363 = vpop.f32.mrf.mxu0
        %v2364 = vadd.f32 0.0, %v2363
        %v2365 = vpop.f32.mrf.mxu0
        %2366 = vdwg.mxu0
        %2367 = vrot.lane.b32.xlu0 %v1452, 64
        %v2368 = vpop.permute.xlu0 %2367
        %2369 = vrot.lane.b32.xlu0 %v1458, 64
        %v2370 = vpop.permute.xlu0 %2369
        %v2371 = vsel %vm1474, %v2368, 0
        %v2373 = vsel %vm1474, %v2370, 0
        %2375 = vmatprep.subr.mxu0 0.0
        %2376 = vmatpush1.xpose.msra.mxu0 0.0
        %2377 = vmatprep.subr.mxu0 0.0
        %2378 = vmatpush1.xpose.msra.mxu0 0.0
        %2379 = vmatprep.subr.mxu0 0.0
        %2380 = vmatpush1.xpose.msra.mxu0 0.0
        %2381 = vmatprep.subr.mxu0 0.0
        %2382 = vmatpush1.xpose.msra.mxu0 0.0
        %2383 = vmatprep.subr.mxu0 0.0
        %2384 = vmatpush1.xpose.msra.mxu0 0.0
        %2385 = vmatprep.subr.mxu0 0.0
        %2386 = vmatpush1.xpose.msra.mxu0 0.0
        %2387 = vmatprep.subr.mxu0 0.0
        %2388 = vmatpush1.xpose.msra.mxu0 0.0
        %2389 = vmatprep.subr.mxu0 0.0
        %2390 = vmatpush1.xpose.msra.mxu0 0.0
        %2391 = vmatprep.subr.mxu0 0.0
        %2392 = vmatpush1.xpose.msra.mxu0 0.0
        %2393 = vmatprep.subr.mxu0 0.0
        %2394 = vmatpush1.xpose.msra.mxu0 0.0
        %2395 = vmatprep.subr.mxu0 0.0
        %2396 = vmatpush1.xpose.msra.mxu0 0.0
        %2397 = vmatprep.subr.mxu0 0.0
        %2398 = vmatpush1.xpose.msra.mxu0 0.0
        %2399 = vmatprep.subr.mxu0 0.0
        %2400 = vmatpush1.xpose.msra.mxu0 0.0
        %2401 = vmatprep.subr.mxu0 0.0
        %2402 = vmatpush1.xpose.msra.mxu0 0.0
        %2403 = vmatprep.subr.mxu0 0.0
        %2404 = vmatpush1.xpose.msra.mxu0 %v2373
        %2405 = vmatprep.subr.mxu0 0.0
        %2406 = vmatpush1.xpose.msra.mxu0 %v2371
        %2407 = vmatprep.subr.mxu0 0.0
        %2408 = vmatpush2.xpose.msra.mxu0 0.0
        %2409 = vmatprep.subr.mxu0 0.0
        %2410 = vmatpush2.xpose.msra.mxu0 0.0
        %2411 = vmatprep.subr.mxu0 0.0
        %2412 = vmatpush2.xpose.msra.mxu0 0.0
        %2413 = vmatprep.subr.mxu0 0.0
        %2414 = vmatpush2.xpose.msra.mxu0 0.0
        %2415 = vmatprep.subr.mxu0 0.0
        %2416 = vmatpush2.xpose.msra.mxu0 0.0
        %2417 = vmatprep.subr.mxu0 0.0
        %2418 = vmatpush2.xpose.msra.mxu0 0.0
        %2419 = vmatprep.subr.mxu0 0.0
        %2420 = vmatpush2.xpose.msra.mxu0 0.0
        %2421 = vmatprep.subr.mxu0 0.0
        %2422 = vmatpush2.xpose.msra.mxu0 0.0
        %2423 = vmatprep.subr.mxu0 0.0
        %2424 = vmatpush2.xpose.msra.mxu0 0.0
        %2425 = vmatprep.subr.mxu0 0.0
        %2426 = vmatpush2.xpose.msra.mxu0 0.0
        %2427 = vmatprep.subr.mxu0 0.0
        %2428 = vmatpush2.xpose.msra.mxu0 0.0
        %2429 = vmatprep.subr.mxu0 0.0
        %2430 = vmatpush2.xpose.msra.mxu0 0.0
        %2431 = vmatprep.subr.mxu0 0.0
        %2432 = vmatpush2.xpose.msra.mxu0 0.0
        %2433 = vmatprep.subr.mxu0 0.0
        %2434 = vmatpush2.xpose.msra.mxu0 0.0
        %2435 = vmatprep.subr.mxu0 0.0
        %2436 = vmatpush2.xpose.msra.mxu0 0.0
        %2437 = vmatprep.subr.mxu0 0.0
        %2438 = vmatpush2.xpose.msra.mxu0 0.0
        %2439 = vmatprep.mubr.f32.mxu0 0.0
        %2440 = vmatmul.mubr.f32.gmra.mxu0 %v2280
        %v2441 = vpop.f32.mrf.mxu0
        %v2442 = vadd.f32 0.0, %v2441
        %v2443 = vpop.f32.mrf.mxu0
        %2444 = vmatprep.mubr.f32.mxu0 0.0
        %2445 = vmatmul.mubr.f32.gmra.mxu0 %v2282
        %v2446 = vpop.f32.mrf.mxu0
        %v2447 = vadd.f32 0.0, %v2446
        %v2448 = vpop.f32.mrf.mxu0
        %2449 = vdwg.mxu0
        %v2450 = vsel %vm1474, %v2359, -inf
        %2451 = vmax.xlane.f32.xlu0 %v2450
        %v2452 = vpop.xlane.xlu0 %2451
        %v2453 = vsel %vm1474, %v2364, -inf
        %2454 = vmax.xlane.f32.xlu0 %v2453
        %v2455 = vpop.xlane.xlu0 %2454
        %v2456 = vsel %vm1655, %v2442, -inf
        %2457 = vmax.xlane.f32.xlu0 %v2456
        %v2458 = vpop.xlane.xlu0 %2457
        %v2459 = vsel %vm1655, %v2447, -inf
        %2460 = vmax.xlane.f32.xlu0 %v2459
        %v2461 = vpop.xlane.xlu0 %2460
        %v2462 = vmax.f32 %v2452, %v2458
        %v2463 = vmax.f32 %v2455, %v2461
        %v2464 = vsub.f32 %v2359, %v2462
        %v2465 = vsub.f32 %v2364, %v2463
        %v2466 = vmul.f32 %v2464, 1.442695
        %v2467 = vpow.pop %v2466
        %v2468 = vmul.f32 %v2465, 1.442695
        %v2469 = vpow.pop %v2468
        %v2470 = vsub.f32 %v2442, %v2462
        %v2471 = vsub.f32 %v2447, %v2463
        %v2472 = vmul.f32 %v2470, 1.442695
        %v2473 = vpow.pop %v2472
        %v2474 = vmul.f32 %v2471, 1.442695
        %v2475 = vpow.pop %v2474
        %v2476 = vsel %vm1474, %v2467, 0.0
        %2477 = vadd.xlane.f32.xlu0 %v2476
        %v2478 = vpop.xlane.xlu0 %2477
        %v2479 = vsel %vm1474, %v2469, 0.0
        %2480 = vadd.xlane.f32.xlu0 %v2479
        %v2481 = vpop.xlane.xlu0 %2480
        %v2482 = vsel %vm1655, %v2473, 0.0
        %2483 = vadd.xlane.f32.xlu0 %v2482
        %v2484 = vpop.xlane.xlu0 %2483
        %v2485 = vsel %vm1655, %v2475, 0.0
        %2486 = vadd.xlane.f32.xlu0 %v2485
        %v2487 = vpop.xlane.xlu0 %2486
        %v2488 = vadd.f32 %v2478, %v2484
        %v2489 = vadd.f32 %v2481, %v2487
        %2490 = vrot.lane.b32.xlu0 %v1454, 64
        %v2491 = vpop.permute.xlu0 %2490
        %2492 = vrot.lane.b32.xlu0 %v1460, 64
        %v2493 = vpop.permute.xlu0 %2492
        %v2497 = vsel %vm1655, %v2473, 0
        %v2500 = vsel %vm1655, %v2475, 0
        %2502 = vmatprep.subr.mxu0 0.0
        %2503 = vmatpush1.msra.mxu0 0.0
        %2504 = vmatprep.subr.mxu0 0.0
        %2505 = vmatpush1.msra.mxu0 0.0
        %2506 = vmatprep.subr.mxu0 0.0
        %2507 = vmatpush1.msra.mxu0 0.0
        %2508 = vmatprep.subr.mxu0 0.0
        %2509 = vmatpush1.msra.mxu0 0.0
        %2510 = vmatprep.subr.mxu0 0.0
        %2511 = vmatpush1.msra.mxu0 0.0
        %2512 = vmatprep.subr.mxu0 0.0
        %2513 = vmatpush1.msra.mxu0 0.0
        %2514 = vmatprep.subr.mxu0 0.0
        %2515 = vmatpush1.msra.mxu0 0.0
        %2516 = vmatprep.subr.mxu0 0.0
        %2517 = vmatpush1.msra.mxu0 0.0
        %2518 = vmatprep.subr.mxu0 0.0
        %2519 = vmatpush1.msra.mxu0 0.0
        %2520 = vmatprep.subr.mxu0 0.0
        %2521 = vmatpush1.msra.mxu0 0.0
        %2522 = vmatprep.subr.mxu0 0.0
        %2523 = vmatpush1.msra.mxu0 0.0
        %2524 = vmatprep.subr.mxu0 0.0
        %2525 = vmatpush1.msra.mxu0 0.0
        %2526 = vmatprep.subr.mxu0 0.0
        %2527 = vmatpush1.msra.mxu0 0.0
        %2528 = vmatprep.subr.mxu0 0.0
        %2529 = vmatpush1.msra.mxu0 0.0
        %2530 = vmatprep.subr.mxu0 0.0
        %2531 = vmatpush1.msra.mxu0 %v2493
        %2532 = vmatprep.subr.mxu0 0.0
        %2533 = vmatpush1.msra.mxu0 %v2491
        %2534 = vmatprep.subr.mxu0 0.0
        %2535 = vmatpush2.msra.mxu0 0.0
        %2536 = vmatprep.subr.mxu0 0.0
        %2537 = vmatpush2.msra.mxu0 0.0
        %2538 = vmatprep.subr.mxu0 0.0
        %2539 = vmatpush2.msra.mxu0 0.0
        %2540 = vmatprep.subr.mxu0 0.0
        %2541 = vmatpush2.msra.mxu0 0.0
        %2542 = vmatprep.subr.mxu0 0.0
        %2543 = vmatpush2.msra.mxu0 0.0
        %2544 = vmatprep.subr.mxu0 0.0
        %2545 = vmatpush2.msra.mxu0 0.0
        %2546 = vmatprep.subr.mxu0 0.0
        %2547 = vmatpush2.msra.mxu0 0.0
        %2548 = vmatprep.subr.mxu0 0.0
        %2549 = vmatpush2.msra.mxu0 0.0
        %2550 = vmatprep.subr.mxu0 0.0
        %2551 = vmatpush2.msra.mxu0 0.0
        %2552 = vmatprep.subr.mxu0 0.0
        %2553 = vmatpush2.msra.mxu0 0.0
        %2554 = vmatprep.subr.mxu0 0.0
        %2555 = vmatpush2.msra.mxu0 0.0
        %2556 = vmatprep.subr.mxu0 0.0
        %2557 = vmatpush2.msra.mxu0 0.0
        %2558 = vmatprep.subr.mxu0 0.0
        %2559 = vmatpush2.msra.mxu0 0.0
        %2560 = vmatprep.subr.mxu0 0.0
        %2561 = vmatpush2.msra.mxu0 0.0
        %2562 = vmatprep.subr.mxu0 0.0
        %2563 = vmatpush2.msra.mxu0 0.0
        %2564 = vmatprep.subr.mxu0 0.0
        %2565 = vmatpush2.msra.mxu0 0.0
        %2566 = vmatprep.mubr.f32.mxu0 0.0
        %2567 = vmatmul.mubr.f32.gmra.mxu0 %v2497
        %v2568 = vpop.f32.mrf.mxu0
        %v2569 = vadd.f32 0.0, %v2568
        %v2570 = vpop.f32.mrf.mxu0
        %2571 = vmatprep.mubr.f32.mxu0 0.0
        %2572 = vmatmul.mubr.f32.gmra.mxu0 %v2500
        %v2573 = vpop.f32.mrf.mxu0
        %v2574 = vadd.f32 0.0, %v2573
        %v2575 = vpop.f32.mrf.mxu0
        %2576 = vdwg.mxu0
        %2577 = vrot.lane.b32.xlu0 %v1341, 64
        %v2578 = vpop.permute.xlu0 %2577
        %2579 = vrot.lane.b32.xlu0 %v1347, 64
        %v2580 = vpop.permute.xlu0 %2579
        %2581 = vrot.lane.b32.xlu0 %v1353, 64
        %v2582 = vpop.permute.xlu0 %2581
        %2583 = vrot.lane.b32.xlu0 %v1359, 64
        %v2584 = vpop.permute.xlu0 %2583
        %v2590 = vsel %vm1474, %v2467, 0
        %v2593 = vsel %vm1474, %v2469, 0
        %2595 = vmatprep.subr.mxu0 0.0
        %2596 = vmatpush1.msra.mxu0 0.0
        %2597 = vmatprep.subr.mxu0 0.0
        %2598 = vmatpush1.msra.mxu0 0.0
        %2599 = vmatprep.subr.mxu0 0.0
        %2600 = vmatpush1.msra.mxu0 0.0
        %2601 = vmatprep.subr.mxu0 0.0
        %2602 = vmatpush1.msra.mxu0 0.0
        %2603 = vmatprep.subr.mxu0 0.0
        %2604 = vmatpush1.msra.mxu0 0.0
        %2605 = vmatprep.subr.mxu0 0.0
        %2606 = vmatpush1.msra.mxu0 0.0
        %2607 = vmatprep.subr.mxu0 0.0
        %2608 = vmatpush1.msra.mxu0 0.0
        %2609 = vmatprep.subr.mxu0 0.0
        %2610 = vmatpush1.msra.mxu0 0.0
        %2611 = vmatprep.subr.mxu0 0.0
        %2612 = vmatpush1.msra.mxu0 0.0
        %2613 = vmatprep.subr.mxu0 0.0
        %2614 = vmatpush1.msra.mxu0 0.0
        %2615 = vmatprep.subr.mxu0 0.0
        %2616 = vmatpush1.msra.mxu0 0.0
        %2617 = vmatprep.subr.mxu0 0.0
        %2618 = vmatpush1.msra.mxu0 0.0
        %2619 = vmatprep.subr.mxu0 0.0
        %2620 = vmatpush1.msra.mxu0 %v2584
        %2621 = vmatprep.subr.mxu0 0.0
        %2622 = vmatpush1.msra.mxu0 %v2582
        %2623 = vmatprep.subr.mxu0 0.0
        %2624 = vmatpush1.msra.mxu0 %v2580
        %2625 = vmatprep.subr.mxu0 0.0
        %2626 = vmatpush1.msra.mxu0 %v2578
        %2627 = vmatprep.subr.mxu0 0.0
        %2628 = vmatpush2.msra.mxu0 0.0
        %2629 = vmatprep.subr.mxu0 0.0
        %2630 = vmatpush2.msra.mxu0 0.0
        %2631 = vmatprep.subr.mxu0 0.0
        %2632 = vmatpush2.msra.mxu0 0.0
        %2633 = vmatprep.subr.mxu0 0.0
        %2634 = vmatpush2.msra.mxu0 0.0
        %2635 = vmatprep.subr.mxu0 0.0
        %2636 = vmatpush2.msra.mxu0 0.0
        %2637 = vmatprep.subr.mxu0 0.0
        %2638 = vmatpush2.msra.mxu0 0.0
        %2639 = vmatprep.subr.mxu0 0.0
        %2640 = vmatpush2.msra.mxu0 0.0
        %2641 = vmatprep.subr.mxu0 0.0
        %2642 = vmatpush2.msra.mxu0 0.0
        %2643 = vmatprep.subr.mxu0 0.0
        %2644 = vmatpush2.msra.mxu0 0.0
        %2645 = vmatprep.subr.mxu0 0.0
        %2646 = vmatpush2.msra.mxu0 0.0
        %2647 = vmatprep.subr.mxu0 0.0
        %2648 = vmatpush2.msra.mxu0 0.0
        %2649 = vmatprep.subr.mxu0 0.0
        %2650 = vmatpush2.msra.mxu0 0.0
        %2651 = vmatprep.subr.mxu0 0.0
        %2652 = vmatpush2.msra.mxu0 0.0
        %2653 = vmatprep.subr.mxu0 0.0
        %2654 = vmatpush2.msra.mxu0 0.0
        %2655 = vmatprep.subr.mxu0 0.0
        %2656 = vmatpush2.msra.mxu0 0.0
        %2657 = vmatprep.subr.mxu0 0.0
        %2658 = vmatpush2.msra.mxu0 0.0
        %2659 = vmatprep.mubr.f32.mxu0 0.0
        %2660 = vmatmul.mubr.f32.gmra.mxu0 %v2590
        %v2661 = vpop.f32.mrf.mxu0
        %v2662 = vadd.f32 %v2569, %v2661
        %v2663 = vpop.f32.mrf.mxu0
        %2664 = vmatprep.mubr.f32.mxu0 0.0
        %2665 = vmatmul.mubr.f32.gmra.mxu0 %v2593
        %v2666 = vpop.f32.mrf.mxu0
        %v2667 = vadd.f32 %v2574, %v2666
        %v2668 = vpop.f32.mrf.mxu0
        %2669 = vdwg.mxu0
        %v2670 = vrcp.pop %v2488
        %v2671 = vrcp.pop %v2489
        %v2672 = vmul.f32 %v2662, %v2670
        %v2673 = vmul.f32 %v2667, %v2671
        %2674 = vrot.lane.b32.xlu0 %v1222, 32
        %v2675 = vpop.permute.xlu0 %2674
        %2676 = vrot.lane.b32.xlu0 %v1227, 32
        %v2677 = vpop.permute.xlu0 %2676
        %2678 = vrot.lane.b32.xlu0 %v1339, 32
        %v2679 = vpop.permute.xlu0 %2678
        %2680 = vrot.lane.b32.xlu0 %v1345, 32
        %v2681 = vpop.permute.xlu0 %2680
        %2682 = vrot.lane.b32.xlu0 %v1351, 32
        %v2683 = vpop.permute.xlu0 %2682
        %2684 = vrot.lane.b32.xlu0 %v1357, 32
        %v2685 = vpop.permute.xlu0 %2684
        %v2686 = vsel %vm1474, %v2675, 0
        %v2688 = vsel %vm1474, %v2677, 0
        %v2690 = vsel %vm1474, %v2679, 0
        %v2692 = vsel %vm1474, %v2681, 0
        %v2694 = vsel %vm1474, %v2683, 0
        %v2696 = vsel %vm1474, %v2685, 0
        %2698 = vmatprep.subr.mxu0 0.0
        %2699 = vmatpush1.xpose.msra.mxu0 0.0
        %2700 = vmatprep.subr.mxu0 0.0
        %2701 = vmatpush1.xpose.msra.mxu0 0.0
        %2702 = vmatprep.subr.mxu0 0.0
        %2703 = vmatpush1.xpose.msra.mxu0 0.0
        %2704 = vmatprep.subr.mxu0 0.0
        %2705 = vmatpush1.xpose.msra.mxu0 0.0
        %2706 = vmatprep.subr.mxu0 0.0
        %2707 = vmatpush1.xpose.msra.mxu0 0.0
        %2708 = vmatprep.subr.mxu0 0.0
        %2709 = vmatpush1.xpose.msra.mxu0 0.0
        %2710 = vmatprep.subr.mxu0 0.0
        %2711 = vmatpush1.xpose.msra.mxu0 0.0
        %2712 = vmatprep.subr.mxu0 0.0
        %2713 = vmatpush1.xpose.msra.mxu0 0.0
        %2714 = vmatprep.subr.mxu0 0.0
        %2715 = vmatpush1.xpose.msra.mxu0 0.0
        %2716 = vmatprep.subr.mxu0 0.0
        %2717 = vmatpush1.xpose.msra.mxu0 0.0
        %2718 = vmatprep.subr.mxu0 0.0
        %2719 = vmatpush1.xpose.msra.mxu0 0.0
        %2720 = vmatprep.subr.mxu0 0.0
        %2721 = vmatpush1.xpose.msra.mxu0 0.0
        %2722 = vmatprep.subr.mxu0 0.0
        %2723 = vmatpush1.xpose.msra.mxu0 %v2696
        %2724 = vmatprep.subr.mxu0 0.0
        %2725 = vmatpush1.xpose.msra.mxu0 %v2694
        %2726 = vmatprep.subr.mxu0 0.0
        %2727 = vmatpush1.xpose.msra.mxu0 %v2692
        %2728 = vmatprep.subr.mxu0 0.0
        %2729 = vmatpush1.xpose.msra.mxu0 %v2690
        %2730 = vmatprep.subr.mxu0 0.0
        %2731 = vmatpush2.xpose.msra.mxu0 0.0
        %2732 = vmatprep.subr.mxu0 0.0
        %2733 = vmatpush2.xpose.msra.mxu0 0.0
        %2734 = vmatprep.subr.mxu0 0.0
        %2735 = vmatpush2.xpose.msra.mxu0 0.0
        %2736 = vmatprep.subr.mxu0 0.0
        %2737 = vmatpush2.xpose.msra.mxu0 0.0
        %2738 = vmatprep.subr.mxu0 0.0
        %2739 = vmatpush2.xpose.msra.mxu0 0.0
        %2740 = vmatprep.subr.mxu0 0.0
        %2741 = vmatpush2.xpose.msra.mxu0 0.0
        %2742 = vmatprep.subr.mxu0 0.0
        %2743 = vmatpush2.xpose.msra.mxu0 0.0
        %2744 = vmatprep.subr.mxu0 0.0
        %2745 = vmatpush2.xpose.msra.mxu0 0.0
        %2746 = vmatprep.subr.mxu0 0.0
        %2747 = vmatpush2.xpose.msra.mxu0 0.0
        %2748 = vmatprep.subr.mxu0 0.0
        %2749 = vmatpush2.xpose.msra.mxu0 0.0
        %2750 = vmatprep.subr.mxu0 0.0
        %2751 = vmatpush2.xpose.msra.mxu0 0.0
        %2752 = vmatprep.subr.mxu0 0.0
        %2753 = vmatpush2.xpose.msra.mxu0 0.0
        %2754 = vmatprep.subr.mxu0 0.0
        %2755 = vmatpush2.xpose.msra.mxu0 0.0
        %2756 = vmatprep.subr.mxu0 0.0
        %2757 = vmatpush2.xpose.msra.mxu0 0.0
        %2758 = vmatprep.subr.mxu0 0.0
        %2759 = vmatpush2.xpose.msra.mxu0 0.0
        %2760 = vmatprep.subr.mxu0 0.0
        %2761 = vmatpush2.xpose.msra.mxu0 0.0
        %2762 = vmatprep.mubr.f32.mxu0 0.0
        %2763 = vmatmul.mubr.f32.gmra.mxu0 %v2686
        %v2764 = vpop.f32.mrf.mxu0
        %v2765 = vadd.f32 0.0, %v2764
        %v2766 = vpop.f32.mrf.mxu0
        %2767 = vmatprep.mubr.f32.mxu0 0.0
        %2768 = vmatmul.mubr.f32.gmra.mxu0 %v2688
        %v2769 = vpop.f32.mrf.mxu0
        %v2770 = vadd.f32 0.0, %v2769
        %v2771 = vpop.f32.mrf.mxu0
        %2772 = vdwg.mxu0
        %2773 = vrot.lane.b32.xlu0 %v1452, 32
        %v2774 = vpop.permute.xlu0 %2773
        %2775 = vrot.lane.b32.xlu0 %v1458, 32
        %v2776 = vpop.permute.xlu0 %2775
        %v2777 = vsel %vm1474, %v2774, 0
        %v2779 = vsel %vm1474, %v2776, 0
        %2781 = vmatprep.subr.mxu0 0.0
        %2782 = vmatpush1.xpose.msra.mxu0 0.0
        %2783 = vmatprep.subr.mxu0 0.0
        %2784 = vmatpush1.xpose.msra.mxu0 0.0
        %2785 = vmatprep.subr.mxu0 0.0
        %2786 = vmatpush1.xpose.msra.mxu0 0.0
        %2787 = vmatprep.subr.mxu0 0.0
        %2788 = vmatpush1.xpose.msra.mxu0 0.0
        %2789 = vmatprep.subr.mxu0 0.0
        %2790 = vmatpush1.xpose.msra.mxu0 0.0
        %2791 = vmatprep.subr.mxu0 0.0
        %2792 = vmatpush1.xpose.msra.mxu0 0.0
        %2793 = vmatprep.subr.mxu0 0.0
        %2794 = vmatpush1.xpose.msra.mxu0 0.0
        %2795 = vmatprep.subr.mxu0 0.0
        %2796 = vmatpush1.xpose.msra.mxu0 0.0
        %2797 = vmatprep.subr.mxu0 0.0
        %2798 = vmatpush1.xpose.msra.mxu0 0.0
        %2799 = vmatprep.subr.mxu0 0.0
        %2800 = vmatpush1.xpose.msra.mxu0 0.0
        %2801 = vmatprep.subr.mxu0 0.0
        %2802 = vmatpush1.xpose.msra.mxu0 0.0
        %2803 = vmatprep.subr.mxu0 0.0
        %2804 = vmatpush1.xpose.msra.mxu0 0.0
        %2805 = vmatprep.subr.mxu0 0.0
        %2806 = vmatpush1.xpose.msra.mxu0 0.0
        %2807 = vmatprep.subr.mxu0 0.0
        %2808 = vmatpush1.xpose.msra.mxu0 0.0
        %2809 = vmatprep.subr.mxu0 0.0
        %2810 = vmatpush1.xpose.msra.mxu0 %v2779
        %2811 = vmatprep.subr.mxu0 0.0
        %2812 = vmatpush1.xpose.msra.mxu0 %v2777
        %2813 = vmatprep.subr.mxu0 0.0
        %2814 = vmatpush2.xpose.msra.mxu0 0.0
        %2815 = vmatprep.subr.mxu0 0.0
        %2816 = vmatpush2.xpose.msra.mxu0 0.0
        %2817 = vmatprep.subr.mxu0 0.0
        %2818 = vmatpush2.xpose.msra.mxu0 0.0
        %2819 = vmatprep.subr.mxu0 0.0
        %2820 = vmatpush2.xpose.msra.mxu0 0.0
        %2821 = vmatprep.subr.mxu0 0.0
        %2822 = vmatpush2.xpose.msra.mxu0 0.0
        %2823 = vmatprep.subr.mxu0 0.0
        %2824 = vmatpush2.xpose.msra.mxu0 0.0
        %2825 = vmatprep.subr.mxu0 0.0
        %2826 = vmatpush2.xpose.msra.mxu0 0.0
        %2827 = vmatprep.subr.mxu0 0.0
        %2828 = vmatpush2.xpose.msra.mxu0 0.0
        %2829 = vmatprep.subr.mxu0 0.0
        %2830 = vmatpush2.xpose.msra.mxu0 0.0
        %2831 = vmatprep.subr.mxu0 0.0
        %2832 = vmatpush2.xpose.msra.mxu0 0.0
        %2833 = vmatprep.subr.mxu0 0.0
        %2834 = vmatpush2.xpose.msra.mxu0 0.0
        %2835 = vmatprep.subr.mxu0 0.0
        %2836 = vmatpush2.xpose.msra.mxu0 0.0
        %2837 = vmatprep.subr.mxu0 0.0
        %2838 = vmatpush2.xpose.msra.mxu0 0.0
        %2839 = vmatprep.subr.mxu0 0.0
        %2840 = vmatpush2.xpose.msra.mxu0 0.0
        %2841 = vmatprep.subr.mxu0 0.0
        %2842 = vmatpush2.xpose.msra.mxu0 0.0
        %2843 = vmatprep.subr.mxu0 0.0
        %2844 = vmatpush2.xpose.msra.mxu0 0.0
        %2845 = vmatprep.mubr.f32.mxu0 0.0
        %2846 = vmatmul.mubr.f32.gmra.mxu0 %v2686
        %v2847 = vpop.f32.mrf.mxu0
        %v2848 = vadd.f32 0.0, %v2847
        %v2849 = vpop.f32.mrf.mxu0
        %2850 = vmatprep.mubr.f32.mxu0 0.0
        %2851 = vmatmul.mubr.f32.gmra.mxu0 %v2688
        %v2852 = vpop.f32.mrf.mxu0
        %v2853 = vadd.f32 0.0, %v2852
        %v2854 = vpop.f32.mrf.mxu0
        %2855 = vdwg.mxu0
        %v2856 = vsel %vm1474, %v2765, -inf
        %2857 = vmax.xlane.f32.xlu0 %v2856
        %v2858 = vpop.xlane.xlu0 %2857
        %v2859 = vsel %vm1474, %v2770, -inf
        %2860 = vmax.xlane.f32.xlu0 %v2859
        %v2861 = vpop.xlane.xlu0 %2860
        %v2862 = vsel %vm1655, %v2848, -inf
        %2863 = vmax.xlane.f32.xlu0 %v2862
        %v2864 = vpop.xlane.xlu0 %2863
        %v2865 = vsel %vm1655, %v2853, -inf
        %2866 = vmax.xlane.f32.xlu0 %v2865
        %v2867 = vpop.xlane.xlu0 %2866
        %v2868 = vmax.f32 %v2858, %v2864
        %v2869 = vmax.f32 %v2861, %v2867
        %v2870 = vsub.f32 %v2765, %v2868
        %v2871 = vsub.f32 %v2770, %v2869
        %v2872 = vmul.f32 %v2870, 1.442695
        %v2873 = vpow.pop %v2872
        %v2874 = vmul.f32 %v2871, 1.442695
        %v2875 = vpow.pop %v2874
        %v2876 = vsub.f32 %v2848, %v2868
        %v2877 = vsub.f32 %v2853, %v2869
        %v2878 = vmul.f32 %v2876, 1.442695
        %v2879 = vpow.pop %v2878
        %v2880 = vmul.f32 %v2877, 1.442695
        %v2881 = vpow.pop %v2880
        %v2882 = vsel %vm1474, %v2873, 0.0
        %2883 = vadd.xlane.f32.xlu0 %v2882
        %v2884 = vpop.xlane.xlu0 %2883
        %v2885 = vsel %vm1474, %v2875, 0.0
        %2886 = vadd.xlane.f32.xlu0 %v2885
        %v2887 = vpop.xlane.xlu0 %2886
        %v2888 = vsel %vm1655, %v2879, 0.0
        %2889 = vadd.xlane.f32.xlu0 %v2888
        %v2890 = vpop.xlane.xlu0 %2889
        %v2891 = vsel %vm1655, %v2881, 0.0
        %2892 = vadd.xlane.f32.xlu0 %v2891
        %v2893 = vpop.xlane.xlu0 %2892
        %v2894 = vadd.f32 %v2884, %v2890
        %v2895 = vadd.f32 %v2887, %v2893
        %2896 = vrot.lane.b32.xlu0 %v1454, 32
        %v2897 = vpop.permute.xlu0 %2896
        %2898 = vrot.lane.b32.xlu0 %v1460, 32
        %v2899 = vpop.permute.xlu0 %2898
        %v2903 = vsel %vm1655, %v2879, 0
        %v2906 = vsel %vm1655, %v2881, 0
        %2908 = vmatprep.subr.mxu0 0.0
        %2909 = vmatpush1.msra.mxu0 0.0
        %2910 = vmatprep.subr.mxu0 0.0
        %2911 = vmatpush1.msra.mxu0 0.0
        %2912 = vmatprep.subr.mxu0 0.0
        %2913 = vmatpush1.msra.mxu0 0.0
        %2914 = vmatprep.subr.mxu0 0.0
        %2915 = vmatpush1.msra.mxu0 0.0
        %2916 = vmatprep.subr.mxu0 0.0
        %2917 = vmatpush1.msra.mxu0 0.0
        %2918 = vmatprep.subr.mxu0 0.0
        %2919 = vmatpush1.msra.mxu0 0.0
        %2920 = vmatprep.subr.mxu0 0.0
        %2921 = vmatpush1.msra.mxu0 0.0
        %2922 = vmatprep.subr.mxu0 0.0
        %2923 = vmatpush1.msra.mxu0 0.0
        %2924 = vmatprep.subr.mxu0 0.0
        %2925 = vmatpush1.msra.mxu0 0.0
        %2926 = vmatprep.subr.mxu0 0.0
        %2927 = vmatpush1.msra.mxu0 0.0
        %2928 = vmatprep.subr.mxu0 0.0
        %2929 = vmatpush1.msra.mxu0 0.0
        %2930 = vmatprep.subr.mxu0 0.0
        %2931 = vmatpush1.msra.mxu0 0.0
        %2932 = vmatprep.subr.mxu0 0.0
        %2933 = vmatpush1.msra.mxu0 0.0
        %2934 = vmatprep.subr.mxu0 0.0
        %2935 = vmatpush1.msra.mxu0 0.0
        %2936 = vmatprep.subr.mxu0 0.0
        %2937 = vmatpush1.msra.mxu0 %v2899
        %2938 = vmatprep.subr.mxu0 0.0
        %2939 = vmatpush1.msra.mxu0 %v2897
        %2940 = vmatprep.subr.mxu0 0.0
        %2941 = vmatpush2.msra.mxu0 0.0
        %2942 = vmatprep.subr.mxu0 0.0
        %2943 = vmatpush2.msra.mxu0 0.0
        %2944 = vmatprep.subr.mxu0 0.0
        %2945 = vmatpush2.msra.mxu0 0.0
        %2946 = vmatprep.subr.mxu0 0.0
        %2947 = vmatpush2.msra.mxu0 0.0
        %2948 = vmatprep.subr.mxu0 0.0
        %2949 = vmatpush2.msra.mxu0 0.0
        %2950 = vmatprep.subr.mxu0 0.0
        %2951 = vmatpush2.msra.mxu0 0.0
        %2952 = vmatprep.subr.mxu0 0.0
        %2953 = vmatpush2.msra.mxu0 0.0
        %2954 = vmatprep.subr.mxu0 0.0
        %2955 = vmatpush2.msra.mxu0 0.0
        %2956 = vmatprep.subr.mxu0 0.0
        %2957 = vmatpush2.msra.mxu0 0.0
        %2958 = vmatprep.subr.mxu0 0.0
        %2959 = vmatpush2.msra.mxu0 0.0
        %2960 = vmatprep.subr.mxu0 0.0
        %2961 = vmatpush2.msra.mxu0 0.0
        %2962 = vmatprep.subr.mxu0 0.0
        %2963 = vmatpush2.msra.mxu0 0.0
        %2964 = vmatprep.subr.mxu0 0.0
        %2965 = vmatpush2.msra.mxu0 0.0
        %2966 = vmatprep.subr.mxu0 0.0
        %2967 = vmatpush2.msra.mxu0 0.0
        %2968 = vmatprep.subr.mxu0 0.0
        %2969 = vmatpush2.msra.mxu0 0.0
        %2970 = vmatprep.subr.mxu0 0.0
        %2971 = vmatpush2.msra.mxu0 0.0
        %2972 = vmatprep.mubr.f32.mxu0 0.0
        %2973 = vmatmul.mubr.f32.gmra.mxu0 %v2903
        %v2974 = vpop.f32.mrf.mxu0
        %v2975 = vadd.f32 0.0, %v2974
        %v2976 = vpop.f32.mrf.mxu0
        %2977 = vmatprep.mubr.f32.mxu0 0.0
        %2978 = vmatmul.mubr.f32.gmra.mxu0 %v2906
        %v2979 = vpop.f32.mrf.mxu0
        %v2980 = vadd.f32 0.0, %v2979
        %v2981 = vpop.f32.mrf.mxu0
        %2982 = vdwg.mxu0
        %2983 = vrot.lane.b32.xlu0 %v1341, 32
        %v2984 = vpop.permute.xlu0 %2983
        %2985 = vrot.lane.b32.xlu0 %v1347, 32
        %v2986 = vpop.permute.xlu0 %2985
        %2987 = vrot.lane.b32.xlu0 %v1353, 32
        %v2988 = vpop.permute.xlu0 %2987
        %2989 = vrot.lane.b32.xlu0 %v1359, 32
        %v2990 = vpop.permute.xlu0 %2989
        %v2996 = vsel %vm1474, %v2873, 0
        %v2999 = vsel %vm1474, %v2875, 0
        %3001 = vmatprep.subr.mxu0 0.0
        %3002 = vmatpush1.msra.mxu0 0.0
        %3003 = vmatprep.subr.mxu0 0.0
        %3004 = vmatpush1.msra.mxu0 0.0
        %3005 = vmatprep.subr.mxu0 0.0
        %3006 = vmatpush1.msra.mxu0 0.0
        %3007 = vmatprep.subr.mxu0 0.0
        %3008 = vmatpush1.msra.mxu0 0.0
        %3009 = vmatprep.subr.mxu0 0.0
        %3010 = vmatpush1.msra.mxu0 0.0
        %3011 = vmatprep.subr.mxu0 0.0
        %3012 = vmatpush1.msra.mxu0 0.0
        %3013 = vmatprep.subr.mxu0 0.0
        %3014 = vmatpush1.msra.mxu0 0.0
        %3015 = vmatprep.subr.mxu0 0.0
        %3016 = vmatpush1.msra.mxu0 0.0
        %3017 = vmatprep.subr.mxu0 0.0
        %3018 = vmatpush1.msra.mxu0 0.0
        %3019 = vmatprep.subr.mxu0 0.0
        %3020 = vmatpush1.msra.mxu0 0.0
        %3021 = vmatprep.subr.mxu0 0.0
        %3022 = vmatpush1.msra.mxu0 0.0
        %3023 = vmatprep.subr.mxu0 0.0
        %3024 = vmatpush1.msra.mxu0 0.0
        %3025 = vmatprep.subr.mxu0 0.0
        %3026 = vmatpush1.msra.mxu0 %v2990
        %3027 = vmatprep.subr.mxu0 0.0
        %3028 = vmatpush1.msra.mxu0 %v2988
        %3029 = vmatprep.subr.mxu0 0.0
        %3030 = vmatpush1.msra.mxu0 %v2986
        %3031 = vmatprep.subr.mxu0 0.0
        %3032 = vmatpush1.msra.mxu0 %v2984
        %3033 = vmatprep.subr.mxu0 0.0
        %3034 = vmatpush2.msra.mxu0 0.0
        %3035 = vmatprep.subr.mxu0 0.0
        %3036 = vmatpush2.msra.mxu0 0.0
        %3037 = vmatprep.subr.mxu0 0.0
        %3038 = vmatpush2.msra.mxu0 0.0
        %3039 = vmatprep.subr.mxu0 0.0
        %3040 = vmatpush2.msra.mxu0 0.0
        %3041 = vmatprep.subr.mxu0 0.0
        %3042 = vmatpush2.msra.mxu0 0.0
        %3043 = vmatprep.subr.mxu0 0.0
        %3044 = vmatpush2.msra.mxu0 0.0
        %3045 = vmatprep.subr.mxu0 0.0
        %3046 = vmatpush2.msra.mxu0 0.0
        %3047 = vmatprep.subr.mxu0 0.0
        %3048 = vmatpush2.msra.mxu0 0.0
        %3049 = vmatprep.subr.mxu0 0.0
        %3050 = vmatpush2.msra.mxu0 0.0
        %3051 = vmatprep.subr.mxu0 0.0
        %3052 = vmatpush2.msra.mxu0 0.0
        %3053 = vmatprep.subr.mxu0 0.0
        %3054 = vmatpush2.msra.mxu0 0.0
        %3055 = vmatprep.subr.mxu0 0.0
        %3056 = vmatpush2.msra.mxu0 0.0
        %3057 = vmatprep.subr.mxu0 0.0
        %3058 = vmatpush2.msra.mxu0 0.0
        %3059 = vmatprep.subr.mxu0 0.0
        %3060 = vmatpush2.msra.mxu0 0.0
        %3061 = vmatprep.subr.mxu0 0.0
        %3062 = vmatpush2.msra.mxu0 0.0
        %3063 = vmatprep.subr.mxu0 0.0
        %3064 = vmatpush2.msra.mxu0 0.0
        %3065 = vmatprep.mubr.f32.mxu0 0.0
        %3066 = vmatmul.mubr.f32.gmra.mxu0 %v2996
        %v3067 = vpop.f32.mrf.mxu0
        %v3068 = vadd.f32 %v2975, %v3067
        %v3069 = vpop.f32.mrf.mxu0
        %3070 = vmatprep.mubr.f32.mxu0 0.0
        %3071 = vmatmul.mubr.f32.gmra.mxu0 %v2999
        %v3072 = vpop.f32.mrf.mxu0
        %v3073 = vadd.f32 %v2980, %v3072
        %v3074 = vpop.f32.mrf.mxu0
        %3075 = vdwg.mxu0
        %v3076 = vrcp.pop %v2894
        %v3077 = vrcp.pop %v2895
        %v3078 = vmul.f32 %v3068, %v3076
        %v3079 = vmul.f32 %v3073, %v3077
        %3082 = vrot.lane.b32.xlu0 %v2266, 32
        %v3083 = vpop.permute.xlu0 %3082
        %3084 = vrot.lane.b32.xlu0 %v2267, 32
        %v3085 = vpop.permute.xlu0 %3084
        %3090 = vrot.lane.b32.xlu0 %v2672, 64
        %v3091 = vpop.permute.xlu0 %3090
        %3092 = vrot.lane.b32.xlu0 %v2673, 64
        %v3093 = vpop.permute.xlu0 %3092
        %3098 = vrot.lane.b32.xlu0 %v3078, 96
        %v3099 = vpop.permute.xlu0 %3098
        %3100 = vrot.lane.b32.xlu0 %v3079, 96
        %v3101 = vpop.permute.xlu0 %3100
        %v3104 = vsel %vm1474, %v1854, %v3083
        %v3105 = vsel %vm1474, %v1855, %v3085
        %vm3106 = vcmask 523264
        %v3107 = vsel %vm3106, %v3104, %v3091
        %v3108 = vsel %vm3106, %v3105, %v3093
        %vm3109 = vcmask 785408
        %v3110 = vsel %vm3109, %v3107, %v3099
        %v3111 = vsel %vm3109, %v3108, %v3101
        %v3113 = vsel %vm1474, %v1232, 0
        %v3116 = vsel %vm1474, %v1237, 0
        %v3119 = vsel %vm1474, %v1363, 0
        %v3122 = vsel %vm1474, %v1369, 0
        %v3125 = vsel %vm1474, %v1375, 0
        %v3128 = vsel %vm1474, %v1381, 0
        %3130 = vmatprep.subr.mxu0 0.0
        %3131 = vmatpush1.xpose.msra.mxu0 0.0
        %3132 = vmatprep.subr.mxu0 0.0
        %3133 = vmatpush1.xpose.msra.mxu0 0.0
        %3134 = vmatprep.subr.mxu0 0.0
        %3135 = vmatpush1.xpose.msra.mxu0 0.0
        %3136 = vmatprep.subr.mxu0 0.0
        %3137 = vmatpush1.xpose.msra.mxu0 0.0
        %3138 = vmatprep.subr.mxu0 0.0
        %3139 = vmatpush1.xpose.msra.mxu0 0.0
        %3140 = vmatprep.subr.mxu0 0.0
        %3141 = vmatpush1.xpose.msra.mxu0 0.0
        %3142 = vmatprep.subr.mxu0 0.0
        %3143 = vmatpush1.xpose.msra.mxu0 0.0
        %3144 = vmatprep.subr.mxu0 0.0
        %3145 = vmatpush1.xpose.msra.mxu0 0.0
        %3146 = vmatprep.subr.mxu0 0.0
        %3147 = vmatpush1.xpose.msra.mxu0 0.0
        %3148 = vmatprep.subr.mxu0 0.0
        %3149 = vmatpush1.xpose.msra.mxu0 0.0
        %3150 = vmatprep.subr.mxu0 0.0
        %3151 = vmatpush1.xpose.msra.mxu0 0.0
        %3152 = vmatprep.subr.mxu0 0.0
        %3153 = vmatpush1.xpose.msra.mxu0 0.0
        %3154 = vmatprep.subr.mxu0 0.0
        %3155 = vmatpush1.xpose.msra.mxu0 %v3128
        %3156 = vmatprep.subr.mxu0 0.0
        %3157 = vmatpush1.xpose.msra.mxu0 %v3125
        %3158 = vmatprep.subr.mxu0 0.0
        %3159 = vmatpush1.xpose.msra.mxu0 %v3122
        %3160 = vmatprep.subr.mxu0 0.0
        %3161 = vmatpush1.xpose.msra.mxu0 %v3119
        %3162 = vmatprep.subr.mxu0 0.0
        %3163 = vmatpush2.xpose.msra.mxu0 0.0
        %3164 = vmatprep.subr.mxu0 0.0
        %3165 = vmatpush2.xpose.msra.mxu0 0.0
        %3166 = vmatprep.subr.mxu0 0.0
        %3167 = vmatpush2.xpose.msra.mxu0 0.0
        %3168 = vmatprep.subr.mxu0 0.0
        %3169 = vmatpush2.xpose.msra.mxu0 0.0
        %3170 = vmatprep.subr.mxu0 0.0
        %3171 = vmatpush2.xpose.msra.mxu0 0.0
        %3172 = vmatprep.subr.mxu0 0.0
        %3173 = vmatpush2.xpose.msra.mxu0 0.0
        %3174 = vmatprep.subr.mxu0 0.0
        %3175 = vmatpush2.xpose.msra.mxu0 0.0
        %3176 = vmatprep.subr.mxu0 0.0
        %3177 = vmatpush2.xpose.msra.mxu0 0.0
        %3178 = vmatprep.subr.mxu0 0.0
        %3179 = vmatpush2.xpose.msra.mxu0 0.0
        %3180 = vmatprep.subr.mxu0 0.0
        %3181 = vmatpush2.xpose.msra.mxu0 0.0
        %3182 = vmatprep.subr.mxu0 0.0
        %3183 = vmatpush2.xpose.msra.mxu0 0.0
        %3184 = vmatprep.subr.mxu0 0.0
        %3185 = vmatpush2.xpose.msra.mxu0 0.0
        %3186 = vmatprep.subr.mxu0 0.0
        %3187 = vmatpush2.xpose.msra.mxu0 0.0
        %3188 = vmatprep.subr.mxu0 0.0
        %3189 = vmatpush2.xpose.msra.mxu0 0.0
        %3190 = vmatprep.subr.mxu0 0.0
        %3191 = vmatpush2.xpose.msra.mxu0 0.0
        %3192 = vmatprep.subr.mxu0 0.0
        %3193 = vmatpush2.xpose.msra.mxu0 0.0
        %3194 = vmatprep.mubr.f32.mxu0 0.0
        %3195 = vmatmul.mubr.f32.gmra.mxu0 %v3113
        %v3196 = vpop.f32.mrf.mxu0
        %v3197 = vadd.f32 0.0, %v3196
        %v3198 = vpop.f32.mrf.mxu0
        %3199 = vmatprep.mubr.f32.mxu0 0.0
        %3200 = vmatmul.mubr.f32.gmra.mxu0 %v3116
        %v3201 = vpop.f32.mrf.mxu0
        %v3202 = vadd.f32 0.0, %v3201
        %v3203 = vpop.f32.mrf.mxu0
        %3204 = vdwg.mxu0
        %v3206 = vsel %vm1474, %v1464, 0
        %v3209 = vsel %vm1474, %v1470, 0
        %3211 = vmatprep.subr.mxu0 0.0
        %3212 = vmatpush1.xpose.msra.mxu0 0.0
        %3213 = vmatprep.subr.mxu0 0.0
        %3214 = vmatpush1.xpose.msra.mxu0 0.0
        %3215 = vmatprep.subr.mxu0 0.0
        %3216 = vmatpush1.xpose.msra.mxu0 0.0
        %3217 = vmatprep.subr.mxu0 0.0
        %3218 = vmatpush1.xpose.msra.mxu0 0.0
        %3219 = vmatprep.subr.mxu0 0.0
        %3220 = vmatpush1.xpose.msra.mxu0 0.0
        %3221 = vmatprep.subr.mxu0 0.0
        %3222 = vmatpush1.xpose.msra.mxu0 0.0
        %3223 = vmatprep.subr.mxu0 0.0
        %3224 = vmatpush1.xpose.msra.mxu0 0.0
        %3225 = vmatprep.subr.mxu0 0.0
        %3226 = vmatpush1.xpose.msra.mxu0 0.0
        %3227 = vmatprep.subr.mxu0 0.0
        %3228 = vmatpush1.xpose.msra.mxu0 0.0
        %3229 = vmatprep.subr.mxu0 0.0
        %3230 = vmatpush1.xpose.msra.mxu0 0.0
        %3231 = vmatprep.subr.mxu0 0.0
        %3232 = vmatpush1.xpose.msra.mxu0 0.0
        %3233 = vmatprep.subr.mxu0 0.0
        %3234 = vmatpush1.xpose.msra.mxu0 0.0
        %3235 = vmatprep.subr.mxu0 0.0
        %3236 = vmatpush1.xpose.msra.mxu0 0.0
        %3237 = vmatprep.subr.mxu0 0.0
        %3238 = vmatpush1.xpose.msra.mxu0 0.0
        %3239 = vmatprep.subr.mxu0 0.0
        %3240 = vmatpush1.xpose.msra.mxu0 %v3209
        %3241 = vmatprep.subr.mxu0 0.0
        %3242 = vmatpush1.xpose.msra.mxu0 %v3206
        %3243 = vmatprep.subr.mxu0 0.0
        %3244 = vmatpush2.xpose.msra.mxu0 0.0
        %3245 = vmatprep.subr.mxu0 0.0
        %3246 = vmatpush2.xpose.msra.mxu0 0.0
        %3247 = vmatprep.subr.mxu0 0.0
        %3248 = vmatpush2.xpose.msra.mxu0 0.0
        %3249 = vmatprep.subr.mxu0 0.0
        %3250 = vmatpush2.xpose.msra.mxu0 0.0
        %3251 = vmatprep.subr.mxu0 0.0
        %3252 = vmatpush2.xpose.msra.mxu0 0.0
        %3253 = vmatprep.subr.mxu0 0.0
        %3254 = vmatpush2.xpose.msra.mxu0 0.0
        %3255 = vmatprep.subr.mxu0 0.0
        %3256 = vmatpush2.xpose.msra.mxu0 0.0
        %3257 = vmatprep.subr.mxu0 0.0
        %3258 = vmatpush2.xpose.msra.mxu0 0.0
        %3259 = vmatprep.subr.mxu0 0.0
        %3260 = vmatpush2.xpose.msra.mxu0 0.0
        %3261 = vmatprep.subr.mxu0 0.0
        %3262 = vmatpush2.xpose.msra.mxu0 0.0
        %3263 = vmatprep.subr.mxu0 0.0
        %3264 = vmatpush2.xpose.msra.mxu0 0.0
        %3265 = vmatprep.subr.mxu0 0.0
        %3266 = vmatpush2.xpose.msra.mxu0 0.0
        %3267 = vmatprep.subr.mxu0 0.0
        %3268 = vmatpush2.xpose.msra.mxu0 0.0
        %3269 = vmatprep.subr.mxu0 0.0
        %3270 = vmatpush2.xpose.msra.mxu0 0.0
        %3271 = vmatprep.subr.mxu0 0.0
        %3272 = vmatpush2.xpose.msra.mxu0 0.0
        %3273 = vmatprep.subr.mxu0 0.0
        %3274 = vmatpush2.xpose.msra.mxu0 0.0
        %3275 = vmatprep.mubr.f32.mxu0 0.0
        %3276 = vmatmul.mubr.f32.gmra.mxu0 %v3113
        %v3277 = vpop.f32.mrf.mxu0
        %v3278 = vadd.f32 0.0, %v3277
        %v3279 = vpop.f32.mrf.mxu0
        %3280 = vmatprep.mubr.f32.mxu0 0.0
        %3281 = vmatmul.mubr.f32.gmra.mxu0 %v3116
        %v3282 = vpop.f32.mrf.mxu0
        %v3283 = vadd.f32 0.0, %v3282
        %v3284 = vpop.f32.mrf.mxu0
        %3285 = vdwg.mxu0
        %v3286 = vsel %vm1474, %v3197, -inf
        %3287 = vmax.xlane.f32.xlu0 %v3286
        %v3288 = vpop.xlane.xlu0 %3287
        %v3289 = vsel %vm1474, %v3202, -inf
        %3290 = vmax.xlane.f32.xlu0 %v3289
        %v3291 = vpop.xlane.xlu0 %3290
        %v3292 = vsel %vm1655, %v3278, -inf
        %3293 = vmax.xlane.f32.xlu0 %v3292
        %v3294 = vpop.xlane.xlu0 %3293
        %v3295 = vsel %vm1655, %v3283, -inf
        %3296 = vmax.xlane.f32.xlu0 %v3295
        %v3297 = vpop.xlane.xlu0 %3296
        %v3298 = vmax.f32 %v3288, %v3294
        %v3299 = vmax.f32 %v3291, %v3297
        %v3300 = vsub.f32 %v3197, %v3298
        %v3301 = vsub.f32 %v3202, %v3299
        %v3302 = vmul.f32 %v3300, 1.442695
        %v3303 = vpow.pop %v3302
        %v3304 = vmul.f32 %v3301, 1.442695
        %v3305 = vpow.pop %v3304
        %v3306 = vsub.f32 %v3278, %v3298
        %v3307 = vsub.f32 %v3283, %v3299
        %v3308 = vmul.f32 %v3306, 1.442695
        %v3309 = vpow.pop %v3308
        %v3310 = vmul.f32 %v3307, 1.442695
        %v3311 = vpow.pop %v3310
        %v3312 = vsel %vm1474, %v3303, 0.0
        %3313 = vadd.xlane.f32.xlu0 %v3312
        %v3314 = vpop.xlane.xlu0 %3313
        %v3315 = vsel %vm1474, %v3305, 0.0
        %3316 = vadd.xlane.f32.xlu0 %v3315
        %v3317 = vpop.xlane.xlu0 %3316
        %v3318 = vsel %vm1655, %v3309, 0.0
        %3319 = vadd.xlane.f32.xlu0 %v3318
        %v3320 = vpop.xlane.xlu0 %3319
        %v3321 = vsel %vm1655, %v3311, 0.0
        %3322 = vadd.xlane.f32.xlu0 %v3321
        %v3323 = vpop.xlane.xlu0 %3322
        %v3324 = vadd.f32 %v3314, %v3320
        %v3325 = vadd.f32 %v3317, %v3323
        %v3327 = vsel %vm1655, %v3309, 0
        %v3330 = vsel %vm1655, %v3311, 0
        %3332 = vmatprep.subr.mxu0 0.0
        %3333 = vmatpush1.msra.mxu0 0.0
        %3334 = vmatprep.subr.mxu0 0.0
        %3335 = vmatpush1.msra.mxu0 0.0
        %3336 = vmatprep.subr.mxu0 0.0
        %3337 = vmatpush1.msra.mxu0 0.0
        %3338 = vmatprep.subr.mxu0 0.0
        %3339 = vmatpush1.msra.mxu0 0.0
        %3340 = vmatprep.subr.mxu0 0.0
        %3341 = vmatpush1.msra.mxu0 0.0
        %3342 = vmatprep.subr.mxu0 0.0
        %3343 = vmatpush1.msra.mxu0 0.0
        %3344 = vmatprep.subr.mxu0 0.0
        %3345 = vmatpush1.msra.mxu0 0.0
        %3346 = vmatprep.subr.mxu0 0.0
        %3347 = vmatpush1.msra.mxu0 0.0
        %3348 = vmatprep.subr.mxu0 0.0
        %3349 = vmatpush1.msra.mxu0 0.0
        %3350 = vmatprep.subr.mxu0 0.0
        %3351 = vmatpush1.msra.mxu0 0.0
        %3352 = vmatprep.subr.mxu0 0.0
        %3353 = vmatpush1.msra.mxu0 0.0
        %3354 = vmatprep.subr.mxu0 0.0
        %3355 = vmatpush1.msra.mxu0 0.0
        %3356 = vmatprep.subr.mxu0 0.0
        %3357 = vmatpush1.msra.mxu0 0.0
        %3358 = vmatprep.subr.mxu0 0.0
        %3359 = vmatpush1.msra.mxu0 0.0
        %3360 = vmatprep.subr.mxu0 0.0
        %3361 = vmatpush1.msra.mxu0 %v1472
        %3362 = vmatprep.subr.mxu0 0.0
        %3363 = vmatpush1.msra.mxu0 %v1466
        %3364 = vmatprep.subr.mxu0 0.0
        %3365 = vmatpush2.msra.mxu0 0.0
        %3366 = vmatprep.subr.mxu0 0.0
        %3367 = vmatpush2.msra.mxu0 0.0
        %3368 = vmatprep.subr.mxu0 0.0
        %3369 = vmatpush2.msra.mxu0 0.0
        %3370 = vmatprep.subr.mxu0 0.0
        %3371 = vmatpush2.msra.mxu0 0.0
        %3372 = vmatprep.subr.mxu0 0.0
        %3373 = vmatpush2.msra.mxu0 0.0
        %3374 = vmatprep.subr.mxu0 0.0
        %3375 = vmatpush2.msra.mxu0 0.0
        %3376 = vmatprep.subr.mxu0 0.0
        %3377 = vmatpush2.msra.mxu0 0.0
        %3378 = vmatprep.subr.mxu0 0.0
        %3379 = vmatpush2.msra.mxu0 0.0
        %3380 = vmatprep.subr.mxu0 0.0
        %3381 = vmatpush2.msra.mxu0 0.0
        %3382 = vmatprep.subr.mxu0 0.0
        %3383 = vmatpush2.msra.mxu0 0.0
        %3384 = vmatprep.subr.mxu0 0.0
        %3385 = vmatpush2.msra.mxu0 0.0
        %3386 = vmatprep.subr.mxu0 0.0
        %3387 = vmatpush2.msra.mxu0 0.0
        %3388 = vmatprep.subr.mxu0 0.0
        %3389 = vmatpush2.msra.mxu0 0.0
        %3390 = vmatprep.subr.mxu0 0.0
        %3391 = vmatpush2.msra.mxu0 0.0
        %3392 = vmatprep.subr.mxu0 0.0
        %3393 = vmatpush2.msra.mxu0 0.0
        %3394 = vmatprep.subr.mxu0 0.0
        %3395 = vmatpush2.msra.mxu0 0.0
        %3396 = vmatprep.mubr.f32.mxu0 0.0
        %3397 = vmatmul.mubr.f32.gmra.mxu0 %v3327
        %v3398 = vpop.f32.mrf.mxu0
        %v3399 = vadd.f32 0.0, %v3398
        %v3400 = vpop.f32.mrf.mxu0
        %3401 = vmatprep.mubr.f32.mxu0 0.0
        %3402 = vmatmul.mubr.f32.gmra.mxu0 %v3330
        %v3403 = vpop.f32.mrf.mxu0
        %v3404 = vadd.f32 0.0, %v3403
        %v3405 = vpop.f32.mrf.mxu0
        %3406 = vdwg.mxu0
        %v3408 = vsel %vm1474, %v3303, 0
        %v3411 = vsel %vm1474, %v3305, 0
        %3413 = vmatprep.subr.mxu0 0.0
        %3414 = vmatpush1.msra.mxu0 0.0
        %3415 = vmatprep.subr.mxu0 0.0
        %3416 = vmatpush1.msra.mxu0 0.0
        %3417 = vmatprep.subr.mxu0 0.0
        %3418 = vmatpush1.msra.mxu0 0.0
        %3419 = vmatprep.subr.mxu0 0.0
        %3420 = vmatpush1.msra.mxu0 0.0
        %3421 = vmatprep.subr.mxu0 0.0
        %3422 = vmatpush1.msra.mxu0 0.0
        %3423 = vmatprep.subr.mxu0 0.0
        %3424 = vmatpush1.msra.mxu0 0.0
        %3425 = vmatprep.subr.mxu0 0.0
        %3426 = vmatpush1.msra.mxu0 0.0
        %3427 = vmatprep.subr.mxu0 0.0
        %3428 = vmatpush1.msra.mxu0 0.0
        %3429 = vmatprep.subr.mxu0 0.0
        %3430 = vmatpush1.msra.mxu0 0.0
        %3431 = vmatprep.subr.mxu0 0.0
        %3432 = vmatpush1.msra.mxu0 0.0
        %3433 = vmatprep.subr.mxu0 0.0
        %3434 = vmatpush1.msra.mxu0 0.0
        %3435 = vmatprep.subr.mxu0 0.0
        %3436 = vmatpush1.msra.mxu0 0.0
        %3437 = vmatprep.subr.mxu0 0.0
        %3438 = vmatpush1.msra.mxu0 %v1383
        %3439 = vmatprep.subr.mxu0 0.0
        %3440 = vmatpush1.msra.mxu0 %v1377
        %3441 = vmatprep.subr.mxu0 0.0
        %3442 = vmatpush1.msra.mxu0 %v1371
        %3443 = vmatprep.subr.mxu0 0.0
        %3444 = vmatpush1.msra.mxu0 %v1365
        %3445 = vmatprep.subr.mxu0 0.0
        %3446 = vmatpush2.msra.mxu0 0.0
        %3447 = vmatprep.subr.mxu0 0.0
        %3448 = vmatpush2.msra.mxu0 0.0
        %3449 = vmatprep.subr.mxu0 0.0
        %3450 = vmatpush2.msra.mxu0 0.0
        %3451 = vmatprep.subr.mxu0 0.0
        %3452 = vmatpush2.msra.mxu0 0.0
        %3453 = vmatprep.subr.mxu0 0.0
        %3454 = vmatpush2.msra.mxu0 0.0
        %3455 = vmatprep.subr.mxu0 0.0
        %3456 = vmatpush2.msra.mxu0 0.0
        %3457 = vmatprep.subr.mxu0 0.0
        %3458 = vmatpush2.msra.mxu0 0.0
        %3459 = vmatprep.subr.mxu0 0.0
        %3460 = vmatpush2.msra.mxu0 0.0
        %3461 = vmatprep.subr.mxu0 0.0
        %3462 = vmatpush2.msra.mxu0 0.0
        %3463 = vmatprep.subr.mxu0 0.0
        %3464 = vmatpush2.msra.mxu0 0.0
        %3465 = vmatprep.subr.mxu0 0.0
        %3466 = vmatpush2.msra.mxu0 0.0
        %3467 = vmatprep.subr.mxu0 0.0
        %3468 = vmatpush2.msra.mxu0 0.0
        %3469 = vmatprep.subr.mxu0 0.0
        %3470 = vmatpush2.msra.mxu0 0.0
        %3471 = vmatprep.subr.mxu0 0.0
        %3472 = vmatpush2.msra.mxu0 0.0
        %3473 = vmatprep.subr.mxu0 0.0
        %3474 = vmatpush2.msra.mxu0 0.0
        %3475 = vmatprep.subr.mxu0 0.0
        %3476 = vmatpush2.msra.mxu0 0.0
        %3477 = vmatprep.mubr.f32.mxu0 0.0
        %3478 = vmatmul.mubr.f32.gmra.mxu0 %v3408
        %v3479 = vpop.f32.mrf.mxu0
        %v3480 = vadd.f32 %v3399, %v3479
        %v3481 = vpop.f32.mrf.mxu0
        %3482 = vmatprep.mubr.f32.mxu0 0.0
        %3483 = vmatmul.mubr.f32.gmra.mxu0 %v3411
        %v3484 = vpop.f32.mrf.mxu0
        %v3485 = vadd.f32 %v3404, %v3484
        %v3486 = vpop.f32.mrf.mxu0
        %3487 = vdwg.mxu0
        %v3488 = vrcp.pop %v3324
        %v3489 = vrcp.pop %v3325
        %v3490 = vmul.f32 %v3480, %v3488
        %v3491 = vmul.f32 %v3485, %v3489
        %3492 = vrot.lane.b32.xlu0 %v1232, 96
        %v3493 = vpop.permute.xlu0 %3492
        %3494 = vrot.lane.b32.xlu0 %v1237, 96
        %v3495 = vpop.permute.xlu0 %3494
        %3496 = vrot.lane.b32.xlu0 %v1363, 96
        %v3497 = vpop.permute.xlu0 %3496
        %3498 = vrot.lane.b32.xlu0 %v1369, 96
        %v3499 = vpop.permute.xlu0 %3498
        %3500 = vrot.lane.b32.xlu0 %v1375, 96
        %v3501 = vpop.permute.xlu0 %3500
        %3502 = vrot.lane.b32.xlu0 %v1381, 96
        %v3503 = vpop.permute.xlu0 %3502
        %v3504 = vsel %vm1474, %v3493, 0
        %v3506 = vsel %vm1474, %v3495, 0
        %v3508 = vsel %vm1474, %v3497, 0
        %v3510 = vsel %vm1474, %v3499, 0
        %v3512 = vsel %vm1474, %v3501, 0
        %v3514 = vsel %vm1474, %v3503, 0
        %3516 = vmatprep.subr.mxu0 0.0
        %3517 = vmatpush1.xpose.msra.mxu0 0.0
        %3518 = vmatprep.subr.mxu0 0.0
        %3519 = vmatpush1.xpose.msra.mxu0 0.0
        %3520 = vmatprep.subr.mxu0 0.0
        %3521 = vmatpush1.xpose.msra.mxu0 0.0
        %3522 = vmatprep.subr.mxu0 0.0
        %3523 = vmatpush1.xpose.msra.mxu0 0.0
        %3524 = vmatprep.subr.mxu0 0.0
        %3525 = vmatpush1.xpose.msra.mxu0 0.0
        %3526 = vmatprep.subr.mxu0 0.0
        %3527 = vmatpush1.xpose.msra.mxu0 0.0
        %3528 = vmatprep.subr.mxu0 0.0
        %3529 = vmatpush1.xpose.msra.mxu0 0.0
        %3530 = vmatprep.subr.mxu0 0.0
        %3531 = vmatpush1.xpose.msra.mxu0 0.0
        %3532 = vmatprep.subr.mxu0 0.0
        %3533 = vmatpush1.xpose.msra.mxu0 0.0
        %3534 = vmatprep.subr.mxu0 0.0
        %3535 = vmatpush1.xpose.msra.mxu0 0.0
        %3536 = vmatprep.subr.mxu0 0.0
        %3537 = vmatpush1.xpose.msra.mxu0 0.0
        %3538 = vmatprep.subr.mxu0 0.0
        %3539 = vmatpush1.xpose.msra.mxu0 0.0
        %3540 = vmatprep.subr.mxu0 0.0
        %3541 = vmatpush1.xpose.msra.mxu0 %v3514
        %3542 = vmatprep.subr.mxu0 0.0
        %3543 = vmatpush1.xpose.msra.mxu0 %v3512
        %3544 = vmatprep.subr.mxu0 0.0
        %3545 = vmatpush1.xpose.msra.mxu0 %v3510
        %3546 = vmatprep.subr.mxu0 0.0
        %3547 = vmatpush1.xpose.msra.mxu0 %v3508
        %3548 = vmatprep.subr.mxu0 0.0
        %3549 = vmatpush2.xpose.msra.mxu0 0.0
        %3550 = vmatprep.subr.mxu0 0.0
        %3551 = vmatpush2.xpose.msra.mxu0 0.0
        %3552 = vmatprep.subr.mxu0 0.0
        %3553 = vmatpush2.xpose.msra.mxu0 0.0
        %3554 = vmatprep.subr.mxu0 0.0
        %3555 = vmatpush2.xpose.msra.mxu0 0.0
        %3556 = vmatprep.subr.mxu0 0.0
        %3557 = vmatpush2.xpose.msra.mxu0 0.0
        %3558 = vmatprep.subr.mxu0 0.0
        %3559 = vmatpush2.xpose.msra.mxu0 0.0
        %3560 = vmatprep.subr.mxu0 0.0
        %3561 = vmatpush2.xpose.msra.mxu0 0.0
        %3562 = vmatprep.subr.mxu0 0.0
        %3563 = vmatpush2.xpose.msra.mxu0 0.0
        %3564 = vmatprep.subr.mxu0 0.0
        %3565 = vmatpush2.xpose.msra.mxu0 0.0
        %3566 = vmatprep.subr.mxu0 0.0
        %3567 = vmatpush2.xpose.msra.mxu0 0.0
        %3568 = vmatprep.subr.mxu0 0.0
        %3569 = vmatpush2.xpose.msra.mxu0 0.0
        %3570 = vmatprep.subr.mxu0 0.0
        %3571 = vmatpush2.xpose.msra.mxu0 0.0
        %3572 = vmatprep.subr.mxu0 0.0
        %3573 = vmatpush2.xpose.msra.mxu0 0.0
        %3574 = vmatprep.subr.mxu0 0.0
        %3575 = vmatpush2.xpose.msra.mxu0 0.0
        %3576 = vmatprep.subr.mxu0 0.0
        %3577 = vmatpush2.xpose.msra.mxu0 0.0
        %3578 = vmatprep.subr.mxu0 0.0
        %3579 = vmatpush2.xpose.msra.mxu0 0.0
        %3580 = vmatprep.mubr.f32.mxu0 0.0
        %3581 = vmatmul.mubr.f32.gmra.mxu0 %v3504
        %v3582 = vpop.f32.mrf.mxu0
        %v3583 = vadd.f32 0.0, %v3582
        %v3584 = vpop.f32.mrf.mxu0
        %3585 = vmatprep.mubr.f32.mxu0 0.0
        %3586 = vmatmul.mubr.f32.gmra.mxu0 %v3506
        %v3587 = vpop.f32.mrf.mxu0
        %v3588 = vadd.f32 0.0, %v3587
        %v3589 = vpop.f32.mrf.mxu0
        %3590 = vdwg.mxu0
        %3591 = vrot.lane.b32.xlu0 %v1464, 96
        %v3592 = vpop.permute.xlu0 %3591
        %3593 = vrot.lane.b32.xlu0 %v1470, 96
        %v3594 = vpop.permute.xlu0 %3593
        %v3595 = vsel %vm1474, %v3592, 0
        %v3597 = vsel %vm1474, %v3594, 0
        %3599 = vmatprep.subr.mxu0 0.0
        %3600 = vmatpush1.xpose.msra.mxu0 0.0
        %3601 = vmatprep.subr.mxu0 0.0
        %3602 = vmatpush1.xpose.msra.mxu0 0.0
        %3603 = vmatprep.subr.mxu0 0.0
        %3604 = vmatpush1.xpose.msra.mxu0 0.0
        %3605 = vmatprep.subr.mxu0 0.0
        %3606 = vmatpush1.xpose.msra.mxu0 0.0
        %3607 = vmatprep.subr.mxu0 0.0
        %3608 = vmatpush1.xpose.msra.mxu0 0.0
        %3609 = vmatprep.subr.mxu0 0.0
        %3610 = vmatpush1.xpose.msra.mxu0 0.0
        %3611 = vmatprep.subr.mxu0 0.0
        %3612 = vmatpush1.xpose.msra.mxu0 0.0
        %3613 = vmatprep.subr.mxu0 0.0
        %3614 = vmatpush1.xpose.msra.mxu0 0.0
        %3615 = vmatprep.subr.mxu0 0.0
        %3616 = vmatpush1.xpose.msra.mxu0 0.0
        %3617 = vmatprep.subr.mxu0 0.0
        %3618 = vmatpush1.xpose.msra.mxu0 0.0
        %3619 = vmatprep.subr.mxu0 0.0
        %3620 = vmatpush1.xpose.msra.mxu0 0.0
        %3621 = vmatprep.subr.mxu0 0.0
        %3622 = vmatpush1.xpose.msra.mxu0 0.0
        %3623 = vmatprep.subr.mxu0 0.0
        %3624 = vmatpush1.xpose.msra.mxu0 0.0
        %3625 = vmatprep.subr.mxu0 0.0
        %3626 = vmatpush1.xpose.msra.mxu0 0.0
        %3627 = vmatprep.subr.mxu0 0.0
        %3628 = vmatpush1.xpose.msra.mxu0 %v3597
        %3629 = vmatprep.subr.mxu0 0.0
        %3630 = vmatpush1.xpose.msra.mxu0 %v3595
        %3631 = vmatprep.subr.mxu0 0.0
        %3632 = vmatpush2.xpose.msra.mxu0 0.0
        %3633 = vmatprep.subr.mxu0 0.0
        %3634 = vmatpush2.xpose.msra.mxu0 0.0
        %3635 = vmatprep.subr.mxu0 0.0
        %3636 = vmatpush2.xpose.msra.mxu0 0.0
        %3637 = vmatprep.subr.mxu0 0.0
        %3638 = vmatpush2.xpose.msra.mxu0 0.0
        %3639 = vmatprep.subr.mxu0 0.0
        %3640 = vmatpush2.xpose.msra.mxu0 0.0
        %3641 = vmatprep.subr.mxu0 0.0
        %3642 = vmatpush2.xpose.msra.mxu0 0.0
        %3643 = vmatprep.subr.mxu0 0.0
        %3644 = vmatpush2.xpose.msra.mxu0 0.0
        %3645 = vmatprep.subr.mxu0 0.0
        %3646 = vmatpush2.xpose.msra.mxu0 0.0
        %3647 = vmatprep.subr.mxu0 0.0
        %3648 = vmatpush2.xpose.msra.mxu0 0.0
        %3649 = vmatprep.subr.mxu0 0.0
        %3650 = vmatpush2.xpose.msra.mxu0 0.0
        %3651 = vmatprep.subr.mxu0 0.0
        %3652 = vmatpush2.xpose.msra.mxu0 0.0
        %3653 = vmatprep.subr.mxu0 0.0
        %3654 = vmatpush2.xpose.msra.mxu0 0.0
        %3655 = vmatprep.subr.mxu0 0.0
        %3656 = vmatpush2.xpose.msra.mxu0 0.0
        %3657 = vmatprep.subr.mxu0 0.0
        %3658 = vmatpush2.xpose.msra.mxu0 0.0
        %3659 = vmatprep.subr.mxu0 0.0
        %3660 = vmatpush2.xpose.msra.mxu0 0.0
        %3661 = vmatprep.subr.mxu0 0.0
        %3662 = vmatpush2.xpose.msra.mxu0 0.0
        %3663 = vmatprep.mubr.f32.mxu0 0.0
        %3664 = vmatmul.mubr.f32.gmra.mxu0 %v3504
        %v3665 = vpop.f32.mrf.mxu0
        %v3666 = vadd.f32 0.0, %v3665
        %v3667 = vpop.f32.mrf.mxu0
        %3668 = vmatprep.mubr.f32.mxu0 0.0
        %3669 = vmatmul.mubr.f32.gmra.mxu0 %v3506
        %v3670 = vpop.f32.mrf.mxu0
        %v3671 = vadd.f32 0.0, %v3670
        %v3672 = vpop.f32.mrf.mxu0
        %3673 = vdwg.mxu0
        %v3674 = vsel %vm1474, %v3583, -inf
        %3675 = vmax.xlane.f32.xlu0 %v3674
        %v3676 = vpop.xlane.xlu0 %3675
        %v3677 = vsel %vm1474, %v3588, -inf
        %3678 = vmax.xlane.f32.xlu0 %v3677
        %v3679 = vpop.xlane.xlu0 %3678
        %v3680 = vsel %vm1655, %v3666, -inf
        %3681 = vmax.xlane.f32.xlu0 %v3680
        %v3682 = vpop.xlane.xlu0 %3681
        %v3683 = vsel %vm1655, %v3671, -inf
        %3684 = vmax.xlane.f32.xlu0 %v3683
        %v3685 = vpop.xlane.xlu0 %3684
        %v3686 = vmax.f32 %v3676, %v3682
        %v3687 = vmax.f32 %v3679, %v3685
        %v3688 = vsub.f32 %v3583, %v3686
        %v3689 = vsub.f32 %v3588, %v3687
        %v3690 = vmul.f32 %v3688, 1.442695
        %v3691 = vpow.pop %v3690
        %v3692 = vmul.f32 %v3689, 1.442695
        %v3693 = vpow.pop %v3692
        %v3694 = vsub.f32 %v3666, %v3686
        %v3695 = vsub.f32 %v3671, %v3687
        %v3696 = vmul.f32 %v3694, 1.442695
        %v3697 = vpow.pop %v3696
        %v3698 = vmul.f32 %v3695, 1.442695
        %v3699 = vpow.pop %v3698
        %v3700 = vsel %vm1474, %v3691, 0.0
        %3701 = vadd.xlane.f32.xlu0 %v3700
        %v3702 = vpop.xlane.xlu0 %3701
        %v3703 = vsel %vm1474, %v3693, 0.0
        %3704 = vadd.xlane.f32.xlu0 %v3703
        %v3705 = vpop.xlane.xlu0 %3704
        %v3706 = vsel %vm1655, %v3697, 0.0
        %3707 = vadd.xlane.f32.xlu0 %v3706
        %v3708 = vpop.xlane.xlu0 %3707
        %v3709 = vsel %vm1655, %v3699, 0.0
        %3710 = vadd.xlane.f32.xlu0 %v3709
        %v3711 = vpop.xlane.xlu0 %3710
        %v3712 = vadd.f32 %v3702, %v3708
        %v3713 = vadd.f32 %v3705, %v3711
        %3716 = vrot.lane.b32.xlu0 %v1466, 96
        %v3717 = vpop.permute.xlu0 %3716
        %3718 = vrot.lane.b32.xlu0 %v1472, 96
        %v3719 = vpop.permute.xlu0 %3718
        %v3723 = vsel %vm1655, %v3697, 0
        %v3726 = vsel %vm1655, %v3699, 0
        %3728 = vmatprep.subr.mxu0 0.0
        %3729 = vmatpush1.msra.mxu0 0.0
        %3730 = vmatprep.subr.mxu0 0.0
        %3731 = vmatpush1.msra.mxu0 0.0
        %3732 = vmatprep.subr.mxu0 0.0
        %3733 = vmatpush1.msra.mxu0 0.0
        %3734 = vmatprep.subr.mxu0 0.0
        %3735 = vmatpush1.msra.mxu0 0.0
        %3736 = vmatprep.subr.mxu0 0.0
        %3737 = vmatpush1.msra.mxu0 0.0
        %3738 = vmatprep.subr.mxu0 0.0
        %3739 = vmatpush1.msra.mxu0 0.0
        %3740 = vmatprep.subr.mxu0 0.0
        %3741 = vmatpush1.msra.mxu0 0.0
        %3742 = vmatprep.subr.mxu0 0.0
        %3743 = vmatpush1.msra.mxu0 0.0
        %3744 = vmatprep.subr.mxu0 0.0
        %3745 = vmatpush1.msra.mxu0 0.0
        %3746 = vmatprep.subr.mxu0 0.0
        %3747 = vmatpush1.msra.mxu0 0.0
        %3748 = vmatprep.subr.mxu0 0.0
        %3749 = vmatpush1.msra.mxu0 0.0
        %3750 = vmatprep.subr.mxu0 0.0
        %3751 = vmatpush1.msra.mxu0 0.0
        %3752 = vmatprep.subr.mxu0 0.0
        %3753 = vmatpush1.msra.mxu0 0.0
        %3754 = vmatprep.subr.mxu0 0.0
        %3755 = vmatpush1.msra.mxu0 0.0
        %3756 = vmatprep.subr.mxu0 0.0
        %3757 = vmatpush1.msra.mxu0 %v3719
        %3758 = vmatprep.subr.mxu0 0.0
        %3759 = vmatpush1.msra.mxu0 %v3717
        %3760 = vmatprep.subr.mxu0 0.0
        %3761 = vmatpush2.msra.mxu0 0.0
        %3762 = vmatprep.subr.mxu0 0.0
        %3763 = vmatpush2.msra.mxu0 0.0
        %3764 = vmatprep.subr.mxu0 0.0
        %3765 = vmatpush2.msra.mxu0 0.0
        %3766 = vmatprep.subr.mxu0 0.0
        %3767 = vmatpush2.msra.mxu0 0.0
        %3768 = vmatprep.subr.mxu0 0.0
        %3769 = vmatpush2.msra.mxu0 0.0
        %3770 = vmatprep.subr.mxu0 0.0
        %3771 = vmatpush2.msra.mxu0 0.0
        %3772 = vmatprep.subr.mxu0 0.0
        %3773 = vmatpush2.msra.mxu0 0.0
        %3774 = vmatprep.subr.mxu0 0.0
        %3775 = vmatpush2.msra.mxu0 0.0
        %3776 = vmatprep.subr.mxu0 0.0
        %3777 = vmatpush2.msra.mxu0 0.0
        %3778 = vmatprep.subr.mxu0 0.0
        %3779 = vmatpush2.msra.mxu0 0.0
        %3780 = vmatprep.subr.mxu0 0.0
        %3781 = vmatpush2.msra.mxu0 0.0
        %3782 = vmatprep.subr.mxu0 0.0
        %3783 = vmatpush2.msra.mxu0 0.0
        %3784 = vmatprep.subr.mxu0 0.0
        %3785 = vmatpush2.msra.mxu0 0.0
        %3786 = vmatprep.subr.mxu0 0.0
        %3787 = vmatpush2.msra.mxu0 0.0
        %3788 = vmatprep.subr.mxu0 0.0
        %3789 = vmatpush2.msra.mxu0 0.0
        %3790 = vmatprep.subr.mxu0 0.0
        %3791 = vmatpush2.msra.mxu0 0.0
        %3792 = vmatprep.mubr.f32.mxu0 0.0
        %3793 = vmatmul.mubr.f32.gmra.mxu0 %v3723
        %v3794 = vpop.f32.mrf.mxu0
        %v3795 = vadd.f32 0.0, %v3794
        %v3796 = vpop.f32.mrf.mxu0
        %3797 = vmatprep.mubr.f32.mxu0 0.0
        %3798 = vmatmul.mubr.f32.gmra.mxu0 %v3726
        %v3799 = vpop.f32.mrf.mxu0
        %v3800 = vadd.f32 0.0, %v3799
        %v3801 = vpop.f32.mrf.mxu0
        %3802 = vdwg.mxu0
        %3807 = vrot.lane.b32.xlu0 %v1365, 96
        %v3808 = vpop.permute.xlu0 %3807
        %3809 = vrot.lane.b32.xlu0 %v1371, 96
        %v3810 = vpop.permute.xlu0 %3809
        %3811 = vrot.lane.b32.xlu0 %v1377, 96
        %v3812 = vpop.permute.xlu0 %3811
        %3813 = vrot.lane.b32.xlu0 %v1383, 96
        %v3814 = vpop.permute.xlu0 %3813
        %v3820 = vsel %vm1474, %v3691, 0
        %v3823 = vsel %vm1474, %v3693, 0
        %3825 = vmatprep.subr.mxu0 0.0
        %3826 = vmatpush1.msra.mxu0 0.0
        %3827 = vmatprep.subr.mxu0 0.0
        %3828 = vmatpush1.msra.mxu0 0.0
        %3829 = vmatprep.subr.mxu0 0.0
        %3830 = vmatpush1.msra.mxu0 0.0
        %3831 = vmatprep.subr.mxu0 0.0
        %3832 = vmatpush1.msra.mxu0 0.0
        %3833 = vmatprep.subr.mxu0 0.0
        %3834 = vmatpush1.msra.mxu0 0.0
        %3835 = vmatprep.subr.mxu0 0.0
        %3836 = vmatpush1.msra.mxu0 0.0
        %3837 = vmatprep.subr.mxu0 0.0
        %3838 = vmatpush1.msra.mxu0 0.0
        %3839 = vmatprep.subr.mxu0 0.0
        %3840 = vmatpush1.msra.mxu0 0.0
        %3841 = vmatprep.subr.mxu0 0.0
        %3842 = vmatpush1.msra.mxu0 0.0
        %3843 = vmatprep.subr.mxu0 0.0
        %3844 = vmatpush1.msra.mxu0 0.0
        %3845 = vmatprep.subr.mxu0 0.0
        %3846 = vmatpush1.msra.mxu0 0.0
        %3847 = vmatprep.subr.mxu0 0.0
        %3848 = vmatpush1.msra.mxu0 0.0
        %3849 = vmatprep.subr.mxu0 0.0
        %3850 = vmatpush1.msra.mxu0 %v3814
        %3851 = vmatprep.subr.mxu0 0.0
        %3852 = vmatpush1.msra.mxu0 %v3812
        %3853 = vmatprep.subr.mxu0 0.0
        %3854 = vmatpush1.msra.mxu0 %v3810
        %3855 = vmatprep.subr.mxu0 0.0
        %3856 = vmatpush1.msra.mxu0 %v3808
        %3857 = vmatprep.subr.mxu0 0.0
        %3858 = vmatpush2.msra.mxu0 0.0
        %3859 = vmatprep.subr.mxu0 0.0
        %3860 = vmatpush2.msra.mxu0 0.0
        %3861 = vmatprep.subr.mxu0 0.0
        %3862 = vmatpush2.msra.mxu0 0.0
        %3863 = vmatprep.subr.mxu0 0.0
        %3864 = vmatpush2.msra.mxu0 0.0
        %3865 = vmatprep.subr.mxu0 0.0
        %3866 = vmatpush2.msra.mxu0 0.0
        %3867 = vmatprep.subr.mxu0 0.0
        %3868 = vmatpush2.msra.mxu0 0.0
        %3869 = vmatprep.subr.mxu0 0.0
        %3870 = vmatpush2.msra.mxu0 0.0
        %3871 = vmatprep.subr.mxu0 0.0
        %3872 = vmatpush2.msra.mxu0 0.0
        %3873 = vmatprep.subr.mxu0 0.0
        %3874 = vmatpush2.msra.mxu0 0.0
        %3875 = vmatprep.subr.mxu0 0.0
        %3876 = vmatpush2.msra.mxu0 0.0
        %3877 = vmatprep.subr.mxu0 0.0
        %3878 = vmatpush2.msra.mxu0 0.0
        %3879 = vmatprep.subr.mxu0 0.0
        %3880 = vmatpush2.msra.mxu0 0.0
        %3881 = vmatprep.subr.mxu0 0.0
        %3882 = vmatpush2.msra.mxu0 0.0
        %3883 = vmatprep.subr.mxu0 0.0
        %3884 = vmatpush2.msra.mxu0 0.0
        %3885 = vmatprep.subr.mxu0 0.0
        %3886 = vmatpush2.msra.mxu0 0.0
        %3887 = vmatprep.subr.mxu0 0.0
        %3888 = vmatpush2.msra.mxu0 0.0
        %3889 = vmatprep.mubr.f32.mxu0 0.0
        %3890 = vmatmul.mubr.f32.gmra.mxu0 %v3820
        %v3891 = vpop.f32.mrf.mxu0
        %v3892 = vadd.f32 %v3795, %v3891
        %v3893 = vpop.f32.mrf.mxu0
        %3894 = vmatprep.mubr.f32.mxu0 0.0
        %3895 = vmatmul.mubr.f32.gmra.mxu0 %v3823
        %v3896 = vpop.f32.mrf.mxu0
        %v3897 = vadd.f32 %v3800, %v3896
        %v3898 = vpop.f32.mrf.mxu0
        %3899 = vdwg.mxu0
        %v3900 = vrcp.pop %v3712
        %v3901 = vrcp.pop %v3713
        %v3902 = vmul.f32 %v3892, %v3900
        %v3903 = vmul.f32 %v3897, %v3901
        %3904 = vrot.lane.b32.xlu0 %v1232, 64
        %v3905 = vpop.permute.xlu0 %3904
        %3906 = vrot.lane.b32.xlu0 %v1237, 64
        %v3907 = vpop.permute.xlu0 %3906
        %3908 = vrot.lane.b32.xlu0 %v1363, 64
        %v3909 = vpop.permute.xlu0 %3908
        %3910 = vrot.lane.b32.xlu0 %v1369, 64
        %v3911 = vpop.permute.xlu0 %3910
        %3912 = vrot.lane.b32.xlu0 %v1375, 64
        %v3913 = vpop.permute.xlu0 %3912
        %3914 = vrot.lane.b32.xlu0 %v1381, 64
        %v3915 = vpop.permute.xlu0 %3914
        %v3916 = vsel %vm1474, %v3905, 0
        %v3918 = vsel %vm1474, %v3907, 0
        %v3920 = vsel %vm1474, %v3909, 0
        %v3922 = vsel %vm1474, %v3911, 0
        %v3924 = vsel %vm1474, %v3913, 0
        %v3926 = vsel %vm1474, %v3915, 0
        %3928 = vmatprep.subr.mxu0 0.0
        %3929 = vmatpush1.xpose.msra.mxu0 0.0
        %3930 = vmatprep.subr.mxu0 0.0
        %3931 = vmatpush1.xpose.msra.mxu0 0.0
        %3932 = vmatprep.subr.mxu0 0.0
        %3933 = vmatpush1.xpose.msra.mxu0 0.0
        %3934 = vmatprep.subr.mxu0 0.0
        %3935 = vmatpush1.xpose.msra.mxu0 0.0
        %3936 = vmatprep.subr.mxu0 0.0
        %3937 = vmatpush1.xpose.msra.mxu0 0.0
        %3938 = vmatprep.subr.mxu0 0.0
        %3939 = vmatpush1.xpose.msra.mxu0 0.0
        %3940 = vmatprep.subr.mxu0 0.0
        %3941 = vmatpush1.xpose.msra.mxu0 0.0
        %3942 = vmatprep.subr.mxu0 0.0
        %3943 = vmatpush1.xpose.msra.mxu0 0.0
        %3944 = vmatprep.subr.mxu0 0.0
        %3945 = vmatpush1.xpose.msra.mxu0 0.0
        %3946 = vmatprep.subr.mxu0 0.0
        %3947 = vmatpush1.xpose.msra.mxu0 0.0
        %3948 = vmatprep.subr.mxu0 0.0
        %3949 = vmatpush1.xpose.msra.mxu0 0.0
        %3950 = vmatprep.subr.mxu0 0.0
        %3951 = vmatpush1.xpose.msra.mxu0 0.0
        %3952 = vmatprep.subr.mxu0 0.0
        %3953 = vmatpush1.xpose.msra.mxu0 %v3926
        %3954 = vmatprep.subr.mxu0 0.0
        %3955 = vmatpush1.xpose.msra.mxu0 %v3924
        %3956 = vmatprep.subr.mxu0 0.0
        %3957 = vmatpush1.xpose.msra.mxu0 %v3922
        %3958 = vmatprep.subr.mxu0 0.0
        %3959 = vmatpush1.xpose.msra.mxu0 %v3920
        %3960 = vmatprep.subr.mxu0 0.0
        %3961 = vmatpush2.xpose.msra.mxu0 0.0
        %3962 = vmatprep.subr.mxu0 0.0
        %3963 = vmatpush2.xpose.msra.mxu0 0.0
        %3964 = vmatprep.subr.mxu0 0.0
        %3965 = vmatpush2.xpose.msra.mxu0 0.0
        %3966 = vmatprep.subr.mxu0 0.0
        %3967 = vmatpush2.xpose.msra.mxu0 0.0
        %3968 = vmatprep.subr.mxu0 0.0
        %3969 = vmatpush2.xpose.msra.mxu0 0.0
        %3970 = vmatprep.subr.mxu0 0.0
        %3971 = vmatpush2.xpose.msra.mxu0 0.0
        %3972 = vmatprep.subr.mxu0 0.0
        %3973 = vmatpush2.xpose.msra.mxu0 0.0
        %3974 = vmatprep.subr.mxu0 0.0
        %3975 = vmatpush2.xpose.msra.mxu0 0.0
        %3976 = vmatprep.subr.mxu0 0.0
        %3977 = vmatpush2.xpose.msra.mxu0 0.0
        %3978 = vmatprep.subr.mxu0 0.0
        %3979 = vmatpush2.xpose.msra.mxu0 0.0
        %3980 = vmatprep.subr.mxu0 0.0
        %3981 = vmatpush2.xpose.msra.mxu0 0.0
        %3982 = vmatprep.subr.mxu0 0.0
        %3983 = vmatpush2.xpose.msra.mxu0 0.0
        %3984 = vmatprep.subr.mxu0 0.0
        %3985 = vmatpush2.xpose.msra.mxu0 0.0
        %3986 = vmatprep.subr.mxu0 0.0
        %3987 = vmatpush2.xpose.msra.mxu0 0.0
        %3988 = vmatprep.subr.mxu0 0.0
        %3989 = vmatpush2.xpose.msra.mxu0 0.0
        %3990 = vmatprep.subr.mxu0 0.0
        %3991 = vmatpush2.xpose.msra.mxu0 0.0
        %3992 = vmatprep.mubr.f32.mxu0 0.0
        %3993 = vmatmul.mubr.f32.gmra.mxu0 %v3916
        %v3994 = vpop.f32.mrf.mxu0
        %v3995 = vadd.f32 0.0, %v3994
        %v3996 = vpop.f32.mrf.mxu0
        %3997 = vmatprep.mubr.f32.mxu0 0.0
        %3998 = vmatmul.mubr.f32.gmra.mxu0 %v3918
        %v3999 = vpop.f32.mrf.mxu0
        %v4000 = vadd.f32 0.0, %v3999
        %v4001 = vpop.f32.mrf.mxu0
        %4002 = vdwg.mxu0
        %4003 = vrot.lane.b32.xlu0 %v1464, 64
        %v4004 = vpop.permute.xlu0 %4003
        %4005 = vrot.lane.b32.xlu0 %v1470, 64
        %v4006 = vpop.permute.xlu0 %4005
        %v4007 = vsel %vm1474, %v4004, 0
        %v4009 = vsel %vm1474, %v4006, 0
        %4011 = vmatprep.subr.mxu0 0.0
        %4012 = vmatpush1.xpose.msra.mxu0 0.0
        %4013 = vmatprep.subr.mxu0 0.0
        %4014 = vmatpush1.xpose.msra.mxu0 0.0
        %4015 = vmatprep.subr.mxu0 0.0
        %4016 = vmatpush1.xpose.msra.mxu0 0.0
        %4017 = vmatprep.subr.mxu0 0.0
        %4018 = vmatpush1.xpose.msra.mxu0 0.0
        %4019 = vmatprep.subr.mxu0 0.0
        %4020 = vmatpush1.xpose.msra.mxu0 0.0
        %4021 = vmatprep.subr.mxu0 0.0
        %4022 = vmatpush1.xpose.msra.mxu0 0.0
        %4023 = vmatprep.subr.mxu0 0.0
        %4024 = vmatpush1.xpose.msra.mxu0 0.0
        %4025 = vmatprep.subr.mxu0 0.0
        %4026 = vmatpush1.xpose.msra.mxu0 0.0
        %4027 = vmatprep.subr.mxu0 0.0
        %4028 = vmatpush1.xpose.msra.mxu0 0.0
        %4029 = vmatprep.subr.mxu0 0.0
        %4030 = vmatpush1.xpose.msra.mxu0 0.0
        %4031 = vmatprep.subr.mxu0 0.0
        %4032 = vmatpush1.xpose.msra.mxu0 0.0
        %4033 = vmatprep.subr.mxu0 0.0
        %4034 = vmatpush1.xpose.msra.mxu0 0.0
        %4035 = vmatprep.subr.mxu0 0.0
        %4036 = vmatpush1.xpose.msra.mxu0 0.0
        %4037 = vmatprep.subr.mxu0 0.0
        %4038 = vmatpush1.xpose.msra.mxu0 0.0
        %4039 = vmatprep.subr.mxu0 0.0
        %4040 = vmatpush1.xpose.msra.mxu0 %v4009
        %4041 = vmatprep.subr.mxu0 0.0
        %4042 = vmatpush1.xpose.msra.mxu0 %v4007
        %4043 = vmatprep.subr.mxu0 0.0
        %4044 = vmatpush2.xpose.msra.mxu0 0.0
        %4045 = vmatprep.subr.mxu0 0.0
        %4046 = vmatpush2.xpose.msra.mxu0 0.0
        %4047 = vmatprep.subr.mxu0 0.0
        %4048 = vmatpush2.xpose.msra.mxu0 0.0
        %4049 = vmatprep.subr.mxu0 0.0
        %4050 = vmatpush2.xpose.msra.mxu0 0.0
        %4051 = vmatprep.subr.mxu0 0.0
        %4052 = vmatpush2.xpose.msra.mxu0 0.0
        %4053 = vmatprep.subr.mxu0 0.0
        %4054 = vmatpush2.xpose.msra.mxu0 0.0
        %4055 = vmatprep.subr.mxu0 0.0
        %4056 = vmatpush2.xpose.msra.mxu0 0.0
        %4057 = vmatprep.subr.mxu0 0.0
        %4058 = vmatpush2.xpose.msra.mxu0 0.0
        %4059 = vmatprep.subr.mxu0 0.0
        %4060 = vmatpush2.xpose.msra.mxu0 0.0
        %4061 = vmatprep.subr.mxu0 0.0
        %4062 = vmatpush2.xpose.msra.mxu0 0.0
        %4063 = vmatprep.subr.mxu0 0.0
        %4064 = vmatpush2.xpose.msra.mxu0 0.0
        %4065 = vmatprep.subr.mxu0 0.0
        %4066 = vmatpush2.xpose.msra.mxu0 0.0
        %4067 = vmatprep.subr.mxu0 0.0
        %4068 = vmatpush2.xpose.msra.mxu0 0.0
        %4069 = vmatprep.subr.mxu0 0.0
        %4070 = vmatpush2.xpose.msra.mxu0 0.0
        %4071 = vmatprep.subr.mxu0 0.0
        %4072 = vmatpush2.xpose.msra.mxu0 0.0
        %4073 = vmatprep.subr.mxu0 0.0
        %4074 = vmatpush2.xpose.msra.mxu0 0.0
        %4075 = vmatprep.mubr.f32.mxu0 0.0
        %4076 = vmatmul.mubr.f32.gmra.mxu0 %v3916
        %v4077 = vpop.f32.mrf.mxu0
        %v4078 = vadd.f32 0.0, %v4077
        %v4079 = vpop.f32.mrf.mxu0
        %4080 = vmatprep.mubr.f32.mxu0 0.0
        %4081 = vmatmul.mubr.f32.gmra.mxu0 %v3918
        %v4082 = vpop.f32.mrf.mxu0
        %v4083 = vadd.f32 0.0, %v4082
        %v4084 = vpop.f32.mrf.mxu0
        %4085 = vdwg.mxu0
        %v4086 = vsel %vm1474, %v3995, -inf
        %4087 = vmax.xlane.f32.xlu0 %v4086
        %v4088 = vpop.xlane.xlu0 %4087
        %v4089 = vsel %vm1474, %v4000, -inf
        %4090 = vmax.xlane.f32.xlu0 %v4089
        %v4091 = vpop.xlane.xlu0 %4090
        %v4092 = vsel %vm1655, %v4078, -inf
        %4093 = vmax.xlane.f32.xlu0 %v4092
        %v4094 = vpop.xlane.xlu0 %4093
        %v4095 = vsel %vm1655, %v4083, -inf
        %4096 = vmax.xlane.f32.xlu0 %v4095
        %v4097 = vpop.xlane.xlu0 %4096
        %v4098 = vmax.f32 %v4088, %v4094
        %v4099 = vmax.f32 %v4091, %v4097
        %v4100 = vsub.f32 %v3995, %v4098
        %v4101 = vsub.f32 %v4000, %v4099
        %v4102 = vmul.f32 %v4100, 1.442695
        %v4103 = vpow.pop %v4102
        %v4104 = vmul.f32 %v4101, 1.442695
        %v4105 = vpow.pop %v4104
        %v4106 = vsub.f32 %v4078, %v4098
        %v4107 = vsub.f32 %v4083, %v4099
        %v4108 = vmul.f32 %v4106, 1.442695
        %v4109 = vpow.pop %v4108
        %v4110 = vmul.f32 %v4107, 1.442695
        %v4111 = vpow.pop %v4110
        %v4112 = vsel %vm1474, %v4103, 0.0
        %4113 = vadd.xlane.f32.xlu0 %v4112
        %v4114 = vpop.xlane.xlu0 %4113
        %v4115 = vsel %vm1474, %v4105, 0.0
        %4116 = vadd.xlane.f32.xlu0 %v4115
        %v4117 = vpop.xlane.xlu0 %4116
        %v4118 = vsel %vm1655, %v4109, 0.0
        %4119 = vadd.xlane.f32.xlu0 %v4118
        %v4120 = vpop.xlane.xlu0 %4119
        %v4121 = vsel %vm1655, %v4111, 0.0
        %4122 = vadd.xlane.f32.xlu0 %v4121
        %v4123 = vpop.xlane.xlu0 %4122
        %v4124 = vadd.f32 %v4114, %v4120
        %v4125 = vadd.f32 %v4117, %v4123
        %4126 = vrot.lane.b32.xlu0 %v1466, 64
        %v4127 = vpop.permute.xlu0 %4126
        %4128 = vrot.lane.b32.xlu0 %v1472, 64
        %v4129 = vpop.permute.xlu0 %4128
        %v4133 = vsel %vm1655, %v4109, 0
        %v4136 = vsel %vm1655, %v4111, 0
        %4138 = vmatprep.subr.mxu0 0.0
        %4139 = vmatpush1.msra.mxu0 0.0
        %4140 = vmatprep.subr.mxu0 0.0
        %4141 = vmatpush1.msra.mxu0 0.0
        %4142 = vmatprep.subr.mxu0 0.0
        %4143 = vmatpush1.msra.mxu0 0.0
        %4144 = vmatprep.subr.mxu0 0.0
        %4145 = vmatpush1.msra.mxu0 0.0
        %4146 = vmatprep.subr.mxu0 0.0
        %4147 = vmatpush1.msra.mxu0 0.0
        %4148 = vmatprep.subr.mxu0 0.0
        %4149 = vmatpush1.msra.mxu0 0.0
        %4150 = vmatprep.subr.mxu0 0.0
        %4151 = vmatpush1.msra.mxu0 0.0
        %4152 = vmatprep.subr.mxu0 0.0
        %4153 = vmatpush1.msra.mxu0 0.0
        %4154 = vmatprep.subr.mxu0 0.0
        %4155 = vmatpush1.msra.mxu0 0.0
        %4156 = vmatprep.subr.mxu0 0.0
        %4157 = vmatpush1.msra.mxu0 0.0
        %4158 = vmatprep.subr.mxu0 0.0
        %4159 = vmatpush1.msra.mxu0 0.0
        %4160 = vmatprep.subr.mxu0 0.0
        %4161 = vmatpush1.msra.mxu0 0.0
        %4162 = vmatprep.subr.mxu0 0.0
        %4163 = vmatpush1.msra.mxu0 0.0
        %4164 = vmatprep.subr.mxu0 0.0
        %4165 = vmatpush1.msra.mxu0 0.0
        %4166 = vmatprep.subr.mxu0 0.0
        %4167 = vmatpush1.msra.mxu0 %v4129
        %4168 = vmatprep.subr.mxu0 0.0
        %4169 = vmatpush1.msra.mxu0 %v4127
        %4170 = vmatprep.subr.mxu0 0.0
        %4171 = vmatpush2.msra.mxu0 0.0
        %4172 = vmatprep.subr.mxu0 0.0
        %4173 = vmatpush2.msra.mxu0 0.0
        %4174 = vmatprep.subr.mxu0 0.0
        %4175 = vmatpush2.msra.mxu0 0.0
        %4176 = vmatprep.subr.mxu0 0.0
        %4177 = vmatpush2.msra.mxu0 0.0
        %4178 = vmatprep.subr.mxu0 0.0
        %4179 = vmatpush2.msra.mxu0 0.0
        %4180 = vmatprep.subr.mxu0 0.0
        %4181 = vmatpush2.msra.mxu0 0.0
        %4182 = vmatprep.subr.mxu0 0.0
        %4183 = vmatpush2.msra.mxu0 0.0
        %4184 = vmatprep.subr.mxu0 0.0
        %4185 = vmatpush2.msra.mxu0 0.0
        %4186 = vmatprep.subr.mxu0 0.0
        %4187 = vmatpush2.msra.mxu0 0.0
        %4188 = vmatprep.subr.mxu0 0.0
        %4189 = vmatpush2.msra.mxu0 0.0
        %4190 = vmatprep.subr.mxu0 0.0
        %4191 = vmatpush2.msra.mxu0 0.0
        %4192 = vmatprep.subr.mxu0 0.0
        %4193 = vmatpush2.msra.mxu0 0.0
        %4194 = vmatprep.subr.mxu0 0.0
        %4195 = vmatpush2.msra.mxu0 0.0
        %4196 = vmatprep.subr.mxu0 0.0
        %4197 = vmatpush2.msra.mxu0 0.0
        %4198 = vmatprep.subr.mxu0 0.0
        %4199 = vmatpush2.msra.mxu0 0.0
        %4200 = vmatprep.subr.mxu0 0.0
        %4201 = vmatpush2.msra.mxu0 0.0
        %4202 = vmatprep.mubr.f32.mxu0 0.0
        %4203 = vmatmul.mubr.f32.gmra.mxu0 %v4133
        %v4204 = vpop.f32.mrf.mxu0
        %v4205 = vadd.f32 0.0, %v4204
        %v4206 = vpop.f32.mrf.mxu0
        %4207 = vmatprep.mubr.f32.mxu0 0.0
        %4208 = vmatmul.mubr.f32.gmra.mxu0 %v4136
        %v4209 = vpop.f32.mrf.mxu0
        %v4210 = vadd.f32 0.0, %v4209
        %v4211 = vpop.f32.mrf.mxu0
        %4212 = vdwg.mxu0
        %4213 = vrot.lane.b32.xlu0 %v1365, 64
        %v4214 = vpop.permute.xlu0 %4213
        %4215 = vrot.lane.b32.xlu0 %v1371, 64
        %v4216 = vpop.permute.xlu0 %4215
        %4217 = vrot.lane.b32.xlu0 %v1377, 64
        %v4218 = vpop.permute.xlu0 %4217
        %4219 = vrot.lane.b32.xlu0 %v1383, 64
        %v4220 = vpop.permute.xlu0 %4219
        %v4226 = vsel %vm1474, %v4103, 0
        %v4229 = vsel %vm1474, %v4105, 0
        %4231 = vmatprep.subr.mxu0 0.0
        %4232 = vmatpush1.msra.mxu0 0.0
        %4233 = vmatprep.subr.mxu0 0.0
        %4234 = vmatpush1.msra.mxu0 0.0
        %4235 = vmatprep.subr.mxu0 0.0
        %4236 = vmatpush1.msra.mxu0 0.0
        %4237 = vmatprep.subr.mxu0 0.0
        %4238 = vmatpush1.msra.mxu0 0.0
        %4239 = vmatprep.subr.mxu0 0.0
        %4240 = vmatpush1.msra.mxu0 0.0
        %4241 = vmatprep.subr.mxu0 0.0
        %4242 = vmatpush1.msra.mxu0 0.0
        %4243 = vmatprep.subr.mxu0 0.0
        %4244 = vmatpush1.msra.mxu0 0.0
        %4245 = vmatprep.subr.mxu0 0.0
        %4246 = vmatpush1.msra.mxu0 0.0
        %4247 = vmatprep.subr.mxu0 0.0
        %4248 = vmatpush1.msra.mxu0 0.0
        %4249 = vmatprep.subr.mxu0 0.0
        %4250 = vmatpush1.msra.mxu0 0.0
        %4251 = vmatprep.subr.mxu0 0.0
        %4252 = vmatpush1.msra.mxu0 0.0
        %4253 = vmatprep.subr.mxu0 0.0
        %4254 = vmatpush1.msra.mxu0 0.0
        %4255 = vmatprep.subr.mxu0 0.0
        %4256 = vmatpush1.msra.mxu0 %v4220
        %4257 = vmatprep.subr.mxu0 0.0
        %4258 = vmatpush1.msra.mxu0 %v4218
        %4259 = vmatprep.subr.mxu0 0.0
        %4260 = vmatpush1.msra.mxu0 %v4216
        %4261 = vmatprep.subr.mxu0 0.0
        %4262 = vmatpush1.msra.mxu0 %v4214
        %4263 = vmatprep.subr.mxu0 0.0
        %4264 = vmatpush2.msra.mxu0 0.0
        %4265 = vmatprep.subr.mxu0 0.0
        %4266 = vmatpush2.msra.mxu0 0.0
        %4267 = vmatprep.subr.mxu0 0.0
        %4268 = vmatpush2.msra.mxu0 0.0
        %4269 = vmatprep.subr.mxu0 0.0
        %4270 = vmatpush2.msra.mxu0 0.0
        %4271 = vmatprep.subr.mxu0 0.0
        %4272 = vmatpush2.msra.mxu0 0.0
        %4273 = vmatprep.subr.mxu0 0.0
        %4274 = vmatpush2.msra.mxu0 0.0
        %4275 = vmatprep.subr.mxu0 0.0
        %4276 = vmatpush2.msra.mxu0 0.0
        %4277 = vmatprep.subr.mxu0 0.0
        %4278 = vmatpush2.msra.mxu0 0.0
        %4279 = vmatprep.subr.mxu0 0.0
        %4280 = vmatpush2.msra.mxu0 0.0
        %4281 = vmatprep.subr.mxu0 0.0
        %4282 = vmatpush2.msra.mxu0 0.0
        %4283 = vmatprep.subr.mxu0 0.0
        %4284 = vmatpush2.msra.mxu0 0.0
        %4285 = vmatprep.subr.mxu0 0.0
        %4286 = vmatpush2.msra.mxu0 0.0
        %4287 = vmatprep.subr.mxu0 0.0
        %4288 = vmatpush2.msra.mxu0 0.0
        %4289 = vmatprep.subr.mxu0 0.0
        %4290 = vmatpush2.msra.mxu0 0.0
        %4291 = vmatprep.subr.mxu0 0.0
        %4292 = vmatpush2.msra.mxu0 0.0
        %4293 = vmatprep.subr.mxu0 0.0
        %4294 = vmatpush2.msra.mxu0 0.0
        %4295 = vmatprep.mubr.f32.mxu0 0.0
        %4296 = vmatmul.mubr.f32.gmra.mxu0 %v4226
        %v4297 = vpop.f32.mrf.mxu0
        %v4298 = vadd.f32 %v4205, %v4297
        %v4299 = vpop.f32.mrf.mxu0
        %4300 = vmatprep.mubr.f32.mxu0 0.0
        %4301 = vmatmul.mubr.f32.gmra.mxu0 %v4229
        %v4302 = vpop.f32.mrf.mxu0
        %v4303 = vadd.f32 %v4210, %v4302
        %v4304 = vpop.f32.mrf.mxu0
        %4305 = vdwg.mxu0
        %v4306 = vrcp.pop %v4124
        %v4307 = vrcp.pop %v4125
        %v4308 = vmul.f32 %v4298, %v4306
        %v4309 = vmul.f32 %v4303, %v4307
        %4310 = vrot.lane.b32.xlu0 %v1232, 32
        %v4311 = vpop.permute.xlu0 %4310
        %4312 = vrot.lane.b32.xlu0 %v1237, 32
        %v4313 = vpop.permute.xlu0 %4312
        %4314 = vrot.lane.b32.xlu0 %v1363, 32
        %v4315 = vpop.permute.xlu0 %4314
        %4316 = vrot.lane.b32.xlu0 %v1369, 32
        %v4317 = vpop.permute.xlu0 %4316
        %4318 = vrot.lane.b32.xlu0 %v1375, 32
        %v4319 = vpop.permute.xlu0 %4318
        %4320 = vrot.lane.b32.xlu0 %v1381, 32
        %v4321 = vpop.permute.xlu0 %4320
        %v4322 = vsel %vm1474, %v4311, 0
        %v4324 = vsel %vm1474, %v4313, 0
        %v4326 = vsel %vm1474, %v4315, 0
        %v4328 = vsel %vm1474, %v4317, 0
        %v4330 = vsel %vm1474, %v4319, 0
        %v4332 = vsel %vm1474, %v4321, 0
        %4334 = vmatprep.subr.mxu0 0.0
        %4335 = vmatpush1.xpose.msra.mxu0 0.0
        %4336 = vmatprep.subr.mxu0 0.0
        %4337 = vmatpush1.xpose.msra.mxu0 0.0
        %4338 = vmatprep.subr.mxu0 0.0
        %4339 = vmatpush1.xpose.msra.mxu0 0.0
        %4340 = vmatprep.subr.mxu0 0.0
        %4341 = vmatpush1.xpose.msra.mxu0 0.0
        %4342 = vmatprep.subr.mxu0 0.0
        %4343 = vmatpush1.xpose.msra.mxu0 0.0
        %4344 = vmatprep.subr.mxu0 0.0
        %4345 = vmatpush1.xpose.msra.mxu0 0.0
        %4346 = vmatprep.subr.mxu0 0.0
        %4347 = vmatpush1.xpose.msra.mxu0 0.0
        %4348 = vmatprep.subr.mxu0 0.0
        %4349 = vmatpush1.xpose.msra.mxu0 0.0
        %4350 = vmatprep.subr.mxu0 0.0
        %4351 = vmatpush1.xpose.msra.mxu0 0.0
        %4352 = vmatprep.subr.mxu0 0.0
        %4353 = vmatpush1.xpose.msra.mxu0 0.0
        %4354 = vmatprep.subr.mxu0 0.0
        %4355 = vmatpush1.xpose.msra.mxu0 0.0
        %4356 = vmatprep.subr.mxu0 0.0
        %4357 = vmatpush1.xpose.msra.mxu0 0.0
        %4358 = vmatprep.subr.mxu0 0.0
        %4359 = vmatpush1.xpose.msra.mxu0 %v4332
        %4360 = vmatprep.subr.mxu0 0.0
        %4361 = vmatpush1.xpose.msra.mxu0 %v4330
        %4362 = vmatprep.subr.mxu0 0.0
        %4363 = vmatpush1.xpose.msra.mxu0 %v4328
        %4364 = vmatprep.subr.mxu0 0.0
        %4365 = vmatpush1.xpose.msra.mxu0 %v4326
        %4366 = vmatprep.subr.mxu0 0.0
        %4367 = vmatpush2.xpose.msra.mxu0 0.0
        %4368 = vmatprep.subr.mxu0 0.0
        %4369 = vmatpush2.xpose.msra.mxu0 0.0
        %4370 = vmatprep.subr.mxu0 0.0
        %4371 = vmatpush2.xpose.msra.mxu0 0.0
        %4372 = vmatprep.subr.mxu0 0.0
        %4373 = vmatpush2.xpose.msra.mxu0 0.0
        %4374 = vmatprep.subr.mxu0 0.0
        %4375 = vmatpush2.xpose.msra.mxu0 0.0
        %4376 = vmatprep.subr.mxu0 0.0
        %4377 = vmatpush2.xpose.msra.mxu0 0.0
        %4378 = vmatprep.subr.mxu0 0.0
        %4379 = vmatpush2.xpose.msra.mxu0 0.0
        %4380 = vmatprep.subr.mxu0 0.0
        %4381 = vmatpush2.xpose.msra.mxu0 0.0
        %4382 = vmatprep.subr.mxu0 0.0
        %4383 = vmatpush2.xpose.msra.mxu0 0.0
        %4384 = vmatprep.subr.mxu0 0.0
        %4385 = vmatpush2.xpose.msra.mxu0 0.0
        %4386 = vmatprep.subr.mxu0 0.0
        %4387 = vmatpush2.xpose.msra.mxu0 0.0
        %4388 = vmatprep.subr.mxu0 0.0
        %4389 = vmatpush2.xpose.msra.mxu0 0.0
        %4390 = vmatprep.subr.mxu0 0.0
        %4391 = vmatpush2.xpose.msra.mxu0 0.0
        %4392 = vmatprep.subr.mxu0 0.0
        %4393 = vmatpush2.xpose.msra.mxu0 0.0
        %4394 = vmatprep.subr.mxu0 0.0
        %4395 = vmatpush2.xpose.msra.mxu0 0.0
        %4396 = vmatprep.subr.mxu0 0.0
        %4397 = vmatpush2.xpose.msra.mxu0 0.0
        %4398 = vmatprep.mubr.f32.mxu0 0.0
        %4399 = vmatmul.mubr.f32.gmra.mxu0 %v4322
        %v4400 = vpop.f32.mrf.mxu0
        %v4401 = vadd.f32 0.0, %v4400
        %v4402 = vpop.f32.mrf.mxu0
        %4403 = vmatprep.mubr.f32.mxu0 0.0
        %4404 = vmatmul.mubr.f32.gmra.mxu0 %v4324
        %v4405 = vpop.f32.mrf.mxu0
        %v4406 = vadd.f32 0.0, %v4405
        %v4407 = vpop.f32.mrf.mxu0
        %4408 = vdwg.mxu0
        %4409 = vrot.lane.b32.xlu0 %v1464, 32
        %v4410 = vpop.permute.xlu0 %4409
        %4411 = vrot.lane.b32.xlu0 %v1470, 32
        %v4412 = vpop.permute.xlu0 %4411
        %v4413 = vsel %vm1474, %v4410, 0
        %v4415 = vsel %vm1474, %v4412, 0
        %4417 = vmatprep.subr.mxu0 0.0
        %4418 = vmatpush1.xpose.msra.mxu0 0.0
        %4419 = vmatprep.subr.mxu0 0.0
        %4420 = vmatpush1.xpose.msra.mxu0 0.0
        %4421 = vmatprep.subr.mxu0 0.0
        %4422 = vmatpush1.xpose.msra.mxu0 0.0
        %4423 = vmatprep.subr.mxu0 0.0
        %4424 = vmatpush1.xpose.msra.mxu0 0.0
        %4425 = vmatprep.subr.mxu0 0.0
        %4426 = vmatpush1.xpose.msra.mxu0 0.0
        %4427 = vmatprep.subr.mxu0 0.0
        %4428 = vmatpush1.xpose.msra.mxu0 0.0
        %4429 = vmatprep.subr.mxu0 0.0
        %4430 = vmatpush1.xpose.msra.mxu0 0.0
        %4431 = vmatprep.subr.mxu0 0.0
        %4432 = vmatpush1.xpose.msra.mxu0 0.0
        %4433 = vmatprep.subr.mxu0 0.0
        %4434 = vmatpush1.xpose.msra.mxu0 0.0
        %4435 = vmatprep.subr.mxu0 0.0
        %4436 = vmatpush1.xpose.msra.mxu0 0.0
        %4437 = vmatprep.subr.mxu0 0.0
        %4438 = vmatpush1.xpose.msra.mxu0 0.0
        %4439 = vmatprep.subr.mxu0 0.0
        %4440 = vmatpush1.xpose.msra.mxu0 0.0
        %4441 = vmatprep.subr.mxu0 0.0
        %4442 = vmatpush1.xpose.msra.mxu0 0.0
        %4443 = vmatprep.subr.mxu0 0.0
        %4444 = vmatpush1.xpose.msra.mxu0 0.0
        %4445 = vmatprep.subr.mxu0 0.0
        %4446 = vmatpush1.xpose.msra.mxu0 %v4415
        %4447 = vmatprep.subr.mxu0 0.0
        %4448 = vmatpush1.xpose.msra.mxu0 %v4413
        %4449 = vmatprep.subr.mxu0 0.0
        %4450 = vmatpush2.xpose.msra.mxu0 0.0
        %4451 = vmatprep.subr.mxu0 0.0
        %4452 = vmatpush2.xpose.msra.mxu0 0.0
        %4453 = vmatprep.subr.mxu0 0.0
        %4454 = vmatpush2.xpose.msra.mxu0 0.0
        %4455 = vmatprep.subr.mxu0 0.0
        %4456 = vmatpush2.xpose.msra.mxu0 0.0
        %4457 = vmatprep.subr.mxu0 0.0
        %4458 = vmatpush2.xpose.msra.mxu0 0.0
        %4459 = vmatprep.subr.mxu0 0.0
        %4460 = vmatpush2.xpose.msra.mxu0 0.0
        %4461 = vmatprep.subr.mxu0 0.0
        %4462 = vmatpush2.xpose.msra.mxu0 0.0
        %4463 = vmatprep.subr.mxu0 0.0
        %4464 = vmatpush2.xpose.msra.mxu0 0.0
        %4465 = vmatprep.subr.mxu0 0.0
        %4466 = vmatpush2.xpose.msra.mxu0 0.0
        %4467 = vmatprep.subr.mxu0 0.0
        %4468 = vmatpush2.xpose.msra.mxu0 0.0
        %4469 = vmatprep.subr.mxu0 0.0
        %4470 = vmatpush2.xpose.msra.mxu0 0.0
        %4471 = vmatprep.subr.mxu0 0.0
        %4472 = vmatpush2.xpose.msra.mxu0 0.0
        %4473 = vmatprep.subr.mxu0 0.0
        %4474 = vmatpush2.xpose.msra.mxu0 0.0
        %4475 = vmatprep.subr.mxu0 0.0
        %4476 = vmatpush2.xpose.msra.mxu0 0.0
        %4477 = vmatprep.subr.mxu0 0.0
        %4478 = vmatpush2.xpose.msra.mxu0 0.0
        %4479 = vmatprep.subr.mxu0 0.0
        %4480 = vmatpush2.xpose.msra.mxu0 0.0
        %4481 = vmatprep.mubr.f32.mxu0 0.0
        %4482 = vmatmul.mubr.f32.gmra.mxu0 %v4322
        %v4483 = vpop.f32.mrf.mxu0
        %v4484 = vadd.f32 0.0, %v4483
        %v4485 = vpop.f32.mrf.mxu0
        %4486 = vmatprep.mubr.f32.mxu0 0.0
        %4487 = vmatmul.mubr.f32.gmra.mxu0 %v4324
        %v4488 = vpop.f32.mrf.mxu0
        %v4489 = vadd.f32 0.0, %v4488
        %v4490 = vpop.f32.mrf.mxu0
        %4491 = vdwg.mxu0
        %v4492 = vsel %vm1474, %v4401, -inf
        %4493 = vmax.xlane.f32.xlu0 %v4492
        %v4494 = vpop.xlane.xlu0 %4493
        %v4495 = vsel %vm1474, %v4406, -inf
        %4496 = vmax.xlane.f32.xlu0 %v4495
        %v4497 = vpop.xlane.xlu0 %4496
        %v4498 = vsel %vm1655, %v4484, -inf
        %4499 = vmax.xlane.f32.xlu0 %v4498
        %v4500 = vpop.xlane.xlu0 %4499
        %v4501 = vsel %vm1655, %v4489, -inf
        %4502 = vmax.xlane.f32.xlu0 %v4501
        %v4503 = vpop.xlane.xlu0 %4502
        %v4504 = vmax.f32 %v4494, %v4500
        %v4505 = vmax.f32 %v4497, %v4503
        %v4506 = vsub.f32 %v4401, %v4504
        %v4507 = vsub.f32 %v4406, %v4505
        %v4508 = vmul.f32 %v4506, 1.442695
        %v4509 = vpow.pop %v4508
        %v4510 = vmul.f32 %v4507, 1.442695
        %v4511 = vpow.pop %v4510
        %v4512 = vsub.f32 %v4484, %v4504
        %v4513 = vsub.f32 %v4489, %v4505
        %v4514 = vmul.f32 %v4512, 1.442695
        %v4515 = vpow.pop %v4514
        %v4516 = vmul.f32 %v4513, 1.442695
        %v4517 = vpow.pop %v4516
        %v4518 = vsel %vm1474, %v4509, 0.0
        %4519 = vadd.xlane.f32.xlu0 %v4518
        %v4520 = vpop.xlane.xlu0 %4519
        %v4521 = vsel %vm1474, %v4511, 0.0
        %4522 = vadd.xlane.f32.xlu0 %v4521
        %v4523 = vpop.xlane.xlu0 %4522
        %v4524 = vsel %vm1655, %v4515, 0.0
        %4525 = vadd.xlane.f32.xlu0 %v4524
        %v4526 = vpop.xlane.xlu0 %4525
        %v4527 = vsel %vm1655, %v4517, 0.0
        %4528 = vadd.xlane.f32.xlu0 %v4527
        %v4529 = vpop.xlane.xlu0 %4528
        %v4530 = vadd.f32 %v4520, %v4526
        %v4531 = vadd.f32 %v4523, %v4529
        %4532 = vrot.lane.b32.xlu0 %v1466, 32
        %v4533 = vpop.permute.xlu0 %4532
        %4534 = vrot.lane.b32.xlu0 %v1472, 32
        %v4535 = vpop.permute.xlu0 %4534
        %v4539 = vsel %vm1655, %v4515, 0
        %v4542 = vsel %vm1655, %v4517, 0
        %4544 = vmatprep.subr.mxu0 0.0
        %4545 = vmatpush1.msra.mxu0 0.0
        %4546 = vmatprep.subr.mxu0 0.0
        %4547 = vmatpush1.msra.mxu0 0.0
        %4548 = vmatprep.subr.mxu0 0.0
        %4549 = vmatpush1.msra.mxu0 0.0
        %4550 = vmatprep.subr.mxu0 0.0
        %4551 = vmatpush1.msra.mxu0 0.0
        %4552 = vmatprep.subr.mxu0 0.0
        %4553 = vmatpush1.msra.mxu0 0.0
        %4554 = vmatprep.subr.mxu0 0.0
        %4555 = vmatpush1.msra.mxu0 0.0
        %4556 = vmatprep.subr.mxu0 0.0
        %4557 = vmatpush1.msra.mxu0 0.0
        %4558 = vmatprep.subr.mxu0 0.0
        %4559 = vmatpush1.msra.mxu0 0.0
        %4560 = vmatprep.subr.mxu0 0.0
        %4561 = vmatpush1.msra.mxu0 0.0
        %4562 = vmatprep.subr.mxu0 0.0
        %4563 = vmatpush1.msra.mxu0 0.0
        %4564 = vmatprep.subr.mxu0 0.0
        %4565 = vmatpush1.msra.mxu0 0.0
        %4566 = vmatprep.subr.mxu0 0.0
        %4567 = vmatpush1.msra.mxu0 0.0
        %4568 = vmatprep.subr.mxu0 0.0
        %4569 = vmatpush1.msra.mxu0 0.0
        %4570 = vmatprep.subr.mxu0 0.0
        %4571 = vmatpush1.msra.mxu0 0.0
        %4572 = vmatprep.subr.mxu0 0.0
        %4573 = vmatpush1.msra.mxu0 %v4535
        %4574 = vmatprep.subr.mxu0 0.0
        %4575 = vmatpush1.msra.mxu0 %v4533
        %4576 = vmatprep.subr.mxu0 0.0
        %4577 = vmatpush2.msra.mxu0 0.0
        %4578 = vmatprep.subr.mxu0 0.0
        %4579 = vmatpush2.msra.mxu0 0.0
        %4580 = vmatprep.subr.mxu0 0.0
        %4581 = vmatpush2.msra.mxu0 0.0
        %4582 = vmatprep.subr.mxu0 0.0
        %4583 = vmatpush2.msra.mxu0 0.0
        %4584 = vmatprep.subr.mxu0 0.0
        %4585 = vmatpush2.msra.mxu0 0.0
        %4586 = vmatprep.subr.mxu0 0.0
        %4587 = vmatpush2.msra.mxu0 0.0
        %4588 = vmatprep.subr.mxu0 0.0
        %4589 = vmatpush2.msra.mxu0 0.0
        %4590 = vmatprep.subr.mxu0 0.0
        %4591 = vmatpush2.msra.mxu0 0.0
        %4592 = vmatprep.subr.mxu0 0.0
        %4593 = vmatpush2.msra.mxu0 0.0
        %4594 = vmatprep.subr.mxu0 0.0
        %4595 = vmatpush2.msra.mxu0 0.0
        %4596 = vmatprep.subr.mxu0 0.0
        %4597 = vmatpush2.msra.mxu0 0.0
        %4598 = vmatprep.subr.mxu0 0.0
        %4599 = vmatpush2.msra.mxu0 0.0
        %4600 = vmatprep.subr.mxu0 0.0
        %4601 = vmatpush2.msra.mxu0 0.0
        %4602 = vmatprep.subr.mxu0 0.0
        %4603 = vmatpush2.msra.mxu0 0.0
        %4604 = vmatprep.subr.mxu0 0.0
        %4605 = vmatpush2.msra.mxu0 0.0
        %4606 = vmatprep.subr.mxu0 0.0
        %4607 = vmatpush2.msra.mxu0 0.0
        %4608 = vmatprep.mubr.f32.mxu0 0.0
        %4609 = vmatmul.mubr.f32.gmra.mxu0 %v4539
        %v4610 = vpop.f32.mrf.mxu0
        %v4611 = vadd.f32 0.0, %v4610
        %v4612 = vpop.f32.mrf.mxu0
        %4613 = vmatprep.mubr.f32.mxu0 0.0
        %4614 = vmatmul.mubr.f32.gmra.mxu0 %v4542
        %v4615 = vpop.f32.mrf.mxu0
        %v4616 = vadd.f32 0.0, %v4615
        %v4617 = vpop.f32.mrf.mxu0
        %4618 = vdwg.mxu0
        %4619 = vrot.lane.b32.xlu0 %v1365, 32
        %v4620 = vpop.permute.xlu0 %4619
        %4621 = vrot.lane.b32.xlu0 %v1371, 32
        %v4622 = vpop.permute.xlu0 %4621
        %4623 = vrot.lane.b32.xlu0 %v1377, 32
        %v4624 = vpop.permute.xlu0 %4623
        %4625 = vrot.lane.b32.xlu0 %v1383, 32
        %v4626 = vpop.permute.xlu0 %4625
        %v4632 = vsel %vm1474, %v4509, 0
        %v4635 = vsel %vm1474, %v4511, 0
        %4637 = vmatprep.subr.mxu0 0.0
        %4638 = vmatpush1.msra.mxu0 0.0
        %4639 = vmatprep.subr.mxu0 0.0
        %4640 = vmatpush1.msra.mxu0 0.0
        %4641 = vmatprep.subr.mxu0 0.0
        %4642 = vmatpush1.msra.mxu0 0.0
        %4643 = vmatprep.subr.mxu0 0.0
        %4644 = vmatpush1.msra.mxu0 0.0
        %4645 = vmatprep.subr.mxu0 0.0
        %4646 = vmatpush1.msra.mxu0 0.0
        %4647 = vmatprep.subr.mxu0 0.0
        %4648 = vmatpush1.msra.mxu0 0.0
        %4649 = vmatprep.subr.mxu0 0.0
        %4650 = vmatpush1.msra.mxu0 0.0
        %4651 = vmatprep.subr.mxu0 0.0
        %4652 = vmatpush1.msra.mxu0 0.0
        %4653 = vmatprep.subr.mxu0 0.0
        %4654 = vmatpush1.msra.mxu0 0.0
        %4655 = vmatprep.subr.mxu0 0.0
        %4656 = vmatpush1.msra.mxu0 0.0
        %4657 = vmatprep.subr.mxu0 0.0
        %4658 = vmatpush1.msra.mxu0 0.0
        %4659 = vmatprep.subr.mxu0 0.0
        %4660 = vmatpush1.msra.mxu0 0.0
        %4661 = vmatprep.subr.mxu0 0.0
        %4662 = vmatpush1.msra.mxu0 %v4626
        %4663 = vmatprep.subr.mxu0 0.0
        %4664 = vmatpush1.msra.mxu0 %v4624
        %4665 = vmatprep.subr.mxu0 0.0
        %4666 = vmatpush1.msra.mxu0 %v4622
        %4667 = vmatprep.subr.mxu0 0.0
        %4668 = vmatpush1.msra.mxu0 %v4620
        %4669 = vmatprep.subr.mxu0 0.0
        %4670 = vmatpush2.msra.mxu0 0.0
        %4671 = vmatprep.subr.mxu0 0.0
        %4672 = vmatpush2.msra.mxu0 0.0
        %4673 = vmatprep.subr.mxu0 0.0
        %4674 = vmatpush2.msra.mxu0 0.0
        %4675 = vmatprep.subr.mxu0 0.0
        %4676 = vmatpush2.msra.mxu0 0.0
        %4677 = vmatprep.subr.mxu0 0.0
        %4678 = vmatpush2.msra.mxu0 0.0
        %4679 = vmatprep.subr.mxu0 0.0
        %4680 = vmatpush2.msra.mxu0 0.0
        %4681 = vmatprep.subr.mxu0 0.0
        %4682 = vmatpush2.msra.mxu0 0.0
        %4683 = vmatprep.subr.mxu0 0.0
        %4684 = vmatpush2.msra.mxu0 0.0
        %4685 = vmatprep.subr.mxu0 0.0
        %4686 = vmatpush2.msra.mxu0 0.0
        %4687 = vmatprep.subr.mxu0 0.0
        %4688 = vmatpush2.msra.mxu0 0.0
        %4689 = vmatprep.subr.mxu0 0.0
        %4690 = vmatpush2.msra.mxu0 0.0
        %4691 = vmatprep.subr.mxu0 0.0
        %4692 = vmatpush2.msra.mxu0 0.0
        %4693 = vmatprep.subr.mxu0 0.0
        %4694 = vmatpush2.msra.mxu0 0.0
        %4695 = vmatprep.subr.mxu0 0.0
        %4696 = vmatpush2.msra.mxu0 0.0
        %4697 = vmatprep.subr.mxu0 0.0
        %4698 = vmatpush2.msra.mxu0 0.0
        %4699 = vmatprep.subr.mxu0 0.0
        %4700 = vmatpush2.msra.mxu0 0.0
        %4701 = vmatprep.mubr.f32.mxu0 0.0
        %4702 = vmatmul.mubr.f32.gmra.mxu0 %v4632
        %v4703 = vpop.f32.mrf.mxu0
        %v4704 = vadd.f32 %v4611, %v4703
        %v4705 = vpop.f32.mrf.mxu0
        %4706 = vmatprep.mubr.f32.mxu0 0.0
        %4707 = vmatmul.mubr.f32.gmra.mxu0 %v4635
        %v4708 = vpop.f32.mrf.mxu0
        %v4709 = vadd.f32 %v4616, %v4708
        %v4710 = vpop.f32.mrf.mxu0
        %4711 = vdwg.mxu0
        %v4712 = vrcp.pop %v4530
        %v4713 = vrcp.pop %v4531
        %v4714 = vmul.f32 %v4704, %v4712
        %v4715 = vmul.f32 %v4709, %v4713
        %4718 = vrot.lane.b32.xlu0 %v3902, 32
        %v4719 = vpop.permute.xlu0 %4718
        %4720 = vrot.lane.b32.xlu0 %v3903, 32
        %v4721 = vpop.permute.xlu0 %4720
        %4726 = vrot.lane.b32.xlu0 %v4308, 64
        %v4727 = vpop.permute.xlu0 %4726
        %4728 = vrot.lane.b32.xlu0 %v4309, 64
        %v4729 = vpop.permute.xlu0 %4728
        %4734 = vrot.lane.b32.xlu0 %v4714, 96
        %v4735 = vpop.permute.xlu0 %4734
        %4736 = vrot.lane.b32.xlu0 %v4715, 96
        %v4737 = vpop.permute.xlu0 %4736
        %v4740 = vsel %vm1474, %v3490, %v4719
        %v4741 = vsel %vm1474, %v3491, %v4721
        %v4742 = vsel %vm3106, %v4740, %v4727
        %v4743 = vsel %vm3106, %v4741, %v4729
        %v4744 = vsel %vm3109, %v4742, %v4735
        %v4745 = vsel %vm3109, %v4743, %v4737
        %v4746 = vld [vmem:[%s763] sm:$0xff]
        %v4747 = vld [vmem:[%s763 + $0x8] sm:$0xff]
        %v4748 = vld [vmem:[%s763 + $0x10] sm:$0xff]
        %v4749 = vld [vmem:[%s763 + $0x18] sm:$0xff]
        %v4750 = vld [vmem:[%s763 + $0x20] sm:$0xff]
        %v4751 = vld [vmem:[%s763 + $0x28] sm:$0xff]
        %v4752 = vld [vmem:[%s763 + $0x30] sm:$0xff]
        %v4753 = vld [vmem:[%s763 + $0x38] sm:$0xff]
        %v4754 = vld [vmem:[%s763 + $0x40] sm:$0xff]
        %v4755 = vld [vmem:[%s763 + $0x48] sm:$0xff]
        %v4756 = vld [vmem:[%s763 + $0x50] sm:$0xff]
        %v4757 = vld [vmem:[%s763 + $0x58] sm:$0xff]
        %v4758 = vld [vmem:[%s763 + $0x60] sm:$0xff]
        %v4759 = vld [vmem:[%s763 + $0x68] sm:$0xff]
        %v4760 = vld [vmem:[%s763 + $0x70] sm:$0xff]
        %v4761 = vld [vmem:[%s763 + $0x78] sm:$0xff]
        %4762 = vmatprep.subr.mxu0 0.0
        %4763 = vmatpush1.msra.mxu0 %v4761
        %4764 = vmatprep.subr.mxu0 0.0
        %4765 = vmatpush1.msra.mxu0 %v4760
        %4766 = vmatprep.subr.mxu0 0.0
        %4767 = vmatpush1.msra.mxu0 %v4759
        %4768 = vmatprep.subr.mxu0 0.0
        %4769 = vmatpush1.msra.mxu0 %v4758
        %4770 = vmatprep.subr.mxu0 0.0
        %4771 = vmatpush1.msra.mxu0 %v4757
        %4772 = vmatprep.subr.mxu0 0.0
        %4773 = vmatpush1.msra.mxu0 %v4756
        %4774 = vmatprep.subr.mxu0 0.0
        %4775 = vmatpush1.msra.mxu0 %v4755
        %4776 = vmatprep.subr.mxu0 0.0
        %4777 = vmatpush1.msra.mxu0 %v4754
        %4778 = vmatprep.subr.mxu0 0.0
        %4779 = vmatpush1.msra.mxu0 %v4753
        %4780 = vmatprep.subr.mxu0 0.0
        %4781 = vmatpush1.msra.mxu0 %v4752
        %4782 = vmatprep.subr.mxu0 0.0
        %4783 = vmatpush1.msra.mxu0 %v4751
        %4784 = vmatprep.subr.mxu0 0.0
        %4785 = vmatpush1.msra.mxu0 %v4750
        %4786 = vmatprep.subr.mxu0 0.0
        %4787 = vmatpush1.msra.mxu0 %v4749
        %4788 = vmatprep.subr.mxu0 0.0
        %4789 = vmatpush1.msra.mxu0 %v4748
        %4790 = vmatprep.subr.mxu0 0.0
        %4791 = vmatpush1.msra.mxu0 %v4747
        %4792 = vmatprep.subr.mxu0 0.0
        %4793 = vmatpush1.msra.mxu0 %v4746
        %4794 = vmatprep.subr.mxu0 0.0
        %4795 = vmatpush2.msra.mxu0 0.0
        %4796 = vmatprep.subr.mxu0 0.0
        %4797 = vmatpush2.msra.mxu0 0.0
        %4798 = vmatprep.subr.mxu0 0.0
        %4799 = vmatpush2.msra.mxu0 0.0
        %4800 = vmatprep.subr.mxu0 0.0
        %4801 = vmatpush2.msra.mxu0 0.0
        %4802 = vmatprep.subr.mxu0 0.0
        %4803 = vmatpush2.msra.mxu0 0.0
        %4804 = vmatprep.subr.mxu0 0.0
        %4805 = vmatpush2.msra.mxu0 0.0
        %4806 = vmatprep.subr.mxu0 0.0
        %4807 = vmatpush2.msra.mxu0 0.0
        %4808 = vmatprep.subr.mxu0 0.0
        %4809 = vmatpush2.msra.mxu0 0.0
        %4810 = vmatprep.subr.mxu0 0.0
        %4811 = vmatpush2.msra.mxu0 0.0
        %4812 = vmatprep.subr.mxu0 0.0
        %4813 = vmatpush2.msra.mxu0 0.0
        %4814 = vmatprep.subr.mxu0 0.0
        %4815 = vmatpush2.msra.mxu0 0.0
        %4816 = vmatprep.subr.mxu0 0.0
        %4817 = vmatpush2.msra.mxu0 0.0
        %4818 = vmatprep.subr.mxu0 0.0
        %4819 = vmatpush2.msra.mxu0 0.0
        %4820 = vmatprep.subr.mxu0 0.0
        %4821 = vmatpush2.msra.mxu0 0.0
        %4822 = vmatprep.subr.mxu0 0.0
        %4823 = vmatpush2.msra.mxu0 0.0
        %4824 = vmatprep.subr.mxu0 0.0
        %4825 = vmatpush2.msra.mxu0 0.0
        %4826 = vmatprep.mubr.f32.mxu0 0.0
        %4827 = vmatmul.mubr.f32.gmra.mxu0 %v3110
        %v4828 = vpop.f32.mrf.mxu0
        %v4829 = vadd.f32 0.0, %v4828
        %v4830 = vpop.f32.mrf.mxu0
        %4831 = vmatprep.mubr.f32.mxu0 0.0
        %4832 = vmatmul.mubr.f32.gmra.mxu0 %v3111
        %v4833 = vpop.f32.mrf.mxu0
        %v4834 = vadd.f32 0.0, %v4833
        %v4835 = vpop.f32.mrf.mxu0
        %4836 = vmatprep.mubr.f32.mxu0 0.0
        %4837 = vmatmul.mubr.f32.gmra.mxu0 %v4744
        %v4838 = vpop.f32.mrf.mxu0
        %v4839 = vadd.f32 0.0, %v4838
        %v4840 = vpop.f32.mrf.mxu0
        %4841 = vmatprep.mubr.f32.mxu0 0.0
        %4842 = vmatmul.mubr.f32.gmra.mxu0 %v4745
        %v4843 = vpop.f32.mrf.mxu0
        %v4844 = vadd.f32 0.0, %v4843
        %v4845 = vpop.f32.mrf.mxu0
        %4846 = vdwg.mxu0
        %v4847 = vadd.f32 %v1069, %v4829
        %v4848 = vadd.f32 %v1070, %v4834
        %v4849 = vadd.f32 %v1071, %v4839
        %v4850 = vadd.f32 %v1072, %v4844
        %v4851 = vld [vmem:[%s766] sm:$0x1]
        %v4852 = vld [vmem:[%s769] sm:$0x1]
        %4853 = vadd.xlane.f32.xlu0 %v4847
        %v4854 = vpop.xlane.xlu0 %4853
        %4855 = vadd.xlane.f32.xlu0 %v4848
        %v4856 = vpop.xlane.xlu0 %4855
        %4857 = vadd.xlane.f32.xlu0 %v4849
        %v4858 = vpop.xlane.xlu0 %4857
        %4859 = vadd.xlane.f32.xlu0 %v4850
        %v4860 = vpop.xlane.xlu0 %4859
        %v4861 = vmul.f32 %v4854, %v968
        %v4862 = vmul.f32 %v4856, %v968
        %v4863 = vmul.f32 %v4858, %v968
        %v4864 = vmul.f32 %v4860, %v968
        %v4865 = vsub.f32 %v4847, %v4861
        %v4866 = vsub.f32 %v4848, %v4862
        %v4867 = vsub.f32 %v4849, %v4863
        %v4868 = vsub.f32 %v4850, %v4864
        %v4869 = vmul.f32 %v4865, %v4865
        %v4870 = vmul.f32 %v4866, %v4866
        %v4871 = vmul.f32 %v4867, %v4867
        %v4872 = vmul.f32 %v4868, %v4868
        %4873 = vadd.xlane.f32.xlu0 %v4869
        %v4874 = vpop.xlane.xlu0 %4873
        %4875 = vadd.xlane.f32.xlu0 %v4870
        %v4876 = vpop.xlane.xlu0 %4875
        %4877 = vadd.xlane.f32.xlu0 %v4871
        %v4878 = vpop.xlane.xlu0 %4877
        %4879 = vadd.xlane.f32.xlu0 %v4872
        %v4880 = vpop.xlane.xlu0 %4879
        %v4881 = vmul.f32 %v4874, %v968
        %v4882 = vmul.f32 %v4876, %v968
        %v4883 = vmul.f32 %v4878, %v968
        %v4884 = vmul.f32 %v4880, %v968
        %v4885 = vadd.f32 %v4881, 1e-05
        %v4886 = vadd.f32 %v4882, 1e-05
        %v4887 = vadd.f32 %v4883, 1e-05
        %v4888 = vadd.f32 %v4884, 1e-05
        %v4889 = vrsqrt.pop %v4885
        %v4890 = vrsqrt.pop %v4886
        %v4891 = vrsqrt.pop %v4887
        %v4892 = vrsqrt.pop %v4888
        %v4893 = vmul.f32 %v4865, %v4889
        %v4894 = vmul.f32 %v4866, %v4890
        %v4895 = vmul.f32 %v4867, %v4891
        %v4896 = vmul.f32 %v4868, %v4892
        %v4898 = vlaneseq
        %v4899 = vshrl.u32 %v4898, 7
        %v4900 = vsub.s32 0, %v4899
        %v4901 = vrot.slane %v4851, %v4900
        %v4903 = vmul.f32 %v4893, %v4901
        %v4904 = vmul.f32 %v4894, %v4901
        %v4905 = vmul.f32 %v4895, %v4901
        %v4906 = vmul.f32 %v4896, %v4901
        %v4908 = vlaneseq
        %v4909 = vshrl.u32 %v4908, 7
        %v4910 = vsub.s32 0, %v4909
        %v4911 = vrot.slane %v4852, %v4910
        %v4913 = vadd.f32 %v4903, %v4911
        %v4914 = vadd.f32 %v4904, %v4911
        %v4915 = vadd.f32 %v4905, %v4911
        %v4916 = vadd.f32 %v4906, %v4911
        %v4917 = vld [vmem:[%s774] sm:$0xff]
        %v4918 = vld [vmem:[%s774 + $0x8] sm:$0xff]
        %v4919 = vld [vmem:[%s774 + $0x10] sm:$0xff]
        %v4920 = vld [vmem:[%s774 + $0x18] sm:$0xff]
        %v4921 = vld [vmem:[%s774 + $0x20] sm:$0xff]
        %v4922 = vld [vmem:[%s774 + $0x28] sm:$0xff]
        %v4923 = vld [vmem:[%s774 + $0x30] sm:$0xff]
        %v4924 = vld [vmem:[%s774 + $0x38] sm:$0xff]
        %v4925 = vld [vmem:[%s774 + $0x40] sm:$0xff]
        %v4926 = vld [vmem:[%s774 + $0x48] sm:$0xff]
        %v4927 = vld [vmem:[%s774 + $0x50] sm:$0xff]
        %v4928 = vld [vmem:[%s774 + $0x58] sm:$0xff]
        %v4929 = vld [vmem:[%s774 + $0x60] sm:$0xff]
        %v4930 = vld [vmem:[%s774 + $0x68] sm:$0xff]
        %v4931 = vld [vmem:[%s774 + $0x70] sm:$0xff]
        %v4932 = vld [vmem:[%s774 + $0x78] sm:$0xff]
        %v4933 = vld [vmem:[%s774 + $0x80] sm:$0xff]
        %v4934 = vld [vmem:[%s774 + $0x88] sm:$0xff]
        %v4935 = vld [vmem:[%s774 + $0x90] sm:$0xff]
        %v4936 = vld [vmem:[%s774 + $0x98] sm:$0xff]
        %v4937 = vld [vmem:[%s774 + $0xa0] sm:$0xff]
        %v4938 = vld [vmem:[%s774 + $0xa8] sm:$0xff]
        %v4939 = vld [vmem:[%s774 + $0xb0] sm:$0xff]
        %v4940 = vld [vmem:[%s774 + $0xb8] sm:$0xff]
        %v4941 = vld [vmem:[%s774 + $0xc0] sm:$0xff]
        %v4942 = vld [vmem:[%s774 + $0xc8] sm:$0xff]
        %v4943 = vld [vmem:[%s774 + $0xd0] sm:$0xff]
        %v4944 = vld [vmem:[%s774 + $0xd8] sm:$0xff]
        %v4945 = vld [vmem:[%s774 + $0xe0] sm:$0xff]
        %v4946 = vld [vmem:[%s774 + $0xe8] sm:$0xff]
        %v4947 = vld [vmem:[%s774 + $0xf0] sm:$0xff]
        %v4948 = vld [vmem:[%s774 + $0xf8] sm:$0xff]
        %v4949 = vld [vmem:[%s774 + $0x100] sm:$0xff]
        %v4950 = vld [vmem:[%s774 + $0x108] sm:$0xff]
        %v4951 = vld [vmem:[%s774 + $0x110] sm:$0xff]
        %v4952 = vld [vmem:[%s774 + $0x118] sm:$0xff]
        %v4953 = vld [vmem:[%s774 + $0x120] sm:$0xff]
        %v4954 = vld [vmem:[%s774 + $0x128] sm:$0xff]
        %v4955 = vld [vmem:[%s774 + $0x130] sm:$0xff]
        %v4956 = vld [vmem:[%s774 + $0x138] sm:$0xff]
        %v4957 = vld [vmem:[%s774 + $0x140] sm:$0xff]
        %v4958 = vld [vmem:[%s774 + $0x148] sm:$0xff]
        %v4959 = vld [vmem:[%s774 + $0x150] sm:$0xff]
        %v4960 = vld [vmem:[%s774 + $0x158] sm:$0xff]
        %v4961 = vld [vmem:[%s774 + $0x160] sm:$0xff]
        %v4962 = vld [vmem:[%s774 + $0x168] sm:$0xff]
        %v4963 = vld [vmem:[%s774 + $0x170] sm:$0xff]
        %v4964 = vld [vmem:[%s774 + $0x178] sm:$0xff]
        %v4965 = vld [vmem:[%s774 + $0x180] sm:$0xff]
        %v4966 = vld [vmem:[%s774 + $0x188] sm:$0xff]
        %v4967 = vld [vmem:[%s774 + $0x190] sm:$0xff]
        %v4968 = vld [vmem:[%s774 + $0x198] sm:$0xff]
        %v4969 = vld [vmem:[%s774 + $0x1a0] sm:$0xff]
        %v4970 = vld [vmem:[%s774 + $0x1a8] sm:$0xff]
        %v4971 = vld [vmem:[%s774 + $0x1b0] sm:$0xff]
        %v4972 = vld [vmem:[%s774 + $0x1b8] sm:$0xff]
        %v4973 = vld [vmem:[%s774 + $0x1c0] sm:$0xff]
        %v4974 = vld [vmem:[%s774 + $0x1c8] sm:$0xff]
        %v4975 = vld [vmem:[%s774 + $0x1d0] sm:$0xff]
        %v4976 = vld [vmem:[%s774 + $0x1d8] sm:$0xff]
        %v4977 = vld [vmem:[%s774 + $0x1e0] sm:$0xff]
        %v4978 = vld [vmem:[%s774 + $0x1e8] sm:$0xff]
        %v4979 = vld [vmem:[%s774 + $0x1f0] sm:$0xff]
        %v4980 = vld [vmem:[%s774 + $0x1f8] sm:$0xff]
        %4981 = vmatprep.subr.mxu0 %v4978
        %4982 = vmatpush1.msra.mxu0 %v4977
        %4983 = vmatprep.subr.mxu0 %v4974
        %4984 = vmatpush1.msra.mxu0 %v4973
        %4985 = vmatprep.subr.mxu0 %v4970
        %4986 = vmatpush1.msra.mxu0 %v4969
        %4987 = vmatprep.subr.mxu0 %v4966
        %4988 = vmatpush1.msra.mxu0 %v4965
        %4989 = vmatprep.subr.mxu0 %v4962
        %4990 = vmatpush1.msra.mxu0 %v4961
        %4991 = vmatprep.subr.mxu0 %v4958
        %4992 = vmatpush1.msra.mxu0 %v4957
        %4993 = vmatprep.subr.mxu0 %v4954
        %4994 = vmatpush1.msra.mxu0 %v4953
        %4995 = vmatprep.subr.mxu0 %v4950
        %4996 = vmatpush1.msra.mxu0 %v4949
        %4997 = vmatprep.subr.mxu0 %v4946
        %4998 = vmatpush1.msra.mxu0 %v4945
        %4999 = vmatprep.subr.mxu0 %v4942
        %5000 = vmatpush1.msra.mxu0 %v4941
        %5001 = vmatprep.subr.mxu0 %v4938
        %5002 = vmatpush1.msra.mxu0 %v4937
        %5003 = vmatprep.subr.mxu0 %v4934
        %5004 = vmatpush1.msra.mxu0 %v4933
        %5005 = vmatprep.subr.mxu0 %v4930
        %5006 = vmatpush1.msra.mxu0 %v4929
        %5007 = vmatprep.subr.mxu0 %v4926
        %5008 = vmatpush1.msra.mxu0 %v4925
        %5009 = vmatprep.subr.mxu0 %v4922
        %5010 = vmatpush1.msra.mxu0 %v4921
        %5011 = vmatprep.subr.mxu0 %v4918
        %5012 = vmatpush1.msra.mxu0 %v4917
        %5013 = vmatprep.subr.mxu0 0.0
        %5014 = vmatpush2.msra.mxu0 0.0
        %5015 = vmatprep.subr.mxu0 0.0
        %5016 = vmatpush2.msra.mxu0 0.0
        %5017 = vmatprep.subr.mxu0 0.0
        %5018 = vmatpush2.msra.mxu0 0.0
        %5019 = vmatprep.subr.mxu0 0.0
        %5020 = vmatpush2.msra.mxu0 0.0
        %5021 = vmatprep.subr.mxu0 0.0
        %5022 = vmatpush2.msra.mxu0 0.0
        %5023 = vmatprep.subr.mxu0 0.0
        %5024 = vmatpush2.msra.mxu0 0.0
        %5025 = vmatprep.subr.mxu0 0.0
        %5026 = vmatpush2.msra.mxu0 0.0
        %5027 = vmatprep.subr.mxu0 0.0
        %5028 = vmatpush2.msra.mxu0 0.0
        %5029 = vmatprep.subr.mxu0 0.0
        %5030 = vmatpush2.msra.mxu0 0.0
        %5031 = vmatprep.subr.mxu0 0.0
        %5032 = vmatpush2.msra.mxu0 0.0
        %5033 = vmatprep.subr.mxu0 0.0
        %5034 = vmatpush2.msra.mxu0 0.0
        %5035 = vmatprep.subr.mxu0 0.0
        %5036 = vmatpush2.msra.mxu0 0.0
        %5037 = vmatprep.subr.mxu0 0.0
        %5038 = vmatpush2.msra.mxu0 0.0
        %5039 = vmatprep.subr.mxu0 0.0
        %5040 = vmatpush2.msra.mxu0 0.0
        %5041 = vmatprep.subr.mxu0 0.0
        %5042 = vmatpush2.msra.mxu0 0.0
        %5043 = vmatprep.subr.mxu0 0.0
        %5044 = vmatpush2.msra.mxu0 0.0
        %5045 = vmatprep.mubr.f32.mxu0 0.0
        %5046 = vmatmul.mubr.f32.gmra.mxu0 %v4913
        %v5047 = vpop.f32.mrf.mxu0
        %v5048 = vadd.f32 0.0, %v5047
        %v5049 = vpop.f32.mrf.mxu0
        %v5050 = vadd.f32 0.0, %v5049
        %5051 = vmatprep.mubr.f32.mxu0 0.0
        %5052 = vmatmul.mubr.f32.gmra.mxu0 %v4914
        %v5053 = vpop.f32.mrf.mxu0
        %v5054 = vadd.f32 0.0, %v5053
        %v5055 = vpop.f32.mrf.mxu0
        %v5056 = vadd.f32 0.0, %v5055
        %5057 = vmatprep.mubr.f32.mxu0 0.0
        %5058 = vmatmul.mubr.f32.gmra.mxu0 %v4915
        %v5059 = vpop.f32.mrf.mxu0
        %v5060 = vadd.f32 0.0, %v5059
        %v5061 = vpop.f32.mrf.mxu0
        %v5062 = vadd.f32 0.0, %v5061
        %5063 = vmatprep.mubr.f32.mxu0 0.0
        %5064 = vmatmul.mubr.f32.gmra.mxu0 %v4916
        %v5065 = vpop.f32.mrf.mxu0
        %v5066 = vadd.f32 0.0, %v5065
        %v5067 = vpop.f32.mrf.mxu0
        %v5068 = vadd.f32 0.0, %v5067
        %5069 = vdwg.mxu0
        %5070 = vmatprep.subr.mxu0 %v4980
        %5071 = vmatpush1.msra.mxu0 %v4979
        %5072 = vmatprep.subr.mxu0 %v4976
        %5073 = vmatpush1.msra.mxu0 %v4975
        %5074 = vmatprep.subr.mxu0 %v4972
        %5075 = vmatpush1.msra.mxu0 %v4971
        %5076 = vmatprep.subr.mxu0 %v4968
        %5077 = vmatpush1.msra.mxu0 %v4967
        %5078 = vmatprep.subr.mxu0 %v4964
        %5079 = vmatpush1.msra.mxu0 %v4963
        %5080 = vmatprep.subr.mxu0 %v4960
        %5081 = vmatpush1.msra.mxu0 %v4959
        %5082 = vmatprep.subr.mxu0 %v4956
        %5083 = vmatpush1.msra.mxu0 %v4955
        %5084 = vmatprep.subr.mxu0 %v4952
        %5085 = vmatpush1.msra.mxu0 %v4951
        %5086 = vmatprep.subr.mxu0 %v4948
        %5087 = vmatpush1.msra.mxu0 %v4947
        %5088 = vmatprep.subr.mxu0 %v4944
        %5089 = vmatpush1.msra.mxu0 %v4943
        %5090 = vmatprep.subr.mxu0 %v4940
        %5091 = vmatpush1.msra.mxu0 %v4939
        %5092 = vmatprep.subr.mxu0 %v4936
        %5093 = vmatpush1.msra.mxu0 %v4935
        %5094 = vmatprep.subr.mxu0 %v4932
        %5095 = vmatpush1.msra.mxu0 %v4931
        %5096 = vmatprep.subr.mxu0 %v4928
        %5097 = vmatpush1.msra.mxu0 %v4927
        %5098 = vmatprep.subr.mxu0 %v4924
        %5099 = vmatpush1.msra.mxu0 %v4923
        %5100 = vmatprep.subr.mxu0 %v4920
        %5101 = vmatpush1.msra.mxu0 %v4919
        %5102 = vmatprep.subr.mxu0 0.0
        %5103 = vmatpush2.msra.mxu0 0.0
        %5104 = vmatprep.subr.mxu0 0.0
        %5105 = vmatpush2.msra.mxu0 0.0
        %5106 = vmatprep.subr.mxu0 0.0
        %5107 = vmatpush2.msra.mxu0 0.0
        %5108 = vmatprep.subr.mxu0 0.0
        %5109 = vmatpush2.msra.mxu0 0.0
        %5110 = vmatprep.subr.mxu0 0.0
        %5111 = vmatpush2.msra.mxu0 0.0
        %5112 = vmatprep.subr.mxu0 0.0
        %5113 = vmatpush2.msra.mxu0 0.0
        %5114 = vmatprep.subr.mxu0 0.0
        %5115 = vmatpush2.msra.mxu0 0.0
        %5116 = vmatprep.subr.mxu0 0.0
        %5117 = vmatpush2.msra.mxu0 0.0
        %5118 = vmatprep.subr.mxu0 0.0
        %5119 = vmatpush2.msra.mxu0 0.0
        %5120 = vmatprep.subr.mxu0 0.0
        %5121 = vmatpush2.msra.mxu0 0.0
        %5122 = vmatprep.subr.mxu0 0.0
        %5123 = vmatpush2.msra.mxu0 0.0
        %5124 = vmatprep.subr.mxu0 0.0
        %5125 = vmatpush2.msra.mxu0 0.0
        %5126 = vmatprep.subr.mxu0 0.0
        %5127 = vmatpush2.msra.mxu0 0.0
        %5128 = vmatprep.subr.mxu0 0.0
        %5129 = vmatpush2.msra.mxu0 0.0
        %5130 = vmatprep.subr.mxu0 0.0
        %5131 = vmatpush2.msra.mxu0 0.0
        %5132 = vmatprep.subr.mxu0 0.0
        %5133 = vmatpush2.msra.mxu0 0.0
        %5134 = vmatprep.mubr.f32.mxu0 0.0
        %5135 = vmatmul.mubr.f32.gmra.mxu0 %v4913
        %v5136 = vpop.f32.mrf.mxu0
        %v5137 = vadd.f32 0.0, %v5136
        %v5138 = vpop.f32.mrf.mxu0
        %v5139 = vadd.f32 0.0, %v5138
        %5140 = vmatprep.mubr.f32.mxu0 0.0
        %5141 = vmatmul.mubr.f32.gmra.mxu0 %v4914
        %v5142 = vpop.f32.mrf.mxu0
        %v5143 = vadd.f32 0.0, %v5142
        %v5144 = vpop.f32.mrf.mxu0
        %v5145 = vadd.f32 0.0, %v5144
        %5146 = vmatprep.mubr.f32.mxu0 0.0
        %5147 = vmatmul.mubr.f32.gmra.mxu0 %v4915
        %v5148 = vpop.f32.mrf.mxu0
        %v5149 = vadd.f32 0.0, %v5148
        %v5150 = vpop.f32.mrf.mxu0
        %v5151 = vadd.f32 0.0, %v5150
        %5152 = vmatprep.mubr.f32.mxu0 0.0
        %5153 = vmatmul.mubr.f32.gmra.mxu0 %v4916
        %v5154 = vpop.f32.mrf.mxu0
        %v5155 = vadd.f32 0.0, %v5154
        %v5156 = vpop.f32.mrf.mxu0
        %v5157 = vadd.f32 0.0, %v5156
        %5158 = vdwg.mxu0
        %v5159 = vmul.f32 %v5048, 0.5
        %v5160 = vmul.f32 %v5050, 0.5
        %v5161 = vmul.f32 %v5137, 0.5
        %v5162 = vmul.f32 %v5139, 0.5
        %v5163 = vmul.f32 %v5054, 0.5
        %v5164 = vmul.f32 %v5056, 0.5
        %v5165 = vmul.f32 %v5143, 0.5
        %v5166 = vmul.f32 %v5145, 0.5
        %v5167 = vmul.f32 %v5060, 0.5
        %v5168 = vmul.f32 %v5062, 0.5
        %v5169 = vmul.f32 %v5149, 0.5
        %v5170 = vmul.f32 %v5151, 0.5
        %v5171 = vmul.f32 %v5066, 0.5
        %v5172 = vmul.f32 %v5068, 0.5
        %v5173 = vmul.f32 %v5155, 0.5
        %v5174 = vmul.f32 %v5157, 0.5
        %v5175 = vmul.f32 %v5048, 0.70710677
        %v5176 = vmul.f32 %v5050, 0.70710677
        %v5177 = vmul.f32 %v5137, 0.70710677
        %v5178 = vmul.f32 %v5139, 0.70710677
        %v5179 = vmul.f32 %v5054, 0.70710677
        %v5180 = vmul.f32 %v5056, 0.70710677
        %v5181 = vmul.f32 %v5143, 0.70710677
        %v5182 = vmul.f32 %v5145, 0.70710677
        %v5183 = vmul.f32 %v5060, 0.70710677
        %v5184 = vmul.f32 %v5062, 0.70710677
        %v5185 = vmul.f32 %v5149, 0.70710677
        %v5186 = vmul.f32 %v5151, 0.70710677
        %v5187 = vmul.f32 %v5066, 0.70710677
        %v5188 = vmul.f32 %v5068, 0.70710677
        %v5189 = vmul.f32 %v5155, 0.70710677
        %v5190 = vmul.f32 %v5157, 0.70710677
        %v5191 = vand.u32 2147483647, %v5175
        %v5192 = vand.u32 2147483647, %v5176
        %v5193 = vand.u32 2147483647, %v5177
        %v5194 = vand.u32 2147483647, %v5178
        %v5195 = vand.u32 2147483647, %v5179
        %v5196 = vand.u32 2147483647, %v5180
        %v5197 = vand.u32 2147483647, %v5181
        %v5198 = vand.u32 2147483647, %v5182
        %v5199 = vand.u32 2147483647, %v5183
        %v5200 = vand.u32 2147483647, %v5184
        %v5201 = vand.u32 2147483647, %v5185
        %v5202 = vand.u32 2147483647, %v5186
        %v5203 = vand.u32 2147483647, %v5187
        %v5204 = vand.u32 2147483647, %v5188
        %v5205 = vand.u32 2147483647, %v5189
        %v5206 = vand.u32 2147483647, %v5190
        %v5207 = vmul.f32 %v5191, 0.3275911
        %v5208 = vmul.f32 %v5192, 0.3275911
        %v5209 = vmul.f32 %v5193, 0.3275911
        %v5210 = vmul.f32 %v5194, 0.3275911
        %v5211 = vmul.f32 %v5195, 0.3275911
        %v5212 = vmul.f32 %v5196, 0.3275911
        %v5213 = vmul.f32 %v5197, 0.3275911
        %v5214 = vmul.f32 %v5198, 0.3275911
        %v5215 = vmul.f32 %v5199, 0.3275911
        %v5216 = vmul.f32 %v5200, 0.3275911
        %v5217 = vmul.f32 %v5201, 0.3275911
        %v5218 = vmul.f32 %v5202, 0.3275911
        %v5219 = vmul.f32 %v5203, 0.3275911
        %v5220 = vmul.f32 %v5204, 0.3275911
        %v5221 = vmul.f32 %v5205, 0.3275911
        %v5222 = vmul.f32 %v5206, 0.3275911
        %v5223 = vadd.f32 %v5207, 1.0
        %v5224 = vadd.f32 %v5208, 1.0
        %v5225 = vadd.f32 %v5209, 1.0
        %v5226 = vadd.f32 %v5210, 1.0
        %v5227 = vadd.f32 %v5211, 1.0
        %v5228 = vadd.f32 %v5212, 1.0
        %v5229 = vadd.f32 %v5213, 1.0
        %v5230 = vadd.f32 %v5214, 1.0
        %v5231 = vadd.f32 %v5215, 1.0
        %v5232 = vadd.f32 %v5216, 1.0
        %v5233 = vadd.f32 %v5217, 1.0
        %v5234 = vadd.f32 %v5218, 1.0
        %v5235 = vadd.f32 %v5219, 1.0
        %v5236 = vadd.f32 %v5220, 1.0
        %v5237 = vadd.f32 %v5221, 1.0
        %v5238 = vadd.f32 %v5222, 1.0
        %v5239 = vrcp.pop %v5223
        %v5240 = vmul.f32 1.0, %v5239
        %v5241 = vrcp.pop %v5224
        %v5242 = vmul.f32 1.0, %v5241
        %v5243 = vrcp.pop %v5225
        %v5244 = vmul.f32 1.0, %v5243
        %v5245 = vrcp.pop %v5226
        %v5246 = vmul.f32 1.0, %v5245
        %v5247 = vrcp.pop %v5227
        %v5248 = vmul.f32 1.0, %v5247
        %v5249 = vrcp.pop %v5228
        %v5250 = vmul.f32 1.0, %v5249
        %v5251 = vrcp.pop %v5229
        %v5252 = vmul.f32 1.0, %v5251
        %v5253 = vrcp.pop %v5230
        %v5254 = vmul.f32 1.0, %v5253
        %v5255 = vrcp.pop %v5231
        %v5256 = vmul.f32 1.0, %v5255
        %v5257 = vrcp.pop %v5232
        %v5258 = vmul.f32 1.0, %v5257
        %v5259 = vrcp.pop %v5233
        %v5260 = vmul.f32 1.0, %v5259
        %v5261 = vrcp.pop %v5234
        %v5262 = vmul.f32 1.0, %v5261
        %v5263 = vrcp.pop %v5235
        %v5264 = vmul.f32 1.0, %v5263
        %v5265 = vrcp.pop %v5236
        %v5266 = vmul.f32 1.0, %v5265
        %v5267 = vrcp.pop %v5237
        %v5268 = vmul.f32 1.0, %v5267
        %v5269 = vrcp.pop %v5238
        %v5270 = vmul.f32 1.0, %v5269
        %v5271 = vmul.f32 %v5240, 1.0614054
        %v5272 = vmul.f32 %v5242, 1.0614054
        %v5273 = vmul.f32 %v5244, 1.0614054
        %v5274 = vmul.f32 %v5246, 1.0614054
        %v5275 = vmul.f32 %v5248, 1.0614054
        %v5276 = vmul.f32 %v5250, 1.0614054
        %v5277 = vmul.f32 %v5252, 1.0614054
        %v5278 = vmul.f32 %v5254, 1.0614054
        %v5279 = vmul.f32 %v5256, 1.0614054
        %v5280 = vmul.f32 %v5258, 1.0614054
        %v5281 = vmul.f32 %v5260, 1.0614054
        %v5282 = vmul.f32 %v5262, 1.0614054
        %v5283 = vmul.f32 %v5264, 1.0614054
        %v5284 = vmul.f32 %v5266, 1.0614054
        %v5285 = vmul.f32 %v5268, 1.0614054
        %v5286 = vmul.f32 %v5270, 1.0614054
        %v5287 = vadd.f32 %v5271, -1.4531521
        %v5288 = vadd.f32 %v5272, -1.4531521
        %v5289 = vadd.f32 %v5273, -1.4531521
        %v5290 = vadd.f32 %v5274, -1.4531521
        %v5291 = vadd.f32 %v5275, -1.4531521
        %v5292 = vadd.f32 %v5276, -1.4531521
        %v5293 = vadd.f32 %v5277, -1.4531521
        %v5294 = vadd.f32 %v5278, -1.4531521
        %v5295 = vadd.f32 %v5279, -1.4531521
        %v5296 = vadd.f32 %v5280, -1.4531521
        %v5297 = vadd.f32 %v5281, -1.4531521
        %v5298 = vadd.f32 %v5282, -1.4531521
        %v5299 = vadd.f32 %v5283, -1.4531521
        %v5300 = vadd.f32 %v5284, -1.4531521
        %v5301 = vadd.f32 %v5285, -1.4531521
        %v5302 = vadd.f32 %v5286, -1.4531521
        %v5303 = vmul.f32 %v5287, %v5240
        %v5304 = vmul.f32 %v5288, %v5242
        %v5305 = vmul.f32 %v5289, %v5244
        %v5306 = vmul.f32 %v5290, %v5246
        %v5307 = vmul.f32 %v5291, %v5248
        %v5308 = vmul.f32 %v5292, %v5250
        %v5309 = vmul.f32 %v5293, %v5252
        %v5310 = vmul.f32 %v5294, %v5254
        %v5311 = vmul.f32 %v5295, %v5256
        %v5312 = vmul.f32 %v5296, %v5258
        %v5313 = vmul.f32 %v5297, %v5260
        %v5314 = vmul.f32 %v5298, %v5262
        %v5315 = vmul.f32 %v5299, %v5264
        %v5316 = vmul.f32 %v5300, %v5266
        %v5317 = vmul.f32 %v5301, %v5268
        %v5318 = vmul.f32 %v5302, %v5270
        %v5319 = vadd.f32 %v5303, 1.4214138
        %v5320 = vadd.f32 %v5304, 1.4214138
        %v5321 = vadd.f32 %v5305, 1.4214138
        %v5322 = vadd.f32 %v5306, 1.4214138
        %v5323 = vadd.f32 %v5307, 1.4214138
        %v5324 = vadd.f32 %v5308, 1.4214138
        %v5325 = vadd.f32 %v5309, 1.4214138
        %v5326 = vadd.f32 %v5310, 1.4214138
        %v5327 = vadd.f32 %v5311, 1.4214138
        %v5328 = vadd.f32 %v5312, 1.4214138
        %v5329 = vadd.f32 %v5313, 1.4214138
        %v5330 = vadd.f32 %v5314, 1.4214138
        %v5331 = vadd.f32 %v5315, 1.4214138
        %v5332 = vadd.f32 %v5316, 1.4214138
        %v5333 = vadd.f32 %v5317, 1.4214138
        %v5334 = vadd.f32 %v5318, 1.4214138
        %v5335 = vmul.f32 %v5319, %v5240
        %v5336 = vmul.f32 %v5320, %v5242
        %v5337 = vmul.f32 %v5321, %v5244
        %v5338 = vmul.f32 %v5322, %v5246
        %v5339 = vmul.f32 %v5323, %v5248
        %v5340 = vmul.f32 %v5324, %v5250
        %v5341 = vmul.f32 %v5325, %v5252
        %v5342 = vmul.f32 %v5326, %v5254
        %v5343 = vmul.f32 %v5327, %v5256
        %v5344 = vmul.f32 %v5328, %v5258
        %v5345 = vmul.f32 %v5329, %v5260
        %v5346 = vmul.f32 %v5330, %v5262
        %v5347 = vmul.f32 %v5331, %v5264
        %v5348 = vmul.f32 %v5332, %v5266
        %v5349 = vmul.f32 %v5333, %v5268
        %v5350 = vmul.f32 %v5334, %v5270
        %v5351 = vadd.f32 %v5335, -0.28449672
        %v5352 = vadd.f32 %v5336, -0.28449672
        %v5353 = vadd.f32 %v5337, -0.28449672
        %v5354 = vadd.f32 %v5338, -0.28449672
        %v5355 = vadd.f32 %v5339, -0.28449672
        %v5356 = vadd.f32 %v5340, -0.28449672
        %v5357 = vadd.f32 %v5341, -0.28449672
        %v5358 = vadd.f32 %v5342, -0.28449672
        %v5359 = vadd.f32 %v5343, -0.28449672
        %v5360 = vadd.f32 %v5344, -0.28449672
        %v5361 = vadd.f32 %v5345, -0.28449672
        %v5362 = vadd.f32 %v5346, -0.28449672
        %v5363 = vadd.f32 %v5347, -0.28449672
        %v5364 = vadd.f32 %v5348, -0.28449672
        %v5365 = vadd.f32 %v5349, -0.28449672
        %v5366 = vadd.f32 %v5350, -0.28449672
        %v5367 = vmul.f32 %v5351, %v5240
        %v5368 = vmul.f32 %v5352, %v5242
        %v5369 = vmul.f32 %v5353, %v5244
        %v5370 = vmul.f32 %v5354, %v5246
        %v5371 = vmul.f32 %v5355, %v5248
        %v5372 = vmul.f32 %v5356, %v5250
        %v5373 = vmul.f32 %v5357, %v5252
        %v5374 = vmul.f32 %v5358, %v5254
        %v5375 = vmul.f32 %v5359, %v5256
        %v5376 = vmul.f32 %v5360, %v5258
        %v5377 = vmul.f32 %v5361, %v5260
        %v5378 = vmul.f32 %v5362, %v5262
        %v5379 = vmul.f32 %v5363, %v5264
        %v5380 = vmul.f32 %v5364, %v5266
        %v5381 = vmul.f32 %v5365, %v5268
        %v5382 = vmul.f32 %v5366, %v5270
        %v5383 = vadd.f32 %v5367, 0.2548296
        %v5384 = vadd.f32 %v5368, 0.2548296
        %v5385 = vadd.f32 %v5369, 0.2548296
        %v5386 = vadd.f32 %v5370, 0.2548296
        %v5387 = vadd.f32 %v5371, 0.2548296
        %v5388 = vadd.f32 %v5372, 0.2548296
        %v5389 = vadd.f32 %v5373, 0.2548296
        %v5390 = vadd.f32 %v5374, 0.2548296
        %v5391 = vadd.f32 %v5375, 0.2548296
        %v5392 = vadd.f32 %v5376, 0.2548296
        %v5393 = vadd.f32 %v5377, 0.2548296
        %v5394 = vadd.f32 %v5378, 0.2548296
        %v5395 = vadd.f32 %v5379, 0.2548296
        %v5396 = vadd.f32 %v5380, 0.2548296
        %v5397 = vadd.f32 %v5381, 0.2548296
        %v5398 = vadd.f32 %v5382, 0.2548296
        %v5399 = vmul.f32 %v5383, %v5240
        %v5400 = vmul.f32 %v5384, %v5242
        %v5401 = vmul.f32 %v5385, %v5244
        %v5402 = vmul.f32 %v5386, %v5246
        %v5403 = vmul.f32 %v5387, %v5248
        %v5404 = vmul.f32 %v5388, %v5250
        %v5405 = vmul.f32 %v5389, %v5252
        %v5406 = vmul.f32 %v5390, %v5254
        %v5407 = vmul.f32 %v5391, %v5256
        %v5408 = vmul.f32 %v5392, %v5258
        %v5409 = vmul.f32 %v5393, %v5260
        %v5410 = vmul.f32 %v5394, %v5262
        %v5411 = vmul.f32 %v5395, %v5264
        %v5412 = vmul.f32 %v5396, %v5266
        %v5413 = vmul.f32 %v5397, %v5268
        %v5414 = vmul.f32 %v5398, %v5270
        %v5415 = vsub.f32 0.0, %v5191
        %v5416 = vsub.f32 0.0, %v5192
        %v5417 = vsub.f32 0.0, %v5193
        %v5418 = vsub.f32 0.0, %v5194
        %v5419 = vsub.f32 0.0, %v5195
        %v5420 = vsub.f32 0.0, %v5196
        %v5421 = vsub.f32 0.0, %v5197
        %v5422 = vsub.f32 0.0, %v5198
        %v5423 = vsub.f32 0.0, %v5199
        %v5424 = vsub.f32 0.0, %v5200
        %v5425 = vsub.f32 0.0, %v5201
        %v5426 = vsub.f32 0.0, %v5202
        %v5427 = vsub.f32 0.0, %v5203
        %v5428 = vsub.f32 0.0, %v5204
        %v5429 = vsub.f32 0.0, %v5205
        %v5430 = vsub.f32 0.0, %v5206
        %v5431 = vmul.f32 %v5415, %v5191
        %v5432 = vmul.f32 %v5416, %v5192
        %v5433 = vmul.f32 %v5417, %v5193
        %v5434 = vmul.f32 %v5418, %v5194
        %v5435 = vmul.f32 %v5419, %v5195
        %v5436 = vmul.f32 %v5420, %v5196
        %v5437 = vmul.f32 %v5421, %v5197
        %v5438 = vmul.f32 %v5422, %v5198
        %v5439 = vmul.f32 %v5423, %v5199
        %v5440 = vmul.f32 %v5424, %v5200
        %v5441 = vmul.f32 %v5425, %v5201
        %v5442 = vmul.f32 %v5426, %v5202
        %v5443 = vmul.f32 %v5427, %v5203
        %v5444 = vmul.f32 %v5428, %v5204
        %v5445 = vmul.f32 %v5429, %v5205
        %v5446 = vmul.f32 %v5430, %v5206
        %v5447 = vmul.f32 %v5431, 1.442695
        %v5448 = vpow.pop %v5447
        %v5449 = vmul.f32 %v5432, 1.442695
        %v5450 = vpow.pop %v5449
        %v5451 = vmul.f32 %v5433, 1.442695
        %v5452 = vpow.pop %v5451
        %v5453 = vmul.f32 %v5434, 1.442695
        %v5454 = vpow.pop %v5453
        %v5455 = vmul.f32 %v5435, 1.442695
        %v5456 = vpow.pop %v5455
        %v5457 = vmul.f32 %v5436, 1.442695
        %v5458 = vpow.pop %v5457
        %v5459 = vmul.f32 %v5437, 1.442695
        %v5460 = vpow.pop %v5459
        %v5461 = vmul.f32 %v5438, 1.442695
        %v5462 = vpow.pop %v5461
        %v5463 = vmul.f32 %v5439, 1.442695
        %v5464 = vpow.pop %v5463
        %v5465 = vmul.f32 %v5440, 1.442695
        %v5466 = vpow.pop %v5465
        %v5467 = vmul.f32 %v5441, 1.442695
        %v5468 = vpow.pop %v5467
        %v5469 = vmul.f32 %v5442, 1.442695
        %v5470 = vpow.pop %v5469
        %v5471 = vmul.f32 %v5443, 1.442695
        %v5472 = vpow.pop %v5471
        %v5473 = vmul.f32 %v5444, 1.442695
        %v5474 = vpow.pop %v5473
        %v5475 = vmul.f32 %v5445, 1.442695
        %v5476 = vpow.pop %v5475
        %v5477 = vmul.f32 %v5446, 1.442695
        %v5478 = vpow.pop %v5477
        %v5479 = vmul.f32 %v5399, %v5448
        %v5480 = vmul.f32 %v5400, %v5450
        %v5481 = vmul.f32 %v5401, %v5452
        %v5482 = vmul.f32 %v5402, %v5454
        %v5483 = vmul.f32 %v5403, %v5456
        %v5484 = vmul.f32 %v5404, %v5458
        %v5485 = vmul.f32 %v5405, %v5460
        %v5486 = vmul.f32 %v5406, %v5462
        %v5487 = vmul.f32 %v5407, %v5464
        %v5488 = vmul.f32 %v5408, %v5466
        %v5489 = vmul.f32 %v5409, %v5468
        %v5490 = vmul.f32 %v5410, %v5470
        %v5491 = vmul.f32 %v5411, %v5472
        %v5492 = vmul.f32 %v5412, %v5474
        %v5493 = vmul.f32 %v5413, %v5476
        %v5494 = vmul.f32 %v5414, %v5478
        %v5495 = vsub.f32 1.0, %v5479
        %v5496 = vsub.f32 1.0, %v5480
        %v5497 = vsub.f32 1.0, %v5481
        %v5498 = vsub.f32 1.0, %v5482
        %v5499 = vsub.f32 1.0, %v5483
        %v5500 = vsub.f32 1.0, %v5484
        %v5501 = vsub.f32 1.0, %v5485
        %v5502 = vsub.f32 1.0, %v5486
        %v5503 = vsub.f32 1.0, %v5487
        %v5504 = vsub.f32 1.0, %v5488
        %v5505 = vsub.f32 1.0, %v5489
        %v5506 = vsub.f32 1.0, %v5490
        %v5507 = vsub.f32 1.0, %v5491
        %v5508 = vsub.f32 1.0, %v5492
        %v5509 = vsub.f32 1.0, %v5493
        %v5510 = vsub.f32 1.0, %v5494
        %vm5511 = vcmp.ge.f32.partialorder %v5175, 0.0
        %vm5512 = vcmp.ge.f32.partialorder %v5176, 0.0
        %vm5513 = vcmp.ge.f32.partialorder %v5177, 0.0
        %vm5514 = vcmp.ge.f32.partialorder %v5178, 0.0
        %vm5515 = vcmp.ge.f32.partialorder %v5179, 0.0
        %vm5516 = vcmp.ge.f32.partialorder %v5180, 0.0
        %vm5517 = vcmp.ge.f32.partialorder %v5181, 0.0
        %vm5518 = vcmp.ge.f32.partialorder %v5182, 0.0
        %vm5519 = vcmp.ge.f32.partialorder %v5183, 0.0
        %vm5520 = vcmp.ge.f32.partialorder %v5184, 0.0
        %vm5521 = vcmp.ge.f32.partialorder %v5185, 0.0
        %vm5522 = vcmp.ge.f32.partialorder %v5186, 0.0
        %vm5523 = vcmp.ge.f32.partialorder %v5187, 0.0
        %vm5524 = vcmp.ge.f32.partialorder %v5188, 0.0
        %vm5525 = vcmp.ge.f32.partialorder %v5189, 0.0
        %vm5526 = vcmp.ge.f32.partialorder %v5190, 0.0
        %v5527 = vsub.f32 0.0, %v5495
        %v5528 = vsub.f32 0.0, %v5496
        %v5529 = vsub.f32 0.0, %v5497
        %v5530 = vsub.f32 0.0, %v5498
        %v5531 = vsub.f32 0.0, %v5499
        %v5532 = vsub.f32 0.0, %v5500
        %v5533 = vsub.f32 0.0, %v5501
        %v5534 = vsub.f32 0.0, %v5502
        %v5535 = vsub.f32 0.0, %v5503
        %v5536 = vsub.f32 0.0, %v5504
        %v5537 = vsub.f32 0.0, %v5505
        %v5538 = vsub.f32 0.0, %v5506
        %v5539 = vsub.f32 0.0, %v5507
        %v5540 = vsub.f32 0.0, %v5508
        %v5541 = vsub.f32 0.0, %v5509
        %v5542 = vsub.f32 0.0, %v5510
        %v5543 = vsel %vm5511, %v5495, %v5527
        %v5544 = vsel %vm5512, %v5496, %v5528
        %v5545 = vsel %vm5513, %v5497, %v5529
        %v5546 = vsel %vm5514, %v5498, %v5530
        %v5547 = vsel %vm5515, %v5499, %v5531
        %v5548 = vsel %vm5516, %v5500, %v5532
        %v5549 = vsel %vm5517, %v5501, %v5533
        %v5550 = vsel %vm5518, %v5502, %v5534
        %v5551 = vsel %vm5519, %v5503, %v5535
        %v5552 = vsel %vm5520, %v5504, %v5536
        %v5553 = vsel %vm5521, %v5505, %v5537
        %v5554 = vsel %vm5522, %v5506, %v5538
        %v5555 = vsel %vm5523, %v5507, %v5539
        %v5556 = vsel %vm5524, %v5508, %v5540
        %v5557 = vsel %vm5525, %v5509, %v5541
        %v5558 = vsel %vm5526, %v5510, %v5542
        %v5559 = vadd.f32 %v5543, 1.0
        %v5560 = vadd.f32 %v5544, 1.0
        %v5561 = vadd.f32 %v5545, 1.0
        %v5562 = vadd.f32 %v5546, 1.0
        %v5563 = vadd.f32 %v5547, 1.0
        %v5564 = vadd.f32 %v5548, 1.0
        %v5565 = vadd.f32 %v5549, 1.0
        %v5566 = vadd.f32 %v5550, 1.0
        %v5567 = vadd.f32 %v5551, 1.0
        %v5568 = vadd.f32 %v5552, 1.0
        %v5569 = vadd.f32 %v5553, 1.0
        %v5570 = vadd.f32 %v5554, 1.0
        %v5571 = vadd.f32 %v5555, 1.0
        %v5572 = vadd.f32 %v5556, 1.0
        %v5573 = vadd.f32 %v5557, 1.0
        %v5574 = vadd.f32 %v5558, 1.0
        %v5575 = vmul.f32 %v5159, %v5559
        %v5576 = vmul.f32 %v5160, %v5560
        %v5577 = vmul.f32 %v5161, %v5561
        %v5578 = vmul.f32 %v5162, %v5562
        %v5579 = vmul.f32 %v5163, %v5563
        %v5580 = vmul.f32 %v5164, %v5564
        %v5581 = vmul.f32 %v5165, %v5565
        %v5582 = vmul.f32 %v5166, %v5566
        %v5583 = vmul.f32 %v5167, %v5567
        %v5584 = vmul.f32 %v5168, %v5568
        %v5585 = vmul.f32 %v5169, %v5569
        %v5586 = vmul.f32 %v5170, %v5570
        %v5587 = vmul.f32 %v5171, %v5571
        %v5588 = vmul.f32 %v5172, %v5572
        %v5589 = vmul.f32 %v5173, %v5573
        %v5590 = vmul.f32 %v5174, %v5574
        %v5591 = vld [vmem:[%s779] sm:$0xff]
        %v5592 = vld [vmem:[%s779 + $0x8] sm:$0xff]
        %v5593 = vld [vmem:[%s779 + $0x10] sm:$0xff]
        %v5594 = vld [vmem:[%s779 + $0x18] sm:$0xff]
        %v5595 = vld [vmem:[%s779 + $0x20] sm:$0xff]
        %v5596 = vld [vmem:[%s779 + $0x28] sm:$0xff]
        %v5597 = vld [vmem:[%s779 + $0x30] sm:$0xff]
        %v5598 = vld [vmem:[%s779 + $0x38] sm:$0xff]
        %v5599 = vld [vmem:[%s779 + $0x40] sm:$0xff]
        %v5600 = vld [vmem:[%s779 + $0x48] sm:$0xff]
        %v5601 = vld [vmem:[%s779 + $0x50] sm:$0xff]
        %v5602 = vld [vmem:[%s779 + $0x58] sm:$0xff]
        %v5603 = vld [vmem:[%s779 + $0x60] sm:$0xff]
        %v5604 = vld [vmem:[%s779 + $0x68] sm:$0xff]
        %v5605 = vld [vmem:[%s779 + $0x70] sm:$0xff]
        %v5606 = vld [vmem:[%s779 + $0x78] sm:$0xff]
        %v5607 = vld [vmem:[%s779 + $0x80] sm:$0xff]
        %v5608 = vld [vmem:[%s779 + $0x88] sm:$0xff]
        %v5609 = vld [vmem:[%s779 + $0x90] sm:$0xff]
        %v5610 = vld [vmem:[%s779 + $0x98] sm:$0xff]
        %v5611 = vld [vmem:[%s779 + $0xa0] sm:$0xff]
        %v5612 = vld [vmem:[%s779 + $0xa8] sm:$0xff]
        %v5613 = vld [vmem:[%s779 + $0xb0] sm:$0xff]
        %v5614 = vld [vmem:[%s779 + $0xb8] sm:$0xff]
        %v5615 = vld [vmem:[%s779 + $0xc0] sm:$0xff]
        %v5616 = vld [vmem:[%s779 + $0xc8] sm:$0xff]
        %v5617 = vld [vmem:[%s779 + $0xd0] sm:$0xff]
        %v5618 = vld [vmem:[%s779 + $0xd8] sm:$0xff]
        %v5619 = vld [vmem:[%s779 + $0xe0] sm:$0xff]
        %v5620 = vld [vmem:[%s779 + $0xe8] sm:$0xff]
        %v5621 = vld [vmem:[%s779 + $0xf0] sm:$0xff]
        %v5622 = vld [vmem:[%s779 + $0xf8] sm:$0xff]
        %v5623 = vld [vmem:[%s779 + $0x100] sm:$0xff]
        %v5624 = vld [vmem:[%s779 + $0x108] sm:$0xff]
        %v5625 = vld [vmem:[%s779 + $0x110] sm:$0xff]
        %v5626 = vld [vmem:[%s779 + $0x118] sm:$0xff]
        %v5627 = vld [vmem:[%s779 + $0x120] sm:$0xff]
        %v5628 = vld [vmem:[%s779 + $0x128] sm:$0xff]
        %v5629 = vld [vmem:[%s779 + $0x130] sm:$0xff]
        %v5630 = vld [vmem:[%s779 + $0x138] sm:$0xff]
        %v5631 = vld [vmem:[%s779 + $0x140] sm:$0xff]
        %v5632 = vld [vmem:[%s779 + $0x148] sm:$0xff]
        %v5633 = vld [vmem:[%s779 + $0x150] sm:$0xff]
        %v5634 = vld [vmem:[%s779 + $0x158] sm:$0xff]
        %v5635 = vld [vmem:[%s779 + $0x160] sm:$0xff]
        %v5636 = vld [vmem:[%s779 + $0x168] sm:$0xff]
        %v5637 = vld [vmem:[%s779 + $0x170] sm:$0xff]
        %v5638 = vld [vmem:[%s779 + $0x178] sm:$0xff]
        %v5639 = vld [vmem:[%s779 + $0x180] sm:$0xff]
        %v5640 = vld [vmem:[%s779 + $0x188] sm:$0xff]
        %v5641 = vld [vmem:[%s779 + $0x190] sm:$0xff]
        %v5642 = vld [vmem:[%s779 + $0x198] sm:$0xff]
        %v5643 = vld [vmem:[%s779 + $0x1a0] sm:$0xff]
        %v5644 = vld [vmem:[%s779 + $0x1a8] sm:$0xff]
        %v5645 = vld [vmem:[%s779 + $0x1b0] sm:$0xff]
        %v5646 = vld [vmem:[%s779 + $0x1b8] sm:$0xff]
        %v5647 = vld [vmem:[%s779 + $0x1c0] sm:$0xff]
        %v5648 = vld [vmem:[%s779 + $0x1c8] sm:$0xff]
        %v5649 = vld [vmem:[%s779 + $0x1d0] sm:$0xff]
        %v5650 = vld [vmem:[%s779 + $0x1d8] sm:$0xff]
        %v5651 = vld [vmem:[%s779 + $0x1e0] sm:$0xff]
        %v5652 = vld [vmem:[%s779 + $0x1e8] sm:$0xff]
        %v5653 = vld [vmem:[%s779 + $0x1f0] sm:$0xff]
        %v5654 = vld [vmem:[%s779 + $0x1f8] sm:$0xff]
        %5655 = vmatprep.subr.mxu0 0.0
        %5656 = vmatpush1.msra.mxu0 %v5606
        %5657 = vmatprep.subr.mxu0 0.0
        %5658 = vmatpush1.msra.mxu0 %v5605
        %5659 = vmatprep.subr.mxu0 0.0
        %5660 = vmatpush1.msra.mxu0 %v5604
        %5661 = vmatprep.subr.mxu0 0.0
        %5662 = vmatpush1.msra.mxu0 %v5603
        %5663 = vmatprep.subr.mxu0 0.0
        %5664 = vmatpush1.msra.mxu0 %v5602
        %5665 = vmatprep.subr.mxu0 0.0
        %5666 = vmatpush1.msra.mxu0 %v5601
        %5667 = vmatprep.subr.mxu0 0.0
        %5668 = vmatpush1.msra.mxu0 %v5600
        %5669 = vmatprep.subr.mxu0 0.0
        %5670 = vmatpush1.msra.mxu0 %v5599
        %5671 = vmatprep.subr.mxu0 0.0
        %5672 = vmatpush1.msra.mxu0 %v5598
        %5673 = vmatprep.subr.mxu0 0.0
        %5674 = vmatpush1.msra.mxu0 %v5597
        %5675 = vmatprep.subr.mxu0 0.0
        %5676 = vmatpush1.msra.mxu0 %v5596
        %5677 = vmatprep.subr.mxu0 0.0
        %5678 = vmatpush1.msra.mxu0 %v5595
        %5679 = vmatprep.subr.mxu0 0.0
        %5680 = vmatpush1.msra.mxu0 %v5594
        %5681 = vmatprep.subr.mxu0 0.0
        %5682 = vmatpush1.msra.mxu0 %v5593
        %5683 = vmatprep.subr.mxu0 0.0
        %5684 = vmatpush1.msra.mxu0 %v5592
        %5685 = vmatprep.subr.mxu0 0.0
        %5686 = vmatpush1.msra.mxu0 %v5591
        %5687 = vmatprep.subr.mxu0 0.0
        %5688 = vmatpush2.msra.mxu0 %v5622
        %5689 = vmatprep.subr.mxu0 0.0
        %5690 = vmatpush2.msra.mxu0 %v5621
        %5691 = vmatprep.subr.mxu0 0.0
        %5692 = vmatpush2.msra.mxu0 %v5620
        %5693 = vmatprep.subr.mxu0 0.0
        %5694 = vmatpush2.msra.mxu0 %v5619
        %5695 = vmatprep.subr.mxu0 0.0
        %5696 = vmatpush2.msra.mxu0 %v5618
        %5697 = vmatprep.subr.mxu0 0.0
        %5698 = vmatpush2.msra.mxu0 %v5617
        %5699 = vmatprep.subr.mxu0 0.0
        %5700 = vmatpush2.msra.mxu0 %v5616
        %5701 = vmatprep.subr.mxu0 0.0
        %5702 = vmatpush2.msra.mxu0 %v5615
        %5703 = vmatprep.subr.mxu0 0.0
        %5704 = vmatpush2.msra.mxu0 %v5614
        %5705 = vmatprep.subr.mxu0 0.0
        %5706 = vmatpush2.msra.mxu0 %v5613
        %5707 = vmatprep.subr.mxu0 0.0
        %5708 = vmatpush2.msra.mxu0 %v5612
        %5709 = vmatprep.subr.mxu0 0.0
        %5710 = vmatpush2.msra.mxu0 %v5611
        %5711 = vmatprep.subr.mxu0 0.0
        %5712 = vmatpush2.msra.mxu0 %v5610
        %5713 = vmatprep.subr.mxu0 0.0
        %5714 = vmatpush2.msra.mxu0 %v5609
        %5715 = vmatprep.subr.mxu0 0.0
        %5716 = vmatpush2.msra.mxu0 %v5608
        %5717 = vmatprep.subr.mxu0 0.0
        %5718 = vmatpush2.msra.mxu0 %v5607
        %5719 = vmatprep.mubr.f32.mxu0 %v5576
        %5720 = vmatmul.mubr.f32.gmra.mxu0 %v5575
        %v5721 = vpop.f32.mrf.mxu0
        %v5722 = vadd.f32 0.0, %v5721
        %v5723 = vpop.f32.mrf.mxu0
        %5724 = vmatprep.mubr.f32.mxu0 %v5580
        %5725 = vmatmul.mubr.f32.gmra.mxu0 %v5579
        %v5726 = vpop.f32.mrf.mxu0
        %v5727 = vadd.f32 0.0, %v5726
        %v5728 = vpop.f32.mrf.mxu0
        %5729 = vmatprep.mubr.f32.mxu0 %v5584
        %5730 = vmatmul.mubr.f32.gmra.mxu0 %v5583
        %v5731 = vpop.f32.mrf.mxu0
        %v5732 = vadd.f32 0.0, %v5731
        %v5733 = vpop.f32.mrf.mxu0
        %5734 = vmatprep.mubr.f32.mxu0 %v5588
        %5735 = vmatmul.mubr.f32.gmra.mxu0 %v5587
        %v5736 = vpop.f32.mrf.mxu0
        %v5737 = vadd.f32 0.0, %v5736
        %v5738 = vpop.f32.mrf.mxu0
        %5739 = vdwg.mxu0
        %5740 = vmatprep.subr.mxu0 0.0
        %5741 = vmatpush1.msra.mxu0 %v5638
        %5742 = vmatprep.subr.mxu0 0.0
        %5743 = vmatpush1.msra.mxu0 %v5637
        %5744 = vmatprep.subr.mxu0 0.0
        %5745 = vmatpush1.msra.mxu0 %v5636
        %5746 = vmatprep.subr.mxu0 0.0
        %5747 = vmatpush1.msra.mxu0 %v5635
        %5748 = vmatprep.subr.mxu0 0.0
        %5749 = vmatpush1.msra.mxu0 %v5634
        %5750 = vmatprep.subr.mxu0 0.0
        %5751 = vmatpush1.msra.mxu0 %v5633
        %5752 = vmatprep.subr.mxu0 0.0
        %5753 = vmatpush1.msra.mxu0 %v5632
        %5754 = vmatprep.subr.mxu0 0.0
        %5755 = vmatpush1.msra.mxu0 %v5631
        %5756 = vmatprep.subr.mxu0 0.0
        %5757 = vmatpush1.msra.mxu0 %v5630
        %5758 = vmatprep.subr.mxu0 0.0
        %5759 = vmatpush1.msra.mxu0 %v5629
        %5760 = vmatprep.subr.mxu0 0.0
        %5761 = vmatpush1.msra.mxu0 %v5628
        %5762 = vmatprep.subr.mxu0 0.0
        %5763 = vmatpush1.msra.mxu0 %v5627
        %5764 = vmatprep.subr.mxu0 0.0
        %5765 = vmatpush1.msra.mxu0 %v5626
        %5766 = vmatprep.subr.mxu0 0.0
        %5767 = vmatpush1.msra.mxu0 %v5625
        %5768 = vmatprep.subr.mxu0 0.0
        %5769 = vmatpush1.msra.mxu0 %v5624
        %5770 = vmatprep.subr.mxu0 0.0
        %5771 = vmatpush1.msra.mxu0 %v5623
        %5772 = vmatprep.subr.mxu0 0.0
        %5773 = vmatpush2.msra.mxu0 %v5654
        %5774 = vmatprep.subr.mxu0 0.0
        %5775 = vmatpush2.msra.mxu0 %v5653
        %5776 = vmatprep.subr.mxu0 0.0
        %5777 = vmatpush2.msra.mxu0 %v5652
        %5778 = vmatprep.subr.mxu0 0.0
        %5779 = vmatpush2.msra.mxu0 %v5651
        %5780 = vmatprep.subr.mxu0 0.0
        %5781 = vmatpush2.msra.mxu0 %v5650
        %5782 = vmatprep.subr.mxu0 0.0
        %5783 = vmatpush2.msra.mxu0 %v5649
        %5784 = vmatprep.subr.mxu0 0.0
        %5785 = vmatpush2.msra.mxu0 %v5648
        %5786 = vmatprep.subr.mxu0 0.0
        %5787 = vmatpush2.msra.mxu0 %v5647
        %5788 = vmatprep.subr.mxu0 0.0
        %5789 = vmatpush2.msra.mxu0 %v5646
        %5790 = vmatprep.subr.mxu0 0.0
        %5791 = vmatpush2.msra.mxu0 %v5645
        %5792 = vmatprep.subr.mxu0 0.0
        %5793 = vmatpush2.msra.mxu0 %v5644
        %5794 = vmatprep.subr.mxu0 0.0
        %5795 = vmatpush2.msra.mxu0 %v5643
        %5796 = vmatprep.subr.mxu0 0.0
        %5797 = vmatpush2.msra.mxu0 %v5642
        %5798 = vmatprep.subr.mxu0 0.0
        %5799 = vmatpush2.msra.mxu0 %v5641
        %5800 = vmatprep.subr.mxu0 0.0
        %5801 = vmatpush2.msra.mxu0 %v5640
        %5802 = vmatprep.subr.mxu0 0.0
        %5803 = vmatpush2.msra.mxu0 %v5639
        %5804 = vmatprep.mubr.f32.mxu0 %v5578
        %5805 = vmatmul.mubr.f32.gmra.mxu0 %v5577
        %v5806 = vpop.f32.mrf.mxu0
        %v5807 = vadd.f32 %v5722, %v5806
        %v5808 = vpop.f32.mrf.mxu0
        %5809 = vmatprep.mubr.f32.mxu0 %v5582
        %5810 = vmatmul.mubr.f32.gmra.mxu0 %v5581
        %v5811 = vpop.f32.mrf.mxu0
        %v5812 = vadd.f32 %v5727, %v5811
        %v5813 = vpop.f32.mrf.mxu0
        %5814 = vmatprep.mubr.f32.mxu0 %v5586
        %5815 = vmatmul.mubr.f32.gmra.mxu0 %v5585
        %v5816 = vpop.f32.mrf.mxu0
        %v5817 = vadd.f32 %v5732, %v5816
        %v5818 = vpop.f32.mrf.mxu0
        %5819 = vmatprep.mubr.f32.mxu0 %v5590
        %5820 = vmatmul.mubr.f32.gmra.mxu0 %v5589
        %v5821 = vpop.f32.mrf.mxu0
        %v5822 = vadd.f32 %v5737, %v5821
        %v5823 = vpop.f32.mrf.mxu0
        %5824 = vdwg.mxu0
        %v5825 = vadd.f32 %v4847, %v5807
        %v5826 = vadd.f32 %v4848, %v5812
        %v5827 = vadd.f32 %v4849, %v5817
        %v5828 = vadd.f32 %v4850, %v5822
        %5829 = vst [vmem:[#allocation3] sm:$0xff] %v5825
        %5830 = vst [vmem:[#allocation3 + $0x8] sm:$0xff] %v5826
        %5831 = vst [vmem:[#allocation3 + $0x10] sm:$0xff] %v5827
        %5832 = vst [vmem:[#allocation3 + $0x18] sm:$0xff] %v5828
        %p5833 = scmp.eq.s32.totalorder %s32, 5
        // Predicated region
        $region105: #{perceiver_forward.1} parent=99 // pred_check
          %p5834 = pneg %p5833
        $region106: #{perceiver_forward.1} parent=99 // pred_check_branch
          %5836 = sbr.rel (%p5834) target = $region108
        $region107: #{perceiver_forward.1} parent=99 // pred_region
          %v5837 = vld [vmem:[%s16] sm:$0x1]
          %v5838 = vld [vmem:[%s17] sm:$0x1]
          %5839 = vadd.xlane.f32.xlu0 %v5825
          %v5840 = vpop.xlane.xlu0 %5839
          %5841 = vadd.xlane.f32.xlu0 %v5826
          %v5842 = vpop.xlane.xlu0 %5841
          %5843 = vadd.xlane.f32.xlu0 %v5827
          %v5844 = vpop.xlane.xlu0 %5843
          %5845 = vadd.xlane.f32.xlu0 %v5828
          %v5846 = vpop.xlane.xlu0 %5845
          %v5847 = vmul.f32 %v5840, %v968
          %v5848 = vmul.f32 %v5842, %v968
          %v5849 = vmul.f32 %v5844, %v968
          %v5850 = vmul.f32 %v5846, %v968
          %v5851 = vsub.f32 %v5825, %v5847
          %v5852 = vsub.f32 %v5826, %v5848
          %v5853 = vsub.f32 %v5827, %v5849
          %v5854 = vsub.f32 %v5828, %v5850
          %v5855 = vmul.f32 %v5851, %v5851
          %v5856 = vmul.f32 %v5852, %v5852
          %v5857 = vmul.f32 %v5853, %v5853
          %v5858 = vmul.f32 %v5854, %v5854
          %5859 = vadd.xlane.f32.xlu0 %v5855
          %v5860 = vpop.xlane.xlu0 %5859
          %5861 = vadd.xlane.f32.xlu0 %v5856
          %v5862 = vpop.xlane.xlu0 %5861
          %5863 = vadd.xlane.f32.xlu0 %v5857
          %v5864 = vpop.xlane.xlu0 %5863
          %5865 = vadd.xlane.f32.xlu0 %v5858
          %v5866 = vpop.xlane.xlu0 %5865
          %v5867 = vmul.f32 %v5860, %v968
          %v5868 = vmul.f32 %v5862, %v968
          %v5869 = vmul.f32 %v5864, %v968
          %v5870 = vmul.f32 %v5866, %v968
          %v5871 = vadd.f32 %v5867, 1e-05
          %v5872 = vadd.f32 %v5868, 1e-05
          %v5873 = vadd.f32 %v5869, 1e-05
          %v5874 = vadd.f32 %v5870, 1e-05
          %v5875 = vrsqrt.pop %v5871
          %v5876 = vrsqrt.pop %v5872
          %v5877 = vrsqrt.pop %v5873
          %v5878 = vrsqrt.pop %v5874
          %v5879 = vmul.f32 %v5851, %v5875
          %v5880 = vmul.f32 %v5852, %v5876
          %v5881 = vmul.f32 %v5853, %v5877
          %v5882 = vmul.f32 %v5854, %v5878
          %v5884 = vlaneseq
          %v5885 = vshrl.u32 %v5884, 7
          %v5886 = vsub.s32 0, %v5885
          %v5887 = vrot.slane %v5837, %v5886
          %v5889 = vmul.f32 %v5879, %v5887
          %v5890 = vmul.f32 %v5880, %v5887
          %v5891 = vmul.f32 %v5881, %v5887
          %v5892 = vmul.f32 %v5882, %v5887
          %v5894 = vlaneseq
          %v5895 = vshrl.u32 %v5894, 7
          %v5896 = vsub.s32 0, %v5895
          %v5897 = vrot.slane %v5838, %v5896
          %v5899 = vadd.f32 %v5889, %v5897
          %v5900 = vadd.f32 %v5890, %v5897
          %v5901 = vadd.f32 %v5891, %v5897
          %v5902 = vadd.f32 %v5892, %v5897
          %v5903 = vld [vmem:[%s18] sm:$0xff]
          %v5904 = vld [vmem:[%s18 + $0x8] sm:$0xff]
          %v5905 = vld [vmem:[%s18 + $0x10] sm:$0xff]
          %v5906 = vld [vmem:[%s18 + $0x18] sm:$0xff]
          %v5907 = vld [vmem:[%s18 + $0x20] sm:$0xff]
          %v5908 = vld [vmem:[%s18 + $0x28] sm:$0xff]
          %v5909 = vld [vmem:[%s18 + $0x30] sm:$0xff]
          %v5910 = vld [vmem:[%s18 + $0x38] sm:$0xff]
          %v5911 = vld [vmem:[%s18 + $0x40] sm:$0xff]
          %v5912 = vld [vmem:[%s18 + $0x48] sm:$0xff]
          %v5913 = vld [vmem:[%s18 + $0x50] sm:$0xff]
          %v5914 = vld [vmem:[%s18 + $0x58] sm:$0xff]
          %v5915 = vld [vmem:[%s18 + $0x60] sm:$0xff]
          %v5916 = vld [vmem:[%s18 + $0x68] sm:$0xff]
          %v5917 = vld [vmem:[%s18 + $0x70] sm:$0xff]
          %v5918 = vld [vmem:[%s18 + $0x78] sm:$0xff]
          %v5919 = vld [vmem:[%s18 + $0x80] sm:$0xff]
          %v5920 = vld [vmem:[%s18 + $0x88] sm:$0xff]
          %v5921 = vld [vmem:[%s18 + $0x90] sm:$0xff]
          %v5922 = vld [vmem:[%s18 + $0x98] sm:$0xff]
          %v5923 = vld [vmem:[%s18 + $0xa0] sm:$0xff]
          %v5924 = vld [vmem:[%s18 + $0xa8] sm:$0xff]
          %v5925 = vld [vmem:[%s18 + $0xb0] sm:$0xff]
          %v5926 = vld [vmem:[%s18 + $0xb8] sm:$0xff]
          %v5927 = vld [vmem:[%s18 + $0xc0] sm:$0xff]
          %v5928 = vld [vmem:[%s18 + $0xc8] sm:$0xff]
          %v5929 = vld [vmem:[%s18 + $0xd0] sm:$0xff]
          %v5930 = vld [vmem:[%s18 + $0xd8] sm:$0xff]
          %v5931 = vld [vmem:[%s18 + $0xe0] sm:$0xff]
          %v5932 = vld [vmem:[%s18 + $0xe8] sm:$0xff]
          %v5933 = vld [vmem:[%s18 + $0xf0] sm:$0xff]
          %v5934 = vld [vmem:[%s18 + $0xf8] sm:$0xff]
          %v5935 = vld [vmem:[%s19] sm:$0x3]
          %v5937 = vlaneseq
          %v5938 = vshrl.u32 %v5937, 7
          %v5939 = vsub.s32 0, %v5938
          %v5940 = vrot.slane %v5935, %v5939
          %v5941 = vlaneseq
          %v5942 = vshrl.u32 %v5941, 7
          %v5943 = vsub.s32 1, %v5942
          %v5944 = vrot.slane %v5935, %v5943
          %5947 = vmatprep.subr.mxu0 %v5934
          %5948 = vmatpush1.msra.mxu0 %v5933
          %5949 = vmatprep.subr.mxu0 %v5932
          %5950 = vmatpush1.msra.mxu0 %v5931
          %5951 = vmatprep.subr.mxu0 %v5930
          %5952 = vmatpush1.msra.mxu0 %v5929
          %5953 = vmatprep.subr.mxu0 %v5928
          %5954 = vmatpush1.msra.mxu0 %v5927
          %5955 = vmatprep.subr.mxu0 %v5926
          %5956 = vmatpush1.msra.mxu0 %v5925
          %5957 = vmatprep.subr.mxu0 %v5924
          %5958 = vmatpush1.msra.mxu0 %v5923
          %5959 = vmatprep.subr.mxu0 %v5922
          %5960 = vmatpush1.msra.mxu0 %v5921
          %5961 = vmatprep.subr.mxu0 %v5920
          %5962 = vmatpush1.msra.mxu0 %v5919
          %5963 = vmatprep.subr.mxu0 %v5918
          %5964 = vmatpush1.msra.mxu0 %v5917
          %5965 = vmatprep.subr.mxu0 %v5916
          %5966 = vmatpush1.msra.mxu0 %v5915
          %5967 = vmatprep.subr.mxu0 %v5914
          %5968 = vmatpush1.msra.mxu0 %v5913
          %5969 = vmatprep.subr.mxu0 %v5912
          %5970 = vmatpush1.msra.mxu0 %v5911
          %5971 = vmatprep.subr.mxu0 %v5910
          %5972 = vmatpush1.msra.mxu0 %v5909
          %5973 = vmatprep.subr.mxu0 %v5908
          %5974 = vmatpush1.msra.mxu0 %v5907
          %5975 = vmatprep.subr.mxu0 %v5906
          %5976 = vmatpush1.msra.mxu0 %v5905
          %5977 = vmatprep.subr.mxu0 %v5904
          %5978 = vmatpush1.msra.mxu0 %v5903
          %5979 = vmatprep.subr.mxu0 0.0
          %5980 = vmatpush2.msra.mxu0 0.0
          %5981 = vmatprep.subr.mxu0 0.0
          %5982 = vmatpush2.msra.mxu0 0.0
          %5983 = vmatprep.subr.mxu0 0.0
          %5984 = vmatpush2.msra.mxu0 0.0
          %5985 = vmatprep.subr.mxu0 0.0
          %5986 = vmatpush2.msra.mxu0 0.0
          %5987 = vmatprep.subr.mxu0 0.0
          %5988 = vmatpush2.msra.mxu0 0.0
          %5989 = vmatprep.subr.mxu0 0.0
          %5990 = vmatpush2.msra.mxu0 0.0
          %5991 = vmatprep.subr.mxu0 0.0
          %5992 = vmatpush2.msra.mxu0 0.0
          %5993 = vmatprep.subr.mxu0 0.0
          %5994 = vmatpush2.msra.mxu0 0.0
          %5995 = vmatprep.subr.mxu0 0.0
          %5996 = vmatpush2.msra.mxu0 0.0
          %5997 = vmatprep.subr.mxu0 0.0
          %5998 = vmatpush2.msra.mxu0 0.0
          %5999 = vmatprep.subr.mxu0 0.0
          %6000 = vmatpush2.msra.mxu0 0.0
          %6001 = vmatprep.subr.mxu0 0.0
          %6002 = vmatpush2.msra.mxu0 0.0
          %6003 = vmatprep.subr.mxu0 0.0
          %6004 = vmatpush2.msra.mxu0 0.0
          %6005 = vmatprep.subr.mxu0 0.0
          %6006 = vmatpush2.msra.mxu0 0.0
          %6007 = vmatprep.subr.mxu0 0.0
          %6008 = vmatpush2.msra.mxu0 0.0
          %6009 = vmatprep.subr.mxu0 0.0
          %6010 = vmatpush2.msra.mxu0 0.0
          %6011 = vmatprep.mubr.f32.mxu0 0.0
          %6012 = vmatmul.mubr.f32.gmra.mxu0 %v5899
          %v6013 = vpop.f32.mrf.mxu0
          %v6014 = vadd.f32 %v5940, %v6013
          %v6015 = vpop.f32.mrf.mxu0
          %v6016 = vadd.f32 %v5944, %v6015
          %6017 = vmatprep.mubr.f32.mxu0 0.0
          %6018 = vmatmul.mubr.f32.gmra.mxu0 %v5900
          %v6019 = vpop.f32.mrf.mxu0
          %v6020 = vadd.f32 %v5940, %v6019
          %v6021 = vpop.f32.mrf.mxu0
          %v6022 = vadd.f32 %v5944, %v6021
          %6023 = vmatprep.mubr.f32.mxu0 0.0
          %6024 = vmatmul.mubr.f32.gmra.mxu0 %v5901
          %v6025 = vpop.f32.mrf.mxu0
          %v6026 = vadd.f32 %v5940, %v6025
          %v6027 = vpop.f32.mrf.mxu0
          %v6028 = vadd.f32 %v5944, %v6027
          %6029 = vmatprep.mubr.f32.mxu0 0.0
          %6030 = vmatmul.mubr.f32.gmra.mxu0 %v5902
          %v6031 = vpop.f32.mrf.mxu0
          %v6032 = vadd.f32 %v5940, %v6031
          %v6033 = vpop.f32.mrf.mxu0
          %v6034 = vadd.f32 %v5944, %v6033
          %6035 = vdwg.mxu0
          %6036 = vst [vmem:[#allocation4] sm:$0xff] %v6014
          %6037 = vst [vmem:[#allocation4 + $0x8] sm:$0xff] %v6016
          %6038 = vst [vmem:[#allocation4 + $0x10] sm:$0xff] %v6020
          %6039 = vst [vmem:[#allocation4 + $0x18] sm:$0xff] %v6022
          %6040 = vst [vmem:[#allocation4 + $0x20] sm:$0xff] %v6026
          %6041 = vst [vmem:[#allocation4 + $0x28] sm:$0xff] %v6028
          %6042 = vst [vmem:[#allocation4 + $0x30] sm:$0xff] %v6032
          %6043 = vst [vmem:[#allocation4 + $0x38] sm:$0xff] %v6034
        $region108: #{perceiver_forward.1} parent=99 // pred_fallthru
          _
        // Predicated region
        $region109: #{perceiver_forward.1} parent=99 // pred_check
          %p6044 = pneg %p520
        $region110: #{perceiver_forward.1} parent=99 // pred_check_branch
          %6046 = sbr.rel (%p6044) target = $region112
        $region111: #{perceiver_forward.1} parent=99 // pred_region
          %s6048 = ssub.s32 1024, 1024
          %6049 = vsyncadd [#allocation5], %s6048
          %s6050 = sshll.u32 [#allocation4], 4
          %s6051 = int_to_ptr.vmem [resolvable:$true] %s6050
          %6056 = dma.vmem_to_hbm [thread:$0]  %s6051, 1024, %s20, [#allocation5], 256, 256, 16
        $region112: #{perceiver_forward.1} parent=99 // pred_fallthru
          _
        // Predicated region
        $region113: #{perceiver_forward.1} parent=99 // pred_check
          %p6057 = pneg %p520
        $region114: #{perceiver_forward.1} parent=99 // pred_check_branch
          %6059 = sbr.rel (%p6057) target = $region116
        $region115: #{perceiver_forward.1} parent=99 // pred_region
          %6060 = dma.done [#allocation5], 1024
        $region116: #{perceiver_forward.1} parent=99 // pred_fallthru
          _
      $region100: #{perceiver_forward.1} parent=5 // pred_fallthru
        _
      %p6061 = scmp.le.s32.totalorder 2, %s27
      // Predicated region
      $region117: #{perceiver_forward.1} parent=5 // pred_check
        %p6062 = pneg %p6061
      $region118: #{perceiver_forward.1} parent=5 // pred_check_branch
        %6064 = sbr.rel (%p6062) target = $region120
      $region119: #{perceiver_forward.1} parent=5 // pred_region
        %s6065 = ssub.s32 %s27, 2
      $region120: #{perceiver_forward.1} parent=5 // pred_fallthru
        _
    $region6: #{perceiver_forward.1} parent=1 // loop_footer
      %s31 = sadd.s32 1, %s27
    $region7: #{perceiver_forward.1} parent=1 // loop_footer_branch
      %26 = sbr.rel target = $region3
    $region8: #{perceiver_forward.1} parent=1 // loop_exit
      _
    %6066 = vsyncpa [#allocation5], 1
    %s6067 = scalar_lea.sflag [#allocation5], 1
    %6068 = vsyncpa %s6067, 1

</llo_original>
